<compile_context>
chip_gen: v6e
topology: v6e:2x2x1
jax: 0.10.0
libtpu: 0.0.40
codegen_flags: <defaults>
</compile_context>

<pallas_src>
import jax
import jax.numpy as jnp
from jax.experimental import pallas as pl
from jax.experimental.pallas import tpu as pltpu


# ----------------------------------------------------------------------------
# Kernel
# ----------------------------------------------------------------------------
def _make_rdb_kernel(C, G, L, H, W, C_out):
    """Builds the RDB kernel body closed over the static configuration."""
    HW = H * W
    taps = [(dy, dx) for dy in range(3) for dx in range(3)]  # matches w packing

    def kernel(x_ref, w_ref, b_ref, w1_ref, w2_ref, wr_ref, br_ref,
               o_ref, feat_ref):
        x = x_ref[0]                                           # (H, W, C) f32

        # --- zero ONLY the halo ring (interior is fully overwritten below) ---
        zrow = jnp.zeros((1, W + 2, C_out), jnp.bfloat16)
        zcol = jnp.zeros((H + 2, 1, C_out), jnp.bfloat16)
        feat_ref[0:1, :, :] = zrow
        feat_ref[H + 1:H + 2, :, :] = zrow
        feat_ref[:, 0:1, :] = zcol
        feat_ref[:, W + 1:W + 2, :] = zcol

        # --- write x into the interior, channels [0, C) ----------------------
        feat_ref[1:H + 1, 1:W + 1, 0:C] = x.astype(jnp.bfloat16)

        # --- dense 3x3 layers: 9 accumulated small dots per layer ------------
        for i in range(L):
            cin = C + G * i                       # channels this layer consumes
            acc = jnp.zeros((HW, G), jnp.float32)
            for t, (dy, dx) in enumerate(taps):
                lhs = feat_ref[dy:dy + H, dx:dx + W, 0:cin].reshape(HW, cin)
                acc = acc + jnp.dot(lhs, w_ref[i, t, 0:cin, :],
                                    preferred_element_type=jnp.float32)
            acc = acc + b_ref[i]                                   # (HW, G) f32
            feat_ref[1:H + 1, 1:W + 1, cin:cin + G] = (
                acc.reshape(H, W, G).astype(jnp.bfloat16))

        # --- channel attention (avg & max pooled rows share the FC matmuls) --
        flat = feat_ref[1:H + 1, 1:W + 1, :].astype(jnp.float32)  # (H,W,C_out)
        flat = flat.reshape(HW, C_out)
        avg = jnp.sum(flat, axis=0, keepdims=True) * (1.0 / HW)   # (1, C_out)
        mx = jnp.max(flat, axis=0, keepdims=True)                 # (1, C_out)
        pooled = jnp.concatenate([avg, mx], axis=0)               # (2, C_out)
        h = jnp.maximum(
            jnp.dot(pooled, w1_ref[...], preferred_element_type=jnp.float32),
            0.0)                                                  # (2, hidden)
        o2 = jnp.dot(h, w2_ref[...], preferred_element_type=jnp.float32)
        ca = jax.nn.sigmoid(o2[0:1, :] + o2[1:2, :])              # (1, C_out)

        # --- attend -> 1x1 reduce (bf16 MXU operands) -> residual add --------
        attended = (flat * ca).astype(jnp.bfloat16)               # (HW, C_out)
        red = jnp.dot(attended, wr_ref[...],
                      preferred_element_type=jnp.float32) + br_ref[...]
        o_ref[0] = red.reshape(H, W, C) + x                       # residual: f32 x

    return kernel


# ----------------------------------------------------------------------------
# Wrapper (NCHW in / NCHW out)
# ----------------------------------------------------------------------------
def rdb_pallas(x_nchw, params, G, L):
    N, C, H, W = x_nchw.shape
    C_out = C + G * L
    hidden = max(C_out // 16, 1)                  # PyTorch: in_planes // ratio
    cin_max = C + G * (L - 1)

    x_nhwc = jnp.transpose(x_nchw, (0, 2, 3, 1)).astype(jnp.float32)

    # Pack all conv weights per-tap into one (L, 9, cin_max, G) bf16 tensor.
    # Rows [cin, cin_max) of layer i are zero-padded but are never read by the
    # kernel (it slices weights and taps to the true cin of each layer).
    w_blk, b_blk = [], []
    for i in range(L):
        cin = C + G * i
        w, b = params["layers"][i]                        # (G, cin, 3, 3), (G,)
        w_k = jnp.transpose(w, (2, 3, 1, 0))              # (3, 3, cin, G)
        w_k = jnp.pad(w_k, ((0, 0), (0, 0), (0, cin_max - cin), (0, 0)))
        w_blk.append(w_k.reshape(9, cin_max, G))          # tap = dy*3 + dx
        b_blk.append(b.reshape(1, 1, G))
    w_all = jnp.stack(w_blk, axis=0).astype(jnp.bfloat16)      # (L,9,cin_max,G)
    b_all = jnp.concatenate(b_blk, axis=0).astype(jnp.float32)  # (L, 1, G)

    ca_w1 = jnp.transpose(params["ca_fc1"][:, :, 0, 0]).astype(jnp.float32)
    ca_w2 = jnp.transpose(params["ca_fc2"][:, :, 0, 0]).astype(jnp.float32)
    wr = jnp.transpose(params["reduce_w"][:, :, 0, 0]).astype(jnp.bfloat16)
    br = params["reduce_b"].reshape(1, C).astype(jnp.float32)

    out_nhwc = pl.pallas_call(
        _make_rdb_kernel(C, G, L, H, W, C_out),
        out_shape=jax.ShapeDtypeStruct((N, H, W, C), jnp.float32),
        grid=(N,),
        in_specs=[
            pl.BlockSpec((1, H, W, C), lambda n: (n, 0, 0, 0)),         # x
            pl.BlockSpec((L, 9, cin_max, G), lambda n: (0, 0, 0, 0)),   # conv W
            pl.BlockSpec((L, 1, G), lambda n: (0, 0, 0)),               # conv b
            pl.BlockSpec((C_out, hidden), lambda n: (0, 0)),            # CA fc1
            pl.BlockSpec((hidden, C_out), lambda n: (0, 0)),            # CA fc2
            pl.BlockSpec((C_out, C), lambda n: (0, 0)),                 # reduce W
            pl.BlockSpec((1, C), lambda n: (0, 0)),                     # reduce b
        ],
        out_specs=pl.BlockSpec((1, H, W, C), lambda n: (n, 0, 0, 0)),
        scratch_shapes=[pltpu.VMEM((H + 2, W + 2, C_out), jnp.bfloat16)],
        compiler_params=pltpu.CompilerParams(
            dimension_semantics=("parallel",)),
    )(x_nhwc, w_all, b_all, ca_w1, ca_w2, wr, br)

    return jnp.transpose(out_nhwc, (0, 3, 1, 2))


# ----------------------------------------------------------------------------
# Deterministic parameter init (shapes follow the PyTorch module __init__)
# ----------------------------------------------------------------------------
def init_params(key, C, G, L):
    C_out = C + G * L
    hidden = max(C_out // 16, 1)
    keys = jax.random.split(key, 2 * L + 4)
    ki = 0
    params = {"layers": []}
    for i in range(L):
        cin = C + G * i
        w = jax.random.normal(keys[ki], (G, cin, 3, 3), jnp.float32) * 0.1; ki += 1
        b = jax.random.normal(keys[ki], (G,), jnp.float32) * 0.1; ki += 1
        params["layers"].append((w, b))
    params["ca_fc1"] = jax.random.normal(keys[ki], (hidden, C_out, 1, 1), jnp.float32) * 0.1; ki += 1
    params["ca_fc2"] = jax.random.normal(keys[ki], (C_out, hidden, 1, 1), jnp.float32) * 0.1; ki += 1
    params["reduce_w"] = jax.random.normal(keys[ki], (C, C_out, 1, 1), jnp.float32) * 0.1; ki += 1
    params["reduce_b"] = jax.random.normal(keys[ki], (C,), jnp.float32) * 0.1
    return params


# ----------------------------------------------------------------------------
# Pure-JAX references
# ----------------------------------------------------------------------------
def rdb_reference(x_nchw, params, G, L):
    """Exact f32 semantics of the PyTorch module."""
    x = jnp.transpose(x_nchw, (0, 2, 3, 1)).astype(jnp.float32)   # NHWC
    out = x
    for (w, b) in params["layers"]:
        w_hwio = jnp.transpose(w, (2, 3, 1, 0))
        y = jax.lax.conv_general_dilated(
            out, w_hwio, (1, 1), "SAME",
            dimension_numbers=("NHWC", "HWIO", "NHWC")) + b[None, None, None, :]
        out = jnp.concatenate([out, y], axis=-1)
    avg = jnp.mean(out, axis=(1, 2))
    mx = jnp.max(out, axis=(1, 2))
    w1 = params["ca_fc1"][:, :, 0, 0]
    w2 = params["ca_fc2"][:, :, 0, 0]

    def fc(v):
        return jnp.maximum(v @ w1.T, 0.0) @ w2.T

    ca = jax.nn.sigmoid(fc(avg) + fc(mx))
    att = out * ca[:, None, None, :]
    wr = params["reduce_w"][:, :, 0, 0]
    red = att @ wr.T + params["reduce_b"]
    return jnp.transpose(red + x, (0, 3, 1, 2))


def rdb_reference_bf16(x_nchw, params, G, L):
    """Mirrors the kernel's mixed precision exactly: bf16 feature storage /
    MXU operands, f32 accumulation, f32 residual with the original x."""
    x = jnp.transpose(x_nchw, (0, 2, 3, 1)).astype(jnp.float32)   # NHWC f32
    feat = x.astype(jnp.bfloat16)                                 # scratch ch 0:C
    for (w, b) in params["layers"]:
        w_hwio = jnp.transpose(w, (2, 3, 1, 0)).astype(jnp.bfloat16)
        y = jax.lax.conv_general_dilated(
            feat, w_hwio, (1, 1), "SAME",
            dimension_numbers=("NHWC", "HWIO", "NHWC"),
            preferred_element_type=jnp.float32) + b[None, None, None, :]
        feat = jnp.concatenate([feat, y.astype(jnp.bfloat16)], axis=-1)
    flat = feat.astype(jnp.float32)
    N_, H_, W_, C_out_ = flat.shape
    avg = jnp.mean(flat, axis=(1, 2))
    mx = jnp.max(flat, axis=(1, 2))
    w1 = params["ca_fc1"][:, :, 0, 0]
    w2 = params["ca_fc2"][:, :, 0, 0]

    def fc(v):
        return jnp.maximum(v @ w1.T, 0.0) @ w2.T

    ca = jax.nn.sigmoid(fc(avg) + fc(mx))
    attended = (flat * ca[:, None, None, :]).astype(jnp.bfloat16)
    wr_t = jnp.transpose(params["reduce_w"][:, :, 0, 0]).astype(jnp.bfloat16)
    red = jnp.dot(attended.reshape(-1, C_out_), wr_t,
                  preferred_element_type=jnp.float32)
    red = red.reshape(N_, H_, W_, -1) + params["reduce_b"]
    return jnp.transpose(red + x, (0, 3, 1, 2))


# ----------------------------------------------------------------------------
if __name__ == "__main__":
    C, G, L = 8, 4, 2       # out_channels = 16 -> ChannelAttention hidden = 1
    N, H, W = 2, 16, 16

    key = jax.random.PRNGKey(0)
    kx, kp = jax.random.split(key)
    x = jax.random.normal(kx, (N, C, H, W), jnp.float32)
    params = init_params(kp, C, G, L)

    rdb = jax.jit(rdb_pallas, static_argnames=("G", "L"))
    out = jax.block_until_ready(rdb(x, params, G=G, L=L))
    assert out.shape == x.shape

    # Primary check: reference with the same mixed precision as the kernel.
    ref_bf16 = rdb_reference_bf16(x, params, G, L)
    err_bf16 = float(jnp.max(jnp.abs(out - ref_bf16)))
    assert jnp.allclose(out, ref_bf16, atol=5e-3, rtol=5e-3), \
        f"bf16-matched max_err={err_bf16}"

    # Secondary check vs pure-f32 module semantics (loose tolerance covers the
    # intentional bf16 rounding of MXU operands / stored features).
    ref_f32 = rdb_reference(x, params, G, L)
    err_f32 = float(jnp.max(jnp.abs(out - ref_f32)))
    assert jnp.allclose(out, ref_f32, atol=5e-2, rtol=5e-2), \
        f"f32 max_err={err_f32}"

    print("KERNEL_OK")
</pallas_src>

<mosaic_0001>
module attributes {stable_mosaic.version = 11 : i64} {
  func.func @kernel(%arg0: i32, %arg1: memref<1x16x16x8xf32, #tpu.memory_space<vmem>>, %arg2: memref<2x9x12x4xbf16, #tpu.memory_space<vmem>>, %arg3: memref<2x1x4xf32, #tpu.memory_space<vmem>>, %arg4: memref<16x1xf32, #tpu.memory_space<vmem>>, %arg5: memref<1x16xf32, #tpu.memory_space<vmem>>, %arg6: memref<16x8xbf16, #tpu.memory_space<vmem>>, %arg7: memref<1x8xf32, #tpu.memory_space<vmem>>, %arg8: memref<1x16x16x8xf32, #tpu.memory_space<vmem>>, %arg9: memref<18x18x16xbf16, #tpu.memory_space<vmem>>) attributes {dimension_semantics = [#tpu.dimension_semantics<parallel>], iteration_bounds = array<i64: 2>, scalar_prefetch = 0 : i64, scratch_operands = 1 : i64, tpu.core_type = #tpu.core_type<tc>, window_params = [{transform_indices = @transform_0, window_bounds = array<i64: 1, 16, 16, 8>}, {pipeline_mode = #tpu.pipeline_mode<synchronous>, transform_indices = @transform_1, window_bounds = array<i64: 2, 9, 12, 4>}, {pipeline_mode = #tpu.pipeline_mode<synchronous>, transform_indices = @transform_2, window_bounds = array<i64: 2, 1, 4>}, {pipeline_mode = #tpu.pipeline_mode<synchronous>, transform_indices = @transform_3, window_bounds = array<i64: 16, 1>}, {pipeline_mode = #tpu.pipeline_mode<synchronous>, transform_indices = @transform_4, window_bounds = array<i64: 1, 16>}, {pipeline_mode = #tpu.pipeline_mode<synchronous>, transform_indices = @transform_5, window_bounds = array<i64: 16, 8>}, {pipeline_mode = #tpu.pipeline_mode<synchronous>, transform_indices = @transform_6, window_bounds = array<i64: 1, 8>}, {transform_indices = @transform_7, window_bounds = array<i64: 1, 16, 16, 8>}]} {
    %c0 = arith.constant 0 : index
    %c0_0 = arith.constant 0 : index
    %c0_1 = arith.constant 0 : index
    %c0_2 = arith.constant 0 : index
    %0 = vector.load %arg1[%c0, %c0_0, %c0_1, %c0_2] : memref<1x16x16x8xf32, #tpu.memory_space<vmem>>, vector<1x16x16x8xf32>
    %1 = vector.shape_cast %0 : vector<1x16x16x8xf32> to vector<16x16x8xf32>
    %cst = arith.constant 0.000000e+00 : bf16
    %2 = vector.broadcast %cst : bf16 to vector<1x18x16xbf16>
    %cst_3 = arith.constant 0.000000e+00 : bf16
    %3 = vector.broadcast %cst_3 : bf16 to vector<18x1x16xbf16>
    %c0_4 = arith.constant 0 : index
    %c0_5 = arith.constant 0 : index
    %c0_6 = arith.constant 0 : index
    %4 = vector.load %arg9[%c0_4, %c0_5, %c0_6] : memref<18x18x16xbf16, #tpu.memory_space<vmem>>, vector<1x18x16xbf16>
    tpu.vector_store %arg9[%c0_4, %c0_5, %c0_6], %2 {strides = array<i32>} : memref<18x18x16xbf16, #tpu.memory_space<vmem>>, vector<1x18x16xbf16>,
    %c17 = arith.constant 17 : index
    %c0_7 = arith.constant 0 : index
    %c0_8 = arith.constant 0 : index
    %5 = vector.load %arg9[%c17, %c0_7, %c0_8] : memref<18x18x16xbf16, #tpu.memory_space<vmem>>, vector<1x18x16xbf16>
    tpu.vector_store %arg9[%c17, %c0_7, %c0_8], %2 {strides = array<i32>} : memref<18x18x16xbf16, #tpu.memory_space<vmem>>, vector<1x18x16xbf16>,
    %c0_9 = arith.constant 0 : index
    %c0_10 = arith.constant 0 : index
    %c0_11 = arith.constant 0 : index
    %6 = vector.load %arg9[%c0_9, %c0_10, %c0_11] : memref<18x18x16xbf16, #tpu.memory_space<vmem>>, vector<18x1x16xbf16>
    tpu.vector_store %arg9[%c0_9, %c0_10, %c0_11], %3 {strides = array<i32>} : memref<18x18x16xbf16, #tpu.memory_space<vmem>>, vector<18x1x16xbf16>,
    %c0_12 = arith.constant 0 : index
    %c17_13 = arith.constant 17 : index
    %c0_14 = arith.constant 0 : index
    %7 = vector.load %arg9[%c0_12, %c17_13, %c0_14] : memref<18x18x16xbf16, #tpu.memory_space<vmem>>, vector<18x1x16xbf16>
    tpu.vector_store %arg9[%c0_12, %c17_13, %c0_14], %3 {strides = array<i32>} : memref<18x18x16xbf16, #tpu.memory_space<vmem>>, vector<18x1x16xbf16>,
    %8 = arith.truncf %1 : vector<16x16x8xf32> to vector<16x16x8xbf16>
    %c1 = arith.constant 1 : index
    %c1_15 = arith.constant 1 : index
    %c0_16 = arith.constant 0 : index
    %9 = vector.load %arg9[%c1, %c1_15, %c0_16] : memref<18x18x16xbf16, #tpu.memory_space<vmem>>, vector<16x16x8xbf16>
    tpu.vector_store %arg9[%c1, %c1_15, %c0_16], %8 {strides = array<i32>} : memref<18x18x16xbf16, #tpu.memory_space<vmem>>, vector<16x16x8xbf16>,
    %cst_17 = arith.constant 0.000000e+00 : f32
    %10 = vector.broadcast %cst_17 : f32 to vector<256x4xf32>
    %c0_18 = arith.constant 0 : index
    %c0_19 = arith.constant 0 : index
    %c0_20 = arith.constant 0 : index
    %11 = vector.load %arg9[%c0_18, %c0_19, %c0_20] : memref<18x18x16xbf16, #tpu.memory_space<vmem>>, vector<16x16x8xbf16>
    %12 = vector.shape_cast %11 : vector<16x16x8xbf16> to vector<256x8xbf16>
    %c0_21 = arith.constant 0 : index
    %c0_22 = arith.constant 0 : index
    %c0_23 = arith.constant 0 : index
    %c0_24 = arith.constant 0 : index
    %13 = vector.load %arg2[%c0_21, %c0_22, %c0_23, %c0_24] : memref<2x9x12x4xbf16, #tpu.memory_space<vmem>>, vector<1x1x8x4xbf16>
    %14 = vector.shape_cast %13 : vector<1x1x8x4xbf16> to vector<8x4xbf16>
    %cst_25 = arith.constant dense<0.000000e+00> : vector<256x4xf32>
    %15 = tpu.matmul %12, %14, %cst_25 {dimension_numbers = #tpu.dot_dimension_numbers<[1], [0], [0], [1], [0, 0, 1, 1], [], []>} : vector<256x8xbf16>, vector<8x4xbf16>, vector<256x4xf32> -> vector<256x4xf32>
    %16 = arith.addf %10, %15 : vector<256x4xf32>
    %c0_26 = arith.constant 0 : index
    %c1_27 = arith.constant 1 : index
    %c0_28 = arith.constant 0 : index
    %17 = vector.load %arg9[%c0_26, %c1_27, %c0_28] : memref<18x18x16xbf16, #tpu.memory_space<vmem>>, vector<16x16x8xbf16>
    %18 = vector.shape_cast %17 : vector<16x16x8xbf16> to vector<256x8xbf16>
    %c0_29 = arith.constant 0 : index
    %c1_30 = arith.constant 1 : index
    %c0_31 = arith.constant 0 : index
    %c0_32 = arith.constant 0 : index
    %19 = vector.load %arg2[%c0_29, %c1_30, %c0_31, %c0_32] : memref<2x9x12x4xbf16, #tpu.memory_space<vmem>>, vector<1x1x8x4xbf16>
    %20 = vector.shape_cast %19 : vector<1x1x8x4xbf16> to vector<8x4xbf16>
    %cst_33 = arith.constant dense<0.000000e+00> : vector<256x4xf32>
    %21 = tpu.matmul %18, %20, %cst_33 {dimension_numbers = #tpu.dot_dimension_numbers<[1], [0], [0], [1], [0, 0, 1, 1], [], []>} : vector<256x8xbf16>, vector<8x4xbf16>, vector<256x4xf32> -> vector<256x4xf32>
    %22 = arith.addf %16, %21 : vector<256x4xf32>
    %c0_34 = arith.constant 0 : index
    %c2 = arith.constant 2 : index
    %c0_35 = arith.constant 0 : index
    %23 = vector.load %arg9[%c0_34, %c2, %c0_35] : memref<18x18x16xbf16, #tpu.memory_space<vmem>>, vector<16x16x8xbf16>
    %24 = vector.shape_cast %23 : vector<16x16x8xbf16> to vector<256x8xbf16>
    %c0_36 = arith.constant 0 : index
    %c2_37 = arith.constant 2 : index
    %c0_38 = arith.constant 0 : index
    %c0_39 = arith.constant 0 : index
    %25 = vector.load %arg2[%c0_36, %c2_37, %c0_38, %c0_39] : memref<2x9x12x4xbf16, #tpu.memory_space<vmem>>, vector<1x1x8x4xbf16>
    %26 = vector.shape_cast %25 : vector<1x1x8x4xbf16> to vector<8x4xbf16>
    %cst_40 = arith.constant dense<0.000000e+00> : vector<256x4xf32>
    %27 = tpu.matmul %24, %26, %cst_40 {dimension_numbers = #tpu.dot_dimension_numbers<[1], [0], [0], [1], [0, 0, 1, 1], [], []>} : vector<256x8xbf16>, vector<8x4xbf16>, vector<256x4xf32> -> vector<256x4xf32>
    %28 = arith.addf %22, %27 : vector<256x4xf32>
    %c1_41 = arith.constant 1 : index
    %c0_42 = arith.constant 0 : index
    %c0_43 = arith.constant 0 : index
    %29 = vector.load %arg9[%c1_41, %c0_42, %c0_43] : memref<18x18x16xbf16, #tpu.memory_space<vmem>>, vector<16x16x8xbf16>
    %30 = vector.shape_cast %29 : vector<16x16x8xbf16> to vector<256x8xbf16>
    %c0_44 = arith.constant 0 : index
    %c3 = arith.constant 3 : index
    %c0_45 = arith.constant 0 : index
    %c0_46 = arith.constant 0 : index
    %31 = vector.load %arg2[%c0_44, %c3, %c0_45, %c0_46] : memref<2x9x12x4xbf16, #tpu.memory_space<vmem>>, vector<1x1x8x4xbf16>
    %32 = vector.shape_cast %31 : vector<1x1x8x4xbf16> to vector<8x4xbf16>
    %cst_47 = arith.constant dense<0.000000e+00> : vector<256x4xf32>
    %33 = tpu.matmul %30, %32, %cst_47 {dimension_numbers = #tpu.dot_dimension_numbers<[1], [0], [0], [1], [0, 0, 1, 1], [], []>} : vector<256x8xbf16>, vector<8x4xbf16>, vector<256x4xf32> -> vector<256x4xf32>
    %34 = arith.addf %28, %33 : vector<256x4xf32>
    %c1_48 = arith.constant 1 : index
    %c1_49 = arith.constant 1 : index
    %c0_50 = arith.constant 0 : index
    %35 = vector.load %arg9[%c1_48, %c1_49, %c0_50] : memref<18x18x16xbf16, #tpu.memory_space<vmem>>, vector<16x16x8xbf16>
    %36 = vector.shape_cast %35 : vector<16x16x8xbf16> to vector<256x8xbf16>
    %c0_51 = arith.constant 0 : index
    %c4 = arith.constant 4 : index
    %c0_52 = arith.constant 0 : index
    %c0_53 = arith.constant 0 : index
    %37 = vector.load %arg2[%c0_51, %c4, %c0_52, %c0_53] : memref<2x9x12x4xbf16, #tpu.memory_space<vmem>>, vector<1x1x8x4xbf16>
    %38 = vector.shape_cast %37 : vector<1x1x8x4xbf16> to vector<8x4xbf16>
    %cst_54 = arith.constant dense<0.000000e+00> : vector<256x4xf32>
    %39 = tpu.matmul %36, %38, %cst_54 {dimension_numbers = #tpu.dot_dimension_numbers<[1], [0], [0], [1], [0, 0, 1, 1], [], []>} : vector<256x8xbf16>, vector<8x4xbf16>, vector<256x4xf32> -> vector<256x4xf32>
    %40 = arith.addf %34, %39 : vector<256x4xf32>
    %c1_55 = arith.constant 1 : index
    %c2_56 = arith.constant 2 : index
    %c0_57 = arith.constant 0 : index
    %41 = vector.load %arg9[%c1_55, %c2_56, %c0_57] : memref<18x18x16xbf16, #tpu.memory_space<vmem>>, vector<16x16x8xbf16>
    %42 = vector.shape_cast %41 : vector<16x16x8xbf16> to vector<256x8xbf16>
    %c0_58 = arith.constant 0 : index
    %c5 = arith.constant 5 : index
    %c0_59 = arith.constant 0 : index
    %c0_60 = arith.constant 0 : index
    %43 = vector.load %arg2[%c0_58, %c5, %c0_59, %c0_60] : memref<2x9x12x4xbf16, #tpu.memory_space<vmem>>, vector<1x1x8x4xbf16>
    %44 = vector.shape_cast %43 : vector<1x1x8x4xbf16> to vector<8x4xbf16>
    %cst_61 = arith.constant dense<0.000000e+00> : vector<256x4xf32>
    %45 = tpu.matmul %42, %44, %cst_61 {dimension_numbers = #tpu.dot_dimension_numbers<[1], [0], [0], [1], [0, 0, 1, 1], [], []>} : vector<256x8xbf16>, vector<8x4xbf16>, vector<256x4xf32> -> vector<256x4xf32>
    %46 = arith.addf %40, %45 : vector<256x4xf32>
    %c2_62 = arith.constant 2 : index
    %c0_63 = arith.constant 0 : index
    %c0_64 = arith.constant 0 : index
    %47 = vector.load %arg9[%c2_62, %c0_63, %c0_64] : memref<18x18x16xbf16, #tpu.memory_space<vmem>>, vector<16x16x8xbf16>
    %48 = vector.shape_cast %47 : vector<16x16x8xbf16> to vector<256x8xbf16>
    %c0_65 = arith.constant 0 : index
    %c6 = arith.constant 6 : index
    %c0_66 = arith.constant 0 : index
    %c0_67 = arith.constant 0 : index
    %49 = vector.load %arg2[%c0_65, %c6, %c0_66, %c0_67] : memref<2x9x12x4xbf16, #tpu.memory_space<vmem>>, vector<1x1x8x4xbf16>
    %50 = vector.shape_cast %49 : vector<1x1x8x4xbf16> to vector<8x4xbf16>
    %cst_68 = arith.constant dense<0.000000e+00> : vector<256x4xf32>
    %51 = tpu.matmul %48, %50, %cst_68 {dimension_numbers = #tpu.dot_dimension_numbers<[1], [0], [0], [1], [0, 0, 1, 1], [], []>} : vector<256x8xbf16>, vector<8x4xbf16>, vector<256x4xf32> -> vector<256x4xf32>
    %52 = arith.addf %46, %51 : vector<256x4xf32>
    %c2_69 = arith.constant 2 : index
    %c1_70 = arith.constant 1 : index
    %c0_71 = arith.constant 0 : index
    %53 = vector.load %arg9[%c2_69, %c1_70, %c0_71] : memref<18x18x16xbf16, #tpu.memory_space<vmem>>, vector<16x16x8xbf16>
    %54 = vector.shape_cast %53 : vector<16x16x8xbf16> to vector<256x8xbf16>
    %c0_72 = arith.constant 0 : index
    %c7 = arith.constant 7 : index
    %c0_73 = arith.constant 0 : index
    %c0_74 = arith.constant 0 : index
    %55 = vector.load %arg2[%c0_72, %c7, %c0_73, %c0_74] : memref<2x9x12x4xbf16, #tpu.memory_space<vmem>>, vector<1x1x8x4xbf16>
    %56 = vector.shape_cast %55 : vector<1x1x8x4xbf16> to vector<8x4xbf16>
    %cst_75 = arith.constant dense<0.000000e+00> : vector<256x4xf32>
    %57 = tpu.matmul %54, %56, %cst_75 {dimension_numbers = #tpu.dot_dimension_numbers<[1], [0], [0], [1], [0, 0, 1, 1], [], []>} : vector<256x8xbf16>, vector<8x4xbf16>, vector<256x4xf32> -> vector<256x4xf32>
    %58 = arith.addf %52, %57 : vector<256x4xf32>
    %c2_76 = arith.constant 2 : index
    %c2_77 = arith.constant 2 : index
    %c0_78 = arith.constant 0 : index
    %59 = vector.load %arg9[%c2_76, %c2_77, %c0_78] : memref<18x18x16xbf16, #tpu.memory_space<vmem>>, vector<16x16x8xbf16>
    %60 = vector.shape_cast %59 : vector<16x16x8xbf16> to vector<256x8xbf16>
    %c0_79 = arith.constant 0 : index
    %c8 = arith.constant 8 : index
    %c0_80 = arith.constant 0 : index
    %c0_81 = arith.constant 0 : index
    %61 = vector.load %arg2[%c0_79, %c8, %c0_80, %c0_81] : memref<2x9x12x4xbf16, #tpu.memory_space<vmem>>, vector<1x1x8x4xbf16>
    %62 = vector.shape_cast %61 : vector<1x1x8x4xbf16> to vector<8x4xbf16>
    %cst_82 = arith.constant dense<0.000000e+00> : vector<256x4xf32>
    %63 = tpu.matmul %60, %62, %cst_82 {dimension_numbers = #tpu.dot_dimension_numbers<[1], [0], [0], [1], [0, 0, 1, 1], [], []>} : vector<256x8xbf16>, vector<8x4xbf16>, vector<256x4xf32> -> vector<256x4xf32>
    %64 = arith.addf %58, %63 : vector<256x4xf32>
    %c0_83 = arith.constant 0 : index
    %c0_84 = arith.constant 0 : index
    %c0_85 = arith.constant 0 : index
    %65 = vector.load %arg3[%c0_83, %c0_84, %c0_85] : memref<2x1x4xf32, #tpu.memory_space<vmem>>, vector<1x1x4xf32>
    %66 = vector.shape_cast %65 : vector<1x1x4xf32> to vector<1x4xf32>
    %67 = vector.broadcast %66 : vector<1x4xf32> to vector<256x4xf32>
    %68 = arith.addf %64, %67 : vector<256x4xf32>
    %69 = vector.shape_cast %68 : vector<256x4xf32> to vector<16x16x4xf32>
    %70 = arith.truncf %69 : vector<16x16x4xf32> to vector<16x16x4xbf16>
    %c1_86 = arith.constant 1 : index
    %c1_87 = arith.constant 1 : index
    %c8_88 = arith.constant 8 : index
    %71 = vector.load %arg9[%c1_86, %c1_87, %c8_88] : memref<18x18x16xbf16, #tpu.memory_space<vmem>>, vector<16x16x4xbf16>
    tpu.vector_store %arg9[%c1_86, %c1_87, %c8_88], %70 {strides = array<i32>} : memref<18x18x16xbf16, #tpu.memory_space<vmem>>, vector<16x16x4xbf16>,
    %cst_89 = arith.constant 0.000000e+00 : f32
    %72 = vector.broadcast %cst_89 : f32 to vector<256x4xf32>
    %c0_90 = arith.constant 0 : index
    %c0_91 = arith.constant 0 : index
    %c0_92 = arith.constant 0 : index
    %73 = vector.load %arg9[%c0_90, %c0_91, %c0_92] : memref<18x18x16xbf16, #tpu.memory_space<vmem>>, vector<16x16x12xbf16>
    %74 = vector.shape_cast %73 : vector<16x16x12xbf16> to vector<256x12xbf16>
    %c1_93 = arith.constant 1 : index
    %c0_94 = arith.constant 0 : index
    %c0_95 = arith.constant 0 : index
    %c0_96 = arith.constant 0 : index
    %75 = vector.load %arg2[%c1_93, %c0_94, %c0_95, %c0_96] : memref<2x9x12x4xbf16, #tpu.memory_space<vmem>>, vector<1x1x12x4xbf16>
    %76 = vector.shape_cast %75 : vector<1x1x12x4xbf16> to vector<12x4xbf16>
    %cst_97 = arith.constant dense<0.000000e+00> : vector<256x4xf32>
    %77 = tpu.matmul %74, %76, %cst_97 {dimension_numbers = #tpu.dot_dimension_numbers<[1], [0], [0], [1], [0, 0, 1, 1], [], []>} : vector<256x12xbf16>, vector<12x4xbf16>, vector<256x4xf32> -> vector<256x4xf32>
    %78 = arith.addf %72, %77 : vector<256x4xf32>
    %c0_98 = arith.constant 0 : index
    %c1_99 = arith.constant 1 : index
    %c0_100 = arith.constant 0 : index
    %79 = vector.load %arg9[%c0_98, %c1_99, %c0_100] : memref<18x18x16xbf16, #tpu.memory_space<vmem>>, vector<16x16x12xbf16>
    %80 = vector.shape_cast %79 : vector<16x16x12xbf16> to vector<256x12xbf16>
    %c1_101 = arith.constant 1 : index
    %c1_102 = arith.constant 1 : index
    %c0_103 = arith.constant 0 : index
    %c0_104 = arith.constant 0 : index
    %81 = vector.load %arg2[%c1_101, %c1_102, %c0_103, %c0_104] : memref<2x9x12x4xbf16, #tpu.memory_space<vmem>>, vector<1x1x12x4xbf16>
    %82 = vector.shape_cast %81 : vector<1x1x12x4xbf16> to vector<12x4xbf16>
    %cst_105 = arith.constant dense<0.000000e+00> : vector<256x4xf32>
    %83 = tpu.matmul %80, %82, %cst_105 {dimension_numbers = #tpu.dot_dimension_numbers<[1], [0], [0], [1], [0, 0, 1, 1], [], []>} : vector<256x12xbf16>, vector<12x4xbf16>, vector<256x4xf32> -> vector<256x4xf32>
    %84 = arith.addf %78, %83 : vector<256x4xf32>
    %c0_106 = arith.constant 0 : index
    %c2_107 = arith.constant 2 : index
    %c0_108 = arith.constant 0 : index
    %85 = vector.load %arg9[%c0_106, %c2_107, %c0_108] : memref<18x18x16xbf16, #tpu.memory_space<vmem>>, vector<16x16x12xbf16>
    %86 = vector.shape_cast %85 : vector<16x16x12xbf16> to vector<256x12xbf16>
    %c1_109 = arith.constant 1 : index
    %c2_110 = arith.constant 2 : index
    %c0_111 = arith.constant 0 : index
    %c0_112 = arith.constant 0 : index
    %87 = vector.load %arg2[%c1_109, %c2_110, %c0_111, %c0_112] : memref<2x9x12x4xbf16, #tpu.memory_space<vmem>>, vector<1x1x12x4xbf16>
    %88 = vector.shape_cast %87 : vector<1x1x12x4xbf16> to vector<12x4xbf16>
    %cst_113 = arith.constant dense<0.000000e+00> : vector<256x4xf32>
    %89 = tpu.matmul %86, %88, %cst_113 {dimension_numbers = #tpu.dot_dimension_numbers<[1], [0], [0], [1], [0, 0, 1, 1], [], []>} : vector<256x12xbf16>, vector<12x4xbf16>, vector<256x4xf32> -> vector<256x4xf32>
    %90 = arith.addf %84, %89 : vector<256x4xf32>
    %c1_114 = arith.constant 1 : index
    %c0_115 = arith.constant 0 : index
    %c0_116 = arith.constant 0 : index
    %91 = vector.load %arg9[%c1_114, %c0_115, %c0_116] : memref<18x18x16xbf16, #tpu.memory_space<vmem>>, vector<16x16x12xbf16>
    %92 = vector.shape_cast %91 : vector<16x16x12xbf16> to vector<256x12xbf16>
    %c1_117 = arith.constant 1 : index
    %c3_118 = arith.constant 3 : index
    %c0_119 = arith.constant 0 : index
    %c0_120 = arith.constant 0 : index
    %93 = vector.load %arg2[%c1_117, %c3_118, %c0_119, %c0_120] : memref<2x9x12x4xbf16, #tpu.memory_space<vmem>>, vector<1x1x12x4xbf16>
    %94 = vector.shape_cast %93 : vector<1x1x12x4xbf16> to vector<12x4xbf16>
    %cst_121 = arith.constant dense<0.000000e+00> : vector<256x4xf32>
    %95 = tpu.matmul %92, %94, %cst_121 {dimension_numbers = #tpu.dot_dimension_numbers<[1], [0], [0], [1], [0, 0, 1, 1], [], []>} : vector<256x12xbf16>, vector<12x4xbf16>, vector<256x4xf32> -> vector<256x4xf32>
    %96 = arith.addf %90, %95 : vector<256x4xf32>
    %c1_122 = arith.constant 1 : index
    %c1_123 = arith.constant 1 : index
    %c0_124 = arith.constant 0 : index
    %97 = vector.load %arg9[%c1_122, %c1_123, %c0_124] : memref<18x18x16xbf16, #tpu.memory_space<vmem>>, vector<16x16x12xbf16>
    %98 = vector.shape_cast %97 : vector<16x16x12xbf16> to vector<256x12xbf16>
    %c1_125 = arith.constant 1 : index
    %c4_126 = arith.constant 4 : index
    %c0_127 = arith.constant 0 : index
    %c0_128 = arith.constant 0 : index
    %99 = vector.load %arg2[%c1_125, %c4_126, %c0_127, %c0_128] : memref<2x9x12x4xbf16, #tpu.memory_space<vmem>>, vector<1x1x12x4xbf16>
    %100 = vector.shape_cast %99 : vector<1x1x12x4xbf16> to vector<12x4xbf16>
    %cst_129 = arith.constant dense<0.000000e+00> : vector<256x4xf32>
    %101 = tpu.matmul %98, %100, %cst_129 {dimension_numbers = #tpu.dot_dimension_numbers<[1], [0], [0], [1], [0, 0, 1, 1], [], []>} : vector<256x12xbf16>, vector<12x4xbf16>, vector<256x4xf32> -> vector<256x4xf32>
    %102 = arith.addf %96, %101 : vector<256x4xf32>
    %c1_130 = arith.constant 1 : index
    %c2_131 = arith.constant 2 : index
    %c0_132 = arith.constant 0 : index
    %103 = vector.load %arg9[%c1_130, %c2_131, %c0_132] : memref<18x18x16xbf16, #tpu.memory_space<vmem>>, vector<16x16x12xbf16>
    %104 = vector.shape_cast %103 : vector<16x16x12xbf16> to vector<256x12xbf16>
    %c1_133 = arith.constant 1 : index
    %c5_134 = arith.constant 5 : index
    %c0_135 = arith.constant 0 : index
    %c0_136 = arith.constant 0 : index
    %105 = vector.load %arg2[%c1_133, %c5_134, %c0_135, %c0_136] : memref<2x9x12x4xbf16, #tpu.memory_space<vmem>>, vector<1x1x12x4xbf16>
    %106 = vector.shape_cast %105 : vector<1x1x12x4xbf16> to vector<12x4xbf16>
    %cst_137 = arith.constant dense<0.000000e+00> : vector<256x4xf32>
    %107 = tpu.matmul %104, %106, %cst_137 {dimension_numbers = #tpu.dot_dimension_numbers<[1], [0], [0], [1], [0, 0, 1, 1], [], []>} : vector<256x12xbf16>, vector<12x4xbf16>, vector<256x4xf32> -> vector<256x4xf32>
    %108 = arith.addf %102, %107 : vector<256x4xf32>
    %c2_138 = arith.constant 2 : index
    %c0_139 = arith.constant 0 : index
    %c0_140 = arith.constant 0 : index
    %109 = vector.load %arg9[%c2_138, %c0_139, %c0_140] : memref<18x18x16xbf16, #tpu.memory_space<vmem>>, vector<16x16x12xbf16>
    %110 = vector.shape_cast %109 : vector<16x16x12xbf16> to vector<256x12xbf16>
    %c1_141 = arith.constant 1 : index
    %c6_142 = arith.constant 6 : index
    %c0_143 = arith.constant 0 : index
    %c0_144 = arith.constant 0 : index
    %111 = vector.load %arg2[%c1_141, %c6_142, %c0_143, %c0_144] : memref<2x9x12x4xbf16, #tpu.memory_space<vmem>>, vector<1x1x12x4xbf16>
    %112 = vector.shape_cast %111 : vector<1x1x12x4xbf16> to vector<12x4xbf16>
    %cst_145 = arith.constant dense<0.000000e+00> : vector<256x4xf32>
    %113 = tpu.matmul %110, %112, %cst_145 {dimension_numbers = #tpu.dot_dimension_numbers<[1], [0], [0], [1], [0, 0, 1, 1], [], []>} : vector<256x12xbf16>, vector<12x4xbf16>, vector<256x4xf32> -> vector<256x4xf32>
    %114 = arith.addf %108, %113 : vector<256x4xf32>
    %c2_146 = arith.constant 2 : index
    %c1_147 = arith.constant 1 : index
    %c0_148 = arith.constant 0 : index
    %115 = vector.load %arg9[%c2_146, %c1_147, %c0_148] : memref<18x18x16xbf16, #tpu.memory_space<vmem>>, vector<16x16x12xbf16>
    %116 = vector.shape_cast %115 : vector<16x16x12xbf16> to vector<256x12xbf16>
    %c1_149 = arith.constant 1 : index
    %c7_150 = arith.constant 7 : index
    %c0_151 = arith.constant 0 : index
    %c0_152 = arith.constant 0 : index
    %117 = vector.load %arg2[%c1_149, %c7_150, %c0_151, %c0_152] : memref<2x9x12x4xbf16, #tpu.memory_space<vmem>>, vector<1x1x12x4xbf16>
    %118 = vector.shape_cast %117 : vector<1x1x12x4xbf16> to vector<12x4xbf16>
    %cst_153 = arith.constant dense<0.000000e+00> : vector<256x4xf32>
    %119 = tpu.matmul %116, %118, %cst_153 {dimension_numbers = #tpu.dot_dimension_numbers<[1], [0], [0], [1], [0, 0, 1, 1], [], []>} : vector<256x12xbf16>, vector<12x4xbf16>, vector<256x4xf32> -> vector<256x4xf32>
    %120 = arith.addf %114, %119 : vector<256x4xf32>
    %c2_154 = arith.constant 2 : index
    %c2_155 = arith.constant 2 : index
    %c0_156 = arith.constant 0 : index
    %121 = vector.load %arg9[%c2_154, %c2_155, %c0_156] : memref<18x18x16xbf16, #tpu.memory_space<vmem>>, vector<16x16x12xbf16>
    %122 = vector.shape_cast %121 : vector<16x16x12xbf16> to vector<256x12xbf16>
    %c1_157 = arith.constant 1 : index
    %c8_158 = arith.constant 8 : index
    %c0_159 = arith.constant 0 : index
    %c0_160 = arith.constant 0 : index
    %123 = vector.load %arg2[%c1_157, %c8_158, %c0_159, %c0_160] : memref<2x9x12x4xbf16, #tpu.memory_space<vmem>>, vector<1x1x12x4xbf16>
    %124 = vector.shape_cast %123 : vector<1x1x12x4xbf16> to vector<12x4xbf16>
    %cst_161 = arith.constant dense<0.000000e+00> : vector<256x4xf32>
    %125 = tpu.matmul %122, %124, %cst_161 {dimension_numbers = #tpu.dot_dimension_numbers<[1], [0], [0], [1], [0, 0, 1, 1], [], []>} : vector<256x12xbf16>, vector<12x4xbf16>, vector<256x4xf32> -> vector<256x4xf32>
    %126 = arith.addf %120, %125 : vector<256x4xf32>
    %c1_162 = arith.constant 1 : index
    %c0_163 = arith.constant 0 : index
    %c0_164 = arith.constant 0 : index
    %127 = vector.load %arg3[%c1_162, %c0_163, %c0_164] : memref<2x1x4xf32, #tpu.memory_space<vmem>>, vector<1x1x4xf32>
    %128 = vector.shape_cast %127 : vector<1x1x4xf32> to vector<1x4xf32>
    %129 = vector.broadcast %128 : vector<1x4xf32> to vector<256x4xf32>
    %130 = arith.addf %126, %129 : vector<256x4xf32>
    %131 = vector.shape_cast %130 : vector<256x4xf32> to vector<16x16x4xf32>
    %132 = arith.truncf %131 : vector<16x16x4xf32> to vector<16x16x4xbf16>
    %c1_165 = arith.constant 1 : index
    %c1_166 = arith.constant 1 : index
    %c12 = arith.constant 12 : index
    %133 = vector.load %arg9[%c1_165, %c1_166, %c12] : memref<18x18x16xbf16, #tpu.memory_space<vmem>>, vector<16x16x4xbf16>
    tpu.vector_store %arg9[%c1_165, %c1_166, %c12], %132 {strides = array<i32>} : memref<18x18x16xbf16, #tpu.memory_space<vmem>>, vector<16x16x4xbf16>,
    %c1_167 = arith.constant 1 : index
    %c1_168 = arith.constant 1 : index
    %c0_169 = arith.constant 0 : index
    %134 = vector.load %arg9[%c1_167, %c1_168, %c0_169] : memref<18x18x16xbf16, #tpu.memory_space<vmem>>, vector<16x16x16xbf16>
    %135 = arith.extf %134 : vector<16x16x16xbf16> to vector<16x16x16xf32>
    %136 = vector.shape_cast %135 : vector<16x16x16xf32> to vector<256x16xf32>
    %cst_170 = arith.constant dense<0.000000e+00> : vector<16xf32>
    %137 = vector.multi_reduction <add>, %136, %cst_170 [0] : vector<256x16xf32> to vector<16xf32>
    %138 = vector.shape_cast %137 : vector<16xf32> to vector<1x16xf32>
    %cst_171 = arith.constant 3.906250e-03 : f32
    %139 = vector.broadcast %cst_171 : f32 to vector<1x16xf32>
    %140 = arith.mulf %138, %139 : vector<1x16xf32>
    %cst_172 = arith.constant dense<0xFF800000> : vector<16xf32>
    %141 = vector.multi_reduction <maximumf>, %136, %cst_172 [0] : vector<256x16xf32> to vector<16xf32>
    %142 = vector.shape_cast %141 : vector<16xf32> to vector<1x16xf32>
    %143 = tpu.concatenate %140, %142 in 0 : vector<1x16xf32>, vector<1x16xf32> -> vector<2x16xf32>
    %c0_173 = arith.constant 0 : index
    %c0_174 = arith.constant 0 : index
    %144 = vector.load %arg4[%c0_173, %c0_174] : memref<16x1xf32, #tpu.memory_space<vmem>>, vector<16x1xf32>
    %cst_175 = arith.constant dense<0.000000e+00> : vector<2x1xf32>
    %145 = tpu.matmul %143, %144, %cst_175 {dimension_numbers = #tpu.dot_dimension_numbers<[1], [0], [0], [1], [0, 0, 1, 1], [], []>} : vector<2x16xf32>, vector<16x1xf32>, vector<2x1xf32> -> vector<2x1xf32>
    %cst_176 = arith.constant 0.000000e+00 : f32
    %146 = vector.broadcast %cst_176 : f32 to vector<2x1xf32>
    %147 = arith.maximumf %145, %146 : vector<2x1xf32>
    %c0_177 = arith.constant 0 : index
    %c0_178 = arith.constant 0 : index
    %148 = vector.load %arg5[%c0_177, %c0_178] : memref<1x16xf32, #tpu.memory_space<vmem>>, vector<1x16xf32>
    %cst_179 = arith.constant dense<0.000000e+00> : vector<2x16xf32>
    %149 = tpu.matmul %147, %148, %cst_179 {dimension_numbers = #tpu.dot_dimension_numbers<[1], [0], [0], [1], [0, 0, 1, 1], [], []>} : vector<2x1xf32>, vector<1x16xf32>, vector<2x16xf32> -> vector<2x16xf32>
    %150 = vector.extract_strided_slice %149 {offsets = [0, 0], sizes = [1, 16], strides = [1, 1]} : vector<2x16xf32> to vector<1x16xf32>
    %151 = vector.extract_strided_slice %149 {offsets = [1, 0], sizes = [1, 16], strides = [1, 1]} : vector<2x16xf32> to vector<1x16xf32>
    %152 = arith.addf %150, %151 : vector<1x16xf32>
    %153 = arith.negf %152 : vector<1x16xf32>
    %154 = math.exp %153 : vector<1x16xf32>
    %cst_180 = arith.constant 1.000000e+00 : f32
    %155 = vector.broadcast %cst_180 : f32 to vector<1x16xf32>
    %156 = arith.addf %155, %154 : vector<1x16xf32>
    %157 = arith.divf %155, %156 : vector<1x16xf32>
    %158 = vector.broadcast %157 : vector<1x16xf32> to vector<256x16xf32>
    %159 = arith.mulf %136, %158 : vector<256x16xf32>
    %160 = arith.truncf %159 : vector<256x16xf32> to vector<256x16xbf16>
    %c0_181 = arith.constant 0 : index
    %c0_182 = arith.constant 0 : index
    %161 = vector.load %arg6[%c0_181, %c0_182] : memref<16x8xbf16, #tpu.memory_space<vmem>>, vector<16x8xbf16>
    %cst_183 = arith.constant dense<0.000000e+00> : vector<256x8xf32>
    %162 = tpu.matmul %160, %161, %cst_183 {dimension_numbers = #tpu.dot_dimension_numbers<[1], [0], [0], [1], [0, 0, 1, 1], [], []>} : vector<256x16xbf16>, vector<16x8xbf16>, vector<256x8xf32> -> vector<256x8xf32>
    %c0_184 = arith.constant 0 : index
    %c0_185 = arith.constant 0 : index
    %163 = vector.load %arg7[%c0_184, %c0_185] : memref<1x8xf32, #tpu.memory_space<vmem>>, vector<1x8xf32>
    %164 = vector.broadcast %163 : vector<1x8xf32> to vector<256x8xf32>
    %165 = arith.addf %162, %164 : vector<256x8xf32>
    %166 = vector.shape_cast %165 : vector<256x8xf32> to vector<16x16x8xf32>
    %167 = arith.addf %166, %1 : vector<16x16x8xf32>
    %c0_186 = arith.constant 0 : index
    %c0_187 = arith.constant 0 : index
    %c0_188 = arith.constant 0 : index
    %c0_189 = arith.constant 0 : index
    %168 = vector.load %arg8[%c0_186, %c0_187, %c0_188, %c0_189] : memref<1x16x16x8xf32, #tpu.memory_space<vmem>>, vector<1x16x16x8xf32>
    %169 = vector.shape_cast %168 : vector<1x16x16x8xf32> to vector<16x16x8xf32>
    %170 = vector.shape_cast %167 : vector<16x16x8xf32> to vector<1x16x16x8xf32>
    tpu.vector_store %arg8[%c0_186, %c0_187, %c0_188, %c0_189], %170 {strides = array<i32>} : memref<1x16x16x8xf32, #tpu.memory_space<vmem>>, vector<1x16x16x8xf32>,
    return
  }
  func.func @transform_0(%arg0: i32) -> (i32, i32, i32, i32) {
    %c0_i32 = arith.constant 0 : i32
    %c0_i32_0 = arith.constant 0 : i32
    %c0_i32_1 = arith.constant 0 : i32
    %c0_i32_2 = arith.constant 0 : i32
    return %arg0, %c0_i32, %c0_i32_0, %c0_i32_1 : i32, i32, i32, i32
  }
  func.func @transform_1(%arg0: i32) -> (i32, i32, i32, i32) {
    %c0_i32 = arith.constant 0 : i32
    %c0_i32_0 = arith.constant 0 : i32
    %c0_i32_1 = arith.constant 0 : i32
    %c0_i32_2 = arith.constant 0 : i32
    %c0_i32_3 = arith.constant 0 : i32
    return %c0_i32, %c0_i32_0, %c0_i32_1, %c0_i32_2 : i32, i32, i32, i32
  }
  func.func @transform_2(%arg0: i32) -> (i32, i32, i32) {
    %c0_i32 = arith.constant 0 : i32
    %c0_i32_0 = arith.constant 0 : i32
    %c0_i32_1 = arith.constant 0 : i32
    %c0_i32_2 = arith.constant 0 : i32
    return %c0_i32, %c0_i32_0, %c0_i32_1 : i32, i32, i32
  }
  func.func @transform_3(%arg0: i32) -> (i32, i32) {
    %c0_i32 = arith.constant 0 : i32
    %c0_i32_0 = arith.constant 0 : i32
    %c0_i32_1 = arith.constant 0 : i32
    return %c0_i32, %c0_i32_0 : i32, i32
  }
  func.func @transform_4(%arg0: i32) -> (i32, i32) {
    %c0_i32 = arith.constant 0 : i32
    %c0_i32_0 = arith.constant 0 : i32
    %c0_i32_1 = arith.constant 0 : i32
    return %c0_i32, %c0_i32_0 : i32, i32
  }
  func.func @transform_5(%arg0: i32) -> (i32, i32) {
    %c0_i32 = arith.constant 0 : i32
    %c0_i32_0 = arith.constant 0 : i32
    %c0_i32_1 = arith.constant 0 : i32
    return %c0_i32, %c0_i32_0 : i32, i32
  }
  func.func @transform_6(%arg0: i32) -> (i32, i32) {
    %c0_i32 = arith.constant 0 : i32
    %c0_i32_0 = arith.constant 0 : i32
    %c0_i32_1 = arith.constant 0 : i32
    return %c0_i32, %c0_i32_0 : i32, i32
  }
  func.func @transform_7(%arg0: i32) -> (i32, i32, i32, i32) {
    %c0_i32 = arith.constant 0 : i32
    %c0_i32_0 = arith.constant 0 : i32
    %c0_i32_1 = arith.constant 0 : i32
    %c0_i32_2 = arith.constant 0 : i32
    return %arg0, %c0_i32, %c0_i32_0, %c0_i32_1 : i32, i32, i32, i32
  }
}

</mosaic_0001>

<llo_original>
// kernel: rdb_pallas.1
$region0: #{rdb_pallas.1}
  #allocation0 [shape = 'u32[]', space=smem, size = 0x4, offset = 0x4, fixed_abs, tag = 'smem constant byte address 0x4 - core index']
  #allocation1 [shape = 'u32[144,128]{1,0:T(1,128)}', space=vmem, size = 0x12000, scoped, tag = 'internal scratch']
  #allocation2 [shape = 'bf16[18,18,16]{2,1,0:T(8,128)(2,1)}', space=vmem, size = 0x1b000, scoped, tag = 'scratch operand']
  %s0 = inlined_call_operand.vmem [shape: f32[2,16,16,8], index: 0, kind: input, shape index: {}]
  %s1 = inlined_call_operand.vmem [shape: bf16[2,9,12,4], index: 1, kind: input, shape index: {}]
  %s2 = inlined_call_operand.vmem [shape: f32[2,1,4], index: 2, kind: input, shape index: {}]
  %s3 = inlined_call_operand.vmem [shape: f32[16,1], index: 3, kind: input, shape index: {}]
  %s4 = inlined_call_operand.vmem [shape: f32[1,16], index: 4, kind: input, shape index: {}]
  %s5 = inlined_call_operand.vmem [shape: bf16[16,8], index: 5, kind: input, shape index: {}]
  %s6 = inlined_call_operand.vmem [shape: f32[1,8], index: 6, kind: input, shape index: {}]
  %s7 = inlined_call_operand.vmem [shape: f32[2,16,16,8], index: 7, kind: output, shape index: {}]
  %s8 = sld [smem:[#allocation0]]
  $region61: #{rdb_pallas.1} parent=0
    _
  %s10 = ssub.s32 1, %s8
  %s11 = scalar_select 0, %s10, %s8
  loop: start=0, step=1, limit=4
  $region2: #{rdb_pallas.1} parent=0 // loop_pre_header
    _
  $region3: #{rdb_pallas.1} parent=0 // loop_header
    %s13 = sphi 0, %s17
    %p14 = scmp.ge.s32.totalorder %s13, 4
    %s23 = sphi 0, %s25
    %s26 = sphi 0, %s23
    %s27 = sphi 0, %s26
    %s43 = sphi 0, %s27
    %s47 = sphi 0, %s47
    %s49 = sphi 0, %s47
    %s50 = sphi 0, %s49
    %s64 = sphi 0, %s50
    %s68 = sphi 0, %s68
    %s70 = sphi 0, %s68
    %s71 = sphi 0, %s70
    %s85 = sphi 0, %s71
    %s89 = sphi 0, %s89
    %s91 = sphi 0, %s89
    %s92 = sphi 0, %s91
    %s106 = sphi 0, %s92
    %s110 = sphi 0, %s110
    %s112 = sphi 0, %s110
    %s113 = sphi 0, %s112
    %s127 = sphi 0, %s113
    %s131 = sphi 0, %s131
    %s133 = sphi 0, %s131
    %s134 = sphi 0, %s133
    %s148 = sphi 0, %s134
    %s152 = sphi 0, %s152
    %s154 = sphi 0, %s152
    %s155 = sphi 0, %s154
    %s169 = sphi 0, %s155
    %s175 = sphi 0, %s177
    %s178 = sphi 0, %s175
    %s179 = sphi 0, %s178
    %s195 = sphi 0, %s179
  $region4: #{rdb_pallas.1} parent=0 // loop_header_branch
    %16 = sbr.rel (%p14) target = $region8
  $region5: #{rdb_pallas.1} parent=0 // loop_body
    %s18 = ssub.s32 %s13, 1
    %s19 = ssub.s32 %s13, 2
    %s20 = sadd.s32 %s13, 1
    %s21 = ssub.s32 %s13, %s20
    %p22 = scmp.eq.s32.totalorder %s21, 0
    %s24 = sadd.s32 %s23, 1
    %s25 = scalar_select %p22, %s23, %s24
    %p28 = pneg %p22
    %p29 = scmp.eq.s32.totalorder %s13, 1
    %p30 = por %p28, %p29
    %p31 = scmp.ne.s32.totalorder %s23, %s26
    %p32 = scmp.eq.s32.totalorder %s13, 0
    %p33 = por %p31, %p32
    %p34 = scmp.ne.s32.totalorder %s23, %s26
    %p35 = scmp.eq.s32.totalorder %s18, 1
    %p36 = por %p34, %p35
    %p37 = scmp.ne.s32.totalorder %s26, %s27
    %p38 = scmp.eq.s32.totalorder %s18, 0
    %p39 = por %p37, %p38
    %p40 = scmp.ne.s32.totalorder %s26, %s27
    %p41 = scmp.eq.s32.totalorder %s19, 1
    %p42 = por %p40, %p41
    %p44 = scmp.ne.s32.totalorder %s27, %s43
    %p45 = scmp.eq.s32.totalorder %s19, 0
    %p46 = por %p44, %p45
    %s48 = sadd.s32 %s47, 1
    %p51 = scmp.eq.s32.totalorder %s13, 1
    %p52 = scmp.ne.s32.totalorder %s47, %s49
    %p53 = scmp.eq.s32.totalorder %s13, 0
    %p54 = por %p52, %p53
    %p55 = scmp.ne.s32.totalorder %s47, %s49
    %p56 = scmp.eq.s32.totalorder %s18, 1
    %p57 = por %p55, %p56
    %p58 = scmp.ne.s32.totalorder %s49, %s50
    %p59 = scmp.eq.s32.totalorder %s18, 0
    %p60 = por %p58, %p59
    %p61 = scmp.ne.s32.totalorder %s49, %s50
    %p62 = scmp.eq.s32.totalorder %s19, 1
    %p63 = por %p61, %p62
    %p65 = scmp.ne.s32.totalorder %s50, %s64
    %p66 = scmp.eq.s32.totalorder %s19, 0
    %p67 = por %p65, %p66
    %s69 = sadd.s32 %s68, 1
    %p72 = scmp.eq.s32.totalorder %s13, 1
    %p73 = scmp.ne.s32.totalorder %s68, %s70
    %p74 = scmp.eq.s32.totalorder %s13, 0
    %p75 = por %p73, %p74
    %p76 = scmp.ne.s32.totalorder %s68, %s70
    %p77 = scmp.eq.s32.totalorder %s18, 1
    %p78 = por %p76, %p77
    %p79 = scmp.ne.s32.totalorder %s70, %s71
    %p80 = scmp.eq.s32.totalorder %s18, 0
    %p81 = por %p79, %p80
    %p82 = scmp.ne.s32.totalorder %s70, %s71
    %p83 = scmp.eq.s32.totalorder %s19, 1
    %p84 = por %p82, %p83
    %p86 = scmp.ne.s32.totalorder %s71, %s85
    %p87 = scmp.eq.s32.totalorder %s19, 0
    %p88 = por %p86, %p87
    %s90 = sadd.s32 %s89, 1
    %p93 = scmp.eq.s32.totalorder %s13, 1
    %p94 = scmp.ne.s32.totalorder %s89, %s91
    %p95 = scmp.eq.s32.totalorder %s13, 0
    %p96 = por %p94, %p95
    %p97 = scmp.ne.s32.totalorder %s89, %s91
    %p98 = scmp.eq.s32.totalorder %s18, 1
    %p99 = por %p97, %p98
    %p100 = scmp.ne.s32.totalorder %s91, %s92
    %p101 = scmp.eq.s32.totalorder %s18, 0
    %p102 = por %p100, %p101
    %p103 = scmp.ne.s32.totalorder %s91, %s92
    %p104 = scmp.eq.s32.totalorder %s19, 1
    %p105 = por %p103, %p104
    %p107 = scmp.ne.s32.totalorder %s92, %s106
    %p108 = scmp.eq.s32.totalorder %s19, 0
    %p109 = por %p107, %p108
    %s111 = sadd.s32 %s110, 1
    %p114 = scmp.eq.s32.totalorder %s13, 1
    %p115 = scmp.ne.s32.totalorder %s110, %s112
    %p116 = scmp.eq.s32.totalorder %s13, 0
    %p117 = por %p115, %p116
    %p118 = scmp.ne.s32.totalorder %s110, %s112
    %p119 = scmp.eq.s32.totalorder %s18, 1
    %p120 = por %p118, %p119
    %p121 = scmp.ne.s32.totalorder %s112, %s113
    %p122 = scmp.eq.s32.totalorder %s18, 0
    %p123 = por %p121, %p122
    %p124 = scmp.ne.s32.totalorder %s112, %s113
    %p125 = scmp.eq.s32.totalorder %s19, 1
    %p126 = por %p124, %p125
    %p128 = scmp.ne.s32.totalorder %s113, %s127
    %p129 = scmp.eq.s32.totalorder %s19, 0
    %p130 = por %p128, %p129
    %s132 = sadd.s32 %s131, 1
    %p135 = scmp.eq.s32.totalorder %s13, 1
    %p136 = scmp.ne.s32.totalorder %s131, %s133
    %p137 = scmp.eq.s32.totalorder %s13, 0
    %p138 = por %p136, %p137
    %p139 = scmp.ne.s32.totalorder %s131, %s133
    %p140 = scmp.eq.s32.totalorder %s18, 1
    %p141 = por %p139, %p140
    %p142 = scmp.ne.s32.totalorder %s133, %s134
    %p143 = scmp.eq.s32.totalorder %s18, 0
    %p144 = por %p142, %p143
    %p145 = scmp.ne.s32.totalorder %s133, %s134
    %p146 = scmp.eq.s32.totalorder %s19, 1
    %p147 = por %p145, %p146
    %p149 = scmp.ne.s32.totalorder %s134, %s148
    %p150 = scmp.eq.s32.totalorder %s19, 0
    %p151 = por %p149, %p150
    %s153 = sadd.s32 %s152, 1
    %p156 = scmp.eq.s32.totalorder %s13, 1
    %p157 = scmp.ne.s32.totalorder %s152, %s154
    %p158 = scmp.eq.s32.totalorder %s13, 0
    %p159 = por %p157, %p158
    %p160 = scmp.ne.s32.totalorder %s152, %s154
    %p161 = scmp.eq.s32.totalorder %s18, 1
    %p162 = por %p160, %p161
    %p163 = scmp.ne.s32.totalorder %s154, %s155
    %p164 = scmp.eq.s32.totalorder %s18, 0
    %p165 = por %p163, %p164
    %p166 = scmp.ne.s32.totalorder %s154, %s155
    %p167 = scmp.eq.s32.totalorder %s19, 1
    %p168 = por %p166, %p167
    %p170 = scmp.ne.s32.totalorder %s155, %s169
    %p171 = scmp.eq.s32.totalorder %s19, 0
    %p172 = por %p170, %p171
    %s173 = ssub.s32 %s13, %s20
    %p174 = scmp.eq.s32.totalorder %s173, 0
    %s176 = sadd.s32 %s175, 1
    %s177 = scalar_select %p174, %s175, %s176
    %p180 = pneg %p174
    %p181 = scmp.eq.s32.totalorder %s13, 1
    %p182 = por %p180, %p181
    %p183 = scmp.ne.s32.totalorder %s175, %s178
    %p184 = scmp.eq.s32.totalorder %s13, 0
    %p185 = por %p183, %p184
    %p186 = scmp.ne.s32.totalorder %s175, %s178
    %p187 = scmp.eq.s32.totalorder %s18, 1
    %p188 = por %p186, %p187
    %p189 = scmp.ne.s32.totalorder %s178, %s179
    %p190 = scmp.eq.s32.totalorder %s18, 0
    %p191 = por %p189, %p190
    %p192 = scmp.ne.s32.totalorder %s178, %s179
    %p193 = scmp.eq.s32.totalorder %s19, 1
    %p194 = por %p192, %p193
    %p196 = scmp.ne.s32.totalorder %s179, %s195
    %p197 = scmp.eq.s32.totalorder %s19, 0
    %p198 = por %p196, %p197
    %p199 = scmp.le.s32.totalorder 1, %s13
    %p200 = scmp.lt.s32.totalorder %s13, 3
    %p201 = pnand %p199, %p200
    %p202 = pneg %p201
    // Predicated region
    $region9: #{rdb_pallas.1} parent=5 // pred_check
      _
    $region10: #{rdb_pallas.1} parent=5 // pred_check_branch
      %204 = sbr.rel (%p201) target = $region12
    $region11: #{rdb_pallas.1} parent=5 // pred_region
      %s205 = ssub.s32 %s13, 1
      // Predicated region
      $region13: #{rdb_pallas.1} parent=11 // pred_check
        %p206 = pneg %p60
      $region14: #{rdb_pallas.1} parent=11 // pred_check_branch
        %208 = sbr.rel (%p206) target = $region16
      $region15: #{rdb_pallas.1} parent=11 // pred_region
        _
      $region16: #{rdb_pallas.1} parent=11 // pred_fallthru
        _
      // Predicated region
      $region17: #{rdb_pallas.1} parent=11 // pred_check
        %p209 = pneg %p81
      $region18: #{rdb_pallas.1} parent=11 // pred_check_branch
        %211 = sbr.rel (%p209) target = $region20
      $region19: #{rdb_pallas.1} parent=11 // pred_region
        _
      $region20: #{rdb_pallas.1} parent=11 // pred_fallthru
        _
      // Predicated region
      $region21: #{rdb_pallas.1} parent=11 // pred_check
        %p212 = pneg %p102
      $region22: #{rdb_pallas.1} parent=11 // pred_check_branch
        %214 = sbr.rel (%p212) target = $region24
      $region23: #{rdb_pallas.1} parent=11 // pred_region
        _
      $region24: #{rdb_pallas.1} parent=11 // pred_fallthru
        _
      // Predicated region
      $region25: #{rdb_pallas.1} parent=11 // pred_check
        %p215 = pneg %p123
      $region26: #{rdb_pallas.1} parent=11 // pred_check_branch
        %217 = sbr.rel (%p215) target = $region28
      $region27: #{rdb_pallas.1} parent=11 // pred_region
        _
      $region28: #{rdb_pallas.1} parent=11 // pred_fallthru
        _
      // Predicated region
      $region29: #{rdb_pallas.1} parent=11 // pred_check
        %p218 = pneg %p144
      $region30: #{rdb_pallas.1} parent=11 // pred_check_branch
        %220 = sbr.rel (%p218) target = $region32
      $region31: #{rdb_pallas.1} parent=11 // pred_region
        _
      $region32: #{rdb_pallas.1} parent=11 // pred_fallthru
        _
      // Predicated region
      $region33: #{rdb_pallas.1} parent=11 // pred_check
        %p221 = pneg %p165
      $region34: #{rdb_pallas.1} parent=11 // pred_check_branch
        %223 = sbr.rel (%p221) target = $region36
      $region35: #{rdb_pallas.1} parent=11 // pred_region
        _
      $region36: #{rdb_pallas.1} parent=11 // pred_fallthru
        _
    $region12: #{rdb_pallas.1} parent=5 // pred_fallthru
      _
    %p224 = scmp.lt.s32.totalorder %s13, 2
    // Predicated region
    $region37: #{rdb_pallas.1} parent=5 // pred_check
      %p225 = pneg %p224
    $region38: #{rdb_pallas.1} parent=5 // pred_check_branch
      %227 = sbr.rel (%p225) target = $region40
    $region39: #{rdb_pallas.1} parent=5 // pred_region
      // Predicated region
      $region41: #{rdb_pallas.1} parent=39 // pred_check
        %p228 = pneg %p33
      $region42: #{rdb_pallas.1} parent=39 // pred_check_branch
        %230 = sbr.rel (%p228) target = $region44
      $region43: #{rdb_pallas.1} parent=39 // pred_region
        %p231 = scmp.lt.s32.totalorder %s13, 1
        %s232 = scalar_select %p231, %s13, 1
        %s233 = smul.addr %s232, 32
        %s234 = smul.addr %s233, 8
        %s235 = scalar_lea.vmem %s0, %s234
      $region44: #{rdb_pallas.1} parent=39 // pred_fallthru
        _
    $region40: #{rdb_pallas.1} parent=5 // pred_fallthru
      _
    %p236 = scmp.le.s32.totalorder 1, %s13
    %p237 = scmp.lt.s32.totalorder %s13, 3
    %p238 = pnand %p236, %p237
    %p239 = pneg %p238
    // Predicated region
    $region45: #{rdb_pallas.1} parent=5 // pred_check
      _
    $region46: #{rdb_pallas.1} parent=5 // pred_check_branch
      %241 = sbr.rel (%p238) target = $region48
    $region47: #{rdb_pallas.1} parent=5 // pred_region
      %s242 = ssub.s32 %s13, 1
      %p243 = scmp.lt.s32.totalorder %s18, 1
      %s244 = scalar_select %p243, %s18, 1
      %s245 = smul.addr %s244, 32
      %s246 = smul.addr %s245, 8
      %s247 = scalar_lea.vmem %s0, %s246
      %p248 = pneg %p39
      %p249 = pneg %p36
      %p250 = pneg %p60
      %p251 = pneg %p57
      %p252 = pneg %p81
      %p253 = pneg %p78
      %p254 = pneg %p102
      %p255 = pneg %p99
      %p256 = pneg %p123
      %p257 = pneg %p120
      %p258 = pneg %p144
      %p259 = pneg %p141
      %p260 = pneg %p165
      %p261 = pneg %p162
      %p262 = pneg %p191
      %p263 = pneg %p188
      %p264 = scmp.lt.s32.totalorder %s18, 1
      %s265 = scalar_select %p264, %s18, 1
      %s266 = smul.addr %s265, 32
      %s267 = smul.addr %s266, 8
      %s268 = scalar_lea.vmem %s7, %s267
      %p269 = scmp.lt.s32.totalorder %s18, 1
      %s270 = scalar_select %p269, %s18, 1
      %s271 = smul.addr %s270, 32
      %s272 = smul.addr %s271, 8
      %s273 = scalar_lea.vmem %s0, %s272
      %p274 = scmp.lt.s32.totalorder %s18, 1
      %s275 = scalar_select %p274, %s18, 1
      %s276 = smul.addr %s275, 32
      %s277 = smul.addr %s276, 8
      %s278 = scalar_lea.vmem %s7, %s277
      %v280 = vld [vmem:[%s273] sm:$0xff]
      %v281 = vld [vmem:[%s273 + $0x8] sm:$0xff]
      %v282 = vld [vmem:[%s273 + $0x10] sm:$0xff]
      %v283 = vld [vmem:[%s273 + $0x18] sm:$0xff]
      %v284 = vld [vmem:[%s273 + $0x20] sm:$0xff]
      %v285 = vld [vmem:[%s273 + $0x28] sm:$0xff]
      %v286 = vld [vmem:[%s273 + $0x30] sm:$0xff]
      %v287 = vld [vmem:[%s273 + $0x38] sm:$0xff]
      %v288 = vld [vmem:[%s273 + $0x40] sm:$0xff]
      %v289 = vld [vmem:[%s273 + $0x48] sm:$0xff]
      %v290 = vld [vmem:[%s273 + $0x50] sm:$0xff]
      %v291 = vld [vmem:[%s273 + $0x58] sm:$0xff]
      %v292 = vld [vmem:[%s273 + $0x60] sm:$0xff]
      %v293 = vld [vmem:[%s273 + $0x68] sm:$0xff]
      %v294 = vld [vmem:[%s273 + $0x70] sm:$0xff]
      %v295 = vld [vmem:[%s273 + $0x78] sm:$0xff]
      %v296 = vld [vmem:[%s273 + $0x80] sm:$0xff]
      %v297 = vld [vmem:[%s273 + $0x88] sm:$0xff]
      %v298 = vld [vmem:[%s273 + $0x90] sm:$0xff]
      %v299 = vld [vmem:[%s273 + $0x98] sm:$0xff]
      %v300 = vld [vmem:[%s273 + $0xa0] sm:$0xff]
      %v301 = vld [vmem:[%s273 + $0xa8] sm:$0xff]
      %v302 = vld [vmem:[%s273 + $0xb0] sm:$0xff]
      %v303 = vld [vmem:[%s273 + $0xb8] sm:$0xff]
      %v304 = vld [vmem:[%s273 + $0xc0] sm:$0xff]
      %v305 = vld [vmem:[%s273 + $0xc8] sm:$0xff]
      %v306 = vld [vmem:[%s273 + $0xd0] sm:$0xff]
      %v307 = vld [vmem:[%s273 + $0xd8] sm:$0xff]
      %v308 = vld [vmem:[%s273 + $0xe0] sm:$0xff]
      %v309 = vld [vmem:[%s273 + $0xe8] sm:$0xff]
      %v310 = vld [vmem:[%s273 + $0xf0] sm:$0xff]
      %v311 = vld [vmem:[%s273 + $0xf8] sm:$0xff]
      %vm312 = vcmask 125952
      %313 = vst.msk [vmem:[#allocation2] sm:$0xf] %vm312, 0
      %314 = vst.msk [vmem:[#allocation2 + $0x4] sm:$0xf] %vm312, 0
      %vm315 = vcmask 122880
      %316 = vst.msk [vmem:[#allocation2 + $0x8] sm:$0x1] %vm315, 0
      %s317 = scalar_lea.vmem [#allocation2], 204
      %318 = vst.msk [vmem:[%s317] sm:$0xf] %vm312, 0
      %319 = vst.msk [vmem:[%s317 + $0x4] sm:$0xf] %vm312, 0
      %320 = vst.msk [vmem:[%s317 + $0x8] sm:$0x1] %vm315, 0
      %vm321 = vcmask 122880
      %vm322 = vsmask.f32 256
      %vm323 = vmand %vm321, %vm322
      %v324 = vld [vmem:[#allocation2] sm:$0x1]
      %v325 = vsel %vm323, 0, %v324
      %326 = vst [vmem:[#allocation2] sm:$0x1] %v325
      %v327 = vld [vmem:[#allocation2 + $0xc] sm:$0x1]
      %v328 = vsel %vm323, 0, %v327
      %329 = vst [vmem:[#allocation2 + $0xc] sm:$0x1] %v328
      %v330 = vld [vmem:[#allocation2 + $0x18] sm:$0x1]
      %v331 = vsel %vm323, 0, %v330
      %332 = vst [vmem:[#allocation2 + $0x18] sm:$0x1] %v331
      %v333 = vld [vmem:[#allocation2 + $0x24] sm:$0x1]
      %v334 = vsel %vm323, 0, %v333
      %335 = vst [vmem:[#allocation2 + $0x24] sm:$0x1] %v334
      %v336 = vld [vmem:[#allocation2 + $0x30] sm:$0x1]
      %v337 = vsel %vm323, 0, %v336
      %338 = vst [vmem:[#allocation2 + $0x30] sm:$0x1] %v337
      %v339 = vld [vmem:[#allocation2 + $0x3c] sm:$0x1]
      %v340 = vsel %vm323, 0, %v339
      %341 = vst [vmem:[#allocation2 + $0x3c] sm:$0x1] %v340
      %v342 = vld [vmem:[#allocation2 + $0x48] sm:$0x1]
      %v343 = vsel %vm323, 0, %v342
      %344 = vst [vmem:[#allocation2 + $0x48] sm:$0x1] %v343
      %v345 = vld [vmem:[#allocation2 + $0x54] sm:$0x1]
      %v346 = vsel %vm323, 0, %v345
      %347 = vst [vmem:[#allocation2 + $0x54] sm:$0x1] %v346
      %v348 = vld [vmem:[#allocation2 + $0x60] sm:$0x1]
      %v349 = vsel %vm323, 0, %v348
      %350 = vst [vmem:[#allocation2 + $0x60] sm:$0x1] %v349
      %v351 = vld [vmem:[#allocation2 + $0x6c] sm:$0x1]
      %v352 = vsel %vm323, 0, %v351
      %353 = vst [vmem:[#allocation2 + $0x6c] sm:$0x1] %v352
      %v354 = vld [vmem:[#allocation2 + $0x78] sm:$0x1]
      %v355 = vsel %vm323, 0, %v354
      %356 = vst [vmem:[#allocation2 + $0x78] sm:$0x1] %v355
      %v357 = vld [vmem:[#allocation2 + $0x84] sm:$0x1]
      %v358 = vsel %vm323, 0, %v357
      %359 = vst [vmem:[#allocation2 + $0x84] sm:$0x1] %v358
      %v360 = vld [vmem:[#allocation2 + $0x90] sm:$0x1]
      %v361 = vsel %vm323, 0, %v360
      %362 = vst [vmem:[#allocation2 + $0x90] sm:$0x1] %v361
      %v363 = vld [vmem:[#allocation2 + $0x9c] sm:$0x1]
      %v364 = vsel %vm323, 0, %v363
      %365 = vst [vmem:[#allocation2 + $0x9c] sm:$0x1] %v364
      %v366 = vld [vmem:[#allocation2 + $0xa8] sm:$0x1]
      %v367 = vsel %vm323, 0, %v366
      %368 = vst [vmem:[#allocation2 + $0xa8] sm:$0x1] %v367
      %v369 = vld [vmem:[#allocation2 + $0xb4] sm:$0x1]
      %v370 = vsel %vm323, 0, %v369
      %371 = vst [vmem:[#allocation2 + $0xb4] sm:$0x1] %v370
      %v372 = vld [vmem:[#allocation2 + $0xc0] sm:$0x1]
      %v373 = vsel %vm323, 0, %v372
      %374 = vst [vmem:[#allocation2 + $0xc0] sm:$0x1] %v373
      %v375 = vld [vmem:[#allocation2 + $0xcc] sm:$0x1]
      %v376 = vsel %vm323, 0, %v375
      %377 = vst [vmem:[#allocation2 + $0xcc] sm:$0x1] %v376
      %vm378 = vsmask.f32 7938
      %vm379 = vmand %vm321, %vm378
      %v380 = vld [vmem:[#allocation2 + $0x8] sm:$0x1]
      %v381 = vsel %vm379, 0, %v380
      %382 = vst [vmem:[#allocation2 + $0x8] sm:$0x1] %v381
      %v383 = vld [vmem:[#allocation2 + $0x14] sm:$0x1]
      %v384 = vsel %vm379, 0, %v383
      %385 = vst [vmem:[#allocation2 + $0x14] sm:$0x1] %v384
      %v386 = vld [vmem:[#allocation2 + $0x20] sm:$0x1]
      %v387 = vsel %vm379, 0, %v386
      %388 = vst [vmem:[#allocation2 + $0x20] sm:$0x1] %v387
      %v389 = vld [vmem:[#allocation2 + $0x2c] sm:$0x1]
      %v390 = vsel %vm379, 0, %v389
      %391 = vst [vmem:[#allocation2 + $0x2c] sm:$0x1] %v390
      %v392 = vld [vmem:[#allocation2 + $0x38] sm:$0x1]
      %v393 = vsel %vm379, 0, %v392
      %394 = vst [vmem:[#allocation2 + $0x38] sm:$0x1] %v393
      %v395 = vld [vmem:[#allocation2 + $0x44] sm:$0x1]
      %v396 = vsel %vm379, 0, %v395
      %397 = vst [vmem:[#allocation2 + $0x44] sm:$0x1] %v396
      %v398 = vld [vmem:[#allocation2 + $0x50] sm:$0x1]
      %v399 = vsel %vm379, 0, %v398
      %400 = vst [vmem:[#allocation2 + $0x50] sm:$0x1] %v399
      %v401 = vld [vmem:[#allocation2 + $0x5c] sm:$0x1]
      %v402 = vsel %vm379, 0, %v401
      %403 = vst [vmem:[#allocation2 + $0x5c] sm:$0x1] %v402
      %v404 = vld [vmem:[#allocation2 + $0x68] sm:$0x1]
      %v405 = vsel %vm379, 0, %v404
      %406 = vst [vmem:[#allocation2 + $0x68] sm:$0x1] %v405
      %v407 = vld [vmem:[#allocation2 + $0x74] sm:$0x1]
      %v408 = vsel %vm379, 0, %v407
      %409 = vst [vmem:[#allocation2 + $0x74] sm:$0x1] %v408
      %v410 = vld [vmem:[#allocation2 + $0x80] sm:$0x1]
      %v411 = vsel %vm379, 0, %v410
      %412 = vst [vmem:[#allocation2 + $0x80] sm:$0x1] %v411
      %v413 = vld [vmem:[#allocation2 + $0x8c] sm:$0x1]
      %v414 = vsel %vm379, 0, %v413
      %415 = vst [vmem:[#allocation2 + $0x8c] sm:$0x1] %v414
      %v416 = vld [vmem:[#allocation2 + $0x98] sm:$0x1]
      %v417 = vsel %vm379, 0, %v416
      %418 = vst [vmem:[#allocation2 + $0x98] sm:$0x1] %v417
      %v419 = vld [vmem:[#allocation2 + $0xa4] sm:$0x1]
      %v420 = vsel %vm379, 0, %v419
      %421 = vst [vmem:[#allocation2 + $0xa4] sm:$0x1] %v420
      %v422 = vld [vmem:[#allocation2 + $0xb0] sm:$0x1]
      %v423 = vsel %vm379, 0, %v422
      %424 = vst [vmem:[#allocation2 + $0xb0] sm:$0x1] %v423
      %v425 = vld [vmem:[#allocation2 + $0xbc] sm:$0x1]
      %v426 = vsel %vm379, 0, %v425
      %427 = vst [vmem:[#allocation2 + $0xbc] sm:$0x1] %v426
      %v428 = vld [vmem:[#allocation2 + $0xc8] sm:$0x1]
      %v429 = vsel %vm379, 0, %v428
      %430 = vst [vmem:[#allocation2 + $0xc8] sm:$0x1] %v429
      %v431 = vld [vmem:[#allocation2 + $0xd4] sm:$0x1]
      %v432 = vsel %vm379, 0, %v431
      %433 = vst [vmem:[#allocation2 + $0xd4] sm:$0x1] %v432
      %v434 = vpack.c.bf16 %v281, %v280
      %v435 = vpack.c.bf16 %v283, %v282
      %v436 = vpack.c.bf16 %v285, %v284
      %v437 = vpack.c.bf16 %v287, %v286
      %v438 = vpack.c.bf16 %v289, %v288
      %v439 = vpack.c.bf16 %v291, %v290
      %v440 = vpack.c.bf16 %v293, %v292
      %v441 = vpack.c.bf16 %v295, %v294
      %v442 = vpack.c.bf16 %v297, %v296
      %v443 = vpack.c.bf16 %v299, %v298
      %v444 = vpack.c.bf16 %v301, %v300
      %v445 = vpack.c.bf16 %v303, %v302
      %v446 = vpack.c.bf16 %v305, %v304
      %v447 = vpack.c.bf16 %v307, %v306
      %v448 = vpack.c.bf16 %v309, %v308
      %v449 = vpack.c.bf16 %v311, %v310
      %v466 = vunpack.c.l.b16 %v434
      %v467 = vunpack.c.h.b16 %v434
      %v468 = vunpack.c.l.b16 %v435
      %v469 = vunpack.c.h.b16 %v435
      %v470 = vunpack.c.l.b16 %v436
      %v471 = vunpack.c.h.b16 %v436
      %v472 = vunpack.c.l.b16 %v437
      %v473 = vunpack.c.h.b16 %v437
      %v474 = vunpack.c.l.b16 %v438
      %v475 = vunpack.c.h.b16 %v438
      %v476 = vunpack.c.l.b16 %v439
      %v477 = vunpack.c.h.b16 %v439
      %v478 = vunpack.c.l.b16 %v440
      %v479 = vunpack.c.h.b16 %v440
      %v480 = vunpack.c.l.b16 %v441
      %v481 = vunpack.c.h.b16 %v441
      %v482 = vunpack.c.l.b16 %v442
      %v483 = vunpack.c.h.b16 %v442
      %v484 = vunpack.c.l.b16 %v443
      %v485 = vunpack.c.h.b16 %v443
      %v486 = vunpack.c.l.b16 %v444
      %v487 = vunpack.c.h.b16 %v444
      %v488 = vunpack.c.l.b16 %v445
      %v489 = vunpack.c.h.b16 %v445
      %v490 = vunpack.c.l.b16 %v446
      %v491 = vunpack.c.h.b16 %v446
      %v492 = vunpack.c.l.b16 %v447
      %v493 = vunpack.c.h.b16 %v447
      %v494 = vunpack.c.l.b16 %v448
      %v495 = vunpack.c.h.b16 %v448
      %v496 = vunpack.c.l.b16 %v449
      %v497 = vunpack.c.h.b16 %v449
      %v498 = vpack.c.b16 %v466, %v466
      %v499 = vpack.c.b16 %v467, %v467
      %v500 = vpack.c.b16 %v468, %v468
      %v501 = vpack.c.b16 %v469, %v469
      %v502 = vpack.c.b16 %v470, %v470
      %v503 = vpack.c.b16 %v471, %v471
      %v504 = vpack.c.b16 %v472, %v472
      %v505 = vpack.c.b16 %v473, %v473
      %v506 = vpack.c.b16 %v474, %v474
      %v507 = vpack.c.b16 %v475, %v475
      %v508 = vpack.c.b16 %v476, %v476
      %v509 = vpack.c.b16 %v477, %v477
      %v510 = vpack.c.b16 %v478, %v478
      %v511 = vpack.c.b16 %v479, %v479
      %v512 = vpack.c.b16 %v480, %v480
      %v513 = vpack.c.b16 %v481, %v481
      %v514 = vpack.c.b16 %v482, %v482
      %v515 = vpack.c.b16 %v483, %v483
      %v516 = vpack.c.b16 %v484, %v484
      %v517 = vpack.c.b16 %v485, %v485
      %v518 = vpack.c.b16 %v486, %v486
      %v519 = vpack.c.b16 %v487, %v487
      %v520 = vpack.c.b16 %v488, %v488
      %v521 = vpack.c.b16 %v489, %v489
      %v522 = vpack.c.b16 %v490, %v490
      %v523 = vpack.c.b16 %v491, %v491
      %v524 = vpack.c.b16 %v492, %v492
      %v525 = vpack.c.b16 %v493, %v493
      %v526 = vpack.c.b16 %v494, %v494
      %v527 = vpack.c.b16 %v495, %v495
      %v528 = vpack.c.b16 %v496, %v496
      %v529 = vpack.c.b16 %v497, %v497
      %vm530 = vsmask.f32 4368
      %vm531 = vmor %vm322, %vm530
      %v533 = vshrl.u32 %v498, 16
      %v535 = vrot.slane %v533, 7
      %v536 = vshll.u32 %v498, 16
      %v538 = vor.u32 %v535, %v536
      %v539 = vrot.slane %v535, 4
      %v541 = vshrl.u32 %v499, 16
      %v543 = vrot.slane %v541, 7
      %v544 = vshll.u32 %v499, 16
      %v546 = vor.u32 %v543, %v544
      %v547 = vsel %vm531, %v539, %v546
      %v548 = vrot.slane %v543, 4
      %v550 = vshrl.u32 %v500, 16
      %v552 = vrot.slane %v550, 7
      %v553 = vshll.u32 %v500, 16
      %v555 = vor.u32 %v552, %v553
      %v556 = vrot.slane %v552, 4
      %v558 = vshrl.u32 %v501, 16
      %v560 = vrot.slane %v558, 7
      %v561 = vshll.u32 %v501, 16
      %v563 = vor.u32 %v560, %v561
      %v564 = vsel %vm531, %v556, %v563
      %v565 = vrot.slane %v560, 4
      %v567 = vshrl.u32 %v502, 16
      %v569 = vrot.slane %v567, 7
      %v570 = vshll.u32 %v502, 16
      %v572 = vor.u32 %v569, %v570
      %v573 = vrot.slane %v569, 4
      %v575 = vshrl.u32 %v503, 16
      %v577 = vrot.slane %v575, 7
      %v578 = vshll.u32 %v503, 16
      %v580 = vor.u32 %v577, %v578
      %v581 = vsel %vm531, %v573, %v580
      %v582 = vrot.slane %v577, 4
      %v584 = vshrl.u32 %v504, 16
      %v586 = vrot.slane %v584, 7
      %v587 = vshll.u32 %v504, 16
      %v589 = vor.u32 %v586, %v587
      %v590 = vrot.slane %v586, 4
      %v592 = vshrl.u32 %v505, 16
      %v594 = vrot.slane %v592, 7
      %v595 = vshll.u32 %v505, 16
      %v597 = vor.u32 %v594, %v595
      %v598 = vsel %vm531, %v590, %v597
      %v599 = vrot.slane %v594, 4
      %v601 = vshrl.u32 %v506, 16
      %v603 = vrot.slane %v601, 7
      %v604 = vshll.u32 %v506, 16
      %v606 = vor.u32 %v603, %v604
      %v607 = vrot.slane %v603, 4
      %v609 = vshrl.u32 %v507, 16
      %v611 = vrot.slane %v609, 7
      %v612 = vshll.u32 %v507, 16
      %v614 = vor.u32 %v611, %v612
      %v615 = vsel %vm531, %v607, %v614
      %v616 = vrot.slane %v611, 4
      %v618 = vshrl.u32 %v508, 16
      %v620 = vrot.slane %v618, 7
      %v621 = vshll.u32 %v508, 16
      %v623 = vor.u32 %v620, %v621
      %v624 = vrot.slane %v620, 4
      %v626 = vshrl.u32 %v509, 16
      %v628 = vrot.slane %v626, 7
      %v629 = vshll.u32 %v509, 16
      %v631 = vor.u32 %v628, %v629
      %v632 = vsel %vm531, %v624, %v631
      %v633 = vrot.slane %v628, 4
      %v635 = vshrl.u32 %v510, 16
      %v637 = vrot.slane %v635, 7
      %v638 = vshll.u32 %v510, 16
      %v640 = vor.u32 %v637, %v638
      %v641 = vrot.slane %v637, 4
      %v643 = vshrl.u32 %v511, 16
      %v645 = vrot.slane %v643, 7
      %v646 = vshll.u32 %v511, 16
      %v648 = vor.u32 %v645, %v646
      %v649 = vsel %vm531, %v641, %v648
      %v650 = vrot.slane %v645, 4
      %v652 = vshrl.u32 %v512, 16
      %v654 = vrot.slane %v652, 7
      %v655 = vshll.u32 %v512, 16
      %v657 = vor.u32 %v654, %v655
      %v658 = vrot.slane %v654, 4
      %v660 = vshrl.u32 %v513, 16
      %v662 = vrot.slane %v660, 7
      %v663 = vshll.u32 %v513, 16
      %v665 = vor.u32 %v662, %v663
      %v666 = vsel %vm531, %v658, %v665
      %v667 = vrot.slane %v662, 4
      %v669 = vshrl.u32 %v514, 16
      %v671 = vrot.slane %v669, 7
      %v672 = vshll.u32 %v514, 16
      %v674 = vor.u32 %v671, %v672
      %v675 = vrot.slane %v671, 4
      %v677 = vshrl.u32 %v515, 16
      %v679 = vrot.slane %v677, 7
      %v680 = vshll.u32 %v515, 16
      %v682 = vor.u32 %v679, %v680
      %v683 = vsel %vm531, %v675, %v682
      %v684 = vrot.slane %v679, 4
      %v686 = vshrl.u32 %v516, 16
      %v688 = vrot.slane %v686, 7
      %v689 = vshll.u32 %v516, 16
      %v691 = vor.u32 %v688, %v689
      %v692 = vrot.slane %v688, 4
      %v694 = vshrl.u32 %v517, 16
      %v696 = vrot.slane %v694, 7
      %v697 = vshll.u32 %v517, 16
      %v699 = vor.u32 %v696, %v697
      %v700 = vsel %vm531, %v692, %v699
      %v701 = vrot.slane %v696, 4
      %v703 = vshrl.u32 %v518, 16
      %v705 = vrot.slane %v703, 7
      %v706 = vshll.u32 %v518, 16
      %v708 = vor.u32 %v705, %v706
      %v709 = vrot.slane %v705, 4
      %v711 = vshrl.u32 %v519, 16
      %v713 = vrot.slane %v711, 7
      %v714 = vshll.u32 %v519, 16
      %v716 = vor.u32 %v713, %v714
      %v717 = vsel %vm531, %v709, %v716
      %v718 = vrot.slane %v713, 4
      %v720 = vshrl.u32 %v520, 16
      %v722 = vrot.slane %v720, 7
      %v723 = vshll.u32 %v520, 16
      %v725 = vor.u32 %v722, %v723
      %v726 = vrot.slane %v722, 4
      %v728 = vshrl.u32 %v521, 16
      %v730 = vrot.slane %v728, 7
      %v731 = vshll.u32 %v521, 16
      %v733 = vor.u32 %v730, %v731
      %v734 = vsel %vm531, %v726, %v733
      %v735 = vrot.slane %v730, 4
      %v737 = vshrl.u32 %v522, 16
      %v739 = vrot.slane %v737, 7
      %v740 = vshll.u32 %v522, 16
      %v742 = vor.u32 %v739, %v740
      %v743 = vrot.slane %v739, 4
      %v745 = vshrl.u32 %v523, 16
      %v747 = vrot.slane %v745, 7
      %v748 = vshll.u32 %v523, 16
      %v750 = vor.u32 %v747, %v748
      %v751 = vsel %vm531, %v743, %v750
      %v752 = vrot.slane %v747, 4
      %v754 = vshrl.u32 %v524, 16
      %v756 = vrot.slane %v754, 7
      %v757 = vshll.u32 %v524, 16
      %v759 = vor.u32 %v756, %v757
      %v760 = vrot.slane %v756, 4
      %v762 = vshrl.u32 %v525, 16
      %v764 = vrot.slane %v762, 7
      %v765 = vshll.u32 %v525, 16
      %v767 = vor.u32 %v764, %v765
      %v768 = vsel %vm531, %v760, %v767
      %v769 = vrot.slane %v764, 4
      %v771 = vshrl.u32 %v526, 16
      %v773 = vrot.slane %v771, 7
      %v774 = vshll.u32 %v526, 16
      %v776 = vor.u32 %v773, %v774
      %v777 = vrot.slane %v773, 4
      %v779 = vshrl.u32 %v527, 16
      %v781 = vrot.slane %v779, 7
      %v782 = vshll.u32 %v527, 16
      %v784 = vor.u32 %v781, %v782
      %v785 = vsel %vm531, %v777, %v784
      %v786 = vrot.slane %v781, 4
      %v788 = vshrl.u32 %v528, 16
      %v790 = vrot.slane %v788, 7
      %v791 = vshll.u32 %v528, 16
      %v793 = vor.u32 %v790, %v791
      %v794 = vrot.slane %v790, 4
      %v796 = vshrl.u32 %v529, 16
      %v798 = vrot.slane %v796, 7
      %v799 = vshll.u32 %v529, 16
      %v801 = vor.u32 %v798, %v799
      %v802 = vsel %vm531, %v794, %v801
      %v803 = vrot.slane %v798, 4
      %s852 = scalar_lea.vmem [#allocation2], 12
      %vm853 = vcmask 60416
      %vm854 = vmand %vm853, %vm378
      %v855 = vld [vmem:[%s852] sm:$0xf]
      %v856 = vsel %vm854, %v538, %v855
      %857 = vst [vmem:[%s852] sm:$0xf] %v856
      %vm858 = vcmask 60416
      %859 = vst.msk [vmem:[%s852 + $0x4] sm:$0xf] %vm858, %v547
      %vm860 = vcmask 57344
      %vm861 = vmand %vm860, %vm322
      %v862 = vld [vmem:[%s852 + $0x8] sm:$0x1]
      %v863 = vsel %vm861, %v548, %v862
      %864 = vst [vmem:[%s852 + $0x8] sm:$0x1] %v863
      %v865 = vld [vmem:[%s852 + $0xc] sm:$0xf]
      %v866 = vsel %vm854, %v555, %v865
      %867 = vst [vmem:[%s852 + $0xc] sm:$0xf] %v866
      %868 = vst.msk [vmem:[%s852 + $0x10] sm:$0xf] %vm858, %v564
      %v869 = vld [vmem:[%s852 + $0x14] sm:$0x1]
      %v870 = vsel %vm861, %v565, %v869
      %871 = vst [vmem:[%s852 + $0x14] sm:$0x1] %v870
      %v872 = vld [vmem:[%s852 + $0x18] sm:$0xf]
      %v873 = vsel %vm854, %v572, %v872
      %874 = vst [vmem:[%s852 + $0x18] sm:$0xf] %v873
      %875 = vst.msk [vmem:[%s852 + $0x1c] sm:$0xf] %vm858, %v581
      %v876 = vld [vmem:[%s852 + $0x20] sm:$0x1]
      %v877 = vsel %vm861, %v582, %v876
      %878 = vst [vmem:[%s852 + $0x20] sm:$0x1] %v877
      %v879 = vld [vmem:[%s852 + $0x24] sm:$0xf]
      %v880 = vsel %vm854, %v589, %v879
      %881 = vst [vmem:[%s852 + $0x24] sm:$0xf] %v880
      %882 = vst.msk [vmem:[%s852 + $0x28] sm:$0xf] %vm858, %v598
      %v883 = vld [vmem:[%s852 + $0x2c] sm:$0x1]
      %v884 = vsel %vm861, %v599, %v883
      %885 = vst [vmem:[%s852 + $0x2c] sm:$0x1] %v884
      %v886 = vld [vmem:[%s852 + $0x30] sm:$0xf]
      %v887 = vsel %vm854, %v606, %v886
      %888 = vst [vmem:[%s852 + $0x30] sm:$0xf] %v887
      %889 = vst.msk [vmem:[%s852 + $0x34] sm:$0xf] %vm858, %v615
      %v890 = vld [vmem:[%s852 + $0x38] sm:$0x1]
      %v891 = vsel %vm861, %v616, %v890
      %892 = vst [vmem:[%s852 + $0x38] sm:$0x1] %v891
      %v893 = vld [vmem:[%s852 + $0x3c] sm:$0xf]
      %v894 = vsel %vm854, %v623, %v893
      %895 = vst [vmem:[%s852 + $0x3c] sm:$0xf] %v894
      %896 = vst.msk [vmem:[%s852 + $0x40] sm:$0xf] %vm858, %v632
      %v897 = vld [vmem:[%s852 + $0x44] sm:$0x1]
      %v898 = vsel %vm861, %v633, %v897
      %899 = vst [vmem:[%s852 + $0x44] sm:$0x1] %v898
      %v900 = vld [vmem:[%s852 + $0x48] sm:$0xf]
      %v901 = vsel %vm854, %v640, %v900
      %902 = vst [vmem:[%s852 + $0x48] sm:$0xf] %v901
      %903 = vst.msk [vmem:[%s852 + $0x4c] sm:$0xf] %vm858, %v649
      %v904 = vld [vmem:[%s852 + $0x50] sm:$0x1]
      %v905 = vsel %vm861, %v650, %v904
      %906 = vst [vmem:[%s852 + $0x50] sm:$0x1] %v905
      %v907 = vld [vmem:[%s852 + $0x54] sm:$0xf]
      %v908 = vsel %vm854, %v657, %v907
      %909 = vst [vmem:[%s852 + $0x54] sm:$0xf] %v908
      %910 = vst.msk [vmem:[%s852 + $0x58] sm:$0xf] %vm858, %v666
      %v911 = vld [vmem:[%s852 + $0x5c] sm:$0x1]
      %v912 = vsel %vm861, %v667, %v911
      %913 = vst [vmem:[%s852 + $0x5c] sm:$0x1] %v912
      %v914 = vld [vmem:[%s852 + $0x60] sm:$0xf]
      %v915 = vsel %vm854, %v674, %v914
      %916 = vst [vmem:[%s852 + $0x60] sm:$0xf] %v915
      %917 = vst.msk [vmem:[%s852 + $0x64] sm:$0xf] %vm858, %v683
      %v918 = vld [vmem:[%s852 + $0x68] sm:$0x1]
      %v919 = vsel %vm861, %v684, %v918
      %920 = vst [vmem:[%s852 + $0x68] sm:$0x1] %v919
      %v921 = vld [vmem:[%s852 + $0x6c] sm:$0xf]
      %v922 = vsel %vm854, %v691, %v921
      %923 = vst [vmem:[%s852 + $0x6c] sm:$0xf] %v922
      %924 = vst.msk [vmem:[%s852 + $0x70] sm:$0xf] %vm858, %v700
      %v925 = vld [vmem:[%s852 + $0x74] sm:$0x1]
      %v926 = vsel %vm861, %v701, %v925
      %927 = vst [vmem:[%s852 + $0x74] sm:$0x1] %v926
      %v928 = vld [vmem:[%s852 + $0x78] sm:$0xf]
      %v929 = vsel %vm854, %v708, %v928
      %930 = vst [vmem:[%s852 + $0x78] sm:$0xf] %v929
      %931 = vst.msk [vmem:[%s852 + $0x7c] sm:$0xf] %vm858, %v717
      %v932 = vld [vmem:[%s852 + $0x80] sm:$0x1]
      %v933 = vsel %vm861, %v718, %v932
      %934 = vst [vmem:[%s852 + $0x80] sm:$0x1] %v933
      %v935 = vld [vmem:[%s852 + $0x84] sm:$0xf]
      %v936 = vsel %vm854, %v725, %v935
      %937 = vst [vmem:[%s852 + $0x84] sm:$0xf] %v936
      %938 = vst.msk [vmem:[%s852 + $0x88] sm:$0xf] %vm858, %v734
      %v939 = vld [vmem:[%s852 + $0x8c] sm:$0x1]
      %v940 = vsel %vm861, %v735, %v939
      %941 = vst [vmem:[%s852 + $0x8c] sm:$0x1] %v940
      %v942 = vld [vmem:[%s852 + $0x90] sm:$0xf]
      %v943 = vsel %vm854, %v742, %v942
      %944 = vst [vmem:[%s852 + $0x90] sm:$0xf] %v943
      %945 = vst.msk [vmem:[%s852 + $0x94] sm:$0xf] %vm858, %v751
      %v946 = vld [vmem:[%s852 + $0x98] sm:$0x1]
      %v947 = vsel %vm861, %v752, %v946
      %948 = vst [vmem:[%s852 + $0x98] sm:$0x1] %v947
      %v949 = vld [vmem:[%s852 + $0x9c] sm:$0xf]
      %v950 = vsel %vm854, %v759, %v949
      %951 = vst [vmem:[%s852 + $0x9c] sm:$0xf] %v950
      %952 = vst.msk [vmem:[%s852 + $0xa0] sm:$0xf] %vm858, %v768
      %v953 = vld [vmem:[%s852 + $0xa4] sm:$0x1]
      %v954 = vsel %vm861, %v769, %v953
      %955 = vst [vmem:[%s852 + $0xa4] sm:$0x1] %v954
      %v956 = vld [vmem:[%s852 + $0xa8] sm:$0xf]
      %v957 = vsel %vm854, %v776, %v956
      %958 = vst [vmem:[%s852 + $0xa8] sm:$0xf] %v957
      %959 = vst.msk [vmem:[%s852 + $0xac] sm:$0xf] %vm858, %v785
      %v960 = vld [vmem:[%s852 + $0xb0] sm:$0x1]
      %v961 = vsel %vm861, %v786, %v960
      %962 = vst [vmem:[%s852 + $0xb0] sm:$0x1] %v961
      %v963 = vld [vmem:[%s852 + $0xb4] sm:$0xf]
      %v964 = vsel %vm854, %v793, %v963
      %965 = vst [vmem:[%s852 + $0xb4] sm:$0xf] %v964
      %966 = vst.msk [vmem:[%s852 + $0xb8] sm:$0xf] %vm858, %v802
      %v967 = vld [vmem:[%s852 + $0xbc] sm:$0x1]
      %v968 = vsel %vm861, %v803, %v967
      %969 = vst [vmem:[%s852 + $0xbc] sm:$0x1] %v968
      %v970 = vld [vmem:[#allocation2] sm:$0xf]
      %v971 = vld [vmem:[#allocation2 + $0x4] sm:$0xf]
      %v972 = vld [vmem:[#allocation2 + $0xc] sm:$0xf]
      %v973 = vld [vmem:[#allocation2 + $0x10] sm:$0xf]
      %v974 = vld [vmem:[#allocation2 + $0x18] sm:$0xf]
      %v975 = vld [vmem:[#allocation2 + $0x1c] sm:$0xf]
      %v976 = vld [vmem:[#allocation2 + $0x24] sm:$0xf]
      %v977 = vld [vmem:[#allocation2 + $0x28] sm:$0xf]
      %v978 = vld [vmem:[#allocation2 + $0x30] sm:$0xf]
      %v979 = vld [vmem:[#allocation2 + $0x34] sm:$0xf]
      %v980 = vld [vmem:[#allocation2 + $0x3c] sm:$0xf]
      %v981 = vld [vmem:[#allocation2 + $0x40] sm:$0xf]
      %v982 = vld [vmem:[#allocation2 + $0x48] sm:$0xf]
      %v983 = vld [vmem:[#allocation2 + $0x4c] sm:$0xf]
      %v984 = vld [vmem:[#allocation2 + $0x54] sm:$0xf]
      %v985 = vld [vmem:[#allocation2 + $0x58] sm:$0xf]
      %v986 = vld [vmem:[#allocation2 + $0x60] sm:$0xf]
      %v987 = vld [vmem:[#allocation2 + $0x64] sm:$0xf]
      %v988 = vld [vmem:[#allocation2 + $0x6c] sm:$0xf]
      %v989 = vld [vmem:[#allocation2 + $0x70] sm:$0xf]
      %v990 = vld [vmem:[#allocation2 + $0x78] sm:$0xf]
      %v991 = vld [vmem:[#allocation2 + $0x7c] sm:$0xf]
      %v992 = vld [vmem:[#allocation2 + $0x84] sm:$0xf]
      %v993 = vld [vmem:[#allocation2 + $0x88] sm:$0xf]
      %v994 = vld [vmem:[#allocation2 + $0x90] sm:$0xf]
      %v995 = vld [vmem:[#allocation2 + $0x94] sm:$0xf]
      %v996 = vld [vmem:[#allocation2 + $0x9c] sm:$0xf]
      %v997 = vld [vmem:[#allocation2 + $0xa0] sm:$0xf]
      %v998 = vld [vmem:[#allocation2 + $0xa8] sm:$0xf]
      %v999 = vld [vmem:[#allocation2 + $0xac] sm:$0xf]
      %v1000 = vld [vmem:[#allocation2 + $0xb4] sm:$0xf]
      %v1001 = vld [vmem:[#allocation2 + $0xb8] sm:$0xf]
      %v1002 = vld [vmem:[%s1] sm:$0xf]
      %v1003 = vld [vmem:[#allocation2 + $0x8] sm:$0x1]
      %v1004 = vld [vmem:[#allocation2 + $0x14] sm:$0x1]
      %v1005 = vld [vmem:[#allocation2 + $0x20] sm:$0x1]
      %v1006 = vld [vmem:[#allocation2 + $0x2c] sm:$0x1]
      %v1007 = vld [vmem:[#allocation2 + $0x38] sm:$0x1]
      %v1008 = vld [vmem:[#allocation2 + $0x44] sm:$0x1]
      %v1009 = vld [vmem:[#allocation2 + $0x50] sm:$0x1]
      %v1010 = vld [vmem:[#allocation2 + $0x5c] sm:$0x1]
      %v1011 = vld [vmem:[#allocation2 + $0x68] sm:$0x1]
      %v1012 = vld [vmem:[#allocation2 + $0x74] sm:$0x1]
      %v1013 = vld [vmem:[#allocation2 + $0x80] sm:$0x1]
      %v1014 = vld [vmem:[#allocation2 + $0x8c] sm:$0x1]
      %v1015 = vld [vmem:[#allocation2 + $0x98] sm:$0x1]
      %v1016 = vld [vmem:[#allocation2 + $0xa4] sm:$0x1]
      %v1017 = vld [vmem:[#allocation2 + $0xb0] sm:$0x1]
      %v1018 = vld [vmem:[#allocation2 + $0xbc] sm:$0x1]
      %vm1019 = vsmask.f32 3328
      %vm1020 = vsmask.f32 7440
      %vm1021 = vmor %vm1019, %vm1020
      %v1023 = vshrl.u32 %v970, 16
      %v1025 = vrot.slane %v1023, 4
      %v1026 = vshll.u32 %v970, 16
      %v1028 = vrot.slane %v1026, 5
      %v1029 = vor.u32 %v1025, %v1028
      %v1030 = vrot.slane %v1029, 4
      %v1032 = vshll.u32 %v971, 16
      %v1034 = vrot.slane %v1032, 5
      %v1035 = vsel %vm1021, %v1030, %v1034
      %v1036 = vshrl.u32 %v971, 16
      %v1038 = vrot.slane %v1036, 4
      %v1039 = vor.u32 %v1038, %v1034
      %v1040 = vrot.slane %v1039, 4
      %v1042 = vshll.u32 %v1003, 16
      %v1044 = vrot.slane %v1042, 5
      %v1045 = vsel %vm1021, %v1040, %v1044
      %v1047 = vshrl.u32 %v972, 16
      %v1049 = vrot.slane %v1047, 4
      %v1050 = vshll.u32 %v972, 16
      %v1052 = vrot.slane %v1050, 5
      %v1053 = vor.u32 %v1049, %v1052
      %v1054 = vrot.slane %v1053, 4
      %v1056 = vshll.u32 %v973, 16
      %v1058 = vrot.slane %v1056, 5
      %v1059 = vsel %vm1021, %v1054, %v1058
      %v1060 = vshrl.u32 %v973, 16
      %v1062 = vrot.slane %v1060, 4
      %v1063 = vor.u32 %v1062, %v1058
      %v1064 = vrot.slane %v1063, 4
      %v1066 = vshll.u32 %v1004, 16
      %v1068 = vrot.slane %v1066, 5
      %v1069 = vsel %vm1021, %v1064, %v1068
      %v1071 = vshrl.u32 %v974, 16
      %v1073 = vrot.slane %v1071, 4
      %v1074 = vshll.u32 %v974, 16
      %v1076 = vrot.slane %v1074, 5
      %v1077 = vor.u32 %v1073, %v1076
      %v1078 = vrot.slane %v1077, 4
      %v1080 = vshll.u32 %v975, 16
      %v1082 = vrot.slane %v1080, 5
      %v1083 = vsel %vm1021, %v1078, %v1082
      %v1084 = vshrl.u32 %v975, 16
      %v1086 = vrot.slane %v1084, 4
      %v1087 = vor.u32 %v1086, %v1082
      %v1088 = vrot.slane %v1087, 4
      %v1090 = vshll.u32 %v1005, 16
      %v1092 = vrot.slane %v1090, 5
      %v1093 = vsel %vm1021, %v1088, %v1092
      %v1095 = vshrl.u32 %v976, 16
      %v1097 = vrot.slane %v1095, 4
      %v1098 = vshll.u32 %v976, 16
      %v1100 = vrot.slane %v1098, 5
      %v1101 = vor.u32 %v1097, %v1100
      %v1102 = vrot.slane %v1101, 4
      %v1104 = vshll.u32 %v977, 16
      %v1106 = vrot.slane %v1104, 5
      %v1107 = vsel %vm1021, %v1102, %v1106
      %v1108 = vshrl.u32 %v977, 16
      %v1110 = vrot.slane %v1108, 4
      %v1111 = vor.u32 %v1110, %v1106
      %v1112 = vrot.slane %v1111, 4
      %v1114 = vshll.u32 %v1006, 16
      %v1116 = vrot.slane %v1114, 5
      %v1117 = vsel %vm1021, %v1112, %v1116
      %v1119 = vshrl.u32 %v978, 16
      %v1121 = vrot.slane %v1119, 4
      %v1122 = vshll.u32 %v978, 16
      %v1124 = vrot.slane %v1122, 5
      %v1125 = vor.u32 %v1121, %v1124
      %v1126 = vrot.slane %v1125, 4
      %v1128 = vshll.u32 %v979, 16
      %v1130 = vrot.slane %v1128, 5
      %v1131 = vsel %vm1021, %v1126, %v1130
      %v1132 = vshrl.u32 %v979, 16
      %v1134 = vrot.slane %v1132, 4
      %v1135 = vor.u32 %v1134, %v1130
      %v1136 = vrot.slane %v1135, 4
      %v1138 = vshll.u32 %v1007, 16
      %v1140 = vrot.slane %v1138, 5
      %v1141 = vsel %vm1021, %v1136, %v1140
      %v1143 = vshrl.u32 %v980, 16
      %v1145 = vrot.slane %v1143, 4
      %v1146 = vshll.u32 %v980, 16
      %v1148 = vrot.slane %v1146, 5
      %v1149 = vor.u32 %v1145, %v1148
      %v1150 = vrot.slane %v1149, 4
      %v1152 = vshll.u32 %v981, 16
      %v1154 = vrot.slane %v1152, 5
      %v1155 = vsel %vm1021, %v1150, %v1154
      %v1156 = vshrl.u32 %v981, 16
      %v1158 = vrot.slane %v1156, 4
      %v1159 = vor.u32 %v1158, %v1154
      %v1160 = vrot.slane %v1159, 4
      %v1162 = vshll.u32 %v1008, 16
      %v1164 = vrot.slane %v1162, 5
      %v1165 = vsel %vm1021, %v1160, %v1164
      %v1167 = vshrl.u32 %v982, 16
      %v1169 = vrot.slane %v1167, 4
      %v1170 = vshll.u32 %v982, 16
      %v1172 = vrot.slane %v1170, 5
      %v1173 = vor.u32 %v1169, %v1172
      %v1174 = vrot.slane %v1173, 4
      %v1176 = vshll.u32 %v983, 16
      %v1178 = vrot.slane %v1176, 5
      %v1179 = vsel %vm1021, %v1174, %v1178
      %v1180 = vshrl.u32 %v983, 16
      %v1182 = vrot.slane %v1180, 4
      %v1183 = vor.u32 %v1182, %v1178
      %v1184 = vrot.slane %v1183, 4
      %v1186 = vshll.u32 %v1009, 16
      %v1188 = vrot.slane %v1186, 5
      %v1189 = vsel %vm1021, %v1184, %v1188
      %v1191 = vshrl.u32 %v984, 16
      %v1193 = vrot.slane %v1191, 4
      %v1194 = vshll.u32 %v984, 16
      %v1196 = vrot.slane %v1194, 5
      %v1197 = vor.u32 %v1193, %v1196
      %v1198 = vrot.slane %v1197, 4
      %v1200 = vshll.u32 %v985, 16
      %v1202 = vrot.slane %v1200, 5
      %v1203 = vsel %vm1021, %v1198, %v1202
      %v1204 = vshrl.u32 %v985, 16
      %v1206 = vrot.slane %v1204, 4
      %v1207 = vor.u32 %v1206, %v1202
      %v1208 = vrot.slane %v1207, 4
      %v1210 = vshll.u32 %v1010, 16
      %v1212 = vrot.slane %v1210, 5
      %v1213 = vsel %vm1021, %v1208, %v1212
      %v1215 = vshrl.u32 %v986, 16
      %v1217 = vrot.slane %v1215, 4
      %v1218 = vshll.u32 %v986, 16
      %v1220 = vrot.slane %v1218, 5
      %v1221 = vor.u32 %v1217, %v1220
      %v1222 = vrot.slane %v1221, 4
      %v1224 = vshll.u32 %v987, 16
      %v1226 = vrot.slane %v1224, 5
      %v1227 = vsel %vm1021, %v1222, %v1226
      %v1228 = vshrl.u32 %v987, 16
      %v1230 = vrot.slane %v1228, 4
      %v1231 = vor.u32 %v1230, %v1226
      %v1232 = vrot.slane %v1231, 4
      %v1234 = vshll.u32 %v1011, 16
      %v1236 = vrot.slane %v1234, 5
      %v1237 = vsel %vm1021, %v1232, %v1236
      %v1239 = vshrl.u32 %v988, 16
      %v1241 = vrot.slane %v1239, 4
      %v1242 = vshll.u32 %v988, 16
      %v1244 = vrot.slane %v1242, 5
      %v1245 = vor.u32 %v1241, %v1244
      %v1246 = vrot.slane %v1245, 4
      %v1248 = vshll.u32 %v989, 16
      %v1250 = vrot.slane %v1248, 5
      %v1251 = vsel %vm1021, %v1246, %v1250
      %v1252 = vshrl.u32 %v989, 16
      %v1254 = vrot.slane %v1252, 4
      %v1255 = vor.u32 %v1254, %v1250
      %v1256 = vrot.slane %v1255, 4
      %v1258 = vshll.u32 %v1012, 16
      %v1260 = vrot.slane %v1258, 5
      %v1261 = vsel %vm1021, %v1256, %v1260
      %v1263 = vshrl.u32 %v990, 16
      %v1265 = vrot.slane %v1263, 4
      %v1266 = vshll.u32 %v990, 16
      %v1268 = vrot.slane %v1266, 5
      %v1269 = vor.u32 %v1265, %v1268
      %v1270 = vrot.slane %v1269, 4
      %v1272 = vshll.u32 %v991, 16
      %v1274 = vrot.slane %v1272, 5
      %v1275 = vsel %vm1021, %v1270, %v1274
      %v1276 = vshrl.u32 %v991, 16
      %v1278 = vrot.slane %v1276, 4
      %v1279 = vor.u32 %v1278, %v1274
      %v1280 = vrot.slane %v1279, 4
      %v1282 = vshll.u32 %v1013, 16
      %v1284 = vrot.slane %v1282, 5
      %v1285 = vsel %vm1021, %v1280, %v1284
      %v1287 = vshrl.u32 %v992, 16
      %v1289 = vrot.slane %v1287, 4
      %v1290 = vshll.u32 %v992, 16
      %v1292 = vrot.slane %v1290, 5
      %v1293 = vor.u32 %v1289, %v1292
      %v1294 = vrot.slane %v1293, 4
      %v1296 = vshll.u32 %v993, 16
      %v1298 = vrot.slane %v1296, 5
      %v1299 = vsel %vm1021, %v1294, %v1298
      %v1300 = vshrl.u32 %v993, 16
      %v1302 = vrot.slane %v1300, 4
      %v1303 = vor.u32 %v1302, %v1298
      %v1304 = vrot.slane %v1303, 4
      %v1306 = vshll.u32 %v1014, 16
      %v1308 = vrot.slane %v1306, 5
      %v1309 = vsel %vm1021, %v1304, %v1308
      %v1311 = vshrl.u32 %v994, 16
      %v1313 = vrot.slane %v1311, 4
      %v1314 = vshll.u32 %v994, 16
      %v1316 = vrot.slane %v1314, 5
      %v1317 = vor.u32 %v1313, %v1316
      %v1318 = vrot.slane %v1317, 4
      %v1320 = vshll.u32 %v995, 16
      %v1322 = vrot.slane %v1320, 5
      %v1323 = vsel %vm1021, %v1318, %v1322
      %v1324 = vshrl.u32 %v995, 16
      %v1326 = vrot.slane %v1324, 4
      %v1327 = vor.u32 %v1326, %v1322
      %v1328 = vrot.slane %v1327, 4
      %v1330 = vshll.u32 %v1015, 16
      %v1332 = vrot.slane %v1330, 5
      %v1333 = vsel %vm1021, %v1328, %v1332
      %v1335 = vshrl.u32 %v996, 16
      %v1337 = vrot.slane %v1335, 4
      %v1338 = vshll.u32 %v996, 16
      %v1340 = vrot.slane %v1338, 5
      %v1341 = vor.u32 %v1337, %v1340
      %v1342 = vrot.slane %v1341, 4
      %v1344 = vshll.u32 %v997, 16
      %v1346 = vrot.slane %v1344, 5
      %v1347 = vsel %vm1021, %v1342, %v1346
      %v1348 = vshrl.u32 %v997, 16
      %v1350 = vrot.slane %v1348, 4
      %v1351 = vor.u32 %v1350, %v1346
      %v1352 = vrot.slane %v1351, 4
      %v1354 = vshll.u32 %v1016, 16
      %v1356 = vrot.slane %v1354, 5
      %v1357 = vsel %vm1021, %v1352, %v1356
      %v1359 = vshrl.u32 %v998, 16
      %v1361 = vrot.slane %v1359, 4
      %v1362 = vshll.u32 %v998, 16
      %v1364 = vrot.slane %v1362, 5
      %v1365 = vor.u32 %v1361, %v1364
      %v1366 = vrot.slane %v1365, 4
      %v1368 = vshll.u32 %v999, 16
      %v1370 = vrot.slane %v1368, 5
      %v1371 = vsel %vm1021, %v1366, %v1370
      %v1372 = vshrl.u32 %v999, 16
      %v1374 = vrot.slane %v1372, 4
      %v1375 = vor.u32 %v1374, %v1370
      %v1376 = vrot.slane %v1375, 4
      %v1378 = vshll.u32 %v1017, 16
      %v1380 = vrot.slane %v1378, 5
      %v1381 = vsel %vm1021, %v1376, %v1380
      %v1383 = vshrl.u32 %v1000, 16
      %v1385 = vrot.slane %v1383, 4
      %v1386 = vshll.u32 %v1000, 16
      %v1388 = vrot.slane %v1386, 5
      %v1389 = vor.u32 %v1385, %v1388
      %v1390 = vrot.slane %v1389, 4
      %v1392 = vshll.u32 %v1001, 16
      %v1394 = vrot.slane %v1392, 5
      %v1395 = vsel %vm1021, %v1390, %v1394
      %v1396 = vshrl.u32 %v1001, 16
      %v1398 = vrot.slane %v1396, 4
      %v1399 = vor.u32 %v1398, %v1394
      %v1400 = vrot.slane %v1399, 4
      %v1402 = vshll.u32 %v1018, 16
      %v1404 = vrot.slane %v1402, 5
      %v1405 = vsel %vm1021, %v1400, %v1404
      %s1406 = scalar_lea.vmem %s1, 8
      %v1407 = vld [vmem:[%s1406] sm:$0xf]
      %v1408 = vunpack.c.l.b16 %v1035
      %v1409 = vunpack.c.l.b16 %v1045
      %v1410 = vunpack.c.l.b16 %v1059
      %v1411 = vunpack.c.l.b16 %v1069
      %v1412 = vunpack.c.l.b16 %v1083
      %v1413 = vunpack.c.l.b16 %v1093
      %v1414 = vunpack.c.l.b16 %v1107
      %v1415 = vunpack.c.l.b16 %v1117
      %v1416 = vunpack.c.l.b16 %v1131
      %v1417 = vunpack.c.l.b16 %v1141
      %v1418 = vunpack.c.l.b16 %v1155
      %v1419 = vunpack.c.l.b16 %v1165
      %v1420 = vunpack.c.l.b16 %v1179
      %v1421 = vunpack.c.l.b16 %v1189
      %v1422 = vunpack.c.l.b16 %v1203
      %v1423 = vunpack.c.l.b16 %v1213
      %v1424 = vunpack.c.l.b16 %v1227
      %v1425 = vunpack.c.l.b16 %v1237
      %v1426 = vunpack.c.l.b16 %v1251
      %v1427 = vunpack.c.l.b16 %v1261
      %v1428 = vunpack.c.l.b16 %v1275
      %v1429 = vunpack.c.l.b16 %v1285
      %v1430 = vunpack.c.l.b16 %v1299
      %v1431 = vunpack.c.l.b16 %v1309
      %v1432 = vunpack.c.l.b16 %v1323
      %v1433 = vunpack.c.l.b16 %v1333
      %v1434 = vunpack.c.l.b16 %v1347
      %v1435 = vunpack.c.l.b16 %v1357
      %v1436 = vunpack.c.l.b16 %v1371
      %v1437 = vunpack.c.l.b16 %v1381
      %v1438 = vunpack.c.l.b16 %v1395
      %v1439 = vunpack.c.l.b16 %v1405
      %v1440 = vpack.c.b16 %v1409, %v1408
      %v1441 = vpack.c.b16 %v1411, %v1410
      %v1442 = vpack.c.b16 %v1413, %v1412
      %v1443 = vpack.c.b16 %v1415, %v1414
      %v1444 = vpack.c.b16 %v1417, %v1416
      %v1445 = vpack.c.b16 %v1419, %v1418
      %v1446 = vpack.c.b16 %v1421, %v1420
      %v1447 = vpack.c.b16 %v1423, %v1422
      %v1448 = vpack.c.b16 %v1425, %v1424
      %v1449 = vpack.c.b16 %v1427, %v1426
      %v1450 = vpack.c.b16 %v1429, %v1428
      %v1451 = vpack.c.b16 %v1431, %v1430
      %v1452 = vpack.c.b16 %v1433, %v1432
      %v1453 = vpack.c.b16 %v1435, %v1434
      %v1454 = vpack.c.b16 %v1437, %v1436
      %v1455 = vpack.c.b16 %v1439, %v1438
      %vm1456 = vcmask 64512
      %v1458 = vsel %vm1456, %v1440, 0
      %v1461 = vsel %vm1456, %v1441, 0
      %v1464 = vsel %vm1456, %v1442, 0
      %v1467 = vsel %vm1456, %v1443, 0
      %v1470 = vsel %vm1456, %v1444, 0
      %v1473 = vsel %vm1456, %v1445, 0
      %v1476 = vsel %vm1456, %v1446, 0
      %v1479 = vsel %vm1456, %v1447, 0
      %v1482 = vsel %vm1456, %v1448, 0
      %v1485 = vsel %vm1456, %v1449, 0
      %v1488 = vsel %vm1456, %v1450, 0
      %v1491 = vsel %vm1456, %v1451, 0
      %v1494 = vsel %vm1456, %v1452, 0
      %v1497 = vsel %vm1456, %v1453, 0
      %v1500 = vsel %vm1456, %v1454, 0
      %v1503 = vsel %vm1456, %v1455, 0
      %vm1505 = vcmask 1043456
      %v1507 = vsel %vm1505, %v1407, 0
      %1509 = vmatprep.subr.bf16.mxu0 0
      %1510 = vmatpush1.bf16.msra.mxu0 0
      %1511 = vmatprep.subr.bf16.mxu0 0
      %1512 = vmatpush1.bf16.msra.mxu0 0
      %1513 = vmatprep.subr.bf16.mxu0 0
      %1514 = vmatpush1.bf16.msra.mxu0 0
      %1515 = vmatprep.subr.bf16.mxu0 0
      %1516 = vmatpush1.bf16.msra.mxu0 0
      %1517 = vmatprep.subr.bf16.mxu0 0
      %1518 = vmatpush1.bf16.msra.mxu0 0
      %1519 = vmatprep.subr.bf16.mxu0 0
      %1520 = vmatpush1.bf16.msra.mxu0 0
      %1521 = vmatprep.subr.bf16.mxu0 0
      %1522 = vmatpush1.bf16.msra.mxu0 0
      %1523 = vmatprep.subr.bf16.mxu0 0
      %1524 = vmatpush1.bf16.msra.mxu0 %v1507
      %1525 = vmatprep.subr.bf16.mxu0 0
      %1526 = vmatpush2.bf16.msra.mxu0 0
      %1527 = vmatprep.subr.bf16.mxu0 0
      %1528 = vmatpush2.bf16.msra.mxu0 0
      %1529 = vmatprep.subr.bf16.mxu0 0
      %1530 = vmatpush2.bf16.msra.mxu0 0
      %1531 = vmatprep.subr.bf16.mxu0 0
      %1532 = vmatpush2.bf16.msra.mxu0 0
      %1533 = vmatprep.subr.bf16.mxu0 0
      %1534 = vmatpush2.bf16.msra.mxu0 0
      %1535 = vmatprep.subr.bf16.mxu0 0
      %1536 = vmatpush2.bf16.msra.mxu0 0
      %1537 = vmatprep.subr.bf16.mxu0 0
      %1538 = vmatpush2.bf16.msra.mxu0 0
      %1539 = vmatprep.subr.bf16.mxu0 0
      %1540 = vmatpush2.bf16.msra.mxu0 0
      %1541 = vmatprep.mubr.bf16.mxu0 0
      %1542 = vmatmul.mubr.bf16.gmra.mxu0 %v1458
      %v1543 = vpop.f32.mrf.mxu0
      %v1544 = vadd.f32 0.0, %v1543
      %v1545 = vpop.f32.mrf.mxu0
      %v1546 = vpop.f32.mrf.mxu0
      %v1547 = vadd.f32 0.0, %v1546
      %v1548 = vpop.f32.mrf.mxu0
      %1549 = vmatprep.mubr.bf16.mxu0 0
      %1550 = vmatmul.mubr.bf16.gmra.mxu0 %v1461
      %v1551 = vpop.f32.mrf.mxu0
      %v1552 = vadd.f32 0.0, %v1551
      %v1553 = vpop.f32.mrf.mxu0
      %v1554 = vpop.f32.mrf.mxu0
      %v1555 = vadd.f32 0.0, %v1554
      %v1556 = vpop.f32.mrf.mxu0
      %1557 = vmatprep.mubr.bf16.mxu0 0
      %1558 = vmatmul.mubr.bf16.gmra.mxu0 %v1464
      %v1559 = vpop.f32.mrf.mxu0
      %v1560 = vadd.f32 0.0, %v1559
      %v1561 = vpop.f32.mrf.mxu0
      %v1562 = vpop.f32.mrf.mxu0
      %v1563 = vadd.f32 0.0, %v1562
      %v1564 = vpop.f32.mrf.mxu0
      %1565 = vmatprep.mubr.bf16.mxu0 0
      %1566 = vmatmul.mubr.bf16.gmra.mxu0 %v1467
      %v1567 = vpop.f32.mrf.mxu0
      %v1568 = vadd.f32 0.0, %v1567
      %v1569 = vpop.f32.mrf.mxu0
      %v1570 = vpop.f32.mrf.mxu0
      %v1571 = vadd.f32 0.0, %v1570
      %v1572 = vpop.f32.mrf.mxu0
      %1573 = vmatprep.mubr.bf16.mxu0 0
      %1574 = vmatmul.mubr.bf16.gmra.mxu0 %v1470
      %v1575 = vpop.f32.mrf.mxu0
      %v1576 = vadd.f32 0.0, %v1575
      %v1577 = vpop.f32.mrf.mxu0
      %v1578 = vpop.f32.mrf.mxu0
      %v1579 = vadd.f32 0.0, %v1578
      %v1580 = vpop.f32.mrf.mxu0
      %1581 = vmatprep.mubr.bf16.mxu0 0
      %1582 = vmatmul.mubr.bf16.gmra.mxu0 %v1473
      %v1583 = vpop.f32.mrf.mxu0
      %v1584 = vadd.f32 0.0, %v1583
      %v1585 = vpop.f32.mrf.mxu0
      %v1586 = vpop.f32.mrf.mxu0
      %v1587 = vadd.f32 0.0, %v1586
      %v1588 = vpop.f32.mrf.mxu0
      %1589 = vmatprep.mubr.bf16.mxu0 0
      %1590 = vmatmul.mubr.bf16.gmra.mxu0 %v1476
      %v1591 = vpop.f32.mrf.mxu0
      %v1592 = vadd.f32 0.0, %v1591
      %v1593 = vpop.f32.mrf.mxu0
      %v1594 = vpop.f32.mrf.mxu0
      %v1595 = vadd.f32 0.0, %v1594
      %v1596 = vpop.f32.mrf.mxu0
      %1597 = vmatprep.mubr.bf16.mxu0 0
      %1598 = vmatmul.mubr.bf16.gmra.mxu0 %v1479
      %v1599 = vpop.f32.mrf.mxu0
      %v1600 = vadd.f32 0.0, %v1599
      %v1601 = vpop.f32.mrf.mxu0
      %v1602 = vpop.f32.mrf.mxu0
      %v1603 = vadd.f32 0.0, %v1602
      %v1604 = vpop.f32.mrf.mxu0
      %1605 = vmatprep.mubr.bf16.mxu0 0
      %1606 = vmatmul.mubr.bf16.gmra.mxu0 %v1482
      %v1607 = vpop.f32.mrf.mxu0
      %v1608 = vadd.f32 0.0, %v1607
      %v1609 = vpop.f32.mrf.mxu0
      %v1610 = vpop.f32.mrf.mxu0
      %v1611 = vadd.f32 0.0, %v1610
      %v1612 = vpop.f32.mrf.mxu0
      %1613 = vmatprep.mubr.bf16.mxu0 0
      %1614 = vmatmul.mubr.bf16.gmra.mxu0 %v1485
      %v1615 = vpop.f32.mrf.mxu0
      %v1616 = vadd.f32 0.0, %v1615
      %v1617 = vpop.f32.mrf.mxu0
      %v1618 = vpop.f32.mrf.mxu0
      %v1619 = vadd.f32 0.0, %v1618
      %v1620 = vpop.f32.mrf.mxu0
      %1621 = vmatprep.mubr.bf16.mxu0 0
      %1622 = vmatmul.mubr.bf16.gmra.mxu0 %v1488
      %v1623 = vpop.f32.mrf.mxu0
      %v1624 = vadd.f32 0.0, %v1623
      %v1625 = vpop.f32.mrf.mxu0
      %v1626 = vpop.f32.mrf.mxu0
      %v1627 = vadd.f32 0.0, %v1626
      %v1628 = vpop.f32.mrf.mxu0
      %1629 = vmatprep.mubr.bf16.mxu0 0
      %1630 = vmatmul.mubr.bf16.gmra.mxu0 %v1491
      %v1631 = vpop.f32.mrf.mxu0
      %v1632 = vadd.f32 0.0, %v1631
      %v1633 = vpop.f32.mrf.mxu0
      %v1634 = vpop.f32.mrf.mxu0
      %v1635 = vadd.f32 0.0, %v1634
      %v1636 = vpop.f32.mrf.mxu0
      %1637 = vmatprep.mubr.bf16.mxu0 0
      %1638 = vmatmul.mubr.bf16.gmra.mxu0 %v1494
      %v1639 = vpop.f32.mrf.mxu0
      %v1640 = vadd.f32 0.0, %v1639
      %v1641 = vpop.f32.mrf.mxu0
      %v1642 = vpop.f32.mrf.mxu0
      %v1643 = vadd.f32 0.0, %v1642
      %v1644 = vpop.f32.mrf.mxu0
      %1645 = vmatprep.mubr.bf16.mxu0 0
      %1646 = vmatmul.mubr.bf16.gmra.mxu0 %v1497
      %v1647 = vpop.f32.mrf.mxu0
      %v1648 = vadd.f32 0.0, %v1647
      %v1649 = vpop.f32.mrf.mxu0
      %v1650 = vpop.f32.mrf.mxu0
      %v1651 = vadd.f32 0.0, %v1650
      %v1652 = vpop.f32.mrf.mxu0
      %1653 = vmatprep.mubr.bf16.mxu0 0
      %1654 = vmatmul.mubr.bf16.gmra.mxu0 %v1500
      %v1655 = vpop.f32.mrf.mxu0
      %v1656 = vadd.f32 0.0, %v1655
      %v1657 = vpop.f32.mrf.mxu0
      %v1658 = vpop.f32.mrf.mxu0
      %v1659 = vadd.f32 0.0, %v1658
      %v1660 = vpop.f32.mrf.mxu0
      %1661 = vmatprep.mubr.bf16.mxu0 0
      %1662 = vmatmul.mubr.bf16.gmra.mxu0 %v1503
      %v1663 = vpop.f32.mrf.mxu0
      %v1664 = vadd.f32 0.0, %v1663
      %v1665 = vpop.f32.mrf.mxu0
      %v1666 = vpop.f32.mrf.mxu0
      %v1667 = vadd.f32 0.0, %v1666
      %v1668 = vpop.f32.mrf.mxu0
      %1669 = vdwg.mxu0
      %v1702 = vunpack.c.l.b16 %v970
      %v1703 = vunpack.c.l.b16 %v971
      %v1704 = vunpack.c.l.b16 %v972
      %v1705 = vunpack.c.l.b16 %v973
      %v1706 = vunpack.c.l.b16 %v974
      %v1707 = vunpack.c.l.b16 %v975
      %v1708 = vunpack.c.l.b16 %v976
      %v1709 = vunpack.c.l.b16 %v977
      %v1710 = vunpack.c.l.b16 %v978
      %v1711 = vunpack.c.l.b16 %v979
      %v1712 = vunpack.c.l.b16 %v980
      %v1713 = vunpack.c.l.b16 %v981
      %v1714 = vunpack.c.l.b16 %v982
      %v1715 = vunpack.c.l.b16 %v983
      %v1716 = vunpack.c.l.b16 %v984
      %v1717 = vunpack.c.l.b16 %v985
      %v1718 = vunpack.c.l.b16 %v986
      %v1719 = vunpack.c.l.b16 %v987
      %v1720 = vunpack.c.l.b16 %v988
      %v1721 = vunpack.c.l.b16 %v989
      %v1722 = vunpack.c.l.b16 %v990
      %v1723 = vunpack.c.l.b16 %v991
      %v1724 = vunpack.c.l.b16 %v992
      %v1725 = vunpack.c.l.b16 %v993
      %v1726 = vunpack.c.l.b16 %v994
      %v1727 = vunpack.c.l.b16 %v995
      %v1728 = vunpack.c.l.b16 %v996
      %v1729 = vunpack.c.l.b16 %v997
      %v1730 = vunpack.c.l.b16 %v998
      %v1731 = vunpack.c.l.b16 %v999
      %v1732 = vunpack.c.l.b16 %v1000
      %v1733 = vunpack.c.l.b16 %v1001
      %v1734 = vpack.c.b16 %v1703, %v1702
      %v1735 = vpack.c.b16 %v1705, %v1704
      %v1736 = vpack.c.b16 %v1707, %v1706
      %v1737 = vpack.c.b16 %v1709, %v1708
      %v1738 = vpack.c.b16 %v1711, %v1710
      %v1739 = vpack.c.b16 %v1713, %v1712
      %v1740 = vpack.c.b16 %v1715, %v1714
      %v1741 = vpack.c.b16 %v1717, %v1716
      %v1742 = vpack.c.b16 %v1719, %v1718
      %v1743 = vpack.c.b16 %v1721, %v1720
      %v1744 = vpack.c.b16 %v1723, %v1722
      %v1745 = vpack.c.b16 %v1725, %v1724
      %v1746 = vpack.c.b16 %v1727, %v1726
      %v1747 = vpack.c.b16 %v1729, %v1728
      %v1748 = vpack.c.b16 %v1731, %v1730
      %v1749 = vpack.c.b16 %v1733, %v1732
      %v1751 = vsel %vm1456, %v1734, 0
      %v1754 = vsel %vm1456, %v1735, 0
      %v1757 = vsel %vm1456, %v1736, 0
      %v1760 = vsel %vm1456, %v1737, 0
      %v1763 = vsel %vm1456, %v1738, 0
      %v1766 = vsel %vm1456, %v1739, 0
      %v1769 = vsel %vm1456, %v1740, 0
      %v1772 = vsel %vm1456, %v1741, 0
      %v1775 = vsel %vm1456, %v1742, 0
      %v1778 = vsel %vm1456, %v1743, 0
      %v1781 = vsel %vm1456, %v1744, 0
      %v1784 = vsel %vm1456, %v1745, 0
      %v1787 = vsel %vm1456, %v1746, 0
      %v1790 = vsel %vm1456, %v1747, 0
      %v1793 = vsel %vm1456, %v1748, 0
      %v1796 = vsel %vm1456, %v1749, 0
      %v1799 = vsel %vm1505, %v1002, 0
      %1801 = vmatprep.subr.bf16.mxu0 0
      %1802 = vmatpush1.bf16.msra.mxu0 0
      %1803 = vmatprep.subr.bf16.mxu0 0
      %1804 = vmatpush1.bf16.msra.mxu0 0
      %1805 = vmatprep.subr.bf16.mxu0 0
      %1806 = vmatpush1.bf16.msra.mxu0 0
      %1807 = vmatprep.subr.bf16.mxu0 0
      %1808 = vmatpush1.bf16.msra.mxu0 0
      %1809 = vmatprep.subr.bf16.mxu0 0
      %1810 = vmatpush1.bf16.msra.mxu0 0
      %1811 = vmatprep.subr.bf16.mxu0 0
      %1812 = vmatpush1.bf16.msra.mxu0 0
      %1813 = vmatprep.subr.bf16.mxu0 0
      %1814 = vmatpush1.bf16.msra.mxu0 0
      %1815 = vmatprep.subr.bf16.mxu0 0
      %1816 = vmatpush1.bf16.msra.mxu0 %v1799
      %1817 = vmatprep.subr.bf16.mxu0 0
      %1818 = vmatpush2.bf16.msra.mxu0 0
      %1819 = vmatprep.subr.bf16.mxu0 0
      %1820 = vmatpush2.bf16.msra.mxu0 0
      %1821 = vmatprep.subr.bf16.mxu0 0
      %1822 = vmatpush2.bf16.msra.mxu0 0
      %1823 = vmatprep.subr.bf16.mxu0 0
      %1824 = vmatpush2.bf16.msra.mxu0 0
      %1825 = vmatprep.subr.bf16.mxu0 0
      %1826 = vmatpush2.bf16.msra.mxu0 0
      %1827 = vmatprep.subr.bf16.mxu0 0
      %1828 = vmatpush2.bf16.msra.mxu0 0
      %1829 = vmatprep.subr.bf16.mxu0 0
      %1830 = vmatpush2.bf16.msra.mxu0 0
      %1831 = vmatprep.subr.bf16.mxu0 0
      %1832 = vmatpush2.bf16.msra.mxu0 0
      %1833 = vmatprep.mubr.bf16.mxu0 0
      %1834 = vmatmul.mubr.bf16.gmra.mxu0 %v1751
      %v1835 = vpop.f32.mrf.mxu0
      %v1836 = vadd.f32 %v1544, %v1835
      %v1837 = vpop.f32.mrf.mxu0
      %v1838 = vpop.f32.mrf.mxu0
      %v1839 = vadd.f32 %v1547, %v1838
      %v1840 = vpop.f32.mrf.mxu0
      %1841 = vmatprep.mubr.bf16.mxu0 0
      %1842 = vmatmul.mubr.bf16.gmra.mxu0 %v1754
      %v1843 = vpop.f32.mrf.mxu0
      %v1844 = vadd.f32 %v1552, %v1843
      %v1845 = vpop.f32.mrf.mxu0
      %v1846 = vpop.f32.mrf.mxu0
      %v1847 = vadd.f32 %v1555, %v1846
      %v1848 = vpop.f32.mrf.mxu0
      %1849 = vmatprep.mubr.bf16.mxu0 0
      %1850 = vmatmul.mubr.bf16.gmra.mxu0 %v1757
      %v1851 = vpop.f32.mrf.mxu0
      %v1852 = vadd.f32 %v1560, %v1851
      %v1853 = vpop.f32.mrf.mxu0
      %v1854 = vpop.f32.mrf.mxu0
      %v1855 = vadd.f32 %v1563, %v1854
      %v1856 = vpop.f32.mrf.mxu0
      %1857 = vmatprep.mubr.bf16.mxu0 0
      %1858 = vmatmul.mubr.bf16.gmra.mxu0 %v1760
      %v1859 = vpop.f32.mrf.mxu0
      %v1860 = vadd.f32 %v1568, %v1859
      %v1861 = vpop.f32.mrf.mxu0
      %v1862 = vpop.f32.mrf.mxu0
      %v1863 = vadd.f32 %v1571, %v1862
      %v1864 = vpop.f32.mrf.mxu0
      %1865 = vmatprep.mubr.bf16.mxu0 0
      %1866 = vmatmul.mubr.bf16.gmra.mxu0 %v1763
      %v1867 = vpop.f32.mrf.mxu0
      %v1868 = vadd.f32 %v1576, %v1867
      %v1869 = vpop.f32.mrf.mxu0
      %v1870 = vpop.f32.mrf.mxu0
      %v1871 = vadd.f32 %v1579, %v1870
      %v1872 = vpop.f32.mrf.mxu0
      %1873 = vmatprep.mubr.bf16.mxu0 0
      %1874 = vmatmul.mubr.bf16.gmra.mxu0 %v1766
      %v1875 = vpop.f32.mrf.mxu0
      %v1876 = vadd.f32 %v1584, %v1875
      %v1877 = vpop.f32.mrf.mxu0
      %v1878 = vpop.f32.mrf.mxu0
      %v1879 = vadd.f32 %v1587, %v1878
      %v1880 = vpop.f32.mrf.mxu0
      %1881 = vmatprep.mubr.bf16.mxu0 0
      %1882 = vmatmul.mubr.bf16.gmra.mxu0 %v1769
      %v1883 = vpop.f32.mrf.mxu0
      %v1884 = vadd.f32 %v1592, %v1883
      %v1885 = vpop.f32.mrf.mxu0
      %v1886 = vpop.f32.mrf.mxu0
      %v1887 = vadd.f32 %v1595, %v1886
      %v1888 = vpop.f32.mrf.mxu0
      %1889 = vmatprep.mubr.bf16.mxu0 0
      %1890 = vmatmul.mubr.bf16.gmra.mxu0 %v1772
      %v1891 = vpop.f32.mrf.mxu0
      %v1892 = vadd.f32 %v1600, %v1891
      %v1893 = vpop.f32.mrf.mxu0
      %v1894 = vpop.f32.mrf.mxu0
      %v1895 = vadd.f32 %v1603, %v1894
      %v1896 = vpop.f32.mrf.mxu0
      %1897 = vmatprep.mubr.bf16.mxu0 0
      %1898 = vmatmul.mubr.bf16.gmra.mxu0 %v1775
      %v1899 = vpop.f32.mrf.mxu0
      %v1900 = vadd.f32 %v1608, %v1899
      %v1901 = vpop.f32.mrf.mxu0
      %v1902 = vpop.f32.mrf.mxu0
      %v1903 = vadd.f32 %v1611, %v1902
      %v1904 = vpop.f32.mrf.mxu0
      %1905 = vmatprep.mubr.bf16.mxu0 0
      %1906 = vmatmul.mubr.bf16.gmra.mxu0 %v1778
      %v1907 = vpop.f32.mrf.mxu0
      %v1908 = vadd.f32 %v1616, %v1907
      %v1909 = vpop.f32.mrf.mxu0
      %v1910 = vpop.f32.mrf.mxu0
      %v1911 = vadd.f32 %v1619, %v1910
      %v1912 = vpop.f32.mrf.mxu0
      %1913 = vmatprep.mubr.bf16.mxu0 0
      %1914 = vmatmul.mubr.bf16.gmra.mxu0 %v1781
      %v1915 = vpop.f32.mrf.mxu0
      %v1916 = vadd.f32 %v1624, %v1915
      %v1917 = vpop.f32.mrf.mxu0
      %v1918 = vpop.f32.mrf.mxu0
      %v1919 = vadd.f32 %v1627, %v1918
      %v1920 = vpop.f32.mrf.mxu0
      %1921 = vmatprep.mubr.bf16.mxu0 0
      %1922 = vmatmul.mubr.bf16.gmra.mxu0 %v1784
      %v1923 = vpop.f32.mrf.mxu0
      %v1924 = vadd.f32 %v1632, %v1923
      %v1925 = vpop.f32.mrf.mxu0
      %v1926 = vpop.f32.mrf.mxu0
      %v1927 = vadd.f32 %v1635, %v1926
      %v1928 = vpop.f32.mrf.mxu0
      %1929 = vmatprep.mubr.bf16.mxu0 0
      %1930 = vmatmul.mubr.bf16.gmra.mxu0 %v1787
      %v1931 = vpop.f32.mrf.mxu0
      %v1932 = vadd.f32 %v1640, %v1931
      %v1933 = vpop.f32.mrf.mxu0
      %v1934 = vpop.f32.mrf.mxu0
      %v1935 = vadd.f32 %v1643, %v1934
      %v1936 = vpop.f32.mrf.mxu0
      %1937 = vmatprep.mubr.bf16.mxu0 0
      %1938 = vmatmul.mubr.bf16.gmra.mxu0 %v1790
      %v1939 = vpop.f32.mrf.mxu0
      %v1940 = vadd.f32 %v1648, %v1939
      %v1941 = vpop.f32.mrf.mxu0
      %v1942 = vpop.f32.mrf.mxu0
      %v1943 = vadd.f32 %v1651, %v1942
      %v1944 = vpop.f32.mrf.mxu0
      %1945 = vmatprep.mubr.bf16.mxu0 0
      %1946 = vmatmul.mubr.bf16.gmra.mxu0 %v1793
      %v1947 = vpop.f32.mrf.mxu0
      %v1948 = vadd.f32 %v1656, %v1947
      %v1949 = vpop.f32.mrf.mxu0
      %v1950 = vpop.f32.mrf.mxu0
      %v1951 = vadd.f32 %v1659, %v1950
      %v1952 = vpop.f32.mrf.mxu0
      %1953 = vmatprep.mubr.bf16.mxu0 0
      %1954 = vmatmul.mubr.bf16.gmra.mxu0 %v1796
      %v1955 = vpop.f32.mrf.mxu0
      %v1956 = vadd.f32 %v1664, %v1955
      %v1957 = vpop.f32.mrf.mxu0
      %v1958 = vpop.f32.mrf.mxu0
      %v1959 = vadd.f32 %v1667, %v1958
      %v1960 = vpop.f32.mrf.mxu0
      %1961 = vdwg.mxu0
      %v1962 = vld [vmem:[#allocation2] sm:$0xe]
      %v1963 = vld [vmem:[#allocation2 + $0xc] sm:$0xe]
      %v1964 = vld [vmem:[#allocation2 + $0x18] sm:$0xe]
      %v1965 = vld [vmem:[#allocation2 + $0x24] sm:$0xe]
      %v1966 = vld [vmem:[#allocation2 + $0x30] sm:$0xe]
      %v1967 = vld [vmem:[#allocation2 + $0x3c] sm:$0xe]
      %v1968 = vld [vmem:[#allocation2 + $0x48] sm:$0xe]
      %v1969 = vld [vmem:[#allocation2 + $0x54] sm:$0xe]
      %v1970 = vld [vmem:[#allocation2 + $0x60] sm:$0xe]
      %v1971 = vld [vmem:[#allocation2 + $0x6c] sm:$0xe]
      %v1972 = vld [vmem:[#allocation2 + $0x78] sm:$0xe]
      %v1973 = vld [vmem:[#allocation2 + $0x84] sm:$0xe]
      %v1974 = vld [vmem:[#allocation2 + $0x90] sm:$0xe]
      %v1975 = vld [vmem:[#allocation2 + $0x9c] sm:$0xe]
      %v1976 = vld [vmem:[#allocation2 + $0xa8] sm:$0xe]
      %v1977 = vld [vmem:[#allocation2 + $0xb4] sm:$0xe]
      %vm2010 = vcmask 1042432
      %vm2011 = vcmask 1046532
      %vm2012 = vmor %vm2010, %vm2011
      %v2013 = vrot.slane %v1962, 5
      %v2014 = vrot.slane %v2013, 4
      %v2015 = vrot.slane %v971, 5
      %v2016 = vsel %vm2012, %v2014, %v2015
      %v2017 = vrot.slane %v2015, 4
      %v2018 = vrot.slane %v1003, 5
      %v2019 = vsel %vm2012, %v2017, %v2018
      %v2020 = vrot.slane %v1963, 5
      %v2021 = vrot.slane %v2020, 4
      %v2022 = vrot.slane %v973, 5
      %v2023 = vsel %vm2012, %v2021, %v2022
      %v2024 = vrot.slane %v2022, 4
      %v2025 = vrot.slane %v1004, 5
      %v2026 = vsel %vm2012, %v2024, %v2025
      %v2027 = vrot.slane %v1964, 5
      %v2028 = vrot.slane %v2027, 4
      %v2029 = vrot.slane %v975, 5
      %v2030 = vsel %vm2012, %v2028, %v2029
      %v2031 = vrot.slane %v2029, 4
      %v2032 = vrot.slane %v1005, 5
      %v2033 = vsel %vm2012, %v2031, %v2032
      %v2034 = vrot.slane %v1965, 5
      %v2035 = vrot.slane %v2034, 4
      %v2036 = vrot.slane %v977, 5
      %v2037 = vsel %vm2012, %v2035, %v2036
      %v2038 = vrot.slane %v2036, 4
      %v2039 = vrot.slane %v1006, 5
      %v2040 = vsel %vm2012, %v2038, %v2039
      %v2041 = vrot.slane %v1966, 5
      %v2042 = vrot.slane %v2041, 4
      %v2043 = vrot.slane %v979, 5
      %v2044 = vsel %vm2012, %v2042, %v2043
      %v2045 = vrot.slane %v2043, 4
      %v2046 = vrot.slane %v1007, 5
      %v2047 = vsel %vm2012, %v2045, %v2046
      %v2048 = vrot.slane %v1967, 5
      %v2049 = vrot.slane %v2048, 4
      %v2050 = vrot.slane %v981, 5
      %v2051 = vsel %vm2012, %v2049, %v2050
      %v2052 = vrot.slane %v2050, 4
      %v2053 = vrot.slane %v1008, 5
      %v2054 = vsel %vm2012, %v2052, %v2053
      %v2055 = vrot.slane %v1968, 5
      %v2056 = vrot.slane %v2055, 4
      %v2057 = vrot.slane %v983, 5
      %v2058 = vsel %vm2012, %v2056, %v2057
      %v2059 = vrot.slane %v2057, 4
      %v2060 = vrot.slane %v1009, 5
      %v2061 = vsel %vm2012, %v2059, %v2060
      %v2062 = vrot.slane %v1969, 5
      %v2063 = vrot.slane %v2062, 4
      %v2064 = vrot.slane %v985, 5
      %v2065 = vsel %vm2012, %v2063, %v2064
      %v2066 = vrot.slane %v2064, 4
      %v2067 = vrot.slane %v1010, 5
      %v2068 = vsel %vm2012, %v2066, %v2067
      %v2069 = vrot.slane %v1970, 5
      %v2070 = vrot.slane %v2069, 4
      %v2071 = vrot.slane %v987, 5
      %v2072 = vsel %vm2012, %v2070, %v2071
      %v2073 = vrot.slane %v2071, 4
      %v2074 = vrot.slane %v1011, 5
      %v2075 = vsel %vm2012, %v2073, %v2074
      %v2076 = vrot.slane %v1971, 5
      %v2077 = vrot.slane %v2076, 4
      %v2078 = vrot.slane %v989, 5
      %v2079 = vsel %vm2012, %v2077, %v2078
      %v2080 = vrot.slane %v2078, 4
      %v2081 = vrot.slane %v1012, 5
      %v2082 = vsel %vm2012, %v2080, %v2081
      %v2083 = vrot.slane %v1972, 5
      %v2084 = vrot.slane %v2083, 4
      %v2085 = vrot.slane %v991, 5
      %v2086 = vsel %vm2012, %v2084, %v2085
      %v2087 = vrot.slane %v2085, 4
      %v2088 = vrot.slane %v1013, 5
      %v2089 = vsel %vm2012, %v2087, %v2088
      %v2090 = vrot.slane %v1973, 5
      %v2091 = vrot.slane %v2090, 4
      %v2092 = vrot.slane %v993, 5
      %v2093 = vsel %vm2012, %v2091, %v2092
      %v2094 = vrot.slane %v2092, 4
      %v2095 = vrot.slane %v1014, 5
      %v2096 = vsel %vm2012, %v2094, %v2095
      %v2097 = vrot.slane %v1974, 5
      %v2098 = vrot.slane %v2097, 4
      %v2099 = vrot.slane %v995, 5
      %v2100 = vsel %vm2012, %v2098, %v2099
      %v2101 = vrot.slane %v2099, 4
      %v2102 = vrot.slane %v1015, 5
      %v2103 = vsel %vm2012, %v2101, %v2102
      %v2104 = vrot.slane %v1975, 5
      %v2105 = vrot.slane %v2104, 4
      %v2106 = vrot.slane %v997, 5
      %v2107 = vsel %vm2012, %v2105, %v2106
      %v2108 = vrot.slane %v2106, 4
      %v2109 = vrot.slane %v1016, 5
      %v2110 = vsel %vm2012, %v2108, %v2109
      %v2111 = vrot.slane %v1976, 5
      %v2112 = vrot.slane %v2111, 4
      %v2113 = vrot.slane %v999, 5
      %v2114 = vsel %vm2012, %v2112, %v2113
      %v2115 = vrot.slane %v2113, 4
      %v2116 = vrot.slane %v1017, 5
      %v2117 = vsel %vm2012, %v2115, %v2116
      %v2118 = vrot.slane %v1977, 5
      %v2119 = vrot.slane %v2118, 4
      %v2120 = vrot.slane %v1001, 5
      %v2121 = vsel %vm2012, %v2119, %v2120
      %v2122 = vrot.slane %v2120, 4
      %v2123 = vrot.slane %v1018, 5
      %v2124 = vsel %vm2012, %v2122, %v2123
      %s2125 = scalar_lea.vmem %s1, 16
      %v2126 = vld [vmem:[%s2125] sm:$0xf]
      %v2127 = vunpack.c.l.b16 %v2016
      %v2128 = vunpack.c.l.b16 %v2019
      %v2129 = vunpack.c.l.b16 %v2023
      %v2130 = vunpack.c.l.b16 %v2026
      %v2131 = vunpack.c.l.b16 %v2030
      %v2132 = vunpack.c.l.b16 %v2033
      %v2133 = vunpack.c.l.b16 %v2037
      %v2134 = vunpack.c.l.b16 %v2040
      %v2135 = vunpack.c.l.b16 %v2044
      %v2136 = vunpack.c.l.b16 %v2047
      %v2137 = vunpack.c.l.b16 %v2051
      %v2138 = vunpack.c.l.b16 %v2054
      %v2139 = vunpack.c.l.b16 %v2058
      %v2140 = vunpack.c.l.b16 %v2061
      %v2141 = vunpack.c.l.b16 %v2065
      %v2142 = vunpack.c.l.b16 %v2068
      %v2143 = vunpack.c.l.b16 %v2072
      %v2144 = vunpack.c.l.b16 %v2075
      %v2145 = vunpack.c.l.b16 %v2079
      %v2146 = vunpack.c.l.b16 %v2082
      %v2147 = vunpack.c.l.b16 %v2086
      %v2148 = vunpack.c.l.b16 %v2089
      %v2149 = vunpack.c.l.b16 %v2093
      %v2150 = vunpack.c.l.b16 %v2096
      %v2151 = vunpack.c.l.b16 %v2100
      %v2152 = vunpack.c.l.b16 %v2103
      %v2153 = vunpack.c.l.b16 %v2107
      %v2154 = vunpack.c.l.b16 %v2110
      %v2155 = vunpack.c.l.b16 %v2114
      %v2156 = vunpack.c.l.b16 %v2117
      %v2157 = vunpack.c.l.b16 %v2121
      %v2158 = vunpack.c.l.b16 %v2124
      %v2159 = vpack.c.b16 %v2128, %v2127
      %v2160 = vpack.c.b16 %v2130, %v2129
      %v2161 = vpack.c.b16 %v2132, %v2131
      %v2162 = vpack.c.b16 %v2134, %v2133
      %v2163 = vpack.c.b16 %v2136, %v2135
      %v2164 = vpack.c.b16 %v2138, %v2137
      %v2165 = vpack.c.b16 %v2140, %v2139
      %v2166 = vpack.c.b16 %v2142, %v2141
      %v2167 = vpack.c.b16 %v2144, %v2143
      %v2168 = vpack.c.b16 %v2146, %v2145
      %v2169 = vpack.c.b16 %v2148, %v2147
      %v2170 = vpack.c.b16 %v2150, %v2149
      %v2171 = vpack.c.b16 %v2152, %v2151
      %v2172 = vpack.c.b16 %v2154, %v2153
      %v2173 = vpack.c.b16 %v2156, %v2155
      %v2174 = vpack.c.b16 %v2158, %v2157
      %v2176 = vsel %vm1456, %v2159, 0
      %v2179 = vsel %vm1456, %v2160, 0
      %v2182 = vsel %vm1456, %v2161, 0
      %v2185 = vsel %vm1456, %v2162, 0
      %v2188 = vsel %vm1456, %v2163, 0
      %v2191 = vsel %vm1456, %v2164, 0
      %v2194 = vsel %vm1456, %v2165, 0
      %v2197 = vsel %vm1456, %v2166, 0
      %v2200 = vsel %vm1456, %v2167, 0
      %v2203 = vsel %vm1456, %v2168, 0
      %v2206 = vsel %vm1456, %v2169, 0
      %v2209 = vsel %vm1456, %v2170, 0
      %v2212 = vsel %vm1456, %v2171, 0
      %v2215 = vsel %vm1456, %v2172, 0
      %v2218 = vsel %vm1456, %v2173, 0
      %v2221 = vsel %vm1456, %v2174, 0
      %v2224 = vsel %vm1505, %v2126, 0
      %2226 = vmatprep.subr.bf16.mxu0 0
      %2227 = vmatpush1.bf16.msra.mxu0 0
      %2228 = vmatprep.subr.bf16.mxu0 0
      %2229 = vmatpush1.bf16.msra.mxu0 0
      %2230 = vmatprep.subr.bf16.mxu0 0
      %2231 = vmatpush1.bf16.msra.mxu0 0
      %2232 = vmatprep.subr.bf16.mxu0 0
      %2233 = vmatpush1.bf16.msra.mxu0 0
      %2234 = vmatprep.subr.bf16.mxu0 0
      %2235 = vmatpush1.bf16.msra.mxu0 0
      %2236 = vmatprep.subr.bf16.mxu0 0
      %2237 = vmatpush1.bf16.msra.mxu0 0
      %2238 = vmatprep.subr.bf16.mxu0 0
      %2239 = vmatpush1.bf16.msra.mxu0 0
      %2240 = vmatprep.subr.bf16.mxu0 0
      %2241 = vmatpush1.bf16.msra.mxu0 %v2224
      %2242 = vmatprep.subr.bf16.mxu0 0
      %2243 = vmatpush2.bf16.msra.mxu0 0
      %2244 = vmatprep.subr.bf16.mxu0 0
      %2245 = vmatpush2.bf16.msra.mxu0 0
      %2246 = vmatprep.subr.bf16.mxu0 0
      %2247 = vmatpush2.bf16.msra.mxu0 0
      %2248 = vmatprep.subr.bf16.mxu0 0
      %2249 = vmatpush2.bf16.msra.mxu0 0
      %2250 = vmatprep.subr.bf16.mxu0 0
      %2251 = vmatpush2.bf16.msra.mxu0 0
      %2252 = vmatprep.subr.bf16.mxu0 0
      %2253 = vmatpush2.bf16.msra.mxu0 0
      %2254 = vmatprep.subr.bf16.mxu0 0
      %2255 = vmatpush2.bf16.msra.mxu0 0
      %2256 = vmatprep.subr.bf16.mxu0 0
      %2257 = vmatpush2.bf16.msra.mxu0 0
      %2258 = vmatprep.mubr.bf16.mxu0 0
      %2259 = vmatmul.mubr.bf16.gmra.mxu0 %v2176
      %v2260 = vpop.f32.mrf.mxu0
      %v2261 = vadd.f32 0.0, %v2260
      %v2262 = vpop.f32.mrf.mxu0
      %v2263 = vpop.f32.mrf.mxu0
      %v2264 = vadd.f32 0.0, %v2263
      %v2265 = vpop.f32.mrf.mxu0
      %2266 = vmatprep.mubr.bf16.mxu0 0
      %2267 = vmatmul.mubr.bf16.gmra.mxu0 %v2179
      %v2268 = vpop.f32.mrf.mxu0
      %v2269 = vadd.f32 0.0, %v2268
      %v2270 = vpop.f32.mrf.mxu0
      %v2271 = vpop.f32.mrf.mxu0
      %v2272 = vadd.f32 0.0, %v2271
      %v2273 = vpop.f32.mrf.mxu0
      %2274 = vmatprep.mubr.bf16.mxu0 0
      %2275 = vmatmul.mubr.bf16.gmra.mxu0 %v2182
      %v2276 = vpop.f32.mrf.mxu0
      %v2277 = vadd.f32 0.0, %v2276
      %v2278 = vpop.f32.mrf.mxu0
      %v2279 = vpop.f32.mrf.mxu0
      %v2280 = vadd.f32 0.0, %v2279
      %v2281 = vpop.f32.mrf.mxu0
      %2282 = vmatprep.mubr.bf16.mxu0 0
      %2283 = vmatmul.mubr.bf16.gmra.mxu0 %v2185
      %v2284 = vpop.f32.mrf.mxu0
      %v2285 = vadd.f32 0.0, %v2284
      %v2286 = vpop.f32.mrf.mxu0
      %v2287 = vpop.f32.mrf.mxu0
      %v2288 = vadd.f32 0.0, %v2287
      %v2289 = vpop.f32.mrf.mxu0
      %2290 = vmatprep.mubr.bf16.mxu0 0
      %2291 = vmatmul.mubr.bf16.gmra.mxu0 %v2188
      %v2292 = vpop.f32.mrf.mxu0
      %v2293 = vadd.f32 0.0, %v2292
      %v2294 = vpop.f32.mrf.mxu0
      %v2295 = vpop.f32.mrf.mxu0
      %v2296 = vadd.f32 0.0, %v2295
      %v2297 = vpop.f32.mrf.mxu0
      %2298 = vmatprep.mubr.bf16.mxu0 0
      %2299 = vmatmul.mubr.bf16.gmra.mxu0 %v2191
      %v2300 = vpop.f32.mrf.mxu0
      %v2301 = vadd.f32 0.0, %v2300
      %v2302 = vpop.f32.mrf.mxu0
      %v2303 = vpop.f32.mrf.mxu0
      %v2304 = vadd.f32 0.0, %v2303
      %v2305 = vpop.f32.mrf.mxu0
      %2306 = vmatprep.mubr.bf16.mxu0 0
      %2307 = vmatmul.mubr.bf16.gmra.mxu0 %v2194
      %v2308 = vpop.f32.mrf.mxu0
      %v2309 = vadd.f32 0.0, %v2308
      %v2310 = vpop.f32.mrf.mxu0
      %v2311 = vpop.f32.mrf.mxu0
      %v2312 = vadd.f32 0.0, %v2311
      %v2313 = vpop.f32.mrf.mxu0
      %2314 = vmatprep.mubr.bf16.mxu0 0
      %2315 = vmatmul.mubr.bf16.gmra.mxu0 %v2197
      %v2316 = vpop.f32.mrf.mxu0
      %v2317 = vadd.f32 0.0, %v2316
      %v2318 = vpop.f32.mrf.mxu0
      %v2319 = vpop.f32.mrf.mxu0
      %v2320 = vadd.f32 0.0, %v2319
      %v2321 = vpop.f32.mrf.mxu0
      %2322 = vmatprep.mubr.bf16.mxu0 0
      %2323 = vmatmul.mubr.bf16.gmra.mxu0 %v2200
      %v2324 = vpop.f32.mrf.mxu0
      %v2325 = vadd.f32 0.0, %v2324
      %v2326 = vpop.f32.mrf.mxu0
      %v2327 = vpop.f32.mrf.mxu0
      %v2328 = vadd.f32 0.0, %v2327
      %v2329 = vpop.f32.mrf.mxu0
      %2330 = vmatprep.mubr.bf16.mxu0 0
      %2331 = vmatmul.mubr.bf16.gmra.mxu0 %v2203
      %v2332 = vpop.f32.mrf.mxu0
      %v2333 = vadd.f32 0.0, %v2332
      %v2334 = vpop.f32.mrf.mxu0
      %v2335 = vpop.f32.mrf.mxu0
      %v2336 = vadd.f32 0.0, %v2335
      %v2337 = vpop.f32.mrf.mxu0
      %2338 = vmatprep.mubr.bf16.mxu0 0
      %2339 = vmatmul.mubr.bf16.gmra.mxu0 %v2206
      %v2340 = vpop.f32.mrf.mxu0
      %v2341 = vadd.f32 0.0, %v2340
      %v2342 = vpop.f32.mrf.mxu0
      %v2343 = vpop.f32.mrf.mxu0
      %v2344 = vadd.f32 0.0, %v2343
      %v2345 = vpop.f32.mrf.mxu0
      %2346 = vmatprep.mubr.bf16.mxu0 0
      %2347 = vmatmul.mubr.bf16.gmra.mxu0 %v2209
      %v2348 = vpop.f32.mrf.mxu0
      %v2349 = vadd.f32 0.0, %v2348
      %v2350 = vpop.f32.mrf.mxu0
      %v2351 = vpop.f32.mrf.mxu0
      %v2352 = vadd.f32 0.0, %v2351
      %v2353 = vpop.f32.mrf.mxu0
      %2354 = vmatprep.mubr.bf16.mxu0 0
      %2355 = vmatmul.mubr.bf16.gmra.mxu0 %v2212
      %v2356 = vpop.f32.mrf.mxu0
      %v2357 = vadd.f32 0.0, %v2356
      %v2358 = vpop.f32.mrf.mxu0
      %v2359 = vpop.f32.mrf.mxu0
      %v2360 = vadd.f32 0.0, %v2359
      %v2361 = vpop.f32.mrf.mxu0
      %2362 = vmatprep.mubr.bf16.mxu0 0
      %2363 = vmatmul.mubr.bf16.gmra.mxu0 %v2215
      %v2364 = vpop.f32.mrf.mxu0
      %v2365 = vadd.f32 0.0, %v2364
      %v2366 = vpop.f32.mrf.mxu0
      %v2367 = vpop.f32.mrf.mxu0
      %v2368 = vadd.f32 0.0, %v2367
      %v2369 = vpop.f32.mrf.mxu0
      %2370 = vmatprep.mubr.bf16.mxu0 0
      %2371 = vmatmul.mubr.bf16.gmra.mxu0 %v2218
      %v2372 = vpop.f32.mrf.mxu0
      %v2373 = vadd.f32 0.0, %v2372
      %v2374 = vpop.f32.mrf.mxu0
      %v2375 = vpop.f32.mrf.mxu0
      %v2376 = vadd.f32 0.0, %v2375
      %v2377 = vpop.f32.mrf.mxu0
      %2378 = vmatprep.mubr.bf16.mxu0 0
      %2379 = vmatmul.mubr.bf16.gmra.mxu0 %v2221
      %v2380 = vpop.f32.mrf.mxu0
      %v2381 = vadd.f32 0.0, %v2380
      %v2382 = vpop.f32.mrf.mxu0
      %v2383 = vpop.f32.mrf.mxu0
      %v2384 = vadd.f32 0.0, %v2383
      %v2385 = vpop.f32.mrf.mxu0
      %2386 = vdwg.mxu0
      %v2387 = vadd.f32 %v1836, %v2261
      %v2388 = vadd.f32 %v1839, %v2264
      %v2389 = vadd.f32 %v1844, %v2269
      %v2390 = vadd.f32 %v1847, %v2272
      %v2391 = vadd.f32 %v1852, %v2277
      %v2392 = vadd.f32 %v1855, %v2280
      %v2393 = vadd.f32 %v1860, %v2285
      %v2394 = vadd.f32 %v1863, %v2288
      %v2395 = vadd.f32 %v1868, %v2293
      %v2396 = vadd.f32 %v1871, %v2296
      %v2397 = vadd.f32 %v1876, %v2301
      %v2398 = vadd.f32 %v1879, %v2304
      %v2399 = vadd.f32 %v1884, %v2309
      %v2400 = vadd.f32 %v1887, %v2312
      %v2401 = vadd.f32 %v1892, %v2317
      %v2402 = vadd.f32 %v1895, %v2320
      %v2403 = vadd.f32 %v1900, %v2325
      %v2404 = vadd.f32 %v1903, %v2328
      %v2405 = vadd.f32 %v1908, %v2333
      %v2406 = vadd.f32 %v1911, %v2336
      %v2407 = vadd.f32 %v1916, %v2341
      %v2408 = vadd.f32 %v1919, %v2344
      %v2409 = vadd.f32 %v1924, %v2349
      %v2410 = vadd.f32 %v1927, %v2352
      %v2411 = vadd.f32 %v1932, %v2357
      %v2412 = vadd.f32 %v1935, %v2360
      %v2413 = vadd.f32 %v1940, %v2365
      %v2414 = vadd.f32 %v1943, %v2368
      %v2415 = vadd.f32 %v1948, %v2373
      %v2416 = vadd.f32 %v1951, %v2376
      %v2417 = vadd.f32 %v1956, %v2381
      %v2418 = vadd.f32 %v1959, %v2384
      %v2419 = vld [vmem:[%s852] sm:$0xf]
      %v2420 = vld [vmem:[%s852 + $0x4] sm:$0xf]
      %v2421 = vld [vmem:[%s852 + $0xc] sm:$0xf]
      %v2422 = vld [vmem:[%s852 + $0x10] sm:$0xf]
      %v2423 = vld [vmem:[%s852 + $0x18] sm:$0xf]
      %v2424 = vld [vmem:[%s852 + $0x1c] sm:$0xf]
      %v2425 = vld [vmem:[%s852 + $0x24] sm:$0xf]
      %v2426 = vld [vmem:[%s852 + $0x28] sm:$0xf]
      %v2427 = vld [vmem:[%s852 + $0x30] sm:$0xf]
      %v2428 = vld [vmem:[%s852 + $0x34] sm:$0xf]
      %v2429 = vld [vmem:[%s852 + $0x3c] sm:$0xf]
      %v2430 = vld [vmem:[%s852 + $0x40] sm:$0xf]
      %v2431 = vld [vmem:[%s852 + $0x48] sm:$0xf]
      %v2432 = vld [vmem:[%s852 + $0x4c] sm:$0xf]
      %v2433 = vld [vmem:[%s852 + $0x54] sm:$0xf]
      %v2434 = vld [vmem:[%s852 + $0x58] sm:$0xf]
      %v2435 = vld [vmem:[%s852 + $0x60] sm:$0xf]
      %v2436 = vld [vmem:[%s852 + $0x64] sm:$0xf]
      %v2437 = vld [vmem:[%s852 + $0x6c] sm:$0xf]
      %v2438 = vld [vmem:[%s852 + $0x70] sm:$0xf]
      %v2439 = vld [vmem:[%s852 + $0x78] sm:$0xf]
      %v2440 = vld [vmem:[%s852 + $0x7c] sm:$0xf]
      %v2441 = vld [vmem:[%s852 + $0x84] sm:$0xf]
      %v2442 = vld [vmem:[%s852 + $0x88] sm:$0xf]
      %v2443 = vld [vmem:[%s852 + $0x90] sm:$0xf]
      %v2444 = vld [vmem:[%s852 + $0x94] sm:$0xf]
      %v2445 = vld [vmem:[%s852 + $0x9c] sm:$0xf]
      %v2446 = vld [vmem:[%s852 + $0xa0] sm:$0xf]
      %v2447 = vld [vmem:[%s852 + $0xa8] sm:$0xf]
      %v2448 = vld [vmem:[%s852 + $0xac] sm:$0xf]
      %v2449 = vld [vmem:[%s852 + $0xb4] sm:$0xf]
      %v2450 = vld [vmem:[%s852 + $0xb8] sm:$0xf]
      %s2451 = scalar_lea.vmem %s1, 24
      %v2452 = vld [vmem:[%s2451] sm:$0xf]
      %v2485 = vunpack.c.l.b16 %v2419
      %v2486 = vunpack.c.l.b16 %v2420
      %v2487 = vunpack.c.l.b16 %v2421
      %v2488 = vunpack.c.l.b16 %v2422
      %v2489 = vunpack.c.l.b16 %v2423
      %v2490 = vunpack.c.l.b16 %v2424
      %v2491 = vunpack.c.l.b16 %v2425
      %v2492 = vunpack.c.l.b16 %v2426
      %v2493 = vunpack.c.l.b16 %v2427
      %v2494 = vunpack.c.l.b16 %v2428
      %v2495 = vunpack.c.l.b16 %v2429
      %v2496 = vunpack.c.l.b16 %v2430
      %v2497 = vunpack.c.l.b16 %v2431
      %v2498 = vunpack.c.l.b16 %v2432
      %v2499 = vunpack.c.l.b16 %v2433
      %v2500 = vunpack.c.l.b16 %v2434
      %v2501 = vunpack.c.l.b16 %v2435
      %v2502 = vunpack.c.l.b16 %v2436
      %v2503 = vunpack.c.l.b16 %v2437
      %v2504 = vunpack.c.l.b16 %v2438
      %v2505 = vunpack.c.l.b16 %v2439
      %v2506 = vunpack.c.l.b16 %v2440
      %v2507 = vunpack.c.l.b16 %v2441
      %v2508 = vunpack.c.l.b16 %v2442
      %v2509 = vunpack.c.l.b16 %v2443
      %v2510 = vunpack.c.l.b16 %v2444
      %v2511 = vunpack.c.l.b16 %v2445
      %v2512 = vunpack.c.l.b16 %v2446
      %v2513 = vunpack.c.l.b16 %v2447
      %v2514 = vunpack.c.l.b16 %v2448
      %v2515 = vunpack.c.l.b16 %v2449
      %v2516 = vunpack.c.l.b16 %v2450
      %v2517 = vpack.c.b16 %v2486, %v2485
      %v2518 = vpack.c.b16 %v2488, %v2487
      %v2519 = vpack.c.b16 %v2490, %v2489
      %v2520 = vpack.c.b16 %v2492, %v2491
      %v2521 = vpack.c.b16 %v2494, %v2493
      %v2522 = vpack.c.b16 %v2496, %v2495
      %v2523 = vpack.c.b16 %v2498, %v2497
      %v2524 = vpack.c.b16 %v2500, %v2499
      %v2525 = vpack.c.b16 %v2502, %v2501
      %v2526 = vpack.c.b16 %v2504, %v2503
      %v2527 = vpack.c.b16 %v2506, %v2505
      %v2528 = vpack.c.b16 %v2508, %v2507
      %v2529 = vpack.c.b16 %v2510, %v2509
      %v2530 = vpack.c.b16 %v2512, %v2511
      %v2531 = vpack.c.b16 %v2514, %v2513
      %v2532 = vpack.c.b16 %v2516, %v2515
      %v2534 = vsel %vm1456, %v2517, 0
      %v2537 = vsel %vm1456, %v2518, 0
      %v2540 = vsel %vm1456, %v2519, 0
      %v2543 = vsel %vm1456, %v2520, 0
      %v2546 = vsel %vm1456, %v2521, 0
      %v2549 = vsel %vm1456, %v2522, 0
      %v2552 = vsel %vm1456, %v2523, 0
      %v2555 = vsel %vm1456, %v2524, 0
      %v2558 = vsel %vm1456, %v2525, 0
      %v2561 = vsel %vm1456, %v2526, 0
      %v2564 = vsel %vm1456, %v2527, 0
      %v2567 = vsel %vm1456, %v2528, 0
      %v2570 = vsel %vm1456, %v2529, 0
      %v2573 = vsel %vm1456, %v2530, 0
      %v2576 = vsel %vm1456, %v2531, 0
      %v2579 = vsel %vm1456, %v2532, 0
      %v2582 = vsel %vm1505, %v2452, 0
      %2584 = vmatprep.subr.bf16.mxu0 0
      %2585 = vmatpush1.bf16.msra.mxu0 0
      %2586 = vmatprep.subr.bf16.mxu0 0
      %2587 = vmatpush1.bf16.msra.mxu0 0
      %2588 = vmatprep.subr.bf16.mxu0 0
      %2589 = vmatpush1.bf16.msra.mxu0 0
      %2590 = vmatprep.subr.bf16.mxu0 0
      %2591 = vmatpush1.bf16.msra.mxu0 0
      %2592 = vmatprep.subr.bf16.mxu0 0
      %2593 = vmatpush1.bf16.msra.mxu0 0
      %2594 = vmatprep.subr.bf16.mxu0 0
      %2595 = vmatpush1.bf16.msra.mxu0 0
      %2596 = vmatprep.subr.bf16.mxu0 0
      %2597 = vmatpush1.bf16.msra.mxu0 0
      %2598 = vmatprep.subr.bf16.mxu0 0
      %2599 = vmatpush1.bf16.msra.mxu0 %v2582
      %2600 = vmatprep.subr.bf16.mxu0 0
      %2601 = vmatpush2.bf16.msra.mxu0 0
      %2602 = vmatprep.subr.bf16.mxu0 0
      %2603 = vmatpush2.bf16.msra.mxu0 0
      %2604 = vmatprep.subr.bf16.mxu0 0
      %2605 = vmatpush2.bf16.msra.mxu0 0
      %2606 = vmatprep.subr.bf16.mxu0 0
      %2607 = vmatpush2.bf16.msra.mxu0 0
      %2608 = vmatprep.subr.bf16.mxu0 0
      %2609 = vmatpush2.bf16.msra.mxu0 0
      %2610 = vmatprep.subr.bf16.mxu0 0
      %2611 = vmatpush2.bf16.msra.mxu0 0
      %2612 = vmatprep.subr.bf16.mxu0 0
      %2613 = vmatpush2.bf16.msra.mxu0 0
      %2614 = vmatprep.subr.bf16.mxu0 0
      %2615 = vmatpush2.bf16.msra.mxu0 0
      %2616 = vmatprep.mubr.bf16.mxu0 0
      %2617 = vmatmul.mubr.bf16.gmra.mxu0 %v2534
      %v2618 = vpop.f32.mrf.mxu0
      %v2619 = vadd.f32 0.0, %v2618
      %v2620 = vpop.f32.mrf.mxu0
      %v2621 = vpop.f32.mrf.mxu0
      %v2622 = vadd.f32 0.0, %v2621
      %v2623 = vpop.f32.mrf.mxu0
      %2624 = vmatprep.mubr.bf16.mxu0 0
      %2625 = vmatmul.mubr.bf16.gmra.mxu0 %v2537
      %v2626 = vpop.f32.mrf.mxu0
      %v2627 = vadd.f32 0.0, %v2626
      %v2628 = vpop.f32.mrf.mxu0
      %v2629 = vpop.f32.mrf.mxu0
      %v2630 = vadd.f32 0.0, %v2629
      %v2631 = vpop.f32.mrf.mxu0
      %2632 = vmatprep.mubr.bf16.mxu0 0
      %2633 = vmatmul.mubr.bf16.gmra.mxu0 %v2540
      %v2634 = vpop.f32.mrf.mxu0
      %v2635 = vadd.f32 0.0, %v2634
      %v2636 = vpop.f32.mrf.mxu0
      %v2637 = vpop.f32.mrf.mxu0
      %v2638 = vadd.f32 0.0, %v2637
      %v2639 = vpop.f32.mrf.mxu0
      %2640 = vmatprep.mubr.bf16.mxu0 0
      %2641 = vmatmul.mubr.bf16.gmra.mxu0 %v2543
      %v2642 = vpop.f32.mrf.mxu0
      %v2643 = vadd.f32 0.0, %v2642
      %v2644 = vpop.f32.mrf.mxu0
      %v2645 = vpop.f32.mrf.mxu0
      %v2646 = vadd.f32 0.0, %v2645
      %v2647 = vpop.f32.mrf.mxu0
      %2648 = vmatprep.mubr.bf16.mxu0 0
      %2649 = vmatmul.mubr.bf16.gmra.mxu0 %v2546
      %v2650 = vpop.f32.mrf.mxu0
      %v2651 = vadd.f32 0.0, %v2650
      %v2652 = vpop.f32.mrf.mxu0
      %v2653 = vpop.f32.mrf.mxu0
      %v2654 = vadd.f32 0.0, %v2653
      %v2655 = vpop.f32.mrf.mxu0
      %2656 = vmatprep.mubr.bf16.mxu0 0
      %2657 = vmatmul.mubr.bf16.gmra.mxu0 %v2549
      %v2658 = vpop.f32.mrf.mxu0
      %v2659 = vadd.f32 0.0, %v2658
      %v2660 = vpop.f32.mrf.mxu0
      %v2661 = vpop.f32.mrf.mxu0
      %v2662 = vadd.f32 0.0, %v2661
      %v2663 = vpop.f32.mrf.mxu0
      %2664 = vmatprep.mubr.bf16.mxu0 0
      %2665 = vmatmul.mubr.bf16.gmra.mxu0 %v2552
      %v2666 = vpop.f32.mrf.mxu0
      %v2667 = vadd.f32 0.0, %v2666
      %v2668 = vpop.f32.mrf.mxu0
      %v2669 = vpop.f32.mrf.mxu0
      %v2670 = vadd.f32 0.0, %v2669
      %v2671 = vpop.f32.mrf.mxu0
      %2672 = vmatprep.mubr.bf16.mxu0 0
      %2673 = vmatmul.mubr.bf16.gmra.mxu0 %v2555
      %v2674 = vpop.f32.mrf.mxu0
      %v2675 = vadd.f32 0.0, %v2674
      %v2676 = vpop.f32.mrf.mxu0
      %v2677 = vpop.f32.mrf.mxu0
      %v2678 = vadd.f32 0.0, %v2677
      %v2679 = vpop.f32.mrf.mxu0
      %2680 = vmatprep.mubr.bf16.mxu0 0
      %2681 = vmatmul.mubr.bf16.gmra.mxu0 %v2558
      %v2682 = vpop.f32.mrf.mxu0
      %v2683 = vadd.f32 0.0, %v2682
      %v2684 = vpop.f32.mrf.mxu0
      %v2685 = vpop.f32.mrf.mxu0
      %v2686 = vadd.f32 0.0, %v2685
      %v2687 = vpop.f32.mrf.mxu0
      %2688 = vmatprep.mubr.bf16.mxu0 0
      %2689 = vmatmul.mubr.bf16.gmra.mxu0 %v2561
      %v2690 = vpop.f32.mrf.mxu0
      %v2691 = vadd.f32 0.0, %v2690
      %v2692 = vpop.f32.mrf.mxu0
      %v2693 = vpop.f32.mrf.mxu0
      %v2694 = vadd.f32 0.0, %v2693
      %v2695 = vpop.f32.mrf.mxu0
      %2696 = vmatprep.mubr.bf16.mxu0 0
      %2697 = vmatmul.mubr.bf16.gmra.mxu0 %v2564
      %v2698 = vpop.f32.mrf.mxu0
      %v2699 = vadd.f32 0.0, %v2698
      %v2700 = vpop.f32.mrf.mxu0
      %v2701 = vpop.f32.mrf.mxu0
      %v2702 = vadd.f32 0.0, %v2701
      %v2703 = vpop.f32.mrf.mxu0
      %2704 = vmatprep.mubr.bf16.mxu0 0
      %2705 = vmatmul.mubr.bf16.gmra.mxu0 %v2567
      %v2706 = vpop.f32.mrf.mxu0
      %v2707 = vadd.f32 0.0, %v2706
      %v2708 = vpop.f32.mrf.mxu0
      %v2709 = vpop.f32.mrf.mxu0
      %v2710 = vadd.f32 0.0, %v2709
      %v2711 = vpop.f32.mrf.mxu0
      %2712 = vmatprep.mubr.bf16.mxu0 0
      %2713 = vmatmul.mubr.bf16.gmra.mxu0 %v2570
      %v2714 = vpop.f32.mrf.mxu0
      %v2715 = vadd.f32 0.0, %v2714
      %v2716 = vpop.f32.mrf.mxu0
      %v2717 = vpop.f32.mrf.mxu0
      %v2718 = vadd.f32 0.0, %v2717
      %v2719 = vpop.f32.mrf.mxu0
      %2720 = vmatprep.mubr.bf16.mxu0 0
      %2721 = vmatmul.mubr.bf16.gmra.mxu0 %v2573
      %v2722 = vpop.f32.mrf.mxu0
      %v2723 = vadd.f32 0.0, %v2722
      %v2724 = vpop.f32.mrf.mxu0
      %v2725 = vpop.f32.mrf.mxu0
      %v2726 = vadd.f32 0.0, %v2725
      %v2727 = vpop.f32.mrf.mxu0
      %2728 = vmatprep.mubr.bf16.mxu0 0
      %2729 = vmatmul.mubr.bf16.gmra.mxu0 %v2576
      %v2730 = vpop.f32.mrf.mxu0
      %v2731 = vadd.f32 0.0, %v2730
      %v2732 = vpop.f32.mrf.mxu0
      %v2733 = vpop.f32.mrf.mxu0
      %v2734 = vadd.f32 0.0, %v2733
      %v2735 = vpop.f32.mrf.mxu0
      %2736 = vmatprep.mubr.bf16.mxu0 0
      %2737 = vmatmul.mubr.bf16.gmra.mxu0 %v2579
      %v2738 = vpop.f32.mrf.mxu0
      %v2739 = vadd.f32 0.0, %v2738
      %v2740 = vpop.f32.mrf.mxu0
      %v2741 = vpop.f32.mrf.mxu0
      %v2742 = vadd.f32 0.0, %v2741
      %v2743 = vpop.f32.mrf.mxu0
      %2744 = vdwg.mxu0
      %v2745 = vadd.f32 %v2387, %v2619
      %v2746 = vadd.f32 %v2388, %v2622
      %v2747 = vadd.f32 %v2389, %v2627
      %v2748 = vadd.f32 %v2390, %v2630
      %v2749 = vadd.f32 %v2391, %v2635
      %v2750 = vadd.f32 %v2392, %v2638
      %v2751 = vadd.f32 %v2393, %v2643
      %v2752 = vadd.f32 %v2394, %v2646
      %v2753 = vadd.f32 %v2395, %v2651
      %v2754 = vadd.f32 %v2396, %v2654
      %v2755 = vadd.f32 %v2397, %v2659
      %v2756 = vadd.f32 %v2398, %v2662
      %v2757 = vadd.f32 %v2399, %v2667
      %v2758 = vadd.f32 %v2400, %v2670
      %v2759 = vadd.f32 %v2401, %v2675
      %v2760 = vadd.f32 %v2402, %v2678
      %v2761 = vadd.f32 %v2403, %v2683
      %v2762 = vadd.f32 %v2404, %v2686
      %v2763 = vadd.f32 %v2405, %v2691
      %v2764 = vadd.f32 %v2406, %v2694
      %v2765 = vadd.f32 %v2407, %v2699
      %v2766 = vadd.f32 %v2408, %v2702
      %v2767 = vadd.f32 %v2409, %v2707
      %v2768 = vadd.f32 %v2410, %v2710
      %v2769 = vadd.f32 %v2411, %v2715
      %v2770 = vadd.f32 %v2412, %v2718
      %v2771 = vadd.f32 %v2413, %v2723
      %v2772 = vadd.f32 %v2414, %v2726
      %v2773 = vadd.f32 %v2415, %v2731
      %v2774 = vadd.f32 %v2416, %v2734
      %v2775 = vadd.f32 %v2417, %v2739
      %v2776 = vadd.f32 %v2418, %v2742
      %v2777 = vld [vmem:[%s852] sm:$0xf]
      %v2778 = vld [vmem:[%s852 + $0x4] sm:$0xf]
      %v2779 = vld [vmem:[%s852 + $0x8] sm:$0x1]
      %v2780 = vld [vmem:[%s852 + $0xc] sm:$0xf]
      %v2781 = vld [vmem:[%s852 + $0x10] sm:$0xf]
      %v2782 = vld [vmem:[%s852 + $0x14] sm:$0x1]
      %v2783 = vld [vmem:[%s852 + $0x18] sm:$0xf]
      %v2784 = vld [vmem:[%s852 + $0x1c] sm:$0xf]
      %v2785 = vld [vmem:[%s852 + $0x20] sm:$0x1]
      %v2786 = vld [vmem:[%s852 + $0x24] sm:$0xf]
      %v2787 = vld [vmem:[%s852 + $0x28] sm:$0xf]
      %v2788 = vld [vmem:[%s852 + $0x2c] sm:$0x1]
      %v2789 = vld [vmem:[%s852 + $0x30] sm:$0xf]
      %v2790 = vld [vmem:[%s852 + $0x34] sm:$0xf]
      %v2791 = vld [vmem:[%s852 + $0x38] sm:$0x1]
      %v2792 = vld [vmem:[%s852 + $0x3c] sm:$0xf]
      %v2793 = vld [vmem:[%s852 + $0x40] sm:$0xf]
      %v2794 = vld [vmem:[%s852 + $0x44] sm:$0x1]
      %v2795 = vld [vmem:[%s852 + $0x48] sm:$0xf]
      %v2796 = vld [vmem:[%s852 + $0x4c] sm:$0xf]
      %v2797 = vld [vmem:[%s852 + $0x50] sm:$0x1]
      %v2798 = vld [vmem:[%s852 + $0x54] sm:$0xf]
      %v2799 = vld [vmem:[%s852 + $0x58] sm:$0xf]
      %v2800 = vld [vmem:[%s852 + $0x5c] sm:$0x1]
      %v2801 = vld [vmem:[%s852 + $0x60] sm:$0xf]
      %v2802 = vld [vmem:[%s852 + $0x64] sm:$0xf]
      %v2803 = vld [vmem:[%s852 + $0x68] sm:$0x1]
      %v2804 = vld [vmem:[%s852 + $0x6c] sm:$0xf]
      %v2805 = vld [vmem:[%s852 + $0x70] sm:$0xf]
      %v2806 = vld [vmem:[%s852 + $0x74] sm:$0x1]
      %v2807 = vld [vmem:[%s852 + $0x78] sm:$0xf]
      %v2808 = vld [vmem:[%s852 + $0x7c] sm:$0xf]
      %v2809 = vld [vmem:[%s852 + $0x80] sm:$0x1]
      %v2810 = vld [vmem:[%s852 + $0x84] sm:$0xf]
      %v2811 = vld [vmem:[%s852 + $0x88] sm:$0xf]
      %v2812 = vld [vmem:[%s852 + $0x8c] sm:$0x1]
      %v2813 = vld [vmem:[%s852 + $0x90] sm:$0xf]
      %v2814 = vld [vmem:[%s852 + $0x94] sm:$0xf]
      %v2815 = vld [vmem:[%s852 + $0x98] sm:$0x1]
      %v2816 = vld [vmem:[%s852 + $0x9c] sm:$0xf]
      %v2817 = vld [vmem:[%s852 + $0xa0] sm:$0xf]
      %v2818 = vld [vmem:[%s852 + $0xa4] sm:$0x1]
      %v2819 = vld [vmem:[%s852 + $0xa8] sm:$0xf]
      %v2820 = vld [vmem:[%s852 + $0xac] sm:$0xf]
      %v2821 = vld [vmem:[%s852 + $0xb0] sm:$0x1]
      %v2822 = vld [vmem:[%s852 + $0xb4] sm:$0xf]
      %v2823 = vld [vmem:[%s852 + $0xb8] sm:$0xf]
      %v2824 = vld [vmem:[%s852 + $0xbc] sm:$0x1]
      %v2826 = vshrl.u32 %v2777, 16
      %v2828 = vrot.slane %v2826, 4
      %v2829 = vshll.u32 %v2777, 16
      %v2831 = vrot.slane %v2829, 5
      %v2832 = vor.u32 %v2828, %v2831
      %v2833 = vrot.slane %v2832, 4
      %v2835 = vshll.u32 %v2778, 16
      %v2837 = vrot.slane %v2835, 5
      %v2838 = vsel %vm1021, %v2833, %v2837
      %v2839 = vshrl.u32 %v2778, 16
      %v2841 = vrot.slane %v2839, 4
      %v2842 = vor.u32 %v2841, %v2837
      %v2843 = vrot.slane %v2842, 4
      %v2845 = vshll.u32 %v2779, 16
      %v2847 = vrot.slane %v2845, 5
      %v2848 = vsel %vm1021, %v2843, %v2847
      %v2850 = vshrl.u32 %v2780, 16
      %v2852 = vrot.slane %v2850, 4
      %v2853 = vshll.u32 %v2780, 16
      %v2855 = vrot.slane %v2853, 5
      %v2856 = vor.u32 %v2852, %v2855
      %v2857 = vrot.slane %v2856, 4
      %v2859 = vshll.u32 %v2781, 16
      %v2861 = vrot.slane %v2859, 5
      %v2862 = vsel %vm1021, %v2857, %v2861
      %v2863 = vshrl.u32 %v2781, 16
      %v2865 = vrot.slane %v2863, 4
      %v2866 = vor.u32 %v2865, %v2861
      %v2867 = vrot.slane %v2866, 4
      %v2869 = vshll.u32 %v2782, 16
      %v2871 = vrot.slane %v2869, 5
      %v2872 = vsel %vm1021, %v2867, %v2871
      %v2874 = vshrl.u32 %v2783, 16
      %v2876 = vrot.slane %v2874, 4
      %v2877 = vshll.u32 %v2783, 16
      %v2879 = vrot.slane %v2877, 5
      %v2880 = vor.u32 %v2876, %v2879
      %v2881 = vrot.slane %v2880, 4
      %v2883 = vshll.u32 %v2784, 16
      %v2885 = vrot.slane %v2883, 5
      %v2886 = vsel %vm1021, %v2881, %v2885
      %v2887 = vshrl.u32 %v2784, 16
      %v2889 = vrot.slane %v2887, 4
      %v2890 = vor.u32 %v2889, %v2885
      %v2891 = vrot.slane %v2890, 4
      %v2893 = vshll.u32 %v2785, 16
      %v2895 = vrot.slane %v2893, 5
      %v2896 = vsel %vm1021, %v2891, %v2895
      %v2898 = vshrl.u32 %v2786, 16
      %v2900 = vrot.slane %v2898, 4
      %v2901 = vshll.u32 %v2786, 16
      %v2903 = vrot.slane %v2901, 5
      %v2904 = vor.u32 %v2900, %v2903
      %v2905 = vrot.slane %v2904, 4
      %v2907 = vshll.u32 %v2787, 16
      %v2909 = vrot.slane %v2907, 5
      %v2910 = vsel %vm1021, %v2905, %v2909
      %v2911 = vshrl.u32 %v2787, 16
      %v2913 = vrot.slane %v2911, 4
      %v2914 = vor.u32 %v2913, %v2909
      %v2915 = vrot.slane %v2914, 4
      %v2917 = vshll.u32 %v2788, 16
      %v2919 = vrot.slane %v2917, 5
      %v2920 = vsel %vm1021, %v2915, %v2919
      %v2922 = vshrl.u32 %v2789, 16
      %v2924 = vrot.slane %v2922, 4
      %v2925 = vshll.u32 %v2789, 16
      %v2927 = vrot.slane %v2925, 5
      %v2928 = vor.u32 %v2924, %v2927
      %v2929 = vrot.slane %v2928, 4
      %v2931 = vshll.u32 %v2790, 16
      %v2933 = vrot.slane %v2931, 5
      %v2934 = vsel %vm1021, %v2929, %v2933
      %v2935 = vshrl.u32 %v2790, 16
      %v2937 = vrot.slane %v2935, 4
      %v2938 = vor.u32 %v2937, %v2933
      %v2939 = vrot.slane %v2938, 4
      %v2941 = vshll.u32 %v2791, 16
      %v2943 = vrot.slane %v2941, 5
      %v2944 = vsel %vm1021, %v2939, %v2943
      %v2946 = vshrl.u32 %v2792, 16
      %v2948 = vrot.slane %v2946, 4
      %v2949 = vshll.u32 %v2792, 16
      %v2951 = vrot.slane %v2949, 5
      %v2952 = vor.u32 %v2948, %v2951
      %v2953 = vrot.slane %v2952, 4
      %v2955 = vshll.u32 %v2793, 16
      %v2957 = vrot.slane %v2955, 5
      %v2958 = vsel %vm1021, %v2953, %v2957
      %v2959 = vshrl.u32 %v2793, 16
      %v2961 = vrot.slane %v2959, 4
      %v2962 = vor.u32 %v2961, %v2957
      %v2963 = vrot.slane %v2962, 4
      %v2965 = vshll.u32 %v2794, 16
      %v2967 = vrot.slane %v2965, 5
      %v2968 = vsel %vm1021, %v2963, %v2967
      %v2970 = vshrl.u32 %v2795, 16
      %v2972 = vrot.slane %v2970, 4
      %v2973 = vshll.u32 %v2795, 16
      %v2975 = vrot.slane %v2973, 5
      %v2976 = vor.u32 %v2972, %v2975
      %v2977 = vrot.slane %v2976, 4
      %v2979 = vshll.u32 %v2796, 16
      %v2981 = vrot.slane %v2979, 5
      %v2982 = vsel %vm1021, %v2977, %v2981
      %v2983 = vshrl.u32 %v2796, 16
      %v2985 = vrot.slane %v2983, 4
      %v2986 = vor.u32 %v2985, %v2981
      %v2987 = vrot.slane %v2986, 4
      %v2989 = vshll.u32 %v2797, 16
      %v2991 = vrot.slane %v2989, 5
      %v2992 = vsel %vm1021, %v2987, %v2991
      %v2994 = vshrl.u32 %v2798, 16
      %v2996 = vrot.slane %v2994, 4
      %v2997 = vshll.u32 %v2798, 16
      %v2999 = vrot.slane %v2997, 5
      %v3000 = vor.u32 %v2996, %v2999
      %v3001 = vrot.slane %v3000, 4
      %v3003 = vshll.u32 %v2799, 16
      %v3005 = vrot.slane %v3003, 5
      %v3006 = vsel %vm1021, %v3001, %v3005
      %v3007 = vshrl.u32 %v2799, 16
      %v3009 = vrot.slane %v3007, 4
      %v3010 = vor.u32 %v3009, %v3005
      %v3011 = vrot.slane %v3010, 4
      %v3013 = vshll.u32 %v2800, 16
      %v3015 = vrot.slane %v3013, 5
      %v3016 = vsel %vm1021, %v3011, %v3015
      %v3018 = vshrl.u32 %v2801, 16
      %v3020 = vrot.slane %v3018, 4
      %v3021 = vshll.u32 %v2801, 16
      %v3023 = vrot.slane %v3021, 5
      %v3024 = vor.u32 %v3020, %v3023
      %v3025 = vrot.slane %v3024, 4
      %v3027 = vshll.u32 %v2802, 16
      %v3029 = vrot.slane %v3027, 5
      %v3030 = vsel %vm1021, %v3025, %v3029
      %v3031 = vshrl.u32 %v2802, 16
      %v3033 = vrot.slane %v3031, 4
      %v3034 = vor.u32 %v3033, %v3029
      %v3035 = vrot.slane %v3034, 4
      %v3037 = vshll.u32 %v2803, 16
      %v3039 = vrot.slane %v3037, 5
      %v3040 = vsel %vm1021, %v3035, %v3039
      %v3042 = vshrl.u32 %v2804, 16
      %v3044 = vrot.slane %v3042, 4
      %v3045 = vshll.u32 %v2804, 16
      %v3047 = vrot.slane %v3045, 5
      %v3048 = vor.u32 %v3044, %v3047
      %v3049 = vrot.slane %v3048, 4
      %v3051 = vshll.u32 %v2805, 16
      %v3053 = vrot.slane %v3051, 5
      %v3054 = vsel %vm1021, %v3049, %v3053
      %v3055 = vshrl.u32 %v2805, 16
      %v3057 = vrot.slane %v3055, 4
      %v3058 = vor.u32 %v3057, %v3053
      %v3059 = vrot.slane %v3058, 4
      %v3061 = vshll.u32 %v2806, 16
      %v3063 = vrot.slane %v3061, 5
      %v3064 = vsel %vm1021, %v3059, %v3063
      %v3066 = vshrl.u32 %v2807, 16
      %v3068 = vrot.slane %v3066, 4
      %v3069 = vshll.u32 %v2807, 16
      %v3071 = vrot.slane %v3069, 5
      %v3072 = vor.u32 %v3068, %v3071
      %v3073 = vrot.slane %v3072, 4
      %v3075 = vshll.u32 %v2808, 16
      %v3077 = vrot.slane %v3075, 5
      %v3078 = vsel %vm1021, %v3073, %v3077
      %v3079 = vshrl.u32 %v2808, 16
      %v3081 = vrot.slane %v3079, 4
      %v3082 = vor.u32 %v3081, %v3077
      %v3083 = vrot.slane %v3082, 4
      %v3085 = vshll.u32 %v2809, 16
      %v3087 = vrot.slane %v3085, 5
      %v3088 = vsel %vm1021, %v3083, %v3087
      %v3090 = vshrl.u32 %v2810, 16
      %v3092 = vrot.slane %v3090, 4
      %v3093 = vshll.u32 %v2810, 16
      %v3095 = vrot.slane %v3093, 5
      %v3096 = vor.u32 %v3092, %v3095
      %v3097 = vrot.slane %v3096, 4
      %v3099 = vshll.u32 %v2811, 16
      %v3101 = vrot.slane %v3099, 5
      %v3102 = vsel %vm1021, %v3097, %v3101
      %v3103 = vshrl.u32 %v2811, 16
      %v3105 = vrot.slane %v3103, 4
      %v3106 = vor.u32 %v3105, %v3101
      %v3107 = vrot.slane %v3106, 4
      %v3109 = vshll.u32 %v2812, 16
      %v3111 = vrot.slane %v3109, 5
      %v3112 = vsel %vm1021, %v3107, %v3111
      %v3114 = vshrl.u32 %v2813, 16
      %v3116 = vrot.slane %v3114, 4
      %v3117 = vshll.u32 %v2813, 16
      %v3119 = vrot.slane %v3117, 5
      %v3120 = vor.u32 %v3116, %v3119
      %v3121 = vrot.slane %v3120, 4
      %v3123 = vshll.u32 %v2814, 16
      %v3125 = vrot.slane %v3123, 5
      %v3126 = vsel %vm1021, %v3121, %v3125
      %v3127 = vshrl.u32 %v2814, 16
      %v3129 = vrot.slane %v3127, 4
      %v3130 = vor.u32 %v3129, %v3125
      %v3131 = vrot.slane %v3130, 4
      %v3133 = vshll.u32 %v2815, 16
      %v3135 = vrot.slane %v3133, 5
      %v3136 = vsel %vm1021, %v3131, %v3135
      %v3138 = vshrl.u32 %v2816, 16
      %v3140 = vrot.slane %v3138, 4
      %v3141 = vshll.u32 %v2816, 16
      %v3143 = vrot.slane %v3141, 5
      %v3144 = vor.u32 %v3140, %v3143
      %v3145 = vrot.slane %v3144, 4
      %v3147 = vshll.u32 %v2817, 16
      %v3149 = vrot.slane %v3147, 5
      %v3150 = vsel %vm1021, %v3145, %v3149
      %v3151 = vshrl.u32 %v2817, 16
      %v3153 = vrot.slane %v3151, 4
      %v3154 = vor.u32 %v3153, %v3149
      %v3155 = vrot.slane %v3154, 4
      %v3157 = vshll.u32 %v2818, 16
      %v3159 = vrot.slane %v3157, 5
      %v3160 = vsel %vm1021, %v3155, %v3159
      %v3162 = vshrl.u32 %v2819, 16
      %v3164 = vrot.slane %v3162, 4
      %v3165 = vshll.u32 %v2819, 16
      %v3167 = vrot.slane %v3165, 5
      %v3168 = vor.u32 %v3164, %v3167
      %v3169 = vrot.slane %v3168, 4
      %v3171 = vshll.u32 %v2820, 16
      %v3173 = vrot.slane %v3171, 5
      %v3174 = vsel %vm1021, %v3169, %v3173
      %v3175 = vshrl.u32 %v2820, 16
      %v3177 = vrot.slane %v3175, 4
      %v3178 = vor.u32 %v3177, %v3173
      %v3179 = vrot.slane %v3178, 4
      %v3181 = vshll.u32 %v2821, 16
      %v3183 = vrot.slane %v3181, 5
      %v3184 = vsel %vm1021, %v3179, %v3183
      %v3186 = vshrl.u32 %v2822, 16
      %v3188 = vrot.slane %v3186, 4
      %v3189 = vshll.u32 %v2822, 16
      %v3191 = vrot.slane %v3189, 5
      %v3192 = vor.u32 %v3188, %v3191
      %v3193 = vrot.slane %v3192, 4
      %v3195 = vshll.u32 %v2823, 16
      %v3197 = vrot.slane %v3195, 5
      %v3198 = vsel %vm1021, %v3193, %v3197
      %v3199 = vshrl.u32 %v2823, 16
      %v3201 = vrot.slane %v3199, 4
      %v3202 = vor.u32 %v3201, %v3197
      %v3203 = vrot.slane %v3202, 4
      %v3205 = vshll.u32 %v2824, 16
      %v3207 = vrot.slane %v3205, 5
      %v3208 = vsel %vm1021, %v3203, %v3207
      %s3209 = scalar_lea.vmem %s1, 32
      %v3210 = vld [vmem:[%s3209] sm:$0xf]
      %v3211 = vunpack.c.l.b16 %v2838
      %v3212 = vunpack.c.l.b16 %v2848
      %v3213 = vunpack.c.l.b16 %v2862
      %v3214 = vunpack.c.l.b16 %v2872
      %v3215 = vunpack.c.l.b16 %v2886
      %v3216 = vunpack.c.l.b16 %v2896
      %v3217 = vunpack.c.l.b16 %v2910
      %v3218 = vunpack.c.l.b16 %v2920
      %v3219 = vunpack.c.l.b16 %v2934
      %v3220 = vunpack.c.l.b16 %v2944
      %v3221 = vunpack.c.l.b16 %v2958
      %v3222 = vunpack.c.l.b16 %v2968
      %v3223 = vunpack.c.l.b16 %v2982
      %v3224 = vunpack.c.l.b16 %v2992
      %v3225 = vunpack.c.l.b16 %v3006
      %v3226 = vunpack.c.l.b16 %v3016
      %v3227 = vunpack.c.l.b16 %v3030
      %v3228 = vunpack.c.l.b16 %v3040
      %v3229 = vunpack.c.l.b16 %v3054
      %v3230 = vunpack.c.l.b16 %v3064
      %v3231 = vunpack.c.l.b16 %v3078
      %v3232 = vunpack.c.l.b16 %v3088
      %v3233 = vunpack.c.l.b16 %v3102
      %v3234 = vunpack.c.l.b16 %v3112
      %v3235 = vunpack.c.l.b16 %v3126
      %v3236 = vunpack.c.l.b16 %v3136
      %v3237 = vunpack.c.l.b16 %v3150
      %v3238 = vunpack.c.l.b16 %v3160
      %v3239 = vunpack.c.l.b16 %v3174
      %v3240 = vunpack.c.l.b16 %v3184
      %v3241 = vunpack.c.l.b16 %v3198
      %v3242 = vunpack.c.l.b16 %v3208
      %v3243 = vpack.c.b16 %v3212, %v3211
      %v3244 = vpack.c.b16 %v3214, %v3213
      %v3245 = vpack.c.b16 %v3216, %v3215
      %v3246 = vpack.c.b16 %v3218, %v3217
      %v3247 = vpack.c.b16 %v3220, %v3219
      %v3248 = vpack.c.b16 %v3222, %v3221
      %v3249 = vpack.c.b16 %v3224, %v3223
      %v3250 = vpack.c.b16 %v3226, %v3225
      %v3251 = vpack.c.b16 %v3228, %v3227
      %v3252 = vpack.c.b16 %v3230, %v3229
      %v3253 = vpack.c.b16 %v3232, %v3231
      %v3254 = vpack.c.b16 %v3234, %v3233
      %v3255 = vpack.c.b16 %v3236, %v3235
      %v3256 = vpack.c.b16 %v3238, %v3237
      %v3257 = vpack.c.b16 %v3240, %v3239
      %v3258 = vpack.c.b16 %v3242, %v3241
      %v3260 = vsel %vm1456, %v3243, 0
      %v3263 = vsel %vm1456, %v3244, 0
      %v3266 = vsel %vm1456, %v3245, 0
      %v3269 = vsel %vm1456, %v3246, 0
      %v3272 = vsel %vm1456, %v3247, 0
      %v3275 = vsel %vm1456, %v3248, 0
      %v3278 = vsel %vm1456, %v3249, 0
      %v3281 = vsel %vm1456, %v3250, 0
      %v3284 = vsel %vm1456, %v3251, 0
      %v3287 = vsel %vm1456, %v3252, 0
      %v3290 = vsel %vm1456, %v3253, 0
      %v3293 = vsel %vm1456, %v3254, 0
      %v3296 = vsel %vm1456, %v3255, 0
      %v3299 = vsel %vm1456, %v3256, 0
      %v3302 = vsel %vm1456, %v3257, 0
      %v3305 = vsel %vm1456, %v3258, 0
      %v3308 = vsel %vm1505, %v3210, 0
      %3310 = vmatprep.subr.bf16.mxu0 0
      %3311 = vmatpush1.bf16.msra.mxu0 0
      %3312 = vmatprep.subr.bf16.mxu0 0
      %3313 = vmatpush1.bf16.msra.mxu0 0
      %3314 = vmatprep.subr.bf16.mxu0 0
      %3315 = vmatpush1.bf16.msra.mxu0 0
      %3316 = vmatprep.subr.bf16.mxu0 0
      %3317 = vmatpush1.bf16.msra.mxu0 0
      %3318 = vmatprep.subr.bf16.mxu0 0
      %3319 = vmatpush1.bf16.msra.mxu0 0
      %3320 = vmatprep.subr.bf16.mxu0 0
      %3321 = vmatpush1.bf16.msra.mxu0 0
      %3322 = vmatprep.subr.bf16.mxu0 0
      %3323 = vmatpush1.bf16.msra.mxu0 0
      %3324 = vmatprep.subr.bf16.mxu0 0
      %3325 = vmatpush1.bf16.msra.mxu0 %v3308
      %3326 = vmatprep.subr.bf16.mxu0 0
      %3327 = vmatpush2.bf16.msra.mxu0 0
      %3328 = vmatprep.subr.bf16.mxu0 0
      %3329 = vmatpush2.bf16.msra.mxu0 0
      %3330 = vmatprep.subr.bf16.mxu0 0
      %3331 = vmatpush2.bf16.msra.mxu0 0
      %3332 = vmatprep.subr.bf16.mxu0 0
      %3333 = vmatpush2.bf16.msra.mxu0 0
      %3334 = vmatprep.subr.bf16.mxu0 0
      %3335 = vmatpush2.bf16.msra.mxu0 0
      %3336 = vmatprep.subr.bf16.mxu0 0
      %3337 = vmatpush2.bf16.msra.mxu0 0
      %3338 = vmatprep.subr.bf16.mxu0 0
      %3339 = vmatpush2.bf16.msra.mxu0 0
      %3340 = vmatprep.subr.bf16.mxu0 0
      %3341 = vmatpush2.bf16.msra.mxu0 0
      %3342 = vmatprep.mubr.bf16.mxu0 0
      %3343 = vmatmul.mubr.bf16.gmra.mxu0 %v3260
      %v3344 = vpop.f32.mrf.mxu0
      %v3345 = vadd.f32 0.0, %v3344
      %v3346 = vpop.f32.mrf.mxu0
      %v3347 = vpop.f32.mrf.mxu0
      %v3348 = vadd.f32 0.0, %v3347
      %v3349 = vpop.f32.mrf.mxu0
      %3350 = vmatprep.mubr.bf16.mxu0 0
      %3351 = vmatmul.mubr.bf16.gmra.mxu0 %v3263
      %v3352 = vpop.f32.mrf.mxu0
      %v3353 = vadd.f32 0.0, %v3352
      %v3354 = vpop.f32.mrf.mxu0
      %v3355 = vpop.f32.mrf.mxu0
      %v3356 = vadd.f32 0.0, %v3355
      %v3357 = vpop.f32.mrf.mxu0
      %3358 = vmatprep.mubr.bf16.mxu0 0
      %3359 = vmatmul.mubr.bf16.gmra.mxu0 %v3266
      %v3360 = vpop.f32.mrf.mxu0
      %v3361 = vadd.f32 0.0, %v3360
      %v3362 = vpop.f32.mrf.mxu0
      %v3363 = vpop.f32.mrf.mxu0
      %v3364 = vadd.f32 0.0, %v3363
      %v3365 = vpop.f32.mrf.mxu0
      %3366 = vmatprep.mubr.bf16.mxu0 0
      %3367 = vmatmul.mubr.bf16.gmra.mxu0 %v3269
      %v3368 = vpop.f32.mrf.mxu0
      %v3369 = vadd.f32 0.0, %v3368
      %v3370 = vpop.f32.mrf.mxu0
      %v3371 = vpop.f32.mrf.mxu0
      %v3372 = vadd.f32 0.0, %v3371
      %v3373 = vpop.f32.mrf.mxu0
      %3374 = vmatprep.mubr.bf16.mxu0 0
      %3375 = vmatmul.mubr.bf16.gmra.mxu0 %v3272
      %v3376 = vpop.f32.mrf.mxu0
      %v3377 = vadd.f32 0.0, %v3376
      %v3378 = vpop.f32.mrf.mxu0
      %v3379 = vpop.f32.mrf.mxu0
      %v3380 = vadd.f32 0.0, %v3379
      %v3381 = vpop.f32.mrf.mxu0
      %3382 = vmatprep.mubr.bf16.mxu0 0
      %3383 = vmatmul.mubr.bf16.gmra.mxu0 %v3275
      %v3384 = vpop.f32.mrf.mxu0
      %v3385 = vadd.f32 0.0, %v3384
      %v3386 = vpop.f32.mrf.mxu0
      %v3387 = vpop.f32.mrf.mxu0
      %v3388 = vadd.f32 0.0, %v3387
      %v3389 = vpop.f32.mrf.mxu0
      %3390 = vmatprep.mubr.bf16.mxu0 0
      %3391 = vmatmul.mubr.bf16.gmra.mxu0 %v3278
      %v3392 = vpop.f32.mrf.mxu0
      %v3393 = vadd.f32 0.0, %v3392
      %v3394 = vpop.f32.mrf.mxu0
      %v3395 = vpop.f32.mrf.mxu0
      %v3396 = vadd.f32 0.0, %v3395
      %v3397 = vpop.f32.mrf.mxu0
      %3398 = vmatprep.mubr.bf16.mxu0 0
      %3399 = vmatmul.mubr.bf16.gmra.mxu0 %v3281
      %v3400 = vpop.f32.mrf.mxu0
      %v3401 = vadd.f32 0.0, %v3400
      %v3402 = vpop.f32.mrf.mxu0
      %v3403 = vpop.f32.mrf.mxu0
      %v3404 = vadd.f32 0.0, %v3403
      %v3405 = vpop.f32.mrf.mxu0
      %3406 = vmatprep.mubr.bf16.mxu0 0
      %3407 = vmatmul.mubr.bf16.gmra.mxu0 %v3284
      %v3408 = vpop.f32.mrf.mxu0
      %v3409 = vadd.f32 0.0, %v3408
      %v3410 = vpop.f32.mrf.mxu0
      %v3411 = vpop.f32.mrf.mxu0
      %v3412 = vadd.f32 0.0, %v3411
      %v3413 = vpop.f32.mrf.mxu0
      %3414 = vmatprep.mubr.bf16.mxu0 0
      %3415 = vmatmul.mubr.bf16.gmra.mxu0 %v3287
      %v3416 = vpop.f32.mrf.mxu0
      %v3417 = vadd.f32 0.0, %v3416
      %v3418 = vpop.f32.mrf.mxu0
      %v3419 = vpop.f32.mrf.mxu0
      %v3420 = vadd.f32 0.0, %v3419
      %v3421 = vpop.f32.mrf.mxu0
      %3422 = vmatprep.mubr.bf16.mxu0 0
      %3423 = vmatmul.mubr.bf16.gmra.mxu0 %v3290
      %v3424 = vpop.f32.mrf.mxu0
      %v3425 = vadd.f32 0.0, %v3424
      %v3426 = vpop.f32.mrf.mxu0
      %v3427 = vpop.f32.mrf.mxu0
      %v3428 = vadd.f32 0.0, %v3427
      %v3429 = vpop.f32.mrf.mxu0
      %3430 = vmatprep.mubr.bf16.mxu0 0
      %3431 = vmatmul.mubr.bf16.gmra.mxu0 %v3293
      %v3432 = vpop.f32.mrf.mxu0
      %v3433 = vadd.f32 0.0, %v3432
      %v3434 = vpop.f32.mrf.mxu0
      %v3435 = vpop.f32.mrf.mxu0
      %v3436 = vadd.f32 0.0, %v3435
      %v3437 = vpop.f32.mrf.mxu0
      %3438 = vmatprep.mubr.bf16.mxu0 0
      %3439 = vmatmul.mubr.bf16.gmra.mxu0 %v3296
      %v3440 = vpop.f32.mrf.mxu0
      %v3441 = vadd.f32 0.0, %v3440
      %v3442 = vpop.f32.mrf.mxu0
      %v3443 = vpop.f32.mrf.mxu0
      %v3444 = vadd.f32 0.0, %v3443
      %v3445 = vpop.f32.mrf.mxu0
      %3446 = vmatprep.mubr.bf16.mxu0 0
      %3447 = vmatmul.mubr.bf16.gmra.mxu0 %v3299
      %v3448 = vpop.f32.mrf.mxu0
      %v3449 = vadd.f32 0.0, %v3448
      %v3450 = vpop.f32.mrf.mxu0
      %v3451 = vpop.f32.mrf.mxu0
      %v3452 = vadd.f32 0.0, %v3451
      %v3453 = vpop.f32.mrf.mxu0
      %3454 = vmatprep.mubr.bf16.mxu0 0
      %3455 = vmatmul.mubr.bf16.gmra.mxu0 %v3302
      %v3456 = vpop.f32.mrf.mxu0
      %v3457 = vadd.f32 0.0, %v3456
      %v3458 = vpop.f32.mrf.mxu0
      %v3459 = vpop.f32.mrf.mxu0
      %v3460 = vadd.f32 0.0, %v3459
      %v3461 = vpop.f32.mrf.mxu0
      %3462 = vmatprep.mubr.bf16.mxu0 0
      %3463 = vmatmul.mubr.bf16.gmra.mxu0 %v3305
      %v3464 = vpop.f32.mrf.mxu0
      %v3465 = vadd.f32 0.0, %v3464
      %v3466 = vpop.f32.mrf.mxu0
      %v3467 = vpop.f32.mrf.mxu0
      %v3468 = vadd.f32 0.0, %v3467
      %v3469 = vpop.f32.mrf.mxu0
      %3470 = vdwg.mxu0
      %v3471 = vadd.f32 %v2745, %v3345
      %v3472 = vadd.f32 %v2746, %v3348
      %v3473 = vadd.f32 %v2747, %v3353
      %v3474 = vadd.f32 %v2748, %v3356
      %v3475 = vadd.f32 %v2749, %v3361
      %v3476 = vadd.f32 %v2750, %v3364
      %v3477 = vadd.f32 %v2751, %v3369
      %v3478 = vadd.f32 %v2752, %v3372
      %v3479 = vadd.f32 %v2753, %v3377
      %v3480 = vadd.f32 %v2754, %v3380
      %v3481 = vadd.f32 %v2755, %v3385
      %v3482 = vadd.f32 %v2756, %v3388
      %v3483 = vadd.f32 %v2757, %v3393
      %v3484 = vadd.f32 %v2758, %v3396
      %v3485 = vadd.f32 %v2759, %v3401
      %v3486 = vadd.f32 %v2760, %v3404
      %v3487 = vadd.f32 %v2761, %v3409
      %v3488 = vadd.f32 %v2762, %v3412
      %v3489 = vadd.f32 %v2763, %v3417
      %v3490 = vadd.f32 %v2764, %v3420
      %v3491 = vadd.f32 %v2765, %v3425
      %v3492 = vadd.f32 %v2766, %v3428
      %v3493 = vadd.f32 %v2767, %v3433
      %v3494 = vadd.f32 %v2768, %v3436
      %v3495 = vadd.f32 %v2769, %v3441
      %v3496 = vadd.f32 %v2770, %v3444
      %v3497 = vadd.f32 %v2771, %v3449
      %v3498 = vadd.f32 %v2772, %v3452
      %v3499 = vadd.f32 %v2773, %v3457
      %v3500 = vadd.f32 %v2774, %v3460
      %v3501 = vadd.f32 %v2775, %v3465
      %v3502 = vadd.f32 %v2776, %v3468
      %v3503 = vld [vmem:[%s852] sm:$0xe]
      %v3504 = vld [vmem:[%s852 + $0xc] sm:$0xe]
      %v3505 = vld [vmem:[%s852 + $0x18] sm:$0xe]
      %v3506 = vld [vmem:[%s852 + $0x24] sm:$0xe]
      %v3507 = vld [vmem:[%s852 + $0x30] sm:$0xe]
      %v3508 = vld [vmem:[%s852 + $0x3c] sm:$0xe]
      %v3509 = vld [vmem:[%s852 + $0x48] sm:$0xe]
      %v3510 = vld [vmem:[%s852 + $0x54] sm:$0xe]
      %v3511 = vld [vmem:[%s852 + $0x60] sm:$0xe]
      %v3512 = vld [vmem:[%s852 + $0x6c] sm:$0xe]
      %v3513 = vld [vmem:[%s852 + $0x78] sm:$0xe]
      %v3514 = vld [vmem:[%s852 + $0x84] sm:$0xe]
      %v3515 = vld [vmem:[%s852 + $0x90] sm:$0xe]
      %v3516 = vld [vmem:[%s852 + $0x9c] sm:$0xe]
      %v3517 = vld [vmem:[%s852 + $0xa8] sm:$0xe]
      %v3518 = vld [vmem:[%s852 + $0xb4] sm:$0xe]
      %v3567 = vrot.slane %v3503, 5
      %v3568 = vrot.slane %v3567, 4
      %v3569 = vrot.slane %v2778, 5
      %v3570 = vsel %vm2012, %v3568, %v3569
      %v3571 = vrot.slane %v3569, 4
      %v3572 = vrot.slane %v2779, 5
      %v3573 = vsel %vm2012, %v3571, %v3572
      %v3574 = vrot.slane %v3504, 5
      %v3575 = vrot.slane %v3574, 4
      %v3576 = vrot.slane %v2781, 5
      %v3577 = vsel %vm2012, %v3575, %v3576
      %v3578 = vrot.slane %v3576, 4
      %v3579 = vrot.slane %v2782, 5
      %v3580 = vsel %vm2012, %v3578, %v3579
      %v3581 = vrot.slane %v3505, 5
      %v3582 = vrot.slane %v3581, 4
      %v3583 = vrot.slane %v2784, 5
      %v3584 = vsel %vm2012, %v3582, %v3583
      %v3585 = vrot.slane %v3583, 4
      %v3586 = vrot.slane %v2785, 5
      %v3587 = vsel %vm2012, %v3585, %v3586
      %v3588 = vrot.slane %v3506, 5
      %v3589 = vrot.slane %v3588, 4
      %v3590 = vrot.slane %v2787, 5
      %v3591 = vsel %vm2012, %v3589, %v3590
      %v3592 = vrot.slane %v3590, 4
      %v3593 = vrot.slane %v2788, 5
      %v3594 = vsel %vm2012, %v3592, %v3593
      %v3595 = vrot.slane %v3507, 5
      %v3596 = vrot.slane %v3595, 4
      %v3597 = vrot.slane %v2790, 5
      %v3598 = vsel %vm2012, %v3596, %v3597
      %v3599 = vrot.slane %v3597, 4
      %v3600 = vrot.slane %v2791, 5
      %v3601 = vsel %vm2012, %v3599, %v3600
      %v3602 = vrot.slane %v3508, 5
      %v3603 = vrot.slane %v3602, 4
      %v3604 = vrot.slane %v2793, 5
      %v3605 = vsel %vm2012, %v3603, %v3604
      %v3606 = vrot.slane %v3604, 4
      %v3607 = vrot.slane %v2794, 5
      %v3608 = vsel %vm2012, %v3606, %v3607
      %v3609 = vrot.slane %v3509, 5
      %v3610 = vrot.slane %v3609, 4
      %v3611 = vrot.slane %v2796, 5
      %v3612 = vsel %vm2012, %v3610, %v3611
      %v3613 = vrot.slane %v3611, 4
      %v3614 = vrot.slane %v2797, 5
      %v3615 = vsel %vm2012, %v3613, %v3614
      %v3616 = vrot.slane %v3510, 5
      %v3617 = vrot.slane %v3616, 4
      %v3618 = vrot.slane %v2799, 5
      %v3619 = vsel %vm2012, %v3617, %v3618
      %v3620 = vrot.slane %v3618, 4
      %v3621 = vrot.slane %v2800, 5
      %v3622 = vsel %vm2012, %v3620, %v3621
      %v3623 = vrot.slane %v3511, 5
      %v3624 = vrot.slane %v3623, 4
      %v3625 = vrot.slane %v2802, 5
      %v3626 = vsel %vm2012, %v3624, %v3625
      %v3627 = vrot.slane %v3625, 4
      %v3628 = vrot.slane %v2803, 5
      %v3629 = vsel %vm2012, %v3627, %v3628
      %v3630 = vrot.slane %v3512, 5
      %v3631 = vrot.slane %v3630, 4
      %v3632 = vrot.slane %v2805, 5
      %v3633 = vsel %vm2012, %v3631, %v3632
      %v3634 = vrot.slane %v3632, 4
      %v3635 = vrot.slane %v2806, 5
      %v3636 = vsel %vm2012, %v3634, %v3635
      %v3637 = vrot.slane %v3513, 5
      %v3638 = vrot.slane %v3637, 4
      %v3639 = vrot.slane %v2808, 5
      %v3640 = vsel %vm2012, %v3638, %v3639
      %v3641 = vrot.slane %v3639, 4
      %v3642 = vrot.slane %v2809, 5
      %v3643 = vsel %vm2012, %v3641, %v3642
      %v3644 = vrot.slane %v3514, 5
      %v3645 = vrot.slane %v3644, 4
      %v3646 = vrot.slane %v2811, 5
      %v3647 = vsel %vm2012, %v3645, %v3646
      %v3648 = vrot.slane %v3646, 4
      %v3649 = vrot.slane %v2812, 5
      %v3650 = vsel %vm2012, %v3648, %v3649
      %v3651 = vrot.slane %v3515, 5
      %v3652 = vrot.slane %v3651, 4
      %v3653 = vrot.slane %v2814, 5
      %v3654 = vsel %vm2012, %v3652, %v3653
      %v3655 = vrot.slane %v3653, 4
      %v3656 = vrot.slane %v2815, 5
      %v3657 = vsel %vm2012, %v3655, %v3656
      %v3658 = vrot.slane %v3516, 5
      %v3659 = vrot.slane %v3658, 4
      %v3660 = vrot.slane %v2817, 5
      %v3661 = vsel %vm2012, %v3659, %v3660
      %v3662 = vrot.slane %v3660, 4
      %v3663 = vrot.slane %v2818, 5
      %v3664 = vsel %vm2012, %v3662, %v3663
      %v3665 = vrot.slane %v3517, 5
      %v3666 = vrot.slane %v3665, 4
      %v3667 = vrot.slane %v2820, 5
      %v3668 = vsel %vm2012, %v3666, %v3667
      %v3669 = vrot.slane %v3667, 4
      %v3670 = vrot.slane %v2821, 5
      %v3671 = vsel %vm2012, %v3669, %v3670
      %v3672 = vrot.slane %v3518, 5
      %v3673 = vrot.slane %v3672, 4
      %v3674 = vrot.slane %v2823, 5
      %v3675 = vsel %vm2012, %v3673, %v3674
      %v3676 = vrot.slane %v3674, 4
      %v3677 = vrot.slane %v2824, 5
      %v3678 = vsel %vm2012, %v3676, %v3677
      %s3679 = scalar_lea.vmem %s1, 40
      %v3680 = vld [vmem:[%s3679] sm:$0xf]
      %v3681 = vunpack.c.l.b16 %v3570
      %v3682 = vunpack.c.l.b16 %v3573
      %v3683 = vunpack.c.l.b16 %v3577
      %v3684 = vunpack.c.l.b16 %v3580
      %v3685 = vunpack.c.l.b16 %v3584
      %v3686 = vunpack.c.l.b16 %v3587
      %v3687 = vunpack.c.l.b16 %v3591
      %v3688 = vunpack.c.l.b16 %v3594
      %v3689 = vunpack.c.l.b16 %v3598
      %v3690 = vunpack.c.l.b16 %v3601
      %v3691 = vunpack.c.l.b16 %v3605
      %v3692 = vunpack.c.l.b16 %v3608
      %v3693 = vunpack.c.l.b16 %v3612
      %v3694 = vunpack.c.l.b16 %v3615
      %v3695 = vunpack.c.l.b16 %v3619
      %v3696 = vunpack.c.l.b16 %v3622
      %v3697 = vunpack.c.l.b16 %v3626
      %v3698 = vunpack.c.l.b16 %v3629
      %v3699 = vunpack.c.l.b16 %v3633
      %v3700 = vunpack.c.l.b16 %v3636
      %v3701 = vunpack.c.l.b16 %v3640
      %v3702 = vunpack.c.l.b16 %v3643
      %v3703 = vunpack.c.l.b16 %v3647
      %v3704 = vunpack.c.l.b16 %v3650
      %v3705 = vunpack.c.l.b16 %v3654
      %v3706 = vunpack.c.l.b16 %v3657
      %v3707 = vunpack.c.l.b16 %v3661
      %v3708 = vunpack.c.l.b16 %v3664
      %v3709 = vunpack.c.l.b16 %v3668
      %v3710 = vunpack.c.l.b16 %v3671
      %v3711 = vunpack.c.l.b16 %v3675
      %v3712 = vunpack.c.l.b16 %v3678
      %v3713 = vpack.c.b16 %v3682, %v3681
      %v3714 = vpack.c.b16 %v3684, %v3683
      %v3715 = vpack.c.b16 %v3686, %v3685
      %v3716 = vpack.c.b16 %v3688, %v3687
      %v3717 = vpack.c.b16 %v3690, %v3689
      %v3718 = vpack.c.b16 %v3692, %v3691
      %v3719 = vpack.c.b16 %v3694, %v3693
      %v3720 = vpack.c.b16 %v3696, %v3695
      %v3721 = vpack.c.b16 %v3698, %v3697
      %v3722 = vpack.c.b16 %v3700, %v3699
      %v3723 = vpack.c.b16 %v3702, %v3701
      %v3724 = vpack.c.b16 %v3704, %v3703
      %v3725 = vpack.c.b16 %v3706, %v3705
      %v3726 = vpack.c.b16 %v3708, %v3707
      %v3727 = vpack.c.b16 %v3710, %v3709
      %v3728 = vpack.c.b16 %v3712, %v3711
      %v3730 = vsel %vm1456, %v3713, 0
      %v3733 = vsel %vm1456, %v3714, 0
      %v3736 = vsel %vm1456, %v3715, 0
      %v3739 = vsel %vm1456, %v3716, 0
      %v3742 = vsel %vm1456, %v3717, 0
      %v3745 = vsel %vm1456, %v3718, 0
      %v3748 = vsel %vm1456, %v3719, 0
      %v3751 = vsel %vm1456, %v3720, 0
      %v3754 = vsel %vm1456, %v3721, 0
      %v3757 = vsel %vm1456, %v3722, 0
      %v3760 = vsel %vm1456, %v3723, 0
      %v3763 = vsel %vm1456, %v3724, 0
      %v3766 = vsel %vm1456, %v3725, 0
      %v3769 = vsel %vm1456, %v3726, 0
      %v3772 = vsel %vm1456, %v3727, 0
      %v3775 = vsel %vm1456, %v3728, 0
      %v3778 = vsel %vm1505, %v3680, 0
      %3780 = vmatprep.subr.bf16.mxu0 0
      %3781 = vmatpush1.bf16.msra.mxu0 0
      %3782 = vmatprep.subr.bf16.mxu0 0
      %3783 = vmatpush1.bf16.msra.mxu0 0
      %3784 = vmatprep.subr.bf16.mxu0 0
      %3785 = vmatpush1.bf16.msra.mxu0 0
      %3786 = vmatprep.subr.bf16.mxu0 0
      %3787 = vmatpush1.bf16.msra.mxu0 0
      %3788 = vmatprep.subr.bf16.mxu0 0
      %3789 = vmatpush1.bf16.msra.mxu0 0
      %3790 = vmatprep.subr.bf16.mxu0 0
      %3791 = vmatpush1.bf16.msra.mxu0 0
      %3792 = vmatprep.subr.bf16.mxu0 0
      %3793 = vmatpush1.bf16.msra.mxu0 0
      %3794 = vmatprep.subr.bf16.mxu0 0
      %3795 = vmatpush1.bf16.msra.mxu0 %v3778
      %3796 = vmatprep.subr.bf16.mxu0 0
      %3797 = vmatpush2.bf16.msra.mxu0 0
      %3798 = vmatprep.subr.bf16.mxu0 0
      %3799 = vmatpush2.bf16.msra.mxu0 0
      %3800 = vmatprep.subr.bf16.mxu0 0
      %3801 = vmatpush2.bf16.msra.mxu0 0
      %3802 = vmatprep.subr.bf16.mxu0 0
      %3803 = vmatpush2.bf16.msra.mxu0 0
      %3804 = vmatprep.subr.bf16.mxu0 0
      %3805 = vmatpush2.bf16.msra.mxu0 0
      %3806 = vmatprep.subr.bf16.mxu0 0
      %3807 = vmatpush2.bf16.msra.mxu0 0
      %3808 = vmatprep.subr.bf16.mxu0 0
      %3809 = vmatpush2.bf16.msra.mxu0 0
      %3810 = vmatprep.subr.bf16.mxu0 0
      %3811 = vmatpush2.bf16.msra.mxu0 0
      %3812 = vmatprep.mubr.bf16.mxu0 0
      %3813 = vmatmul.mubr.bf16.gmra.mxu0 %v3730
      %v3814 = vpop.f32.mrf.mxu0
      %v3815 = vadd.f32 0.0, %v3814
      %v3816 = vpop.f32.mrf.mxu0
      %v3817 = vpop.f32.mrf.mxu0
      %v3818 = vadd.f32 0.0, %v3817
      %v3819 = vpop.f32.mrf.mxu0
      %3820 = vmatprep.mubr.bf16.mxu0 0
      %3821 = vmatmul.mubr.bf16.gmra.mxu0 %v3733
      %v3822 = vpop.f32.mrf.mxu0
      %v3823 = vadd.f32 0.0, %v3822
      %v3824 = vpop.f32.mrf.mxu0
      %v3825 = vpop.f32.mrf.mxu0
      %v3826 = vadd.f32 0.0, %v3825
      %v3827 = vpop.f32.mrf.mxu0
      %3828 = vmatprep.mubr.bf16.mxu0 0
      %3829 = vmatmul.mubr.bf16.gmra.mxu0 %v3736
      %v3830 = vpop.f32.mrf.mxu0
      %v3831 = vadd.f32 0.0, %v3830
      %v3832 = vpop.f32.mrf.mxu0
      %v3833 = vpop.f32.mrf.mxu0
      %v3834 = vadd.f32 0.0, %v3833
      %v3835 = vpop.f32.mrf.mxu0
      %3836 = vmatprep.mubr.bf16.mxu0 0
      %3837 = vmatmul.mubr.bf16.gmra.mxu0 %v3739
      %v3838 = vpop.f32.mrf.mxu0
      %v3839 = vadd.f32 0.0, %v3838
      %v3840 = vpop.f32.mrf.mxu0
      %v3841 = vpop.f32.mrf.mxu0
      %v3842 = vadd.f32 0.0, %v3841
      %v3843 = vpop.f32.mrf.mxu0
      %3844 = vmatprep.mubr.bf16.mxu0 0
      %3845 = vmatmul.mubr.bf16.gmra.mxu0 %v3742
      %v3846 = vpop.f32.mrf.mxu0
      %v3847 = vadd.f32 0.0, %v3846
      %v3848 = vpop.f32.mrf.mxu0
      %v3849 = vpop.f32.mrf.mxu0
      %v3850 = vadd.f32 0.0, %v3849
      %v3851 = vpop.f32.mrf.mxu0
      %3852 = vmatprep.mubr.bf16.mxu0 0
      %3853 = vmatmul.mubr.bf16.gmra.mxu0 %v3745
      %v3854 = vpop.f32.mrf.mxu0
      %v3855 = vadd.f32 0.0, %v3854
      %v3856 = vpop.f32.mrf.mxu0
      %v3857 = vpop.f32.mrf.mxu0
      %v3858 = vadd.f32 0.0, %v3857
      %v3859 = vpop.f32.mrf.mxu0
      %3860 = vmatprep.mubr.bf16.mxu0 0
      %3861 = vmatmul.mubr.bf16.gmra.mxu0 %v3748
      %v3862 = vpop.f32.mrf.mxu0
      %v3863 = vadd.f32 0.0, %v3862
      %v3864 = vpop.f32.mrf.mxu0
      %v3865 = vpop.f32.mrf.mxu0
      %v3866 = vadd.f32 0.0, %v3865
      %v3867 = vpop.f32.mrf.mxu0
      %3868 = vmatprep.mubr.bf16.mxu0 0
      %3869 = vmatmul.mubr.bf16.gmra.mxu0 %v3751
      %v3870 = vpop.f32.mrf.mxu0
      %v3871 = vadd.f32 0.0, %v3870
      %v3872 = vpop.f32.mrf.mxu0
      %v3873 = vpop.f32.mrf.mxu0
      %v3874 = vadd.f32 0.0, %v3873
      %v3875 = vpop.f32.mrf.mxu0
      %3876 = vmatprep.mubr.bf16.mxu0 0
      %3877 = vmatmul.mubr.bf16.gmra.mxu0 %v3754
      %v3878 = vpop.f32.mrf.mxu0
      %v3879 = vadd.f32 0.0, %v3878
      %v3880 = vpop.f32.mrf.mxu0
      %v3881 = vpop.f32.mrf.mxu0
      %v3882 = vadd.f32 0.0, %v3881
      %v3883 = vpop.f32.mrf.mxu0
      %3884 = vmatprep.mubr.bf16.mxu0 0
      %3885 = vmatmul.mubr.bf16.gmra.mxu0 %v3757
      %v3886 = vpop.f32.mrf.mxu0
      %v3887 = vadd.f32 0.0, %v3886
      %v3888 = vpop.f32.mrf.mxu0
      %v3889 = vpop.f32.mrf.mxu0
      %v3890 = vadd.f32 0.0, %v3889
      %v3891 = vpop.f32.mrf.mxu0
      %3892 = vmatprep.mubr.bf16.mxu0 0
      %3893 = vmatmul.mubr.bf16.gmra.mxu0 %v3760
      %v3894 = vpop.f32.mrf.mxu0
      %v3895 = vadd.f32 0.0, %v3894
      %v3896 = vpop.f32.mrf.mxu0
      %v3897 = vpop.f32.mrf.mxu0
      %v3898 = vadd.f32 0.0, %v3897
      %v3899 = vpop.f32.mrf.mxu0
      %3900 = vmatprep.mubr.bf16.mxu0 0
      %3901 = vmatmul.mubr.bf16.gmra.mxu0 %v3763
      %v3902 = vpop.f32.mrf.mxu0
      %v3903 = vadd.f32 0.0, %v3902
      %v3904 = vpop.f32.mrf.mxu0
      %v3905 = vpop.f32.mrf.mxu0
      %v3906 = vadd.f32 0.0, %v3905
      %v3907 = vpop.f32.mrf.mxu0
      %3908 = vmatprep.mubr.bf16.mxu0 0
      %3909 = vmatmul.mubr.bf16.gmra.mxu0 %v3766
      %v3910 = vpop.f32.mrf.mxu0
      %v3911 = vadd.f32 0.0, %v3910
      %v3912 = vpop.f32.mrf.mxu0
      %v3913 = vpop.f32.mrf.mxu0
      %v3914 = vadd.f32 0.0, %v3913
      %v3915 = vpop.f32.mrf.mxu0
      %3916 = vmatprep.mubr.bf16.mxu0 0
      %3917 = vmatmul.mubr.bf16.gmra.mxu0 %v3769
      %v3918 = vpop.f32.mrf.mxu0
      %v3919 = vadd.f32 0.0, %v3918
      %v3920 = vpop.f32.mrf.mxu0
      %v3921 = vpop.f32.mrf.mxu0
      %v3922 = vadd.f32 0.0, %v3921
      %v3923 = vpop.f32.mrf.mxu0
      %3924 = vmatprep.mubr.bf16.mxu0 0
      %3925 = vmatmul.mubr.bf16.gmra.mxu0 %v3772
      %v3926 = vpop.f32.mrf.mxu0
      %v3927 = vadd.f32 0.0, %v3926
      %v3928 = vpop.f32.mrf.mxu0
      %v3929 = vpop.f32.mrf.mxu0
      %v3930 = vadd.f32 0.0, %v3929
      %v3931 = vpop.f32.mrf.mxu0
      %3932 = vmatprep.mubr.bf16.mxu0 0
      %3933 = vmatmul.mubr.bf16.gmra.mxu0 %v3775
      %v3934 = vpop.f32.mrf.mxu0
      %v3935 = vadd.f32 0.0, %v3934
      %v3936 = vpop.f32.mrf.mxu0
      %v3937 = vpop.f32.mrf.mxu0
      %v3938 = vadd.f32 0.0, %v3937
      %v3939 = vpop.f32.mrf.mxu0
      %3940 = vdwg.mxu0
      %v3941 = vadd.f32 %v3471, %v3815
      %v3942 = vadd.f32 %v3472, %v3818
      %v3943 = vadd.f32 %v3473, %v3823
      %v3944 = vadd.f32 %v3474, %v3826
      %v3945 = vadd.f32 %v3475, %v3831
      %v3946 = vadd.f32 %v3476, %v3834
      %v3947 = vadd.f32 %v3477, %v3839
      %v3948 = vadd.f32 %v3478, %v3842
      %v3949 = vadd.f32 %v3479, %v3847
      %v3950 = vadd.f32 %v3480, %v3850
      %v3951 = vadd.f32 %v3481, %v3855
      %v3952 = vadd.f32 %v3482, %v3858
      %v3953 = vadd.f32 %v3483, %v3863
      %v3954 = vadd.f32 %v3484, %v3866
      %v3955 = vadd.f32 %v3485, %v3871
      %v3956 = vadd.f32 %v3486, %v3874
      %v3957 = vadd.f32 %v3487, %v3879
      %v3958 = vadd.f32 %v3488, %v3882
      %v3959 = vadd.f32 %v3489, %v3887
      %v3960 = vadd.f32 %v3490, %v3890
      %v3961 = vadd.f32 %v3491, %v3895
      %v3962 = vadd.f32 %v3492, %v3898
      %v3963 = vadd.f32 %v3493, %v3903
      %v3964 = vadd.f32 %v3494, %v3906
      %v3965 = vadd.f32 %v3495, %v3911
      %v3966 = vadd.f32 %v3496, %v3914
      %v3967 = vadd.f32 %v3497, %v3919
      %v3968 = vadd.f32 %v3498, %v3922
      %v3969 = vadd.f32 %v3499, %v3927
      %v3970 = vadd.f32 %v3500, %v3930
      %v3971 = vadd.f32 %v3501, %v3935
      %v3972 = vadd.f32 %v3502, %v3938
      %s3973 = scalar_lea.vmem [#allocation2], 24
      %v3974 = vld [vmem:[%s3973] sm:$0xf]
      %v3975 = vld [vmem:[%s3973 + $0x4] sm:$0xf]
      %v3976 = vld [vmem:[%s3973 + $0xc] sm:$0xf]
      %v3977 = vld [vmem:[%s3973 + $0x10] sm:$0xf]
      %v3978 = vld [vmem:[%s3973 + $0x18] sm:$0xf]
      %v3979 = vld [vmem:[%s3973 + $0x1c] sm:$0xf]
      %v3980 = vld [vmem:[%s3973 + $0x24] sm:$0xf]
      %v3981 = vld [vmem:[%s3973 + $0x28] sm:$0xf]
      %v3982 = vld [vmem:[%s3973 + $0x30] sm:$0xf]
      %v3983 = vld [vmem:[%s3973 + $0x34] sm:$0xf]
      %v3984 = vld [vmem:[%s3973 + $0x3c] sm:$0xf]
      %v3985 = vld [vmem:[%s3973 + $0x40] sm:$0xf]
      %v3986 = vld [vmem:[%s3973 + $0x48] sm:$0xf]
      %v3987 = vld [vmem:[%s3973 + $0x4c] sm:$0xf]
      %v3988 = vld [vmem:[%s3973 + $0x54] sm:$0xf]
      %v3989 = vld [vmem:[%s3973 + $0x58] sm:$0xf]
      %v3990 = vld [vmem:[%s3973 + $0x60] sm:$0xf]
      %v3991 = vld [vmem:[%s3973 + $0x64] sm:$0xf]
      %v3992 = vld [vmem:[%s3973 + $0x6c] sm:$0xf]
      %v3993 = vld [vmem:[%s3973 + $0x70] sm:$0xf]
      %v3994 = vld [vmem:[%s3973 + $0x78] sm:$0xf]
      %v3995 = vld [vmem:[%s3973 + $0x7c] sm:$0xf]
      %v3996 = vld [vmem:[%s3973 + $0x84] sm:$0xf]
      %v3997 = vld [vmem:[%s3973 + $0x88] sm:$0xf]
      %v3998 = vld [vmem:[%s3973 + $0x90] sm:$0xf]
      %v3999 = vld [vmem:[%s3973 + $0x94] sm:$0xf]
      %v4000 = vld [vmem:[%s3973 + $0x9c] sm:$0xf]
      %v4001 = vld [vmem:[%s3973 + $0xa0] sm:$0xf]
      %v4002 = vld [vmem:[%s3973 + $0xa8] sm:$0xf]
      %v4003 = vld [vmem:[%s3973 + $0xac] sm:$0xf]
      %v4004 = vld [vmem:[%s3973 + $0xb4] sm:$0xf]
      %v4005 = vld [vmem:[%s3973 + $0xb8] sm:$0xf]
      %s4006 = scalar_lea.vmem %s1, 48
      %v4007 = vld [vmem:[%s4006] sm:$0xf]
      %v4040 = vunpack.c.l.b16 %v3974
      %v4041 = vunpack.c.l.b16 %v3975
      %v4042 = vunpack.c.l.b16 %v3976
      %v4043 = vunpack.c.l.b16 %v3977
      %v4044 = vunpack.c.l.b16 %v3978
      %v4045 = vunpack.c.l.b16 %v3979
      %v4046 = vunpack.c.l.b16 %v3980
      %v4047 = vunpack.c.l.b16 %v3981
      %v4048 = vunpack.c.l.b16 %v3982
      %v4049 = vunpack.c.l.b16 %v3983
      %v4050 = vunpack.c.l.b16 %v3984
      %v4051 = vunpack.c.l.b16 %v3985
      %v4052 = vunpack.c.l.b16 %v3986
      %v4053 = vunpack.c.l.b16 %v3987
      %v4054 = vunpack.c.l.b16 %v3988
      %v4055 = vunpack.c.l.b16 %v3989
      %v4056 = vunpack.c.l.b16 %v3990
      %v4057 = vunpack.c.l.b16 %v3991
      %v4058 = vunpack.c.l.b16 %v3992
      %v4059 = vunpack.c.l.b16 %v3993
      %v4060 = vunpack.c.l.b16 %v3994
      %v4061 = vunpack.c.l.b16 %v3995
      %v4062 = vunpack.c.l.b16 %v3996
      %v4063 = vunpack.c.l.b16 %v3997
      %v4064 = vunpack.c.l.b16 %v3998
      %v4065 = vunpack.c.l.b16 %v3999
      %v4066 = vunpack.c.l.b16 %v4000
      %v4067 = vunpack.c.l.b16 %v4001
      %v4068 = vunpack.c.l.b16 %v4002
      %v4069 = vunpack.c.l.b16 %v4003
      %v4070 = vunpack.c.l.b16 %v4004
      %v4071 = vunpack.c.l.b16 %v4005
      %v4072 = vpack.c.b16 %v4041, %v4040
      %v4073 = vpack.c.b16 %v4043, %v4042
      %v4074 = vpack.c.b16 %v4045, %v4044
      %v4075 = vpack.c.b16 %v4047, %v4046
      %v4076 = vpack.c.b16 %v4049, %v4048
      %v4077 = vpack.c.b16 %v4051, %v4050
      %v4078 = vpack.c.b16 %v4053, %v4052
      %v4079 = vpack.c.b16 %v4055, %v4054
      %v4080 = vpack.c.b16 %v4057, %v4056
      %v4081 = vpack.c.b16 %v4059, %v4058
      %v4082 = vpack.c.b16 %v4061, %v4060
      %v4083 = vpack.c.b16 %v4063, %v4062
      %v4084 = vpack.c.b16 %v4065, %v4064
      %v4085 = vpack.c.b16 %v4067, %v4066
      %v4086 = vpack.c.b16 %v4069, %v4068
      %v4087 = vpack.c.b16 %v4071, %v4070
      %v4089 = vsel %vm1456, %v4072, 0
      %v4092 = vsel %vm1456, %v4073, 0
      %v4095 = vsel %vm1456, %v4074, 0
      %v4098 = vsel %vm1456, %v4075, 0
      %v4101 = vsel %vm1456, %v4076, 0
      %v4104 = vsel %vm1456, %v4077, 0
      %v4107 = vsel %vm1456, %v4078, 0
      %v4110 = vsel %vm1456, %v4079, 0
      %v4113 = vsel %vm1456, %v4080, 0
      %v4116 = vsel %vm1456, %v4081, 0
      %v4119 = vsel %vm1456, %v4082, 0
      %v4122 = vsel %vm1456, %v4083, 0
      %v4125 = vsel %vm1456, %v4084, 0
      %v4128 = vsel %vm1456, %v4085, 0
      %v4131 = vsel %vm1456, %v4086, 0
      %v4134 = vsel %vm1456, %v4087, 0
      %v4137 = vsel %vm1505, %v4007, 0
      %4139 = vmatprep.subr.bf16.mxu0 0
      %4140 = vmatpush1.bf16.msra.mxu0 0
      %4141 = vmatprep.subr.bf16.mxu0 0
      %4142 = vmatpush1.bf16.msra.mxu0 0
      %4143 = vmatprep.subr.bf16.mxu0 0
      %4144 = vmatpush1.bf16.msra.mxu0 0
      %4145 = vmatprep.subr.bf16.mxu0 0
      %4146 = vmatpush1.bf16.msra.mxu0 0
      %4147 = vmatprep.subr.bf16.mxu0 0
      %4148 = vmatpush1.bf16.msra.mxu0 0
      %4149 = vmatprep.subr.bf16.mxu0 0
      %4150 = vmatpush1.bf16.msra.mxu0 0
      %4151 = vmatprep.subr.bf16.mxu0 0
      %4152 = vmatpush1.bf16.msra.mxu0 0
      %4153 = vmatprep.subr.bf16.mxu0 0
      %4154 = vmatpush1.bf16.msra.mxu0 %v4137
      %4155 = vmatprep.subr.bf16.mxu0 0
      %4156 = vmatpush2.bf16.msra.mxu0 0
      %4157 = vmatprep.subr.bf16.mxu0 0
      %4158 = vmatpush2.bf16.msra.mxu0 0
      %4159 = vmatprep.subr.bf16.mxu0 0
      %4160 = vmatpush2.bf16.msra.mxu0 0
      %4161 = vmatprep.subr.bf16.mxu0 0
      %4162 = vmatpush2.bf16.msra.mxu0 0
      %4163 = vmatprep.subr.bf16.mxu0 0
      %4164 = vmatpush2.bf16.msra.mxu0 0
      %4165 = vmatprep.subr.bf16.mxu0 0
      %4166 = vmatpush2.bf16.msra.mxu0 0
      %4167 = vmatprep.subr.bf16.mxu0 0
      %4168 = vmatpush2.bf16.msra.mxu0 0
      %4169 = vmatprep.subr.bf16.mxu0 0
      %4170 = vmatpush2.bf16.msra.mxu0 0
      %4171 = vmatprep.mubr.bf16.mxu0 0
      %4172 = vmatmul.mubr.bf16.gmra.mxu0 %v4089
      %v4173 = vpop.f32.mrf.mxu0
      %v4174 = vadd.f32 0.0, %v4173
      %v4175 = vpop.f32.mrf.mxu0
      %v4176 = vpop.f32.mrf.mxu0
      %v4177 = vadd.f32 0.0, %v4176
      %v4178 = vpop.f32.mrf.mxu0
      %4179 = vmatprep.mubr.bf16.mxu0 0
      %4180 = vmatmul.mubr.bf16.gmra.mxu0 %v4092
      %v4181 = vpop.f32.mrf.mxu0
      %v4182 = vadd.f32 0.0, %v4181
      %v4183 = vpop.f32.mrf.mxu0
      %v4184 = vpop.f32.mrf.mxu0
      %v4185 = vadd.f32 0.0, %v4184
      %v4186 = vpop.f32.mrf.mxu0
      %4187 = vmatprep.mubr.bf16.mxu0 0
      %4188 = vmatmul.mubr.bf16.gmra.mxu0 %v4095
      %v4189 = vpop.f32.mrf.mxu0
      %v4190 = vadd.f32 0.0, %v4189
      %v4191 = vpop.f32.mrf.mxu0
      %v4192 = vpop.f32.mrf.mxu0
      %v4193 = vadd.f32 0.0, %v4192
      %v4194 = vpop.f32.mrf.mxu0
      %4195 = vmatprep.mubr.bf16.mxu0 0
      %4196 = vmatmul.mubr.bf16.gmra.mxu0 %v4098
      %v4197 = vpop.f32.mrf.mxu0
      %v4198 = vadd.f32 0.0, %v4197
      %v4199 = vpop.f32.mrf.mxu0
      %v4200 = vpop.f32.mrf.mxu0
      %v4201 = vadd.f32 0.0, %v4200
      %v4202 = vpop.f32.mrf.mxu0
      %4203 = vmatprep.mubr.bf16.mxu0 0
      %4204 = vmatmul.mubr.bf16.gmra.mxu0 %v4101
      %v4205 = vpop.f32.mrf.mxu0
      %v4206 = vadd.f32 0.0, %v4205
      %v4207 = vpop.f32.mrf.mxu0
      %v4208 = vpop.f32.mrf.mxu0
      %v4209 = vadd.f32 0.0, %v4208
      %v4210 = vpop.f32.mrf.mxu0
      %4211 = vmatprep.mubr.bf16.mxu0 0
      %4212 = vmatmul.mubr.bf16.gmra.mxu0 %v4104
      %v4213 = vpop.f32.mrf.mxu0
      %v4214 = vadd.f32 0.0, %v4213
      %v4215 = vpop.f32.mrf.mxu0
      %v4216 = vpop.f32.mrf.mxu0
      %v4217 = vadd.f32 0.0, %v4216
      %v4218 = vpop.f32.mrf.mxu0
      %4219 = vmatprep.mubr.bf16.mxu0 0
      %4220 = vmatmul.mubr.bf16.gmra.mxu0 %v4107
      %v4221 = vpop.f32.mrf.mxu0
      %v4222 = vadd.f32 0.0, %v4221
      %v4223 = vpop.f32.mrf.mxu0
      %v4224 = vpop.f32.mrf.mxu0
      %v4225 = vadd.f32 0.0, %v4224
      %v4226 = vpop.f32.mrf.mxu0
      %4227 = vmatprep.mubr.bf16.mxu0 0
      %4228 = vmatmul.mubr.bf16.gmra.mxu0 %v4110
      %v4229 = vpop.f32.mrf.mxu0
      %v4230 = vadd.f32 0.0, %v4229
      %v4231 = vpop.f32.mrf.mxu0
      %v4232 = vpop.f32.mrf.mxu0
      %v4233 = vadd.f32 0.0, %v4232
      %v4234 = vpop.f32.mrf.mxu0
      %4235 = vmatprep.mubr.bf16.mxu0 0
      %4236 = vmatmul.mubr.bf16.gmra.mxu0 %v4113
      %v4237 = vpop.f32.mrf.mxu0
      %v4238 = vadd.f32 0.0, %v4237
      %v4239 = vpop.f32.mrf.mxu0
      %v4240 = vpop.f32.mrf.mxu0
      %v4241 = vadd.f32 0.0, %v4240
      %v4242 = vpop.f32.mrf.mxu0
      %4243 = vmatprep.mubr.bf16.mxu0 0
      %4244 = vmatmul.mubr.bf16.gmra.mxu0 %v4116
      %v4245 = vpop.f32.mrf.mxu0
      %v4246 = vadd.f32 0.0, %v4245
      %v4247 = vpop.f32.mrf.mxu0
      %v4248 = vpop.f32.mrf.mxu0
      %v4249 = vadd.f32 0.0, %v4248
      %v4250 = vpop.f32.mrf.mxu0
      %4251 = vmatprep.mubr.bf16.mxu0 0
      %4252 = vmatmul.mubr.bf16.gmra.mxu0 %v4119
      %v4253 = vpop.f32.mrf.mxu0
      %v4254 = vadd.f32 0.0, %v4253
      %v4255 = vpop.f32.mrf.mxu0
      %v4256 = vpop.f32.mrf.mxu0
      %v4257 = vadd.f32 0.0, %v4256
      %v4258 = vpop.f32.mrf.mxu0
      %4259 = vmatprep.mubr.bf16.mxu0 0
      %4260 = vmatmul.mubr.bf16.gmra.mxu0 %v4122
      %v4261 = vpop.f32.mrf.mxu0
      %v4262 = vadd.f32 0.0, %v4261
      %v4263 = vpop.f32.mrf.mxu0
      %v4264 = vpop.f32.mrf.mxu0
      %v4265 = vadd.f32 0.0, %v4264
      %v4266 = vpop.f32.mrf.mxu0
      %4267 = vmatprep.mubr.bf16.mxu0 0
      %4268 = vmatmul.mubr.bf16.gmra.mxu0 %v4125
      %v4269 = vpop.f32.mrf.mxu0
      %v4270 = vadd.f32 0.0, %v4269
      %v4271 = vpop.f32.mrf.mxu0
      %v4272 = vpop.f32.mrf.mxu0
      %v4273 = vadd.f32 0.0, %v4272
      %v4274 = vpop.f32.mrf.mxu0
      %4275 = vmatprep.mubr.bf16.mxu0 0
      %4276 = vmatmul.mubr.bf16.gmra.mxu0 %v4128
      %v4277 = vpop.f32.mrf.mxu0
      %v4278 = vadd.f32 0.0, %v4277
      %v4279 = vpop.f32.mrf.mxu0
      %v4280 = vpop.f32.mrf.mxu0
      %v4281 = vadd.f32 0.0, %v4280
      %v4282 = vpop.f32.mrf.mxu0
      %4283 = vmatprep.mubr.bf16.mxu0 0
      %4284 = vmatmul.mubr.bf16.gmra.mxu0 %v4131
      %v4285 = vpop.f32.mrf.mxu0
      %v4286 = vadd.f32 0.0, %v4285
      %v4287 = vpop.f32.mrf.mxu0
      %v4288 = vpop.f32.mrf.mxu0
      %v4289 = vadd.f32 0.0, %v4288
      %v4290 = vpop.f32.mrf.mxu0
      %4291 = vmatprep.mubr.bf16.mxu0 0
      %4292 = vmatmul.mubr.bf16.gmra.mxu0 %v4134
      %v4293 = vpop.f32.mrf.mxu0
      %v4294 = vadd.f32 0.0, %v4293
      %v4295 = vpop.f32.mrf.mxu0
      %v4296 = vpop.f32.mrf.mxu0
      %v4297 = vadd.f32 0.0, %v4296
      %v4298 = vpop.f32.mrf.mxu0
      %4299 = vdwg.mxu0
      %v4300 = vadd.f32 %v3941, %v4174
      %v4301 = vadd.f32 %v3942, %v4177
      %v4302 = vadd.f32 %v3943, %v4182
      %v4303 = vadd.f32 %v3944, %v4185
      %v4304 = vadd.f32 %v3945, %v4190
      %v4305 = vadd.f32 %v3946, %v4193
      %v4306 = vadd.f32 %v3947, %v4198
      %v4307 = vadd.f32 %v3948, %v4201
      %v4308 = vadd.f32 %v3949, %v4206
      %v4309 = vadd.f32 %v3950, %v4209
      %v4310 = vadd.f32 %v3951, %v4214
      %v4311 = vadd.f32 %v3952, %v4217
      %v4312 = vadd.f32 %v3953, %v4222
      %v4313 = vadd.f32 %v3954, %v4225
      %v4314 = vadd.f32 %v3955, %v4230
      %v4315 = vadd.f32 %v3956, %v4233
      %v4316 = vadd.f32 %v3957, %v4238
      %v4317 = vadd.f32 %v3958, %v4241
      %v4318 = vadd.f32 %v3959, %v4246
      %v4319 = vadd.f32 %v3960, %v4249
      %v4320 = vadd.f32 %v3961, %v4254
      %v4321 = vadd.f32 %v3962, %v4257
      %v4322 = vadd.f32 %v3963, %v4262
      %v4323 = vadd.f32 %v3964, %v4265
      %v4324 = vadd.f32 %v3965, %v4270
      %v4325 = vadd.f32 %v3966, %v4273
      %v4326 = vadd.f32 %v3967, %v4278
      %v4327 = vadd.f32 %v3968, %v4281
      %v4328 = vadd.f32 %v3969, %v4286
      %v4329 = vadd.f32 %v3970, %v4289
      %v4330 = vadd.f32 %v3971, %v4294
      %v4331 = vadd.f32 %v3972, %v4297
      %v4332 = vld [vmem:[%s3973] sm:$0xf]
      %v4333 = vld [vmem:[%s3973 + $0x4] sm:$0xf]
      %v4334 = vld [vmem:[%s3973 + $0x8] sm:$0x1]
      %v4335 = vld [vmem:[%s3973 + $0xc] sm:$0xf]
      %v4336 = vld [vmem:[%s3973 + $0x10] sm:$0xf]
      %v4337 = vld [vmem:[%s3973 + $0x14] sm:$0x1]
      %v4338 = vld [vmem:[%s3973 + $0x18] sm:$0xf]
      %v4339 = vld [vmem:[%s3973 + $0x1c] sm:$0xf]
      %v4340 = vld [vmem:[%s3973 + $0x20] sm:$0x1]
      %v4341 = vld [vmem:[%s3973 + $0x24] sm:$0xf]
      %v4342 = vld [vmem:[%s3973 + $0x28] sm:$0xf]
      %v4343 = vld [vmem:[%s3973 + $0x2c] sm:$0x1]
      %v4344 = vld [vmem:[%s3973 + $0x30] sm:$0xf]
      %v4345 = vld [vmem:[%s3973 + $0x34] sm:$0xf]
      %v4346 = vld [vmem:[%s3973 + $0x38] sm:$0x1]
      %v4347 = vld [vmem:[%s3973 + $0x3c] sm:$0xf]
      %v4348 = vld [vmem:[%s3973 + $0x40] sm:$0xf]
      %v4349 = vld [vmem:[%s3973 + $0x44] sm:$0x1]
      %v4350 = vld [vmem:[%s3973 + $0x48] sm:$0xf]
      %v4351 = vld [vmem:[%s3973 + $0x4c] sm:$0xf]
      %v4352 = vld [vmem:[%s3973 + $0x50] sm:$0x1]
      %v4353 = vld [vmem:[%s3973 + $0x54] sm:$0xf]
      %v4354 = vld [vmem:[%s3973 + $0x58] sm:$0xf]
      %v4355 = vld [vmem:[%s3973 + $0x5c] sm:$0x1]
      %v4356 = vld [vmem:[%s3973 + $0x60] sm:$0xf]
      %v4357 = vld [vmem:[%s3973 + $0x64] sm:$0xf]
      %v4358 = vld [vmem:[%s3973 + $0x68] sm:$0x1]
      %v4359 = vld [vmem:[%s3973 + $0x6c] sm:$0xf]
      %v4360 = vld [vmem:[%s3973 + $0x70] sm:$0xf]
      %v4361 = vld [vmem:[%s3973 + $0x74] sm:$0x1]
      %v4362 = vld [vmem:[%s3973 + $0x78] sm:$0xf]
      %v4363 = vld [vmem:[%s3973 + $0x7c] sm:$0xf]
      %v4364 = vld [vmem:[%s3973 + $0x80] sm:$0x1]
      %v4365 = vld [vmem:[%s3973 + $0x84] sm:$0xf]
      %v4366 = vld [vmem:[%s3973 + $0x88] sm:$0xf]
      %v4367 = vld [vmem:[%s3973 + $0x8c] sm:$0x1]
      %v4368 = vld [vmem:[%s3973 + $0x90] sm:$0xf]
      %v4369 = vld [vmem:[%s3973 + $0x94] sm:$0xf]
      %v4370 = vld [vmem:[%s3973 + $0x98] sm:$0x1]
      %v4371 = vld [vmem:[%s3973 + $0x9c] sm:$0xf]
      %v4372 = vld [vmem:[%s3973 + $0xa0] sm:$0xf]
      %v4373 = vld [vmem:[%s3973 + $0xa4] sm:$0x1]
      %v4374 = vld [vmem:[%s3973 + $0xa8] sm:$0xf]
      %v4375 = vld [vmem:[%s3973 + $0xac] sm:$0xf]
      %v4376 = vld [vmem:[%s3973 + $0xb0] sm:$0x1]
      %v4377 = vld [vmem:[%s3973 + $0xb4] sm:$0xf]
      %v4378 = vld [vmem:[%s3973 + $0xb8] sm:$0xf]
      %v4379 = vld [vmem:[%s3973 + $0xbc] sm:$0x1]
      %v4381 = vshrl.u32 %v4332, 16
      %v4383 = vrot.slane %v4381, 4
      %v4384 = vshll.u32 %v4332, 16
      %v4386 = vrot.slane %v4384, 5
      %v4387 = vor.u32 %v4383, %v4386
      %v4388 = vrot.slane %v4387, 4
      %v4390 = vshll.u32 %v4333, 16
      %v4392 = vrot.slane %v4390, 5
      %v4393 = vsel %vm1021, %v4388, %v4392
      %v4394 = vshrl.u32 %v4333, 16
      %v4396 = vrot.slane %v4394, 4
      %v4397 = vor.u32 %v4396, %v4392
      %v4398 = vrot.slane %v4397, 4
      %v4400 = vshll.u32 %v4334, 16
      %v4402 = vrot.slane %v4400, 5
      %v4403 = vsel %vm1021, %v4398, %v4402
      %v4405 = vshrl.u32 %v4335, 16
      %v4407 = vrot.slane %v4405, 4
      %v4408 = vshll.u32 %v4335, 16
      %v4410 = vrot.slane %v4408, 5
      %v4411 = vor.u32 %v4407, %v4410
      %v4412 = vrot.slane %v4411, 4
      %v4414 = vshll.u32 %v4336, 16
      %v4416 = vrot.slane %v4414, 5
      %v4417 = vsel %vm1021, %v4412, %v4416
      %v4418 = vshrl.u32 %v4336, 16
      %v4420 = vrot.slane %v4418, 4
      %v4421 = vor.u32 %v4420, %v4416
      %v4422 = vrot.slane %v4421, 4
      %v4424 = vshll.u32 %v4337, 16
      %v4426 = vrot.slane %v4424, 5
      %v4427 = vsel %vm1021, %v4422, %v4426
      %v4429 = vshrl.u32 %v4338, 16
      %v4431 = vrot.slane %v4429, 4
      %v4432 = vshll.u32 %v4338, 16
      %v4434 = vrot.slane %v4432, 5
      %v4435 = vor.u32 %v4431, %v4434
      %v4436 = vrot.slane %v4435, 4
      %v4438 = vshll.u32 %v4339, 16
      %v4440 = vrot.slane %v4438, 5
      %v4441 = vsel %vm1021, %v4436, %v4440
      %v4442 = vshrl.u32 %v4339, 16
      %v4444 = vrot.slane %v4442, 4
      %v4445 = vor.u32 %v4444, %v4440
      %v4446 = vrot.slane %v4445, 4
      %v4448 = vshll.u32 %v4340, 16
      %v4450 = vrot.slane %v4448, 5
      %v4451 = vsel %vm1021, %v4446, %v4450
      %v4453 = vshrl.u32 %v4341, 16
      %v4455 = vrot.slane %v4453, 4
      %v4456 = vshll.u32 %v4341, 16
      %v4458 = vrot.slane %v4456, 5
      %v4459 = vor.u32 %v4455, %v4458
      %v4460 = vrot.slane %v4459, 4
      %v4462 = vshll.u32 %v4342, 16
      %v4464 = vrot.slane %v4462, 5
      %v4465 = vsel %vm1021, %v4460, %v4464
      %v4466 = vshrl.u32 %v4342, 16
      %v4468 = vrot.slane %v4466, 4
      %v4469 = vor.u32 %v4468, %v4464
      %v4470 = vrot.slane %v4469, 4
      %v4472 = vshll.u32 %v4343, 16
      %v4474 = vrot.slane %v4472, 5
      %v4475 = vsel %vm1021, %v4470, %v4474
      %v4477 = vshrl.u32 %v4344, 16
      %v4479 = vrot.slane %v4477, 4
      %v4480 = vshll.u32 %v4344, 16
      %v4482 = vrot.slane %v4480, 5
      %v4483 = vor.u32 %v4479, %v4482
      %v4484 = vrot.slane %v4483, 4
      %v4486 = vshll.u32 %v4345, 16
      %v4488 = vrot.slane %v4486, 5
      %v4489 = vsel %vm1021, %v4484, %v4488
      %v4490 = vshrl.u32 %v4345, 16
      %v4492 = vrot.slane %v4490, 4
      %v4493 = vor.u32 %v4492, %v4488
      %v4494 = vrot.slane %v4493, 4
      %v4496 = vshll.u32 %v4346, 16
      %v4498 = vrot.slane %v4496, 5
      %v4499 = vsel %vm1021, %v4494, %v4498
      %v4501 = vshrl.u32 %v4347, 16
      %v4503 = vrot.slane %v4501, 4
      %v4504 = vshll.u32 %v4347, 16
      %v4506 = vrot.slane %v4504, 5
      %v4507 = vor.u32 %v4503, %v4506
      %v4508 = vrot.slane %v4507, 4
      %v4510 = vshll.u32 %v4348, 16
      %v4512 = vrot.slane %v4510, 5
      %v4513 = vsel %vm1021, %v4508, %v4512
      %v4514 = vshrl.u32 %v4348, 16
      %v4516 = vrot.slane %v4514, 4
      %v4517 = vor.u32 %v4516, %v4512
      %v4518 = vrot.slane %v4517, 4
      %v4520 = vshll.u32 %v4349, 16
      %v4522 = vrot.slane %v4520, 5
      %v4523 = vsel %vm1021, %v4518, %v4522
      %v4525 = vshrl.u32 %v4350, 16
      %v4527 = vrot.slane %v4525, 4
      %v4528 = vshll.u32 %v4350, 16
      %v4530 = vrot.slane %v4528, 5
      %v4531 = vor.u32 %v4527, %v4530
      %v4532 = vrot.slane %v4531, 4
      %v4534 = vshll.u32 %v4351, 16
      %v4536 = vrot.slane %v4534, 5
      %v4537 = vsel %vm1021, %v4532, %v4536
      %v4538 = vshrl.u32 %v4351, 16
      %v4540 = vrot.slane %v4538, 4
      %v4541 = vor.u32 %v4540, %v4536
      %v4542 = vrot.slane %v4541, 4
      %v4544 = vshll.u32 %v4352, 16
      %v4546 = vrot.slane %v4544, 5
      %v4547 = vsel %vm1021, %v4542, %v4546
      %v4549 = vshrl.u32 %v4353, 16
      %v4551 = vrot.slane %v4549, 4
      %v4552 = vshll.u32 %v4353, 16
      %v4554 = vrot.slane %v4552, 5
      %v4555 = vor.u32 %v4551, %v4554
      %v4556 = vrot.slane %v4555, 4
      %v4558 = vshll.u32 %v4354, 16
      %v4560 = vrot.slane %v4558, 5
      %v4561 = vsel %vm1021, %v4556, %v4560
      %v4562 = vshrl.u32 %v4354, 16
      %v4564 = vrot.slane %v4562, 4
      %v4565 = vor.u32 %v4564, %v4560
      %v4566 = vrot.slane %v4565, 4
      %v4568 = vshll.u32 %v4355, 16
      %v4570 = vrot.slane %v4568, 5
      %v4571 = vsel %vm1021, %v4566, %v4570
      %v4573 = vshrl.u32 %v4356, 16
      %v4575 = vrot.slane %v4573, 4
      %v4576 = vshll.u32 %v4356, 16
      %v4578 = vrot.slane %v4576, 5
      %v4579 = vor.u32 %v4575, %v4578
      %v4580 = vrot.slane %v4579, 4
      %v4582 = vshll.u32 %v4357, 16
      %v4584 = vrot.slane %v4582, 5
      %v4585 = vsel %vm1021, %v4580, %v4584
      %v4586 = vshrl.u32 %v4357, 16
      %v4588 = vrot.slane %v4586, 4
      %v4589 = vor.u32 %v4588, %v4584
      %v4590 = vrot.slane %v4589, 4
      %v4592 = vshll.u32 %v4358, 16
      %v4594 = vrot.slane %v4592, 5
      %v4595 = vsel %vm1021, %v4590, %v4594
      %v4597 = vshrl.u32 %v4359, 16
      %v4599 = vrot.slane %v4597, 4
      %v4600 = vshll.u32 %v4359, 16
      %v4602 = vrot.slane %v4600, 5
      %v4603 = vor.u32 %v4599, %v4602
      %v4604 = vrot.slane %v4603, 4
      %v4606 = vshll.u32 %v4360, 16
      %v4608 = vrot.slane %v4606, 5
      %v4609 = vsel %vm1021, %v4604, %v4608
      %v4610 = vshrl.u32 %v4360, 16
      %v4612 = vrot.slane %v4610, 4
      %v4613 = vor.u32 %v4612, %v4608
      %v4614 = vrot.slane %v4613, 4
      %v4616 = vshll.u32 %v4361, 16
      %v4618 = vrot.slane %v4616, 5
      %v4619 = vsel %vm1021, %v4614, %v4618
      %v4621 = vshrl.u32 %v4362, 16
      %v4623 = vrot.slane %v4621, 4
      %v4624 = vshll.u32 %v4362, 16
      %v4626 = vrot.slane %v4624, 5
      %v4627 = vor.u32 %v4623, %v4626
      %v4628 = vrot.slane %v4627, 4
      %v4630 = vshll.u32 %v4363, 16
      %v4632 = vrot.slane %v4630, 5
      %v4633 = vsel %vm1021, %v4628, %v4632
      %v4634 = vshrl.u32 %v4363, 16
      %v4636 = vrot.slane %v4634, 4
      %v4637 = vor.u32 %v4636, %v4632
      %v4638 = vrot.slane %v4637, 4
      %v4640 = vshll.u32 %v4364, 16
      %v4642 = vrot.slane %v4640, 5
      %v4643 = vsel %vm1021, %v4638, %v4642
      %v4645 = vshrl.u32 %v4365, 16
      %v4647 = vrot.slane %v4645, 4
      %v4648 = vshll.u32 %v4365, 16
      %v4650 = vrot.slane %v4648, 5
      %v4651 = vor.u32 %v4647, %v4650
      %v4652 = vrot.slane %v4651, 4
      %v4654 = vshll.u32 %v4366, 16
      %v4656 = vrot.slane %v4654, 5
      %v4657 = vsel %vm1021, %v4652, %v4656
      %v4658 = vshrl.u32 %v4366, 16
      %v4660 = vrot.slane %v4658, 4
      %v4661 = vor.u32 %v4660, %v4656
      %v4662 = vrot.slane %v4661, 4
      %v4664 = vshll.u32 %v4367, 16
      %v4666 = vrot.slane %v4664, 5
      %v4667 = vsel %vm1021, %v4662, %v4666
      %v4669 = vshrl.u32 %v4368, 16
      %v4671 = vrot.slane %v4669, 4
      %v4672 = vshll.u32 %v4368, 16
      %v4674 = vrot.slane %v4672, 5
      %v4675 = vor.u32 %v4671, %v4674
      %v4676 = vrot.slane %v4675, 4
      %v4678 = vshll.u32 %v4369, 16
      %v4680 = vrot.slane %v4678, 5
      %v4681 = vsel %vm1021, %v4676, %v4680
      %v4682 = vshrl.u32 %v4369, 16
      %v4684 = vrot.slane %v4682, 4
      %v4685 = vor.u32 %v4684, %v4680
      %v4686 = vrot.slane %v4685, 4
      %v4688 = vshll.u32 %v4370, 16
      %v4690 = vrot.slane %v4688, 5
      %v4691 = vsel %vm1021, %v4686, %v4690
      %v4693 = vshrl.u32 %v4371, 16
      %v4695 = vrot.slane %v4693, 4
      %v4696 = vshll.u32 %v4371, 16
      %v4698 = vrot.slane %v4696, 5
      %v4699 = vor.u32 %v4695, %v4698
      %v4700 = vrot.slane %v4699, 4
      %v4702 = vshll.u32 %v4372, 16
      %v4704 = vrot.slane %v4702, 5
      %v4705 = vsel %vm1021, %v4700, %v4704
      %v4706 = vshrl.u32 %v4372, 16
      %v4708 = vrot.slane %v4706, 4
      %v4709 = vor.u32 %v4708, %v4704
      %v4710 = vrot.slane %v4709, 4
      %v4712 = vshll.u32 %v4373, 16
      %v4714 = vrot.slane %v4712, 5
      %v4715 = vsel %vm1021, %v4710, %v4714
      %v4717 = vshrl.u32 %v4374, 16
      %v4719 = vrot.slane %v4717, 4
      %v4720 = vshll.u32 %v4374, 16
      %v4722 = vrot.slane %v4720, 5
      %v4723 = vor.u32 %v4719, %v4722
      %v4724 = vrot.slane %v4723, 4
      %v4726 = vshll.u32 %v4375, 16
      %v4728 = vrot.slane %v4726, 5
      %v4729 = vsel %vm1021, %v4724, %v4728
      %v4730 = vshrl.u32 %v4375, 16
      %v4732 = vrot.slane %v4730, 4
      %v4733 = vor.u32 %v4732, %v4728
      %v4734 = vrot.slane %v4733, 4
      %v4736 = vshll.u32 %v4376, 16
      %v4738 = vrot.slane %v4736, 5
      %v4739 = vsel %vm1021, %v4734, %v4738
      %v4741 = vshrl.u32 %v4377, 16
      %v4743 = vrot.slane %v4741, 4
      %v4744 = vshll.u32 %v4377, 16
      %v4746 = vrot.slane %v4744, 5
      %v4747 = vor.u32 %v4743, %v4746
      %v4748 = vrot.slane %v4747, 4
      %v4750 = vshll.u32 %v4378, 16
      %v4752 = vrot.slane %v4750, 5
      %v4753 = vsel %vm1021, %v4748, %v4752
      %v4754 = vshrl.u32 %v4378, 16
      %v4756 = vrot.slane %v4754, 4
      %v4757 = vor.u32 %v4756, %v4752
      %v4758 = vrot.slane %v4757, 4
      %v4760 = vshll.u32 %v4379, 16
      %v4762 = vrot.slane %v4760, 5
      %v4763 = vsel %vm1021, %v4758, %v4762
      %s4764 = scalar_lea.vmem %s1, 56
      %v4765 = vld [vmem:[%s4764] sm:$0xf]
      %v4766 = vunpack.c.l.b16 %v4393
      %v4767 = vunpack.c.l.b16 %v4403
      %v4768 = vunpack.c.l.b16 %v4417
      %v4769 = vunpack.c.l.b16 %v4427
      %v4770 = vunpack.c.l.b16 %v4441
      %v4771 = vunpack.c.l.b16 %v4451
      %v4772 = vunpack.c.l.b16 %v4465
      %v4773 = vunpack.c.l.b16 %v4475
      %v4774 = vunpack.c.l.b16 %v4489
      %v4775 = vunpack.c.l.b16 %v4499
      %v4776 = vunpack.c.l.b16 %v4513
      %v4777 = vunpack.c.l.b16 %v4523
      %v4778 = vunpack.c.l.b16 %v4537
      %v4779 = vunpack.c.l.b16 %v4547
      %v4780 = vunpack.c.l.b16 %v4561
      %v4781 = vunpack.c.l.b16 %v4571
      %v4782 = vunpack.c.l.b16 %v4585
      %v4783 = vunpack.c.l.b16 %v4595
      %v4784 = vunpack.c.l.b16 %v4609
      %v4785 = vunpack.c.l.b16 %v4619
      %v4786 = vunpack.c.l.b16 %v4633
      %v4787 = vunpack.c.l.b16 %v4643
      %v4788 = vunpack.c.l.b16 %v4657
      %v4789 = vunpack.c.l.b16 %v4667
      %v4790 = vunpack.c.l.b16 %v4681
      %v4791 = vunpack.c.l.b16 %v4691
      %v4792 = vunpack.c.l.b16 %v4705
      %v4793 = vunpack.c.l.b16 %v4715
      %v4794 = vunpack.c.l.b16 %v4729
      %v4795 = vunpack.c.l.b16 %v4739
      %v4796 = vunpack.c.l.b16 %v4753
      %v4797 = vunpack.c.l.b16 %v4763
      %v4798 = vpack.c.b16 %v4767, %v4766
      %v4799 = vpack.c.b16 %v4769, %v4768
      %v4800 = vpack.c.b16 %v4771, %v4770
      %v4801 = vpack.c.b16 %v4773, %v4772
      %v4802 = vpack.c.b16 %v4775, %v4774
      %v4803 = vpack.c.b16 %v4777, %v4776
      %v4804 = vpack.c.b16 %v4779, %v4778
      %v4805 = vpack.c.b16 %v4781, %v4780
      %v4806 = vpack.c.b16 %v4783, %v4782
      %v4807 = vpack.c.b16 %v4785, %v4784
      %v4808 = vpack.c.b16 %v4787, %v4786
      %v4809 = vpack.c.b16 %v4789, %v4788
      %v4810 = vpack.c.b16 %v4791, %v4790
      %v4811 = vpack.c.b16 %v4793, %v4792
      %v4812 = vpack.c.b16 %v4795, %v4794
      %v4813 = vpack.c.b16 %v4797, %v4796
      %v4815 = vsel %vm1456, %v4798, 0
      %v4818 = vsel %vm1456, %v4799, 0
      %v4821 = vsel %vm1456, %v4800, 0
      %v4824 = vsel %vm1456, %v4801, 0
      %v4827 = vsel %vm1456, %v4802, 0
      %v4830 = vsel %vm1456, %v4803, 0
      %v4833 = vsel %vm1456, %v4804, 0
      %v4836 = vsel %vm1456, %v4805, 0
      %v4839 = vsel %vm1456, %v4806, 0
      %v4842 = vsel %vm1456, %v4807, 0
      %v4845 = vsel %vm1456, %v4808, 0
      %v4848 = vsel %vm1456, %v4809, 0
      %v4851 = vsel %vm1456, %v4810, 0
      %v4854 = vsel %vm1456, %v4811, 0
      %v4857 = vsel %vm1456, %v4812, 0
      %v4860 = vsel %vm1456, %v4813, 0
      %v4863 = vsel %vm1505, %v4765, 0
      %4865 = vmatprep.subr.bf16.mxu0 0
      %4866 = vmatpush1.bf16.msra.mxu0 0
      %4867 = vmatprep.subr.bf16.mxu0 0
      %4868 = vmatpush1.bf16.msra.mxu0 0
      %4869 = vmatprep.subr.bf16.mxu0 0
      %4870 = vmatpush1.bf16.msra.mxu0 0
      %4871 = vmatprep.subr.bf16.mxu0 0
      %4872 = vmatpush1.bf16.msra.mxu0 0
      %4873 = vmatprep.subr.bf16.mxu0 0
      %4874 = vmatpush1.bf16.msra.mxu0 0
      %4875 = vmatprep.subr.bf16.mxu0 0
      %4876 = vmatpush1.bf16.msra.mxu0 0
      %4877 = vmatprep.subr.bf16.mxu0 0
      %4878 = vmatpush1.bf16.msra.mxu0 0
      %4879 = vmatprep.subr.bf16.mxu0 0
      %4880 = vmatpush1.bf16.msra.mxu0 %v4863
      %4881 = vmatprep.subr.bf16.mxu0 0
      %4882 = vmatpush2.bf16.msra.mxu0 0
      %4883 = vmatprep.subr.bf16.mxu0 0
      %4884 = vmatpush2.bf16.msra.mxu0 0
      %4885 = vmatprep.subr.bf16.mxu0 0
      %4886 = vmatpush2.bf16.msra.mxu0 0
      %4887 = vmatprep.subr.bf16.mxu0 0
      %4888 = vmatpush2.bf16.msra.mxu0 0
      %4889 = vmatprep.subr.bf16.mxu0 0
      %4890 = vmatpush2.bf16.msra.mxu0 0
      %4891 = vmatprep.subr.bf16.mxu0 0
      %4892 = vmatpush2.bf16.msra.mxu0 0
      %4893 = vmatprep.subr.bf16.mxu0 0
      %4894 = vmatpush2.bf16.msra.mxu0 0
      %4895 = vmatprep.subr.bf16.mxu0 0
      %4896 = vmatpush2.bf16.msra.mxu0 0
      %4897 = vmatprep.mubr.bf16.mxu0 0
      %4898 = vmatmul.mubr.bf16.gmra.mxu0 %v4815
      %v4899 = vpop.f32.mrf.mxu0
      %v4900 = vadd.f32 0.0, %v4899
      %v4901 = vpop.f32.mrf.mxu0
      %v4902 = vpop.f32.mrf.mxu0
      %v4903 = vadd.f32 0.0, %v4902
      %v4904 = vpop.f32.mrf.mxu0
      %4905 = vmatprep.mubr.bf16.mxu0 0
      %4906 = vmatmul.mubr.bf16.gmra.mxu0 %v4818
      %v4907 = vpop.f32.mrf.mxu0
      %v4908 = vadd.f32 0.0, %v4907
      %v4909 = vpop.f32.mrf.mxu0
      %v4910 = vpop.f32.mrf.mxu0
      %v4911 = vadd.f32 0.0, %v4910
      %v4912 = vpop.f32.mrf.mxu0
      %4913 = vmatprep.mubr.bf16.mxu0 0
      %4914 = vmatmul.mubr.bf16.gmra.mxu0 %v4821
      %v4915 = vpop.f32.mrf.mxu0
      %v4916 = vadd.f32 0.0, %v4915
      %v4917 = vpop.f32.mrf.mxu0
      %v4918 = vpop.f32.mrf.mxu0
      %v4919 = vadd.f32 0.0, %v4918
      %v4920 = vpop.f32.mrf.mxu0
      %4921 = vmatprep.mubr.bf16.mxu0 0
      %4922 = vmatmul.mubr.bf16.gmra.mxu0 %v4824
      %v4923 = vpop.f32.mrf.mxu0
      %v4924 = vadd.f32 0.0, %v4923
      %v4925 = vpop.f32.mrf.mxu0
      %v4926 = vpop.f32.mrf.mxu0
      %v4927 = vadd.f32 0.0, %v4926
      %v4928 = vpop.f32.mrf.mxu0
      %4929 = vmatprep.mubr.bf16.mxu0 0
      %4930 = vmatmul.mubr.bf16.gmra.mxu0 %v4827
      %v4931 = vpop.f32.mrf.mxu0
      %v4932 = vadd.f32 0.0, %v4931
      %v4933 = vpop.f32.mrf.mxu0
      %v4934 = vpop.f32.mrf.mxu0
      %v4935 = vadd.f32 0.0, %v4934
      %v4936 = vpop.f32.mrf.mxu0
      %4937 = vmatprep.mubr.bf16.mxu0 0
      %4938 = vmatmul.mubr.bf16.gmra.mxu0 %v4830
      %v4939 = vpop.f32.mrf.mxu0
      %v4940 = vadd.f32 0.0, %v4939
      %v4941 = vpop.f32.mrf.mxu0
      %v4942 = vpop.f32.mrf.mxu0
      %v4943 = vadd.f32 0.0, %v4942
      %v4944 = vpop.f32.mrf.mxu0
      %4945 = vmatprep.mubr.bf16.mxu0 0
      %4946 = vmatmul.mubr.bf16.gmra.mxu0 %v4833
      %v4947 = vpop.f32.mrf.mxu0
      %v4948 = vadd.f32 0.0, %v4947
      %v4949 = vpop.f32.mrf.mxu0
      %v4950 = vpop.f32.mrf.mxu0
      %v4951 = vadd.f32 0.0, %v4950
      %v4952 = vpop.f32.mrf.mxu0
      %4953 = vmatprep.mubr.bf16.mxu0 0
      %4954 = vmatmul.mubr.bf16.gmra.mxu0 %v4836
      %v4955 = vpop.f32.mrf.mxu0
      %v4956 = vadd.f32 0.0, %v4955
      %v4957 = vpop.f32.mrf.mxu0
      %v4958 = vpop.f32.mrf.mxu0
      %v4959 = vadd.f32 0.0, %v4958
      %v4960 = vpop.f32.mrf.mxu0
      %4961 = vmatprep.mubr.bf16.mxu0 0
      %4962 = vmatmul.mubr.bf16.gmra.mxu0 %v4839
      %v4963 = vpop.f32.mrf.mxu0
      %v4964 = vadd.f32 0.0, %v4963
      %v4965 = vpop.f32.mrf.mxu0
      %v4966 = vpop.f32.mrf.mxu0
      %v4967 = vadd.f32 0.0, %v4966
      %v4968 = vpop.f32.mrf.mxu0
      %4969 = vmatprep.mubr.bf16.mxu0 0
      %4970 = vmatmul.mubr.bf16.gmra.mxu0 %v4842
      %v4971 = vpop.f32.mrf.mxu0
      %v4972 = vadd.f32 0.0, %v4971
      %v4973 = vpop.f32.mrf.mxu0
      %v4974 = vpop.f32.mrf.mxu0
      %v4975 = vadd.f32 0.0, %v4974
      %v4976 = vpop.f32.mrf.mxu0
      %4977 = vmatprep.mubr.bf16.mxu0 0
      %4978 = vmatmul.mubr.bf16.gmra.mxu0 %v4845
      %v4979 = vpop.f32.mrf.mxu0
      %v4980 = vadd.f32 0.0, %v4979
      %v4981 = vpop.f32.mrf.mxu0
      %v4982 = vpop.f32.mrf.mxu0
      %v4983 = vadd.f32 0.0, %v4982
      %v4984 = vpop.f32.mrf.mxu0
      %4985 = vmatprep.mubr.bf16.mxu0 0
      %4986 = vmatmul.mubr.bf16.gmra.mxu0 %v4848
      %v4987 = vpop.f32.mrf.mxu0
      %v4988 = vadd.f32 0.0, %v4987
      %v4989 = vpop.f32.mrf.mxu0
      %v4990 = vpop.f32.mrf.mxu0
      %v4991 = vadd.f32 0.0, %v4990
      %v4992 = vpop.f32.mrf.mxu0
      %4993 = vmatprep.mubr.bf16.mxu0 0
      %4994 = vmatmul.mubr.bf16.gmra.mxu0 %v4851
      %v4995 = vpop.f32.mrf.mxu0
      %v4996 = vadd.f32 0.0, %v4995
      %v4997 = vpop.f32.mrf.mxu0
      %v4998 = vpop.f32.mrf.mxu0
      %v4999 = vadd.f32 0.0, %v4998
      %v5000 = vpop.f32.mrf.mxu0
      %5001 = vmatprep.mubr.bf16.mxu0 0
      %5002 = vmatmul.mubr.bf16.gmra.mxu0 %v4854
      %v5003 = vpop.f32.mrf.mxu0
      %v5004 = vadd.f32 0.0, %v5003
      %v5005 = vpop.f32.mrf.mxu0
      %v5006 = vpop.f32.mrf.mxu0
      %v5007 = vadd.f32 0.0, %v5006
      %v5008 = vpop.f32.mrf.mxu0
      %5009 = vmatprep.mubr.bf16.mxu0 0
      %5010 = vmatmul.mubr.bf16.gmra.mxu0 %v4857
      %v5011 = vpop.f32.mrf.mxu0
      %v5012 = vadd.f32 0.0, %v5011
      %v5013 = vpop.f32.mrf.mxu0
      %v5014 = vpop.f32.mrf.mxu0
      %v5015 = vadd.f32 0.0, %v5014
      %v5016 = vpop.f32.mrf.mxu0
      %5017 = vmatprep.mubr.bf16.mxu0 0
      %5018 = vmatmul.mubr.bf16.gmra.mxu0 %v4860
      %v5019 = vpop.f32.mrf.mxu0
      %v5020 = vadd.f32 0.0, %v5019
      %v5021 = vpop.f32.mrf.mxu0
      %v5022 = vpop.f32.mrf.mxu0
      %v5023 = vadd.f32 0.0, %v5022
      %v5024 = vpop.f32.mrf.mxu0
      %5025 = vdwg.mxu0
      %v5026 = vadd.f32 %v4300, %v4900
      %v5027 = vadd.f32 %v4301, %v4903
      %v5028 = vadd.f32 %v4302, %v4908
      %v5029 = vadd.f32 %v4303, %v4911
      %v5030 = vadd.f32 %v4304, %v4916
      %v5031 = vadd.f32 %v4305, %v4919
      %v5032 = vadd.f32 %v4306, %v4924
      %v5033 = vadd.f32 %v4307, %v4927
      %v5034 = vadd.f32 %v4308, %v4932
      %v5035 = vadd.f32 %v4309, %v4935
      %v5036 = vadd.f32 %v4310, %v4940
      %v5037 = vadd.f32 %v4311, %v4943
      %v5038 = vadd.f32 %v4312, %v4948
      %v5039 = vadd.f32 %v4313, %v4951
      %v5040 = vadd.f32 %v4314, %v4956
      %v5041 = vadd.f32 %v4315, %v4959
      %v5042 = vadd.f32 %v4316, %v4964
      %v5043 = vadd.f32 %v4317, %v4967
      %v5044 = vadd.f32 %v4318, %v4972
      %v5045 = vadd.f32 %v4319, %v4975
      %v5046 = vadd.f32 %v4320, %v4980
      %v5047 = vadd.f32 %v4321, %v4983
      %v5048 = vadd.f32 %v4322, %v4988
      %v5049 = vadd.f32 %v4323, %v4991
      %v5050 = vadd.f32 %v4324, %v4996
      %v5051 = vadd.f32 %v4325, %v4999
      %v5052 = vadd.f32 %v4326, %v5004
      %v5053 = vadd.f32 %v4327, %v5007
      %v5054 = vadd.f32 %v4328, %v5012
      %v5055 = vadd.f32 %v4329, %v5015
      %v5056 = vadd.f32 %v4330, %v5020
      %v5057 = vadd.f32 %v4331, %v5023
      %v5058 = vld [vmem:[%s3973] sm:$0xe]
      %v5059 = vld [vmem:[%s3973 + $0xc] sm:$0xe]
      %v5060 = vld [vmem:[%s3973 + $0x18] sm:$0xe]
      %v5061 = vld [vmem:[%s3973 + $0x24] sm:$0xe]
      %v5062 = vld [vmem:[%s3973 + $0x30] sm:$0xe]
      %v5063 = vld [vmem:[%s3973 + $0x3c] sm:$0xe]
      %v5064 = vld [vmem:[%s3973 + $0x48] sm:$0xe]
      %v5065 = vld [vmem:[%s3973 + $0x54] sm:$0xe]
      %v5066 = vld [vmem:[%s3973 + $0x60] sm:$0xe]
      %v5067 = vld [vmem:[%s3973 + $0x6c] sm:$0xe]
      %v5068 = vld [vmem:[%s3973 + $0x78] sm:$0xe]
      %v5069 = vld [vmem:[%s3973 + $0x84] sm:$0xe]
      %v5070 = vld [vmem:[%s3973 + $0x90] sm:$0xe]
      %v5071 = vld [vmem:[%s3973 + $0x9c] sm:$0xe]
      %v5072 = vld [vmem:[%s3973 + $0xa8] sm:$0xe]
      %v5073 = vld [vmem:[%s3973 + $0xb4] sm:$0xe]
      %v5122 = vrot.slane %v5058, 5
      %v5123 = vrot.slane %v5122, 4
      %v5124 = vrot.slane %v4333, 5
      %v5125 = vsel %vm2012, %v5123, %v5124
      %v5126 = vrot.slane %v5124, 4
      %v5127 = vrot.slane %v4334, 5
      %v5128 = vsel %vm2012, %v5126, %v5127
      %v5129 = vrot.slane %v5059, 5
      %v5130 = vrot.slane %v5129, 4
      %v5131 = vrot.slane %v4336, 5
      %v5132 = vsel %vm2012, %v5130, %v5131
      %v5133 = vrot.slane %v5131, 4
      %v5134 = vrot.slane %v4337, 5
      %v5135 = vsel %vm2012, %v5133, %v5134
      %v5136 = vrot.slane %v5060, 5
      %v5137 = vrot.slane %v5136, 4
      %v5138 = vrot.slane %v4339, 5
      %v5139 = vsel %vm2012, %v5137, %v5138
      %v5140 = vrot.slane %v5138, 4
      %v5141 = vrot.slane %v4340, 5
      %v5142 = vsel %vm2012, %v5140, %v5141
      %v5143 = vrot.slane %v5061, 5
      %v5144 = vrot.slane %v5143, 4
      %v5145 = vrot.slane %v4342, 5
      %v5146 = vsel %vm2012, %v5144, %v5145
      %v5147 = vrot.slane %v5145, 4
      %v5148 = vrot.slane %v4343, 5
      %v5149 = vsel %vm2012, %v5147, %v5148
      %v5150 = vrot.slane %v5062, 5
      %v5151 = vrot.slane %v5150, 4
      %v5152 = vrot.slane %v4345, 5
      %v5153 = vsel %vm2012, %v5151, %v5152
      %v5154 = vrot.slane %v5152, 4
      %v5155 = vrot.slane %v4346, 5
      %v5156 = vsel %vm2012, %v5154, %v5155
      %v5157 = vrot.slane %v5063, 5
      %v5158 = vrot.slane %v5157, 4
      %v5159 = vrot.slane %v4348, 5
      %v5160 = vsel %vm2012, %v5158, %v5159
      %v5161 = vrot.slane %v5159, 4
      %v5162 = vrot.slane %v4349, 5
      %v5163 = vsel %vm2012, %v5161, %v5162
      %v5164 = vrot.slane %v5064, 5
      %v5165 = vrot.slane %v5164, 4
      %v5166 = vrot.slane %v4351, 5
      %v5167 = vsel %vm2012, %v5165, %v5166
      %v5168 = vrot.slane %v5166, 4
      %v5169 = vrot.slane %v4352, 5
      %v5170 = vsel %vm2012, %v5168, %v5169
      %v5171 = vrot.slane %v5065, 5
      %v5172 = vrot.slane %v5171, 4
      %v5173 = vrot.slane %v4354, 5
      %v5174 = vsel %vm2012, %v5172, %v5173
      %v5175 = vrot.slane %v5173, 4
      %v5176 = vrot.slane %v4355, 5
      %v5177 = vsel %vm2012, %v5175, %v5176
      %v5178 = vrot.slane %v5066, 5
      %v5179 = vrot.slane %v5178, 4
      %v5180 = vrot.slane %v4357, 5
      %v5181 = vsel %vm2012, %v5179, %v5180
      %v5182 = vrot.slane %v5180, 4
      %v5183 = vrot.slane %v4358, 5
      %v5184 = vsel %vm2012, %v5182, %v5183
      %v5185 = vrot.slane %v5067, 5
      %v5186 = vrot.slane %v5185, 4
      %v5187 = vrot.slane %v4360, 5
      %v5188 = vsel %vm2012, %v5186, %v5187
      %v5189 = vrot.slane %v5187, 4
      %v5190 = vrot.slane %v4361, 5
      %v5191 = vsel %vm2012, %v5189, %v5190
      %v5192 = vrot.slane %v5068, 5
      %v5193 = vrot.slane %v5192, 4
      %v5194 = vrot.slane %v4363, 5
      %v5195 = vsel %vm2012, %v5193, %v5194
      %v5196 = vrot.slane %v5194, 4
      %v5197 = vrot.slane %v4364, 5
      %v5198 = vsel %vm2012, %v5196, %v5197
      %v5199 = vrot.slane %v5069, 5
      %v5200 = vrot.slane %v5199, 4
      %v5201 = vrot.slane %v4366, 5
      %v5202 = vsel %vm2012, %v5200, %v5201
      %v5203 = vrot.slane %v5201, 4
      %v5204 = vrot.slane %v4367, 5
      %v5205 = vsel %vm2012, %v5203, %v5204
      %v5206 = vrot.slane %v5070, 5
      %v5207 = vrot.slane %v5206, 4
      %v5208 = vrot.slane %v4369, 5
      %v5209 = vsel %vm2012, %v5207, %v5208
      %v5210 = vrot.slane %v5208, 4
      %v5211 = vrot.slane %v4370, 5
      %v5212 = vsel %vm2012, %v5210, %v5211
      %v5213 = vrot.slane %v5071, 5
      %v5214 = vrot.slane %v5213, 4
      %v5215 = vrot.slane %v4372, 5
      %v5216 = vsel %vm2012, %v5214, %v5215
      %v5217 = vrot.slane %v5215, 4
      %v5218 = vrot.slane %v4373, 5
      %v5219 = vsel %vm2012, %v5217, %v5218
      %v5220 = vrot.slane %v5072, 5
      %v5221 = vrot.slane %v5220, 4
      %v5222 = vrot.slane %v4375, 5
      %v5223 = vsel %vm2012, %v5221, %v5222
      %v5224 = vrot.slane %v5222, 4
      %v5225 = vrot.slane %v4376, 5
      %v5226 = vsel %vm2012, %v5224, %v5225
      %v5227 = vrot.slane %v5073, 5
      %v5228 = vrot.slane %v5227, 4
      %v5229 = vrot.slane %v4378, 5
      %v5230 = vsel %vm2012, %v5228, %v5229
      %v5231 = vrot.slane %v5229, 4
      %v5232 = vrot.slane %v4379, 5
      %v5233 = vsel %vm2012, %v5231, %v5232
      %s5234 = scalar_lea.vmem %s1, 64
      %v5235 = vld [vmem:[%s5234] sm:$0xf]
      %v5236 = vunpack.c.l.b16 %v5125
      %v5237 = vunpack.c.l.b16 %v5128
      %v5238 = vunpack.c.l.b16 %v5132
      %v5239 = vunpack.c.l.b16 %v5135
      %v5240 = vunpack.c.l.b16 %v5139
      %v5241 = vunpack.c.l.b16 %v5142
      %v5242 = vunpack.c.l.b16 %v5146
      %v5243 = vunpack.c.l.b16 %v5149
      %v5244 = vunpack.c.l.b16 %v5153
      %v5245 = vunpack.c.l.b16 %v5156
      %v5246 = vunpack.c.l.b16 %v5160
      %v5247 = vunpack.c.l.b16 %v5163
      %v5248 = vunpack.c.l.b16 %v5167
      %v5249 = vunpack.c.l.b16 %v5170
      %v5250 = vunpack.c.l.b16 %v5174
      %v5251 = vunpack.c.l.b16 %v5177
      %v5252 = vunpack.c.l.b16 %v5181
      %v5253 = vunpack.c.l.b16 %v5184
      %v5254 = vunpack.c.l.b16 %v5188
      %v5255 = vunpack.c.l.b16 %v5191
      %v5256 = vunpack.c.l.b16 %v5195
      %v5257 = vunpack.c.l.b16 %v5198
      %v5258 = vunpack.c.l.b16 %v5202
      %v5259 = vunpack.c.l.b16 %v5205
      %v5260 = vunpack.c.l.b16 %v5209
      %v5261 = vunpack.c.l.b16 %v5212
      %v5262 = vunpack.c.l.b16 %v5216
      %v5263 = vunpack.c.l.b16 %v5219
      %v5264 = vunpack.c.l.b16 %v5223
      %v5265 = vunpack.c.l.b16 %v5226
      %v5266 = vunpack.c.l.b16 %v5230
      %v5267 = vunpack.c.l.b16 %v5233
      %v5268 = vpack.c.b16 %v5237, %v5236
      %v5269 = vpack.c.b16 %v5239, %v5238
      %v5270 = vpack.c.b16 %v5241, %v5240
      %v5271 = vpack.c.b16 %v5243, %v5242
      %v5272 = vpack.c.b16 %v5245, %v5244
      %v5273 = vpack.c.b16 %v5247, %v5246
      %v5274 = vpack.c.b16 %v5249, %v5248
      %v5275 = vpack.c.b16 %v5251, %v5250
      %v5276 = vpack.c.b16 %v5253, %v5252
      %v5277 = vpack.c.b16 %v5255, %v5254
      %v5278 = vpack.c.b16 %v5257, %v5256
      %v5279 = vpack.c.b16 %v5259, %v5258
      %v5280 = vpack.c.b16 %v5261, %v5260
      %v5281 = vpack.c.b16 %v5263, %v5262
      %v5282 = vpack.c.b16 %v5265, %v5264
      %v5283 = vpack.c.b16 %v5267, %v5266
      %v5285 = vsel %vm1456, %v5268, 0
      %v5288 = vsel %vm1456, %v5269, 0
      %v5291 = vsel %vm1456, %v5270, 0
      %v5294 = vsel %vm1456, %v5271, 0
      %v5297 = vsel %vm1456, %v5272, 0
      %v5300 = vsel %vm1456, %v5273, 0
      %v5303 = vsel %vm1456, %v5274, 0
      %v5306 = vsel %vm1456, %v5275, 0
      %v5309 = vsel %vm1456, %v5276, 0
      %v5312 = vsel %vm1456, %v5277, 0
      %v5315 = vsel %vm1456, %v5278, 0
      %v5318 = vsel %vm1456, %v5279, 0
      %v5321 = vsel %vm1456, %v5280, 0
      %v5324 = vsel %vm1456, %v5281, 0
      %v5327 = vsel %vm1456, %v5282, 0
      %v5330 = vsel %vm1456, %v5283, 0
      %v5333 = vsel %vm1505, %v5235, 0
      %5335 = vmatprep.subr.bf16.mxu0 0
      %5336 = vmatpush1.bf16.msra.mxu0 0
      %5337 = vmatprep.subr.bf16.mxu0 0
      %5338 = vmatpush1.bf16.msra.mxu0 0
      %5339 = vmatprep.subr.bf16.mxu0 0
      %5340 = vmatpush1.bf16.msra.mxu0 0
      %5341 = vmatprep.subr.bf16.mxu0 0
      %5342 = vmatpush1.bf16.msra.mxu0 0
      %5343 = vmatprep.subr.bf16.mxu0 0
      %5344 = vmatpush1.bf16.msra.mxu0 0
      %5345 = vmatprep.subr.bf16.mxu0 0
      %5346 = vmatpush1.bf16.msra.mxu0 0
      %5347 = vmatprep.subr.bf16.mxu0 0
      %5348 = vmatpush1.bf16.msra.mxu0 0
      %5349 = vmatprep.subr.bf16.mxu0 0
      %5350 = vmatpush1.bf16.msra.mxu0 %v5333
      %5351 = vmatprep.subr.bf16.mxu0 0
      %5352 = vmatpush2.bf16.msra.mxu0 0
      %5353 = vmatprep.subr.bf16.mxu0 0
      %5354 = vmatpush2.bf16.msra.mxu0 0
      %5355 = vmatprep.subr.bf16.mxu0 0
      %5356 = vmatpush2.bf16.msra.mxu0 0
      %5357 = vmatprep.subr.bf16.mxu0 0
      %5358 = vmatpush2.bf16.msra.mxu0 0
      %5359 = vmatprep.subr.bf16.mxu0 0
      %5360 = vmatpush2.bf16.msra.mxu0 0
      %5361 = vmatprep.subr.bf16.mxu0 0
      %5362 = vmatpush2.bf16.msra.mxu0 0
      %5363 = vmatprep.subr.bf16.mxu0 0
      %5364 = vmatpush2.bf16.msra.mxu0 0
      %5365 = vmatprep.subr.bf16.mxu0 0
      %5366 = vmatpush2.bf16.msra.mxu0 0
      %5367 = vmatprep.mubr.bf16.mxu0 0
      %5368 = vmatmul.mubr.bf16.gmra.mxu0 %v5285
      %v5369 = vpop.f32.mrf.mxu0
      %v5370 = vadd.f32 0.0, %v5369
      %v5371 = vpop.f32.mrf.mxu0
      %v5372 = vpop.f32.mrf.mxu0
      %v5373 = vadd.f32 0.0, %v5372
      %v5374 = vpop.f32.mrf.mxu0
      %5375 = vmatprep.mubr.bf16.mxu0 0
      %5376 = vmatmul.mubr.bf16.gmra.mxu0 %v5288
      %v5377 = vpop.f32.mrf.mxu0
      %v5378 = vadd.f32 0.0, %v5377
      %v5379 = vpop.f32.mrf.mxu0
      %v5380 = vpop.f32.mrf.mxu0
      %v5381 = vadd.f32 0.0, %v5380
      %v5382 = vpop.f32.mrf.mxu0
      %5383 = vmatprep.mubr.bf16.mxu0 0
      %5384 = vmatmul.mubr.bf16.gmra.mxu0 %v5291
      %v5385 = vpop.f32.mrf.mxu0
      %v5386 = vadd.f32 0.0, %v5385
      %v5387 = vpop.f32.mrf.mxu0
      %v5388 = vpop.f32.mrf.mxu0
      %v5389 = vadd.f32 0.0, %v5388
      %v5390 = vpop.f32.mrf.mxu0
      %5391 = vmatprep.mubr.bf16.mxu0 0
      %5392 = vmatmul.mubr.bf16.gmra.mxu0 %v5294
      %v5393 = vpop.f32.mrf.mxu0
      %v5394 = vadd.f32 0.0, %v5393
      %v5395 = vpop.f32.mrf.mxu0
      %v5396 = vpop.f32.mrf.mxu0
      %v5397 = vadd.f32 0.0, %v5396
      %v5398 = vpop.f32.mrf.mxu0
      %5399 = vmatprep.mubr.bf16.mxu0 0
      %5400 = vmatmul.mubr.bf16.gmra.mxu0 %v5297
      %v5401 = vpop.f32.mrf.mxu0
      %v5402 = vadd.f32 0.0, %v5401
      %v5403 = vpop.f32.mrf.mxu0
      %v5404 = vpop.f32.mrf.mxu0
      %v5405 = vadd.f32 0.0, %v5404
      %v5406 = vpop.f32.mrf.mxu0
      %5407 = vmatprep.mubr.bf16.mxu0 0
      %5408 = vmatmul.mubr.bf16.gmra.mxu0 %v5300
      %v5409 = vpop.f32.mrf.mxu0
      %v5410 = vadd.f32 0.0, %v5409
      %v5411 = vpop.f32.mrf.mxu0
      %v5412 = vpop.f32.mrf.mxu0
      %v5413 = vadd.f32 0.0, %v5412
      %v5414 = vpop.f32.mrf.mxu0
      %5415 = vmatprep.mubr.bf16.mxu0 0
      %5416 = vmatmul.mubr.bf16.gmra.mxu0 %v5303
      %v5417 = vpop.f32.mrf.mxu0
      %v5418 = vadd.f32 0.0, %v5417
      %v5419 = vpop.f32.mrf.mxu0
      %v5420 = vpop.f32.mrf.mxu0
      %v5421 = vadd.f32 0.0, %v5420
      %v5422 = vpop.f32.mrf.mxu0
      %5423 = vmatprep.mubr.bf16.mxu0 0
      %5424 = vmatmul.mubr.bf16.gmra.mxu0 %v5306
      %v5425 = vpop.f32.mrf.mxu0
      %v5426 = vadd.f32 0.0, %v5425
      %v5427 = vpop.f32.mrf.mxu0
      %v5428 = vpop.f32.mrf.mxu0
      %v5429 = vadd.f32 0.0, %v5428
      %v5430 = vpop.f32.mrf.mxu0
      %5431 = vmatprep.mubr.bf16.mxu0 0
      %5432 = vmatmul.mubr.bf16.gmra.mxu0 %v5309
      %v5433 = vpop.f32.mrf.mxu0
      %v5434 = vadd.f32 0.0, %v5433
      %v5435 = vpop.f32.mrf.mxu0
      %v5436 = vpop.f32.mrf.mxu0
      %v5437 = vadd.f32 0.0, %v5436
      %v5438 = vpop.f32.mrf.mxu0
      %5439 = vmatprep.mubr.bf16.mxu0 0
      %5440 = vmatmul.mubr.bf16.gmra.mxu0 %v5312
      %v5441 = vpop.f32.mrf.mxu0
      %v5442 = vadd.f32 0.0, %v5441
      %v5443 = vpop.f32.mrf.mxu0
      %v5444 = vpop.f32.mrf.mxu0
      %v5445 = vadd.f32 0.0, %v5444
      %v5446 = vpop.f32.mrf.mxu0
      %5447 = vmatprep.mubr.bf16.mxu0 0
      %5448 = vmatmul.mubr.bf16.gmra.mxu0 %v5315
      %v5449 = vpop.f32.mrf.mxu0
      %v5450 = vadd.f32 0.0, %v5449
      %v5451 = vpop.f32.mrf.mxu0
      %v5452 = vpop.f32.mrf.mxu0
      %v5453 = vadd.f32 0.0, %v5452
      %v5454 = vpop.f32.mrf.mxu0
      %5455 = vmatprep.mubr.bf16.mxu0 0
      %5456 = vmatmul.mubr.bf16.gmra.mxu0 %v5318
      %v5457 = vpop.f32.mrf.mxu0
      %v5458 = vadd.f32 0.0, %v5457
      %v5459 = vpop.f32.mrf.mxu0
      %v5460 = vpop.f32.mrf.mxu0
      %v5461 = vadd.f32 0.0, %v5460
      %v5462 = vpop.f32.mrf.mxu0
      %5463 = vmatprep.mubr.bf16.mxu0 0
      %5464 = vmatmul.mubr.bf16.gmra.mxu0 %v5321
      %v5465 = vpop.f32.mrf.mxu0
      %v5466 = vadd.f32 0.0, %v5465
      %v5467 = vpop.f32.mrf.mxu0
      %v5468 = vpop.f32.mrf.mxu0
      %v5469 = vadd.f32 0.0, %v5468
      %v5470 = vpop.f32.mrf.mxu0
      %5471 = vmatprep.mubr.bf16.mxu0 0
      %5472 = vmatmul.mubr.bf16.gmra.mxu0 %v5324
      %v5473 = vpop.f32.mrf.mxu0
      %v5474 = vadd.f32 0.0, %v5473
      %v5475 = vpop.f32.mrf.mxu0
      %v5476 = vpop.f32.mrf.mxu0
      %v5477 = vadd.f32 0.0, %v5476
      %v5478 = vpop.f32.mrf.mxu0
      %5479 = vmatprep.mubr.bf16.mxu0 0
      %5480 = vmatmul.mubr.bf16.gmra.mxu0 %v5327
      %v5481 = vpop.f32.mrf.mxu0
      %v5482 = vadd.f32 0.0, %v5481
      %v5483 = vpop.f32.mrf.mxu0
      %v5484 = vpop.f32.mrf.mxu0
      %v5485 = vadd.f32 0.0, %v5484
      %v5486 = vpop.f32.mrf.mxu0
      %5487 = vmatprep.mubr.bf16.mxu0 0
      %5488 = vmatmul.mubr.bf16.gmra.mxu0 %v5330
      %v5489 = vpop.f32.mrf.mxu0
      %v5490 = vadd.f32 0.0, %v5489
      %v5491 = vpop.f32.mrf.mxu0
      %v5492 = vpop.f32.mrf.mxu0
      %v5493 = vadd.f32 0.0, %v5492
      %v5494 = vpop.f32.mrf.mxu0
      %5495 = vdwg.mxu0
      %v5496 = vadd.f32 %v5026, %v5370
      %v5497 = vadd.f32 %v5027, %v5373
      %v5498 = vadd.f32 %v5028, %v5378
      %v5499 = vadd.f32 %v5029, %v5381
      %v5500 = vadd.f32 %v5030, %v5386
      %v5501 = vadd.f32 %v5031, %v5389
      %v5502 = vadd.f32 %v5032, %v5394
      %v5503 = vadd.f32 %v5033, %v5397
      %v5504 = vadd.f32 %v5034, %v5402
      %v5505 = vadd.f32 %v5035, %v5405
      %v5506 = vadd.f32 %v5036, %v5410
      %v5507 = vadd.f32 %v5037, %v5413
      %v5508 = vadd.f32 %v5038, %v5418
      %v5509 = vadd.f32 %v5039, %v5421
      %v5510 = vadd.f32 %v5040, %v5426
      %v5511 = vadd.f32 %v5041, %v5429
      %v5512 = vadd.f32 %v5042, %v5434
      %v5513 = vadd.f32 %v5043, %v5437
      %v5514 = vadd.f32 %v5044, %v5442
      %v5515 = vadd.f32 %v5045, %v5445
      %v5516 = vadd.f32 %v5046, %v5450
      %v5517 = vadd.f32 %v5047, %v5453
      %v5518 = vadd.f32 %v5048, %v5458
      %v5519 = vadd.f32 %v5049, %v5461
      %v5520 = vadd.f32 %v5050, %v5466
      %v5521 = vadd.f32 %v5051, %v5469
      %v5522 = vadd.f32 %v5052, %v5474
      %v5523 = vadd.f32 %v5053, %v5477
      %v5524 = vadd.f32 %v5054, %v5482
      %v5525 = vadd.f32 %v5055, %v5485
      %v5526 = vadd.f32 %v5056, %v5490
      %v5527 = vadd.f32 %v5057, %v5493
      %v5528 = vld [vmem:[%s2] sm:$0x1]
      %v5530 = vlaneseq
      %v5531 = vshrl.u32 %v5530, 7
      %v5532 = vsub.s32 0, %v5531
      %v5533 = vrot.slane %v5528, %v5532
      %v5535 = vadd.f32 %v5496, %v5533
      %v5536 = vadd.f32 %v5497, %v5533
      %v5537 = vadd.f32 %v5498, %v5533
      %v5538 = vadd.f32 %v5499, %v5533
      %v5539 = vadd.f32 %v5500, %v5533
      %v5540 = vadd.f32 %v5501, %v5533
      %v5541 = vadd.f32 %v5502, %v5533
      %v5542 = vadd.f32 %v5503, %v5533
      %v5543 = vadd.f32 %v5504, %v5533
      %v5544 = vadd.f32 %v5505, %v5533
      %v5545 = vadd.f32 %v5506, %v5533
      %v5546 = vadd.f32 %v5507, %v5533
      %v5547 = vadd.f32 %v5508, %v5533
      %v5548 = vadd.f32 %v5509, %v5533
      %v5549 = vadd.f32 %v5510, %v5533
      %v5550 = vadd.f32 %v5511, %v5533
      %v5551 = vadd.f32 %v5512, %v5533
      %v5552 = vadd.f32 %v5513, %v5533
      %v5553 = vadd.f32 %v5514, %v5533
      %v5554 = vadd.f32 %v5515, %v5533
      %v5555 = vadd.f32 %v5516, %v5533
      %v5556 = vadd.f32 %v5517, %v5533
      %v5557 = vadd.f32 %v5518, %v5533
      %v5558 = vadd.f32 %v5519, %v5533
      %v5559 = vadd.f32 %v5520, %v5533
      %v5560 = vadd.f32 %v5521, %v5533
      %v5561 = vadd.f32 %v5522, %v5533
      %v5562 = vadd.f32 %v5523, %v5533
      %v5563 = vadd.f32 %v5524, %v5533
      %v5564 = vadd.f32 %v5525, %v5533
      %v5565 = vadd.f32 %v5526, %v5533
      %v5566 = vadd.f32 %v5527, %v5533
      %v5567 = vpack.c.bf16 %v5536, %v5535
      %v5568 = vpack.c.bf16 %v5538, %v5537
      %v5569 = vpack.c.bf16 %v5540, %v5539
      %v5570 = vpack.c.bf16 %v5542, %v5541
      %v5571 = vpack.c.bf16 %v5544, %v5543
      %v5572 = vpack.c.bf16 %v5546, %v5545
      %v5573 = vpack.c.bf16 %v5548, %v5547
      %v5574 = vpack.c.bf16 %v5550, %v5549
      %v5575 = vpack.c.bf16 %v5552, %v5551
      %v5576 = vpack.c.bf16 %v5554, %v5553
      %v5577 = vpack.c.bf16 %v5556, %v5555
      %v5578 = vpack.c.bf16 %v5558, %v5557
      %v5579 = vpack.c.bf16 %v5560, %v5559
      %v5580 = vpack.c.bf16 %v5562, %v5561
      %v5581 = vpack.c.bf16 %v5564, %v5563
      %v5582 = vpack.c.bf16 %v5566, %v5565
      %v5599 = vunpack.c.l.b16 %v5567
      %v5600 = vunpack.c.h.b16 %v5567
      %v5601 = vunpack.c.l.b16 %v5568
      %v5602 = vunpack.c.h.b16 %v5568
      %v5603 = vunpack.c.l.b16 %v5569
      %v5604 = vunpack.c.h.b16 %v5569
      %v5605 = vunpack.c.l.b16 %v5570
      %v5606 = vunpack.c.h.b16 %v5570
      %v5607 = vunpack.c.l.b16 %v5571
      %v5608 = vunpack.c.h.b16 %v5571
      %v5609 = vunpack.c.l.b16 %v5572
      %v5610 = vunpack.c.h.b16 %v5572
      %v5611 = vunpack.c.l.b16 %v5573
      %v5612 = vunpack.c.h.b16 %v5573
      %v5613 = vunpack.c.l.b16 %v5574
      %v5614 = vunpack.c.h.b16 %v5574
      %v5615 = vunpack.c.l.b16 %v5575
      %v5616 = vunpack.c.h.b16 %v5575
      %v5617 = vunpack.c.l.b16 %v5576
      %v5618 = vunpack.c.h.b16 %v5576
      %v5619 = vunpack.c.l.b16 %v5577
      %v5620 = vunpack.c.h.b16 %v5577
      %v5621 = vunpack.c.l.b16 %v5578
      %v5622 = vunpack.c.h.b16 %v5578
      %v5623 = vunpack.c.l.b16 %v5579
      %v5624 = vunpack.c.h.b16 %v5579
      %v5625 = vunpack.c.l.b16 %v5580
      %v5626 = vunpack.c.h.b16 %v5580
      %v5627 = vunpack.c.l.b16 %v5581
      %v5628 = vunpack.c.h.b16 %v5581
      %v5629 = vunpack.c.l.b16 %v5582
      %v5630 = vunpack.c.h.b16 %v5582
      %v5631 = vpack.c.b16 %v5599, %v5599
      %v5632 = vpack.c.b16 %v5600, %v5600
      %v5633 = vpack.c.b16 %v5601, %v5601
      %v5634 = vpack.c.b16 %v5602, %v5602
      %v5635 = vpack.c.b16 %v5603, %v5603
      %v5636 = vpack.c.b16 %v5604, %v5604
      %v5637 = vpack.c.b16 %v5605, %v5605
      %v5638 = vpack.c.b16 %v5606, %v5606
      %v5639 = vpack.c.b16 %v5607, %v5607
      %v5640 = vpack.c.b16 %v5608, %v5608
      %v5641 = vpack.c.b16 %v5609, %v5609
      %v5642 = vpack.c.b16 %v5610, %v5610
      %v5643 = vpack.c.b16 %v5611, %v5611
      %v5644 = vpack.c.b16 %v5612, %v5612
      %v5645 = vpack.c.b16 %v5613, %v5613
      %v5646 = vpack.c.b16 %v5614, %v5614
      %v5647 = vpack.c.b16 %v5615, %v5615
      %v5648 = vpack.c.b16 %v5616, %v5616
      %v5649 = vpack.c.b16 %v5617, %v5617
      %v5650 = vpack.c.b16 %v5618, %v5618
      %v5651 = vpack.c.b16 %v5619, %v5619
      %v5652 = vpack.c.b16 %v5620, %v5620
      %v5653 = vpack.c.b16 %v5621, %v5621
      %v5654 = vpack.c.b16 %v5622, %v5622
      %v5655 = vpack.c.b16 %v5623, %v5623
      %v5656 = vpack.c.b16 %v5624, %v5624
      %v5657 = vpack.c.b16 %v5625, %v5625
      %v5658 = vpack.c.b16 %v5626, %v5626
      %v5659 = vpack.c.b16 %v5627, %v5627
      %v5660 = vpack.c.b16 %v5628, %v5628
      %v5661 = vpack.c.b16 %v5629, %v5629
      %v5662 = vpack.c.b16 %v5630, %v5630
      %v5664 = vshrl.u32 %v5631, 16
      %v5666 = vrot.slane %v5664, 7
      %v5667 = vshll.u32 %v5631, 16
      %v5669 = vor.u32 %v5666, %v5667
      %v5670 = vrot.slane %v5666, 4
      %v5672 = vshrl.u32 %v5632, 16
      %v5674 = vrot.slane %v5672, 7
      %v5675 = vshll.u32 %v5632, 16
      %v5677 = vor.u32 %v5674, %v5675
      %v5678 = vsel %vm531, %v5670, %v5677
      %v5679 = vrot.slane %v5674, 4
      %v5681 = vshrl.u32 %v5633, 16
      %v5683 = vrot.slane %v5681, 7
      %v5684 = vshll.u32 %v5633, 16
      %v5686 = vor.u32 %v5683, %v5684
      %v5687 = vrot.slane %v5683, 4
      %v5689 = vshrl.u32 %v5634, 16
      %v5691 = vrot.slane %v5689, 7
      %v5692 = vshll.u32 %v5634, 16
      %v5694 = vor.u32 %v5691, %v5692
      %v5695 = vsel %vm531, %v5687, %v5694
      %v5696 = vrot.slane %v5691, 4
      %v5698 = vshrl.u32 %v5635, 16
      %v5700 = vrot.slane %v5698, 7
      %v5701 = vshll.u32 %v5635, 16
      %v5703 = vor.u32 %v5700, %v5701
      %v5704 = vrot.slane %v5700, 4
      %v5706 = vshrl.u32 %v5636, 16
      %v5708 = vrot.slane %v5706, 7
      %v5709 = vshll.u32 %v5636, 16
      %v5711 = vor.u32 %v5708, %v5709
      %v5712 = vsel %vm531, %v5704, %v5711
      %v5713 = vrot.slane %v5708, 4
      %v5715 = vshrl.u32 %v5637, 16
      %v5717 = vrot.slane %v5715, 7
      %v5718 = vshll.u32 %v5637, 16
      %v5720 = vor.u32 %v5717, %v5718
      %v5721 = vrot.slane %v5717, 4
      %v5723 = vshrl.u32 %v5638, 16
      %v5725 = vrot.slane %v5723, 7
      %v5726 = vshll.u32 %v5638, 16
      %v5728 = vor.u32 %v5725, %v5726
      %v5729 = vsel %vm531, %v5721, %v5728
      %v5730 = vrot.slane %v5725, 4
      %v5732 = vshrl.u32 %v5639, 16
      %v5734 = vrot.slane %v5732, 7
      %v5735 = vshll.u32 %v5639, 16
      %v5737 = vor.u32 %v5734, %v5735
      %v5738 = vrot.slane %v5734, 4
      %v5740 = vshrl.u32 %v5640, 16
      %v5742 = vrot.slane %v5740, 7
      %v5743 = vshll.u32 %v5640, 16
      %v5745 = vor.u32 %v5742, %v5743
      %v5746 = vsel %vm531, %v5738, %v5745
      %v5747 = vrot.slane %v5742, 4
      %v5749 = vshrl.u32 %v5641, 16
      %v5751 = vrot.slane %v5749, 7
      %v5752 = vshll.u32 %v5641, 16
      %v5754 = vor.u32 %v5751, %v5752
      %v5755 = vrot.slane %v5751, 4
      %v5757 = vshrl.u32 %v5642, 16
      %v5759 = vrot.slane %v5757, 7
      %v5760 = vshll.u32 %v5642, 16
      %v5762 = vor.u32 %v5759, %v5760
      %v5763 = vsel %vm531, %v5755, %v5762
      %v5764 = vrot.slane %v5759, 4
      %v5766 = vshrl.u32 %v5643, 16
      %v5768 = vrot.slane %v5766, 7
      %v5769 = vshll.u32 %v5643, 16
      %v5771 = vor.u32 %v5768, %v5769
      %v5772 = vrot.slane %v5768, 4
      %v5774 = vshrl.u32 %v5644, 16
      %v5776 = vrot.slane %v5774, 7
      %v5777 = vshll.u32 %v5644, 16
      %v5779 = vor.u32 %v5776, %v5777
      %v5780 = vsel %vm531, %v5772, %v5779
      %v5781 = vrot.slane %v5776, 4
      %v5783 = vshrl.u32 %v5645, 16
      %v5785 = vrot.slane %v5783, 7
      %v5786 = vshll.u32 %v5645, 16
      %v5788 = vor.u32 %v5785, %v5786
      %v5789 = vrot.slane %v5785, 4
      %v5791 = vshrl.u32 %v5646, 16
      %v5793 = vrot.slane %v5791, 7
      %v5794 = vshll.u32 %v5646, 16
      %v5796 = vor.u32 %v5793, %v5794
      %v5797 = vsel %vm531, %v5789, %v5796
      %v5798 = vrot.slane %v5793, 4
      %v5800 = vshrl.u32 %v5647, 16
      %v5802 = vrot.slane %v5800, 7
      %v5803 = vshll.u32 %v5647, 16
      %v5805 = vor.u32 %v5802, %v5803
      %v5806 = vrot.slane %v5802, 4
      %v5808 = vshrl.u32 %v5648, 16
      %v5810 = vrot.slane %v5808, 7
      %v5811 = vshll.u32 %v5648, 16
      %v5813 = vor.u32 %v5810, %v5811
      %v5814 = vsel %vm531, %v5806, %v5813
      %v5815 = vrot.slane %v5810, 4
      %v5817 = vshrl.u32 %v5649, 16
      %v5819 = vrot.slane %v5817, 7
      %v5820 = vshll.u32 %v5649, 16
      %v5822 = vor.u32 %v5819, %v5820
      %v5823 = vrot.slane %v5819, 4
      %v5825 = vshrl.u32 %v5650, 16
      %v5827 = vrot.slane %v5825, 7
      %v5828 = vshll.u32 %v5650, 16
      %v5830 = vor.u32 %v5827, %v5828
      %v5831 = vsel %vm531, %v5823, %v5830
      %v5832 = vrot.slane %v5827, 4
      %v5834 = vshrl.u32 %v5651, 16
      %v5836 = vrot.slane %v5834, 7
      %v5837 = vshll.u32 %v5651, 16
      %v5839 = vor.u32 %v5836, %v5837
      %v5840 = vrot.slane %v5836, 4
      %v5842 = vshrl.u32 %v5652, 16
      %v5844 = vrot.slane %v5842, 7
      %v5845 = vshll.u32 %v5652, 16
      %v5847 = vor.u32 %v5844, %v5845
      %v5848 = vsel %vm531, %v5840, %v5847
      %v5849 = vrot.slane %v5844, 4
      %v5851 = vshrl.u32 %v5653, 16
      %v5853 = vrot.slane %v5851, 7
      %v5854 = vshll.u32 %v5653, 16
      %v5856 = vor.u32 %v5853, %v5854
      %v5857 = vrot.slane %v5853, 4
      %v5859 = vshrl.u32 %v5654, 16
      %v5861 = vrot.slane %v5859, 7
      %v5862 = vshll.u32 %v5654, 16
      %v5864 = vor.u32 %v5861, %v5862
      %v5865 = vsel %vm531, %v5857, %v5864
      %v5866 = vrot.slane %v5861, 4
      %v5868 = vshrl.u32 %v5655, 16
      %v5870 = vrot.slane %v5868, 7
      %v5871 = vshll.u32 %v5655, 16
      %v5873 = vor.u32 %v5870, %v5871
      %v5874 = vrot.slane %v5870, 4
      %v5876 = vshrl.u32 %v5656, 16
      %v5878 = vrot.slane %v5876, 7
      %v5879 = vshll.u32 %v5656, 16
      %v5881 = vor.u32 %v5878, %v5879
      %v5882 = vsel %vm531, %v5874, %v5881
      %v5883 = vrot.slane %v5878, 4
      %v5885 = vshrl.u32 %v5657, 16
      %v5887 = vrot.slane %v5885, 7
      %v5888 = vshll.u32 %v5657, 16
      %v5890 = vor.u32 %v5887, %v5888
      %v5891 = vrot.slane %v5887, 4
      %v5893 = vshrl.u32 %v5658, 16
      %v5895 = vrot.slane %v5893, 7
      %v5896 = vshll.u32 %v5658, 16
      %v5898 = vor.u32 %v5895, %v5896
      %v5899 = vsel %vm531, %v5891, %v5898
      %v5900 = vrot.slane %v5895, 4
      %v5902 = vshrl.u32 %v5659, 16
      %v5904 = vrot.slane %v5902, 7
      %v5905 = vshll.u32 %v5659, 16
      %v5907 = vor.u32 %v5904, %v5905
      %v5908 = vrot.slane %v5904, 4
      %v5910 = vshrl.u32 %v5660, 16
      %v5912 = vrot.slane %v5910, 7
      %v5913 = vshll.u32 %v5660, 16
      %v5915 = vor.u32 %v5912, %v5913
      %v5916 = vsel %vm531, %v5908, %v5915
      %v5917 = vrot.slane %v5912, 4
      %v5919 = vshrl.u32 %v5661, 16
      %v5921 = vrot.slane %v5919, 7
      %v5922 = vshll.u32 %v5661, 16
      %v5924 = vor.u32 %v5921, %v5922
      %v5925 = vrot.slane %v5921, 4
      %v5927 = vshrl.u32 %v5662, 16
      %v5929 = vrot.slane %v5927, 7
      %v5930 = vshll.u32 %v5662, 16
      %v5932 = vor.u32 %v5929, %v5930
      %v5933 = vsel %vm531, %v5925, %v5932
      %v5934 = vrot.slane %v5929, 4
      %5935 = vrot.lane.b32.xlu0 %v5669, 8
      %v5936 = vpop.permute.xlu0 %5935
      %5937 = vrot.lane.b32.xlu0 %v5678, 8
      %v5938 = vpop.permute.xlu0 %5937
      %5939 = vrot.lane.b32.xlu0 %v5679, 8
      %v5940 = vpop.permute.xlu0 %5939
      %5941 = vrot.lane.b32.xlu0 %v5686, 8
      %v5942 = vpop.permute.xlu0 %5941
      %5943 = vrot.lane.b32.xlu0 %v5695, 8
      %v5944 = vpop.permute.xlu0 %5943
      %5945 = vrot.lane.b32.xlu0 %v5696, 8
      %v5946 = vpop.permute.xlu0 %5945
      %5947 = vrot.lane.b32.xlu0 %v5703, 8
      %v5948 = vpop.permute.xlu0 %5947
      %5949 = vrot.lane.b32.xlu0 %v5712, 8
      %v5950 = vpop.permute.xlu0 %5949
      %5951 = vrot.lane.b32.xlu0 %v5713, 8
      %v5952 = vpop.permute.xlu0 %5951
      %5953 = vrot.lane.b32.xlu0 %v5720, 8
      %v5954 = vpop.permute.xlu0 %5953
      %5955 = vrot.lane.b32.xlu0 %v5729, 8
      %v5956 = vpop.permute.xlu0 %5955
      %5957 = vrot.lane.b32.xlu0 %v5730, 8
      %v5958 = vpop.permute.xlu0 %5957
      %5959 = vrot.lane.b32.xlu0 %v5737, 8
      %v5960 = vpop.permute.xlu0 %5959
      %5961 = vrot.lane.b32.xlu0 %v5746, 8
      %v5962 = vpop.permute.xlu0 %5961
      %5963 = vrot.lane.b32.xlu0 %v5747, 8
      %v5964 = vpop.permute.xlu0 %5963
      %5965 = vrot.lane.b32.xlu0 %v5754, 8
      %v5966 = vpop.permute.xlu0 %5965
      %5967 = vrot.lane.b32.xlu0 %v5763, 8
      %v5968 = vpop.permute.xlu0 %5967
      %5969 = vrot.lane.b32.xlu0 %v5764, 8
      %v5970 = vpop.permute.xlu0 %5969
      %5971 = vrot.lane.b32.xlu0 %v5771, 8
      %v5972 = vpop.permute.xlu0 %5971
      %5973 = vrot.lane.b32.xlu0 %v5780, 8
      %v5974 = vpop.permute.xlu0 %5973
      %5975 = vrot.lane.b32.xlu0 %v5781, 8
      %v5976 = vpop.permute.xlu0 %5975
      %5977 = vrot.lane.b32.xlu0 %v5788, 8
      %v5978 = vpop.permute.xlu0 %5977
      %5979 = vrot.lane.b32.xlu0 %v5797, 8
      %v5980 = vpop.permute.xlu0 %5979
      %5981 = vrot.lane.b32.xlu0 %v5798, 8
      %v5982 = vpop.permute.xlu0 %5981
      %5983 = vrot.lane.b32.xlu0 %v5805, 8
      %v5984 = vpop.permute.xlu0 %5983
      %5985 = vrot.lane.b32.xlu0 %v5814, 8
      %v5986 = vpop.permute.xlu0 %5985
      %5987 = vrot.lane.b32.xlu0 %v5815, 8
      %v5988 = vpop.permute.xlu0 %5987
      %5989 = vrot.lane.b32.xlu0 %v5822, 8
      %v5990 = vpop.permute.xlu0 %5989
      %5991 = vrot.lane.b32.xlu0 %v5831, 8
      %v5992 = vpop.permute.xlu0 %5991
      %5993 = vrot.lane.b32.xlu0 %v5832, 8
      %v5994 = vpop.permute.xlu0 %5993
      %5995 = vrot.lane.b32.xlu0 %v5839, 8
      %v5996 = vpop.permute.xlu0 %5995
      %5997 = vrot.lane.b32.xlu0 %v5848, 8
      %v5998 = vpop.permute.xlu0 %5997
      %5999 = vrot.lane.b32.xlu0 %v5849, 8
      %v6000 = vpop.permute.xlu0 %5999
      %6001 = vrot.lane.b32.xlu0 %v5856, 8
      %v6002 = vpop.permute.xlu0 %6001
      %6003 = vrot.lane.b32.xlu0 %v5865, 8
      %v6004 = vpop.permute.xlu0 %6003
      %6005 = vrot.lane.b32.xlu0 %v5866, 8
      %v6006 = vpop.permute.xlu0 %6005
      %6007 = vrot.lane.b32.xlu0 %v5873, 8
      %v6008 = vpop.permute.xlu0 %6007
      %6009 = vrot.lane.b32.xlu0 %v5882, 8
      %v6010 = vpop.permute.xlu0 %6009
      %6011 = vrot.lane.b32.xlu0 %v5883, 8
      %v6012 = vpop.permute.xlu0 %6011
      %6013 = vrot.lane.b32.xlu0 %v5890, 8
      %v6014 = vpop.permute.xlu0 %6013
      %6015 = vrot.lane.b32.xlu0 %v5899, 8
      %v6016 = vpop.permute.xlu0 %6015
      %6017 = vrot.lane.b32.xlu0 %v5900, 8
      %v6018 = vpop.permute.xlu0 %6017
      %6019 = vrot.lane.b32.xlu0 %v5907, 8
      %v6020 = vpop.permute.xlu0 %6019
      %6021 = vrot.lane.b32.xlu0 %v5916, 8
      %v6022 = vpop.permute.xlu0 %6021
      %6023 = vrot.lane.b32.xlu0 %v5917, 8
      %v6024 = vpop.permute.xlu0 %6023
      %6025 = vrot.lane.b32.xlu0 %v5924, 8
      %v6026 = vpop.permute.xlu0 %6025
      %6027 = vrot.lane.b32.xlu0 %v5933, 8
      %v6028 = vpop.permute.xlu0 %6027
      %6029 = vrot.lane.b32.xlu0 %v5934, 8
      %v6030 = vpop.permute.xlu0 %6029
      %vm6079 = vcmask 93248
      %vm6080 = vmand %vm6079, %vm378
      %v6081 = vsel %vm6080, %v5936, %v2777
      %6082 = vst [vmem:[%s852] sm:$0xf] %v6081
      %vm6083 = vcmask 93248
      %6084 = vst.msk [vmem:[%s852 + $0x4] sm:$0xf] %vm6083, %v5938
      %vm6085 = vcmask 90176
      %vm6086 = vmand %vm6085, %vm322
      %v6087 = vld [vmem:[%s852 + $0x8] sm:$0x1]
      %v6088 = vsel %vm6086, %v5940, %v6087
      %6089 = vst [vmem:[%s852 + $0x8] sm:$0x1] %v6088
      %v6090 = vld [vmem:[%s852 + $0xc] sm:$0xf]
      %v6091 = vsel %vm6080, %v5942, %v6090
      %6092 = vst [vmem:[%s852 + $0xc] sm:$0xf] %v6091
      %6093 = vst.msk [vmem:[%s852 + $0x10] sm:$0xf] %vm6083, %v5944
      %v6094 = vld [vmem:[%s852 + $0x14] sm:$0x1]
      %v6095 = vsel %vm6086, %v5946, %v6094
      %6096 = vst [vmem:[%s852 + $0x14] sm:$0x1] %v6095
      %v6097 = vld [vmem:[%s852 + $0x18] sm:$0xf]
      %v6098 = vsel %vm6080, %v5948, %v6097
      %6099 = vst [vmem:[%s852 + $0x18] sm:$0xf] %v6098
      %6100 = vst.msk [vmem:[%s852 + $0x1c] sm:$0xf] %vm6083, %v5950
      %v6101 = vld [vmem:[%s852 + $0x20] sm:$0x1]
      %v6102 = vsel %vm6086, %v5952, %v6101
      %6103 = vst [vmem:[%s852 + $0x20] sm:$0x1] %v6102
      %v6104 = vld [vmem:[%s852 + $0x24] sm:$0xf]
      %v6105 = vsel %vm6080, %v5954, %v6104
      %6106 = vst [vmem:[%s852 + $0x24] sm:$0xf] %v6105
      %6107 = vst.msk [vmem:[%s852 + $0x28] sm:$0xf] %vm6083, %v5956
      %v6108 = vld [vmem:[%s852 + $0x2c] sm:$0x1]
      %v6109 = vsel %vm6086, %v5958, %v6108
      %6110 = vst [vmem:[%s852 + $0x2c] sm:$0x1] %v6109
      %v6111 = vld [vmem:[%s852 + $0x30] sm:$0xf]
      %v6112 = vsel %vm6080, %v5960, %v6111
      %6113 = vst [vmem:[%s852 + $0x30] sm:$0xf] %v6112
      %6114 = vst.msk [vmem:[%s852 + $0x34] sm:$0xf] %vm6083, %v5962
      %v6115 = vld [vmem:[%s852 + $0x38] sm:$0x1]
      %v6116 = vsel %vm6086, %v5964, %v6115
      %6117 = vst [vmem:[%s852 + $0x38] sm:$0x1] %v6116
      %v6118 = vld [vmem:[%s852 + $0x3c] sm:$0xf]
      %v6119 = vsel %vm6080, %v5966, %v6118
      %6120 = vst [vmem:[%s852 + $0x3c] sm:$0xf] %v6119
      %6121 = vst.msk [vmem:[%s852 + $0x40] sm:$0xf] %vm6083, %v5968
      %v6122 = vld [vmem:[%s852 + $0x44] sm:$0x1]
      %v6123 = vsel %vm6086, %v5970, %v6122
      %6124 = vst [vmem:[%s852 + $0x44] sm:$0x1] %v6123
      %v6125 = vld [vmem:[%s852 + $0x48] sm:$0xf]
      %v6126 = vsel %vm6080, %v5972, %v6125
      %6127 = vst [vmem:[%s852 + $0x48] sm:$0xf] %v6126
      %6128 = vst.msk [vmem:[%s852 + $0x4c] sm:$0xf] %vm6083, %v5974
      %v6129 = vld [vmem:[%s852 + $0x50] sm:$0x1]
      %v6130 = vsel %vm6086, %v5976, %v6129
      %6131 = vst [vmem:[%s852 + $0x50] sm:$0x1] %v6130
      %v6132 = vld [vmem:[%s852 + $0x54] sm:$0xf]
      %v6133 = vsel %vm6080, %v5978, %v6132
      %6134 = vst [vmem:[%s852 + $0x54] sm:$0xf] %v6133
      %6135 = vst.msk [vmem:[%s852 + $0x58] sm:$0xf] %vm6083, %v5980
      %v6136 = vld [vmem:[%s852 + $0x5c] sm:$0x1]
      %v6137 = vsel %vm6086, %v5982, %v6136
      %6138 = vst [vmem:[%s852 + $0x5c] sm:$0x1] %v6137
      %v6139 = vld [vmem:[%s852 + $0x60] sm:$0xf]
      %v6140 = vsel %vm6080, %v5984, %v6139
      %6141 = vst [vmem:[%s852 + $0x60] sm:$0xf] %v6140
      %6142 = vst.msk [vmem:[%s852 + $0x64] sm:$0xf] %vm6083, %v5986
      %v6143 = vld [vmem:[%s852 + $0x68] sm:$0x1]
      %v6144 = vsel %vm6086, %v5988, %v6143
      %6145 = vst [vmem:[%s852 + $0x68] sm:$0x1] %v6144
      %v6146 = vld [vmem:[%s852 + $0x6c] sm:$0xf]
      %v6147 = vsel %vm6080, %v5990, %v6146
      %6148 = vst [vmem:[%s852 + $0x6c] sm:$0xf] %v6147
      %6149 = vst.msk [vmem:[%s852 + $0x70] sm:$0xf] %vm6083, %v5992
      %v6150 = vld [vmem:[%s852 + $0x74] sm:$0x1]
      %v6151 = vsel %vm6086, %v5994, %v6150
      %6152 = vst [vmem:[%s852 + $0x74] sm:$0x1] %v6151
      %v6153 = vld [vmem:[%s852 + $0x78] sm:$0xf]
      %v6154 = vsel %vm6080, %v5996, %v6153
      %6155 = vst [vmem:[%s852 + $0x78] sm:$0xf] %v6154
      %6156 = vst.msk [vmem:[%s852 + $0x7c] sm:$0xf] %vm6083, %v5998
      %v6157 = vld [vmem:[%s852 + $0x80] sm:$0x1]
      %v6158 = vsel %vm6086, %v6000, %v6157
      %6159 = vst [vmem:[%s852 + $0x80] sm:$0x1] %v6158
      %v6160 = vld [vmem:[%s852 + $0x84] sm:$0xf]
      %v6161 = vsel %vm6080, %v6002, %v6160
      %6162 = vst [vmem:[%s852 + $0x84] sm:$0xf] %v6161
      %6163 = vst.msk [vmem:[%s852 + $0x88] sm:$0xf] %vm6083, %v6004
      %v6164 = vld [vmem:[%s852 + $0x8c] sm:$0x1]
      %v6165 = vsel %vm6086, %v6006, %v6164
      %6166 = vst [vmem:[%s852 + $0x8c] sm:$0x1] %v6165
      %v6167 = vld [vmem:[%s852 + $0x90] sm:$0xf]
      %v6168 = vsel %vm6080, %v6008, %v6167
      %6169 = vst [vmem:[%s852 + $0x90] sm:$0xf] %v6168
      %6170 = vst.msk [vmem:[%s852 + $0x94] sm:$0xf] %vm6083, %v6010
      %v6171 = vld [vmem:[%s852 + $0x98] sm:$0x1]
      %v6172 = vsel %vm6086, %v6012, %v6171
      %6173 = vst [vmem:[%s852 + $0x98] sm:$0x1] %v6172
      %v6174 = vld [vmem:[%s852 + $0x9c] sm:$0xf]
      %v6175 = vsel %vm6080, %v6014, %v6174
      %6176 = vst [vmem:[%s852 + $0x9c] sm:$0xf] %v6175
      %6177 = vst.msk [vmem:[%s852 + $0xa0] sm:$0xf] %vm6083, %v6016
      %v6178 = vld [vmem:[%s852 + $0xa4] sm:$0x1]
      %v6179 = vsel %vm6086, %v6018, %v6178
      %6180 = vst [vmem:[%s852 + $0xa4] sm:$0x1] %v6179
      %v6181 = vld [vmem:[%s852 + $0xa8] sm:$0xf]
      %v6182 = vsel %vm6080, %v6020, %v6181
      %6183 = vst [vmem:[%s852 + $0xa8] sm:$0xf] %v6182
      %6184 = vst.msk [vmem:[%s852 + $0xac] sm:$0xf] %vm6083, %v6022
      %v6185 = vld [vmem:[%s852 + $0xb0] sm:$0x1]
      %v6186 = vsel %vm6086, %v6024, %v6185
      %6187 = vst [vmem:[%s852 + $0xb0] sm:$0x1] %v6186
      %v6188 = vld [vmem:[%s852 + $0xb4] sm:$0xf]
      %v6189 = vsel %vm6080, %v6026, %v6188
      %6190 = vst [vmem:[%s852 + $0xb4] sm:$0xf] %v6189
      %6191 = vst.msk [vmem:[%s852 + $0xb8] sm:$0xf] %vm6083, %v6028
      %v6192 = vld [vmem:[%s852 + $0xbc] sm:$0x1]
      %v6193 = vsel %vm6086, %v6030, %v6192
      %6194 = vst [vmem:[%s852 + $0xbc] sm:$0x1] %v6193
      %v6195 = vld [vmem:[#allocation2] sm:$0xf]
      %v6196 = vld [vmem:[#allocation2 + $0x4] sm:$0xf]
      %v6197 = vld [vmem:[#allocation2 + $0xc] sm:$0xf]
      %v6198 = vld [vmem:[#allocation2 + $0x10] sm:$0xf]
      %v6199 = vld [vmem:[#allocation2 + $0x18] sm:$0xf]
      %v6200 = vld [vmem:[#allocation2 + $0x1c] sm:$0xf]
      %v6201 = vld [vmem:[#allocation2 + $0x24] sm:$0xf]
      %v6202 = vld [vmem:[#allocation2 + $0x28] sm:$0xf]
      %v6203 = vld [vmem:[#allocation2 + $0x30] sm:$0xf]
      %v6204 = vld [vmem:[#allocation2 + $0x34] sm:$0xf]
      %v6205 = vld [vmem:[#allocation2 + $0x3c] sm:$0xf]
      %v6206 = vld [vmem:[#allocation2 + $0x40] sm:$0xf]
      %v6207 = vld [vmem:[#allocation2 + $0x48] sm:$0xf]
      %v6208 = vld [vmem:[#allocation2 + $0x4c] sm:$0xf]
      %v6209 = vld [vmem:[#allocation2 + $0x54] sm:$0xf]
      %v6210 = vld [vmem:[#allocation2 + $0x58] sm:$0xf]
      %v6211 = vld [vmem:[#allocation2 + $0x60] sm:$0xf]
      %v6212 = vld [vmem:[#allocation2 + $0x64] sm:$0xf]
      %v6213 = vld [vmem:[#allocation2 + $0x6c] sm:$0xf]
      %v6214 = vld [vmem:[#allocation2 + $0x70] sm:$0xf]
      %v6215 = vld [vmem:[#allocation2 + $0x78] sm:$0xf]
      %v6216 = vld [vmem:[#allocation2 + $0x7c] sm:$0xf]
      %v6217 = vld [vmem:[#allocation2 + $0x84] sm:$0xf]
      %v6218 = vld [vmem:[#allocation2 + $0x88] sm:$0xf]
      %v6219 = vld [vmem:[#allocation2 + $0x90] sm:$0xf]
      %v6220 = vld [vmem:[#allocation2 + $0x94] sm:$0xf]
      %v6221 = vld [vmem:[#allocation2 + $0x9c] sm:$0xf]
      %v6222 = vld [vmem:[#allocation2 + $0xa0] sm:$0xf]
      %v6223 = vld [vmem:[#allocation2 + $0xa8] sm:$0xf]
      %v6224 = vld [vmem:[#allocation2 + $0xac] sm:$0xf]
      %v6225 = vld [vmem:[#allocation2 + $0xb4] sm:$0xf]
      %v6226 = vld [vmem:[#allocation2 + $0xb8] sm:$0xf]
      %s6227 = scalar_lea.vmem %s1, 72
      %v6228 = vld [vmem:[%s6227] sm:$0xf]
      %v6229 = vld [vmem:[%s6227 + $0x4] sm:$0x3]
      %v6230 = vld [vmem:[#allocation2 + $0x8] sm:$0x1]
      %v6231 = vld [vmem:[#allocation2 + $0x14] sm:$0x1]
      %v6232 = vld [vmem:[#allocation2 + $0x20] sm:$0x1]
      %v6233 = vld [vmem:[#allocation2 + $0x2c] sm:$0x1]
      %v6234 = vld [vmem:[#allocation2 + $0x38] sm:$0x1]
      %v6235 = vld [vmem:[#allocation2 + $0x44] sm:$0x1]
      %v6236 = vld [vmem:[#allocation2 + $0x50] sm:$0x1]
      %v6237 = vld [vmem:[#allocation2 + $0x5c] sm:$0x1]
      %v6238 = vld [vmem:[#allocation2 + $0x68] sm:$0x1]
      %v6239 = vld [vmem:[#allocation2 + $0x74] sm:$0x1]
      %v6240 = vld [vmem:[#allocation2 + $0x80] sm:$0x1]
      %v6241 = vld [vmem:[#allocation2 + $0x8c] sm:$0x1]
      %v6242 = vld [vmem:[#allocation2 + $0x98] sm:$0x1]
      %v6243 = vld [vmem:[#allocation2 + $0xa4] sm:$0x1]
      %v6244 = vld [vmem:[#allocation2 + $0xb0] sm:$0x1]
      %v6245 = vld [vmem:[#allocation2 + $0xbc] sm:$0x1]
      %v6247 = vshrl.u32 %v6195, 16
      %v6249 = vrot.slane %v6247, 4
      %v6250 = vshll.u32 %v6195, 16
      %v6252 = vrot.slane %v6250, 5
      %v6253 = vor.u32 %v6249, %v6252
      %v6254 = vrot.slane %v6253, 4
      %v6256 = vshll.u32 %v6196, 16
      %v6258 = vrot.slane %v6256, 5
      %v6259 = vsel %vm1021, %v6254, %v6258
      %v6260 = vshrl.u32 %v6196, 16
      %v6262 = vrot.slane %v6260, 4
      %v6263 = vor.u32 %v6262, %v6258
      %v6264 = vrot.slane %v6263, 4
      %v6266 = vshll.u32 %v6230, 16
      %v6268 = vrot.slane %v6266, 5
      %v6269 = vsel %vm1021, %v6264, %v6268
      %v6271 = vshrl.u32 %v6197, 16
      %v6273 = vrot.slane %v6271, 4
      %v6274 = vshll.u32 %v6197, 16
      %v6276 = vrot.slane %v6274, 5
      %v6277 = vor.u32 %v6273, %v6276
      %v6278 = vrot.slane %v6277, 4
      %v6280 = vshll.u32 %v6198, 16
      %v6282 = vrot.slane %v6280, 5
      %v6283 = vsel %vm1021, %v6278, %v6282
      %v6284 = vshrl.u32 %v6198, 16
      %v6286 = vrot.slane %v6284, 4
      %v6287 = vor.u32 %v6286, %v6282
      %v6288 = vrot.slane %v6287, 4
      %v6290 = vshll.u32 %v6231, 16
      %v6292 = vrot.slane %v6290, 5
      %v6293 = vsel %vm1021, %v6288, %v6292
      %v6295 = vshrl.u32 %v6199, 16
      %v6297 = vrot.slane %v6295, 4
      %v6298 = vshll.u32 %v6199, 16
      %v6300 = vrot.slane %v6298, 5
      %v6301 = vor.u32 %v6297, %v6300
      %v6302 = vrot.slane %v6301, 4
      %v6304 = vshll.u32 %v6200, 16
      %v6306 = vrot.slane %v6304, 5
      %v6307 = vsel %vm1021, %v6302, %v6306
      %v6308 = vshrl.u32 %v6200, 16
      %v6310 = vrot.slane %v6308, 4
      %v6311 = vor.u32 %v6310, %v6306
      %v6312 = vrot.slane %v6311, 4
      %v6314 = vshll.u32 %v6232, 16
      %v6316 = vrot.slane %v6314, 5
      %v6317 = vsel %vm1021, %v6312, %v6316
      %v6319 = vshrl.u32 %v6201, 16
      %v6321 = vrot.slane %v6319, 4
      %v6322 = vshll.u32 %v6201, 16
      %v6324 = vrot.slane %v6322, 5
      %v6325 = vor.u32 %v6321, %v6324
      %v6326 = vrot.slane %v6325, 4
      %v6328 = vshll.u32 %v6202, 16
      %v6330 = vrot.slane %v6328, 5
      %v6331 = vsel %vm1021, %v6326, %v6330
      %v6332 = vshrl.u32 %v6202, 16
      %v6334 = vrot.slane %v6332, 4
      %v6335 = vor.u32 %v6334, %v6330
      %v6336 = vrot.slane %v6335, 4
      %v6338 = vshll.u32 %v6233, 16
      %v6340 = vrot.slane %v6338, 5
      %v6341 = vsel %vm1021, %v6336, %v6340
      %v6343 = vshrl.u32 %v6203, 16
      %v6345 = vrot.slane %v6343, 4
      %v6346 = vshll.u32 %v6203, 16
      %v6348 = vrot.slane %v6346, 5
      %v6349 = vor.u32 %v6345, %v6348
      %v6350 = vrot.slane %v6349, 4
      %v6352 = vshll.u32 %v6204, 16
      %v6354 = vrot.slane %v6352, 5
      %v6355 = vsel %vm1021, %v6350, %v6354
      %v6356 = vshrl.u32 %v6204, 16
      %v6358 = vrot.slane %v6356, 4
      %v6359 = vor.u32 %v6358, %v6354
      %v6360 = vrot.slane %v6359, 4
      %v6362 = vshll.u32 %v6234, 16
      %v6364 = vrot.slane %v6362, 5
      %v6365 = vsel %vm1021, %v6360, %v6364
      %v6367 = vshrl.u32 %v6205, 16
      %v6369 = vrot.slane %v6367, 4
      %v6370 = vshll.u32 %v6205, 16
      %v6372 = vrot.slane %v6370, 5
      %v6373 = vor.u32 %v6369, %v6372
      %v6374 = vrot.slane %v6373, 4
      %v6376 = vshll.u32 %v6206, 16
      %v6378 = vrot.slane %v6376, 5
      %v6379 = vsel %vm1021, %v6374, %v6378
      %v6380 = vshrl.u32 %v6206, 16
      %v6382 = vrot.slane %v6380, 4
      %v6383 = vor.u32 %v6382, %v6378
      %v6384 = vrot.slane %v6383, 4
      %v6386 = vshll.u32 %v6235, 16
      %v6388 = vrot.slane %v6386, 5
      %v6389 = vsel %vm1021, %v6384, %v6388
      %v6391 = vshrl.u32 %v6207, 16
      %v6393 = vrot.slane %v6391, 4
      %v6394 = vshll.u32 %v6207, 16
      %v6396 = vrot.slane %v6394, 5
      %v6397 = vor.u32 %v6393, %v6396
      %v6398 = vrot.slane %v6397, 4
      %v6400 = vshll.u32 %v6208, 16
      %v6402 = vrot.slane %v6400, 5
      %v6403 = vsel %vm1021, %v6398, %v6402
      %v6404 = vshrl.u32 %v6208, 16
      %v6406 = vrot.slane %v6404, 4
      %v6407 = vor.u32 %v6406, %v6402
      %v6408 = vrot.slane %v6407, 4
      %v6410 = vshll.u32 %v6236, 16
      %v6412 = vrot.slane %v6410, 5
      %v6413 = vsel %vm1021, %v6408, %v6412
      %v6415 = vshrl.u32 %v6209, 16
      %v6417 = vrot.slane %v6415, 4
      %v6418 = vshll.u32 %v6209, 16
      %v6420 = vrot.slane %v6418, 5
      %v6421 = vor.u32 %v6417, %v6420
      %v6422 = vrot.slane %v6421, 4
      %v6424 = vshll.u32 %v6210, 16
      %v6426 = vrot.slane %v6424, 5
      %v6427 = vsel %vm1021, %v6422, %v6426
      %v6428 = vshrl.u32 %v6210, 16
      %v6430 = vrot.slane %v6428, 4
      %v6431 = vor.u32 %v6430, %v6426
      %v6432 = vrot.slane %v6431, 4
      %v6434 = vshll.u32 %v6237, 16
      %v6436 = vrot.slane %v6434, 5
      %v6437 = vsel %vm1021, %v6432, %v6436
      %v6439 = vshrl.u32 %v6211, 16
      %v6441 = vrot.slane %v6439, 4
      %v6442 = vshll.u32 %v6211, 16
      %v6444 = vrot.slane %v6442, 5
      %v6445 = vor.u32 %v6441, %v6444
      %v6446 = vrot.slane %v6445, 4
      %v6448 = vshll.u32 %v6212, 16
      %v6450 = vrot.slane %v6448, 5
      %v6451 = vsel %vm1021, %v6446, %v6450
      %v6452 = vshrl.u32 %v6212, 16
      %v6454 = vrot.slane %v6452, 4
      %v6455 = vor.u32 %v6454, %v6450
      %v6456 = vrot.slane %v6455, 4
      %v6458 = vshll.u32 %v6238, 16
      %v6460 = vrot.slane %v6458, 5
      %v6461 = vsel %vm1021, %v6456, %v6460
      %v6463 = vshrl.u32 %v6213, 16
      %v6465 = vrot.slane %v6463, 4
      %v6466 = vshll.u32 %v6213, 16
      %v6468 = vrot.slane %v6466, 5
      %v6469 = vor.u32 %v6465, %v6468
      %v6470 = vrot.slane %v6469, 4
      %v6472 = vshll.u32 %v6214, 16
      %v6474 = vrot.slane %v6472, 5
      %v6475 = vsel %vm1021, %v6470, %v6474
      %v6476 = vshrl.u32 %v6214, 16
      %v6478 = vrot.slane %v6476, 4
      %v6479 = vor.u32 %v6478, %v6474
      %v6480 = vrot.slane %v6479, 4
      %v6482 = vshll.u32 %v6239, 16
      %v6484 = vrot.slane %v6482, 5
      %v6485 = vsel %vm1021, %v6480, %v6484
      %v6487 = vshrl.u32 %v6215, 16
      %v6489 = vrot.slane %v6487, 4
      %v6490 = vshll.u32 %v6215, 16
      %v6492 = vrot.slane %v6490, 5
      %v6493 = vor.u32 %v6489, %v6492
      %v6494 = vrot.slane %v6493, 4
      %v6496 = vshll.u32 %v6216, 16
      %v6498 = vrot.slane %v6496, 5
      %v6499 = vsel %vm1021, %v6494, %v6498
      %v6500 = vshrl.u32 %v6216, 16
      %v6502 = vrot.slane %v6500, 4
      %v6503 = vor.u32 %v6502, %v6498
      %v6504 = vrot.slane %v6503, 4
      %v6506 = vshll.u32 %v6240, 16
      %v6508 = vrot.slane %v6506, 5
      %v6509 = vsel %vm1021, %v6504, %v6508
      %v6511 = vshrl.u32 %v6217, 16
      %v6513 = vrot.slane %v6511, 4
      %v6514 = vshll.u32 %v6217, 16
      %v6516 = vrot.slane %v6514, 5
      %v6517 = vor.u32 %v6513, %v6516
      %v6518 = vrot.slane %v6517, 4
      %v6520 = vshll.u32 %v6218, 16
      %v6522 = vrot.slane %v6520, 5
      %v6523 = vsel %vm1021, %v6518, %v6522
      %v6524 = vshrl.u32 %v6218, 16
      %v6526 = vrot.slane %v6524, 4
      %v6527 = vor.u32 %v6526, %v6522
      %v6528 = vrot.slane %v6527, 4
      %v6530 = vshll.u32 %v6241, 16
      %v6532 = vrot.slane %v6530, 5
      %v6533 = vsel %vm1021, %v6528, %v6532
      %v6535 = vshrl.u32 %v6219, 16
      %v6537 = vrot.slane %v6535, 4
      %v6538 = vshll.u32 %v6219, 16
      %v6540 = vrot.slane %v6538, 5
      %v6541 = vor.u32 %v6537, %v6540
      %v6542 = vrot.slane %v6541, 4
      %v6544 = vshll.u32 %v6220, 16
      %v6546 = vrot.slane %v6544, 5
      %v6547 = vsel %vm1021, %v6542, %v6546
      %v6548 = vshrl.u32 %v6220, 16
      %v6550 = vrot.slane %v6548, 4
      %v6551 = vor.u32 %v6550, %v6546
      %v6552 = vrot.slane %v6551, 4
      %v6554 = vshll.u32 %v6242, 16
      %v6556 = vrot.slane %v6554, 5
      %v6557 = vsel %vm1021, %v6552, %v6556
      %v6559 = vshrl.u32 %v6221, 16
      %v6561 = vrot.slane %v6559, 4
      %v6562 = vshll.u32 %v6221, 16
      %v6564 = vrot.slane %v6562, 5
      %v6565 = vor.u32 %v6561, %v6564
      %v6566 = vrot.slane %v6565, 4
      %v6568 = vshll.u32 %v6222, 16
      %v6570 = vrot.slane %v6568, 5
      %v6571 = vsel %vm1021, %v6566, %v6570
      %v6572 = vshrl.u32 %v6222, 16
      %v6574 = vrot.slane %v6572, 4
      %v6575 = vor.u32 %v6574, %v6570
      %v6576 = vrot.slane %v6575, 4
      %v6578 = vshll.u32 %v6243, 16
      %v6580 = vrot.slane %v6578, 5
      %v6581 = vsel %vm1021, %v6576, %v6580
      %v6583 = vshrl.u32 %v6223, 16
      %v6585 = vrot.slane %v6583, 4
      %v6586 = vshll.u32 %v6223, 16
      %v6588 = vrot.slane %v6586, 5
      %v6589 = vor.u32 %v6585, %v6588
      %v6590 = vrot.slane %v6589, 4
      %v6592 = vshll.u32 %v6224, 16
      %v6594 = vrot.slane %v6592, 5
      %v6595 = vsel %vm1021, %v6590, %v6594
      %v6596 = vshrl.u32 %v6224, 16
      %v6598 = vrot.slane %v6596, 4
      %v6599 = vor.u32 %v6598, %v6594
      %v6600 = vrot.slane %v6599, 4
      %v6602 = vshll.u32 %v6244, 16
      %v6604 = vrot.slane %v6602, 5
      %v6605 = vsel %vm1021, %v6600, %v6604
      %v6607 = vshrl.u32 %v6225, 16
      %v6609 = vrot.slane %v6607, 4
      %v6610 = vshll.u32 %v6225, 16
      %v6612 = vrot.slane %v6610, 5
      %v6613 = vor.u32 %v6609, %v6612
      %v6614 = vrot.slane %v6613, 4
      %v6616 = vshll.u32 %v6226, 16
      %v6618 = vrot.slane %v6616, 5
      %v6619 = vsel %vm1021, %v6614, %v6618
      %v6620 = vshrl.u32 %v6226, 16
      %v6622 = vrot.slane %v6620, 4
      %v6623 = vor.u32 %v6622, %v6618
      %v6624 = vrot.slane %v6623, 4
      %v6626 = vshll.u32 %v6245, 16
      %v6628 = vrot.slane %v6626, 5
      %v6629 = vsel %vm1021, %v6624, %v6628
      %s6630 = scalar_lea.vmem %s1, 80
      %v6631 = vld [vmem:[%s6630] sm:$0xf]
      %v6632 = vld [vmem:[%s6630 + $0x4] sm:$0x3]
      %v6633 = vunpack.c.l.b16 %v6259
      %v6634 = vunpack.c.l.b16 %v6269
      %v6635 = vunpack.c.l.b16 %v6283
      %v6636 = vunpack.c.l.b16 %v6293
      %v6637 = vunpack.c.l.b16 %v6307
      %v6638 = vunpack.c.l.b16 %v6317
      %v6639 = vunpack.c.l.b16 %v6331
      %v6640 = vunpack.c.l.b16 %v6341
      %v6641 = vunpack.c.l.b16 %v6355
      %v6642 = vunpack.c.l.b16 %v6365
      %v6643 = vunpack.c.l.b16 %v6379
      %v6644 = vunpack.c.l.b16 %v6389
      %v6645 = vunpack.c.l.b16 %v6403
      %v6646 = vunpack.c.l.b16 %v6413
      %v6647 = vunpack.c.l.b16 %v6427
      %v6648 = vunpack.c.l.b16 %v6437
      %v6649 = vunpack.c.l.b16 %v6451
      %v6650 = vunpack.c.l.b16 %v6461
      %v6651 = vunpack.c.l.b16 %v6475
      %v6652 = vunpack.c.l.b16 %v6485
      %v6653 = vunpack.c.l.b16 %v6499
      %v6654 = vunpack.c.l.b16 %v6509
      %v6655 = vunpack.c.l.b16 %v6523
      %v6656 = vunpack.c.l.b16 %v6533
      %v6657 = vunpack.c.l.b16 %v6547
      %v6658 = vunpack.c.l.b16 %v6557
      %v6659 = vunpack.c.l.b16 %v6571
      %v6660 = vunpack.c.l.b16 %v6581
      %v6661 = vunpack.c.l.b16 %v6595
      %v6662 = vunpack.c.l.b16 %v6605
      %v6663 = vunpack.c.l.b16 %v6619
      %v6664 = vunpack.c.l.b16 %v6629
      %v6665 = vpack.c.b16 %v6634, %v6633
      %v6666 = vpack.c.b16 %v6636, %v6635
      %v6667 = vpack.c.b16 %v6638, %v6637
      %v6668 = vpack.c.b16 %v6640, %v6639
      %v6669 = vpack.c.b16 %v6642, %v6641
      %v6670 = vpack.c.b16 %v6644, %v6643
      %v6671 = vpack.c.b16 %v6646, %v6645
      %v6672 = vpack.c.b16 %v6648, %v6647
      %v6673 = vpack.c.b16 %v6650, %v6649
      %v6674 = vpack.c.b16 %v6652, %v6651
      %v6675 = vpack.c.b16 %v6654, %v6653
      %v6676 = vpack.c.b16 %v6656, %v6655
      %v6677 = vpack.c.b16 %v6658, %v6657
      %v6678 = vpack.c.b16 %v6660, %v6659
      %v6679 = vpack.c.b16 %v6662, %v6661
      %v6680 = vpack.c.b16 %v6664, %v6663
      %v6683 = vunpack.c.l.b16 %v6631
      %v6684 = vunpack.c.l.b16 %v6632
      %v6685 = vpack.c.b16 %v6684, %v6683
      %vm6686 = vcmask 97280
      %v6688 = vsel %vm6686, %v6665, 0
      %v6691 = vsel %vm6686, %v6666, 0
      %v6694 = vsel %vm6686, %v6667, 0
      %v6697 = vsel %vm6686, %v6668, 0
      %v6700 = vsel %vm6686, %v6669, 0
      %v6703 = vsel %vm6686, %v6670, 0
      %v6706 = vsel %vm6686, %v6671, 0
      %v6709 = vsel %vm6686, %v6672, 0
      %v6712 = vsel %vm6686, %v6673, 0
      %v6715 = vsel %vm6686, %v6674, 0
      %v6718 = vsel %vm6686, %v6675, 0
      %v6721 = vsel %vm6686, %v6676, 0
      %v6724 = vsel %vm6686, %v6677, 0
      %v6727 = vsel %vm6686, %v6678, 0
      %v6730 = vsel %vm6686, %v6679, 0
      %v6733 = vsel %vm6686, %v6680, 0
      %vm6735 = vcmask 1045504
      %v6737 = vsel %vm6735, %v6685, 0
      %6739 = vmatprep.subr.bf16.mxu0 0
      %6740 = vmatpush1.bf16.msra.mxu0 0
      %6741 = vmatprep.subr.bf16.mxu0 0
      %6742 = vmatpush1.bf16.msra.mxu0 0
      %6743 = vmatprep.subr.bf16.mxu0 0
      %6744 = vmatpush1.bf16.msra.mxu0 0
      %6745 = vmatprep.subr.bf16.mxu0 0
      %6746 = vmatpush1.bf16.msra.mxu0 0
      %6747 = vmatprep.subr.bf16.mxu0 0
      %6748 = vmatpush1.bf16.msra.mxu0 0
      %6749 = vmatprep.subr.bf16.mxu0 0
      %6750 = vmatpush1.bf16.msra.mxu0 0
      %6751 = vmatprep.subr.bf16.mxu0 0
      %6752 = vmatpush1.bf16.msra.mxu0 0
      %6753 = vmatprep.subr.bf16.mxu0 0
      %6754 = vmatpush1.bf16.msra.mxu0 %v6737
      %6755 = vmatprep.subr.bf16.mxu0 0
      %6756 = vmatpush2.bf16.msra.mxu0 0
      %6757 = vmatprep.subr.bf16.mxu0 0
      %6758 = vmatpush2.bf16.msra.mxu0 0
      %6759 = vmatprep.subr.bf16.mxu0 0
      %6760 = vmatpush2.bf16.msra.mxu0 0
      %6761 = vmatprep.subr.bf16.mxu0 0
      %6762 = vmatpush2.bf16.msra.mxu0 0
      %6763 = vmatprep.subr.bf16.mxu0 0
      %6764 = vmatpush2.bf16.msra.mxu0 0
      %6765 = vmatprep.subr.bf16.mxu0 0
      %6766 = vmatpush2.bf16.msra.mxu0 0
      %6767 = vmatprep.subr.bf16.mxu0 0
      %6768 = vmatpush2.bf16.msra.mxu0 0
      %6769 = vmatprep.subr.bf16.mxu0 0
      %6770 = vmatpush2.bf16.msra.mxu0 0
      %6771 = vmatprep.mubr.bf16.mxu0 0
      %6772 = vmatmul.mubr.bf16.gmra.mxu0 %v6688
      %v6773 = vpop.f32.mrf.mxu0
      %v6774 = vadd.f32 0.0, %v6773
      %v6775 = vpop.f32.mrf.mxu0
      %v6776 = vpop.f32.mrf.mxu0
      %v6777 = vadd.f32 0.0, %v6776
      %v6778 = vpop.f32.mrf.mxu0
      %6779 = vmatprep.mubr.bf16.mxu0 0
      %6780 = vmatmul.mubr.bf16.gmra.mxu0 %v6691
      %v6781 = vpop.f32.mrf.mxu0
      %v6782 = vadd.f32 0.0, %v6781
      %v6783 = vpop.f32.mrf.mxu0
      %v6784 = vpop.f32.mrf.mxu0
      %v6785 = vadd.f32 0.0, %v6784
      %v6786 = vpop.f32.mrf.mxu0
      %6787 = vmatprep.mubr.bf16.mxu0 0
      %6788 = vmatmul.mubr.bf16.gmra.mxu0 %v6694
      %v6789 = vpop.f32.mrf.mxu0
      %v6790 = vadd.f32 0.0, %v6789
      %v6791 = vpop.f32.mrf.mxu0
      %v6792 = vpop.f32.mrf.mxu0
      %v6793 = vadd.f32 0.0, %v6792
      %v6794 = vpop.f32.mrf.mxu0
      %6795 = vmatprep.mubr.bf16.mxu0 0
      %6796 = vmatmul.mubr.bf16.gmra.mxu0 %v6697
      %v6797 = vpop.f32.mrf.mxu0
      %v6798 = vadd.f32 0.0, %v6797
      %v6799 = vpop.f32.mrf.mxu0
      %v6800 = vpop.f32.mrf.mxu0
      %v6801 = vadd.f32 0.0, %v6800
      %v6802 = vpop.f32.mrf.mxu0
      %6803 = vmatprep.mubr.bf16.mxu0 0
      %6804 = vmatmul.mubr.bf16.gmra.mxu0 %v6700
      %v6805 = vpop.f32.mrf.mxu0
      %v6806 = vadd.f32 0.0, %v6805
      %v6807 = vpop.f32.mrf.mxu0
      %v6808 = vpop.f32.mrf.mxu0
      %v6809 = vadd.f32 0.0, %v6808
      %v6810 = vpop.f32.mrf.mxu0
      %6811 = vmatprep.mubr.bf16.mxu0 0
      %6812 = vmatmul.mubr.bf16.gmra.mxu0 %v6703
      %v6813 = vpop.f32.mrf.mxu0
      %v6814 = vadd.f32 0.0, %v6813
      %v6815 = vpop.f32.mrf.mxu0
      %v6816 = vpop.f32.mrf.mxu0
      %v6817 = vadd.f32 0.0, %v6816
      %v6818 = vpop.f32.mrf.mxu0
      %6819 = vmatprep.mubr.bf16.mxu0 0
      %6820 = vmatmul.mubr.bf16.gmra.mxu0 %v6706
      %v6821 = vpop.f32.mrf.mxu0
      %v6822 = vadd.f32 0.0, %v6821
      %v6823 = vpop.f32.mrf.mxu0
      %v6824 = vpop.f32.mrf.mxu0
      %v6825 = vadd.f32 0.0, %v6824
      %v6826 = vpop.f32.mrf.mxu0
      %6827 = vmatprep.mubr.bf16.mxu0 0
      %6828 = vmatmul.mubr.bf16.gmra.mxu0 %v6709
      %v6829 = vpop.f32.mrf.mxu0
      %v6830 = vadd.f32 0.0, %v6829
      %v6831 = vpop.f32.mrf.mxu0
      %v6832 = vpop.f32.mrf.mxu0
      %v6833 = vadd.f32 0.0, %v6832
      %v6834 = vpop.f32.mrf.mxu0
      %6835 = vmatprep.mubr.bf16.mxu0 0
      %6836 = vmatmul.mubr.bf16.gmra.mxu0 %v6712
      %v6837 = vpop.f32.mrf.mxu0
      %v6838 = vadd.f32 0.0, %v6837
      %v6839 = vpop.f32.mrf.mxu0
      %v6840 = vpop.f32.mrf.mxu0
      %v6841 = vadd.f32 0.0, %v6840
      %v6842 = vpop.f32.mrf.mxu0
      %6843 = vmatprep.mubr.bf16.mxu0 0
      %6844 = vmatmul.mubr.bf16.gmra.mxu0 %v6715
      %v6845 = vpop.f32.mrf.mxu0
      %v6846 = vadd.f32 0.0, %v6845
      %v6847 = vpop.f32.mrf.mxu0
      %v6848 = vpop.f32.mrf.mxu0
      %v6849 = vadd.f32 0.0, %v6848
      %v6850 = vpop.f32.mrf.mxu0
      %6851 = vmatprep.mubr.bf16.mxu0 0
      %6852 = vmatmul.mubr.bf16.gmra.mxu0 %v6718
      %v6853 = vpop.f32.mrf.mxu0
      %v6854 = vadd.f32 0.0, %v6853
      %v6855 = vpop.f32.mrf.mxu0
      %v6856 = vpop.f32.mrf.mxu0
      %v6857 = vadd.f32 0.0, %v6856
      %v6858 = vpop.f32.mrf.mxu0
      %6859 = vmatprep.mubr.bf16.mxu0 0
      %6860 = vmatmul.mubr.bf16.gmra.mxu0 %v6721
      %v6861 = vpop.f32.mrf.mxu0
      %v6862 = vadd.f32 0.0, %v6861
      %v6863 = vpop.f32.mrf.mxu0
      %v6864 = vpop.f32.mrf.mxu0
      %v6865 = vadd.f32 0.0, %v6864
      %v6866 = vpop.f32.mrf.mxu0
      %6867 = vmatprep.mubr.bf16.mxu0 0
      %6868 = vmatmul.mubr.bf16.gmra.mxu0 %v6724
      %v6869 = vpop.f32.mrf.mxu0
      %v6870 = vadd.f32 0.0, %v6869
      %v6871 = vpop.f32.mrf.mxu0
      %v6872 = vpop.f32.mrf.mxu0
      %v6873 = vadd.f32 0.0, %v6872
      %v6874 = vpop.f32.mrf.mxu0
      %6875 = vmatprep.mubr.bf16.mxu0 0
      %6876 = vmatmul.mubr.bf16.gmra.mxu0 %v6727
      %v6877 = vpop.f32.mrf.mxu0
      %v6878 = vadd.f32 0.0, %v6877
      %v6879 = vpop.f32.mrf.mxu0
      %v6880 = vpop.f32.mrf.mxu0
      %v6881 = vadd.f32 0.0, %v6880
      %v6882 = vpop.f32.mrf.mxu0
      %6883 = vmatprep.mubr.bf16.mxu0 0
      %6884 = vmatmul.mubr.bf16.gmra.mxu0 %v6730
      %v6885 = vpop.f32.mrf.mxu0
      %v6886 = vadd.f32 0.0, %v6885
      %v6887 = vpop.f32.mrf.mxu0
      %v6888 = vpop.f32.mrf.mxu0
      %v6889 = vadd.f32 0.0, %v6888
      %v6890 = vpop.f32.mrf.mxu0
      %6891 = vmatprep.mubr.bf16.mxu0 0
      %6892 = vmatmul.mubr.bf16.gmra.mxu0 %v6733
      %v6893 = vpop.f32.mrf.mxu0
      %v6894 = vadd.f32 0.0, %v6893
      %v6895 = vpop.f32.mrf.mxu0
      %v6896 = vpop.f32.mrf.mxu0
      %v6897 = vadd.f32 0.0, %v6896
      %v6898 = vpop.f32.mrf.mxu0
      %6899 = vdwg.mxu0
      %v6932 = vunpack.c.l.b16 %v6195
      %v6933 = vunpack.c.l.b16 %v6196
      %v6934 = vunpack.c.l.b16 %v6197
      %v6935 = vunpack.c.l.b16 %v6198
      %v6936 = vunpack.c.l.b16 %v6199
      %v6937 = vunpack.c.l.b16 %v6200
      %v6938 = vunpack.c.l.b16 %v6201
      %v6939 = vunpack.c.l.b16 %v6202
      %v6940 = vunpack.c.l.b16 %v6203
      %v6941 = vunpack.c.l.b16 %v6204
      %v6942 = vunpack.c.l.b16 %v6205
      %v6943 = vunpack.c.l.b16 %v6206
      %v6944 = vunpack.c.l.b16 %v6207
      %v6945 = vunpack.c.l.b16 %v6208
      %v6946 = vunpack.c.l.b16 %v6209
      %v6947 = vunpack.c.l.b16 %v6210
      %v6948 = vunpack.c.l.b16 %v6211
      %v6949 = vunpack.c.l.b16 %v6212
      %v6950 = vunpack.c.l.b16 %v6213
      %v6951 = vunpack.c.l.b16 %v6214
      %v6952 = vunpack.c.l.b16 %v6215
      %v6953 = vunpack.c.l.b16 %v6216
      %v6954 = vunpack.c.l.b16 %v6217
      %v6955 = vunpack.c.l.b16 %v6218
      %v6956 = vunpack.c.l.b16 %v6219
      %v6957 = vunpack.c.l.b16 %v6220
      %v6958 = vunpack.c.l.b16 %v6221
      %v6959 = vunpack.c.l.b16 %v6222
      %v6960 = vunpack.c.l.b16 %v6223
      %v6961 = vunpack.c.l.b16 %v6224
      %v6962 = vunpack.c.l.b16 %v6225
      %v6963 = vunpack.c.l.b16 %v6226
      %v6964 = vpack.c.b16 %v6933, %v6932
      %v6965 = vpack.c.b16 %v6935, %v6934
      %v6966 = vpack.c.b16 %v6937, %v6936
      %v6967 = vpack.c.b16 %v6939, %v6938
      %v6968 = vpack.c.b16 %v6941, %v6940
      %v6969 = vpack.c.b16 %v6943, %v6942
      %v6970 = vpack.c.b16 %v6945, %v6944
      %v6971 = vpack.c.b16 %v6947, %v6946
      %v6972 = vpack.c.b16 %v6949, %v6948
      %v6973 = vpack.c.b16 %v6951, %v6950
      %v6974 = vpack.c.b16 %v6953, %v6952
      %v6975 = vpack.c.b16 %v6955, %v6954
      %v6976 = vpack.c.b16 %v6957, %v6956
      %v6977 = vpack.c.b16 %v6959, %v6958
      %v6978 = vpack.c.b16 %v6961, %v6960
      %v6979 = vpack.c.b16 %v6963, %v6962
      %v6982 = vunpack.c.l.b16 %v6228
      %v6983 = vunpack.c.l.b16 %v6229
      %v6984 = vpack.c.b16 %v6983, %v6982
      %v6986 = vsel %vm6686, %v6964, 0
      %v6989 = vsel %vm6686, %v6965, 0
      %v6992 = vsel %vm6686, %v6966, 0
      %v6995 = vsel %vm6686, %v6967, 0
      %v6998 = vsel %vm6686, %v6968, 0
      %v7001 = vsel %vm6686, %v6969, 0
      %v7004 = vsel %vm6686, %v6970, 0
      %v7007 = vsel %vm6686, %v6971, 0
      %v7010 = vsel %vm6686, %v6972, 0
      %v7013 = vsel %vm6686, %v6973, 0
      %v7016 = vsel %vm6686, %v6974, 0
      %v7019 = vsel %vm6686, %v6975, 0
      %v7022 = vsel %vm6686, %v6976, 0
      %v7025 = vsel %vm6686, %v6977, 0
      %v7028 = vsel %vm6686, %v6978, 0
      %v7031 = vsel %vm6686, %v6979, 0
      %v7034 = vsel %vm6735, %v6984, 0
      %7036 = vmatprep.subr.bf16.mxu0 0
      %7037 = vmatpush1.bf16.msra.mxu0 0
      %7038 = vmatprep.subr.bf16.mxu0 0
      %7039 = vmatpush1.bf16.msra.mxu0 0
      %7040 = vmatprep.subr.bf16.mxu0 0
      %7041 = vmatpush1.bf16.msra.mxu0 0
      %7042 = vmatprep.subr.bf16.mxu0 0
      %7043 = vmatpush1.bf16.msra.mxu0 0
      %7044 = vmatprep.subr.bf16.mxu0 0
      %7045 = vmatpush1.bf16.msra.mxu0 0
      %7046 = vmatprep.subr.bf16.mxu0 0
      %7047 = vmatpush1.bf16.msra.mxu0 0
      %7048 = vmatprep.subr.bf16.mxu0 0
      %7049 = vmatpush1.bf16.msra.mxu0 0
      %7050 = vmatprep.subr.bf16.mxu0 0
      %7051 = vmatpush1.bf16.msra.mxu0 %v7034
      %7052 = vmatprep.subr.bf16.mxu0 0
      %7053 = vmatpush2.bf16.msra.mxu0 0
      %7054 = vmatprep.subr.bf16.mxu0 0
      %7055 = vmatpush2.bf16.msra.mxu0 0
      %7056 = vmatprep.subr.bf16.mxu0 0
      %7057 = vmatpush2.bf16.msra.mxu0 0
      %7058 = vmatprep.subr.bf16.mxu0 0
      %7059 = vmatpush2.bf16.msra.mxu0 0
      %7060 = vmatprep.subr.bf16.mxu0 0
      %7061 = vmatpush2.bf16.msra.mxu0 0
      %7062 = vmatprep.subr.bf16.mxu0 0
      %7063 = vmatpush2.bf16.msra.mxu0 0
      %7064 = vmatprep.subr.bf16.mxu0 0
      %7065 = vmatpush2.bf16.msra.mxu0 0
      %7066 = vmatprep.subr.bf16.mxu0 0
      %7067 = vmatpush2.bf16.msra.mxu0 0
      %7068 = vmatprep.mubr.bf16.mxu0 0
      %7069 = vmatmul.mubr.bf16.gmra.mxu0 %v6986
      %v7070 = vpop.f32.mrf.mxu0
      %v7071 = vadd.f32 %v6774, %v7070
      %v7072 = vpop.f32.mrf.mxu0
      %v7073 = vpop.f32.mrf.mxu0
      %v7074 = vadd.f32 %v6777, %v7073
      %v7075 = vpop.f32.mrf.mxu0
      %7076 = vmatprep.mubr.bf16.mxu0 0
      %7077 = vmatmul.mubr.bf16.gmra.mxu0 %v6989
      %v7078 = vpop.f32.mrf.mxu0
      %v7079 = vadd.f32 %v6782, %v7078
      %v7080 = vpop.f32.mrf.mxu0
      %v7081 = vpop.f32.mrf.mxu0
      %v7082 = vadd.f32 %v6785, %v7081
      %v7083 = vpop.f32.mrf.mxu0
      %7084 = vmatprep.mubr.bf16.mxu0 0
      %7085 = vmatmul.mubr.bf16.gmra.mxu0 %v6992
      %v7086 = vpop.f32.mrf.mxu0
      %v7087 = vadd.f32 %v6790, %v7086
      %v7088 = vpop.f32.mrf.mxu0
      %v7089 = vpop.f32.mrf.mxu0
      %v7090 = vadd.f32 %v6793, %v7089
      %v7091 = vpop.f32.mrf.mxu0
      %7092 = vmatprep.mubr.bf16.mxu0 0
      %7093 = vmatmul.mubr.bf16.gmra.mxu0 %v6995
      %v7094 = vpop.f32.mrf.mxu0
      %v7095 = vadd.f32 %v6798, %v7094
      %v7096 = vpop.f32.mrf.mxu0
      %v7097 = vpop.f32.mrf.mxu0
      %v7098 = vadd.f32 %v6801, %v7097
      %v7099 = vpop.f32.mrf.mxu0
      %7100 = vmatprep.mubr.bf16.mxu0 0
      %7101 = vmatmul.mubr.bf16.gmra.mxu0 %v6998
      %v7102 = vpop.f32.mrf.mxu0
      %v7103 = vadd.f32 %v6806, %v7102
      %v7104 = vpop.f32.mrf.mxu0
      %v7105 = vpop.f32.mrf.mxu0
      %v7106 = vadd.f32 %v6809, %v7105
      %v7107 = vpop.f32.mrf.mxu0
      %7108 = vmatprep.mubr.bf16.mxu0 0
      %7109 = vmatmul.mubr.bf16.gmra.mxu0 %v7001
      %v7110 = vpop.f32.mrf.mxu0
      %v7111 = vadd.f32 %v6814, %v7110
      %v7112 = vpop.f32.mrf.mxu0
      %v7113 = vpop.f32.mrf.mxu0
      %v7114 = vadd.f32 %v6817, %v7113
      %v7115 = vpop.f32.mrf.mxu0
      %7116 = vmatprep.mubr.bf16.mxu0 0
      %7117 = vmatmul.mubr.bf16.gmra.mxu0 %v7004
      %v7118 = vpop.f32.mrf.mxu0
      %v7119 = vadd.f32 %v6822, %v7118
      %v7120 = vpop.f32.mrf.mxu0
      %v7121 = vpop.f32.mrf.mxu0
      %v7122 = vadd.f32 %v6825, %v7121
      %v7123 = vpop.f32.mrf.mxu0
      %7124 = vmatprep.mubr.bf16.mxu0 0
      %7125 = vmatmul.mubr.bf16.gmra.mxu0 %v7007
      %v7126 = vpop.f32.mrf.mxu0
      %v7127 = vadd.f32 %v6830, %v7126
      %v7128 = vpop.f32.mrf.mxu0
      %v7129 = vpop.f32.mrf.mxu0
      %v7130 = vadd.f32 %v6833, %v7129
      %v7131 = vpop.f32.mrf.mxu0
      %7132 = vmatprep.mubr.bf16.mxu0 0
      %7133 = vmatmul.mubr.bf16.gmra.mxu0 %v7010
      %v7134 = vpop.f32.mrf.mxu0
      %v7135 = vadd.f32 %v6838, %v7134
      %v7136 = vpop.f32.mrf.mxu0
      %v7137 = vpop.f32.mrf.mxu0
      %v7138 = vadd.f32 %v6841, %v7137
      %v7139 = vpop.f32.mrf.mxu0
      %7140 = vmatprep.mubr.bf16.mxu0 0
      %7141 = vmatmul.mubr.bf16.gmra.mxu0 %v7013
      %v7142 = vpop.f32.mrf.mxu0
      %v7143 = vadd.f32 %v6846, %v7142
      %v7144 = vpop.f32.mrf.mxu0
      %v7145 = vpop.f32.mrf.mxu0
      %v7146 = vadd.f32 %v6849, %v7145
      %v7147 = vpop.f32.mrf.mxu0
      %7148 = vmatprep.mubr.bf16.mxu0 0
      %7149 = vmatmul.mubr.bf16.gmra.mxu0 %v7016
      %v7150 = vpop.f32.mrf.mxu0
      %v7151 = vadd.f32 %v6854, %v7150
      %v7152 = vpop.f32.mrf.mxu0
      %v7153 = vpop.f32.mrf.mxu0
      %v7154 = vadd.f32 %v6857, %v7153
      %v7155 = vpop.f32.mrf.mxu0
      %7156 = vmatprep.mubr.bf16.mxu0 0
      %7157 = vmatmul.mubr.bf16.gmra.mxu0 %v7019
      %v7158 = vpop.f32.mrf.mxu0
      %v7159 = vadd.f32 %v6862, %v7158
      %v7160 = vpop.f32.mrf.mxu0
      %v7161 = vpop.f32.mrf.mxu0
      %v7162 = vadd.f32 %v6865, %v7161
      %v7163 = vpop.f32.mrf.mxu0
      %7164 = vmatprep.mubr.bf16.mxu0 0
      %7165 = vmatmul.mubr.bf16.gmra.mxu0 %v7022
      %v7166 = vpop.f32.mrf.mxu0
      %v7167 = vadd.f32 %v6870, %v7166
      %v7168 = vpop.f32.mrf.mxu0
      %v7169 = vpop.f32.mrf.mxu0
      %v7170 = vadd.f32 %v6873, %v7169
      %v7171 = vpop.f32.mrf.mxu0
      %7172 = vmatprep.mubr.bf16.mxu0 0
      %7173 = vmatmul.mubr.bf16.gmra.mxu0 %v7025
      %v7174 = vpop.f32.mrf.mxu0
      %v7175 = vadd.f32 %v6878, %v7174
      %v7176 = vpop.f32.mrf.mxu0
      %v7177 = vpop.f32.mrf.mxu0
      %v7178 = vadd.f32 %v6881, %v7177
      %v7179 = vpop.f32.mrf.mxu0
      %7180 = vmatprep.mubr.bf16.mxu0 0
      %7181 = vmatmul.mubr.bf16.gmra.mxu0 %v7028
      %v7182 = vpop.f32.mrf.mxu0
      %v7183 = vadd.f32 %v6886, %v7182
      %v7184 = vpop.f32.mrf.mxu0
      %v7185 = vpop.f32.mrf.mxu0
      %v7186 = vadd.f32 %v6889, %v7185
      %v7187 = vpop.f32.mrf.mxu0
      %7188 = vmatprep.mubr.bf16.mxu0 0
      %7189 = vmatmul.mubr.bf16.gmra.mxu0 %v7031
      %v7190 = vpop.f32.mrf.mxu0
      %v7191 = vadd.f32 %v6894, %v7190
      %v7192 = vpop.f32.mrf.mxu0
      %v7193 = vpop.f32.mrf.mxu0
      %v7194 = vadd.f32 %v6897, %v7193
      %v7195 = vpop.f32.mrf.mxu0
      %7196 = vdwg.mxu0
      %v7197 = vld [vmem:[#allocation2] sm:$0xe]
      %v7198 = vld [vmem:[#allocation2 + $0xc] sm:$0xe]
      %v7199 = vld [vmem:[#allocation2 + $0x18] sm:$0xe]
      %v7200 = vld [vmem:[#allocation2 + $0x24] sm:$0xe]
      %v7201 = vld [vmem:[#allocation2 + $0x30] sm:$0xe]
      %v7202 = vld [vmem:[#allocation2 + $0x3c] sm:$0xe]
      %v7203 = vld [vmem:[#allocation2 + $0x48] sm:$0xe]
      %v7204 = vld [vmem:[#allocation2 + $0x54] sm:$0xe]
      %v7205 = vld [vmem:[#allocation2 + $0x60] sm:$0xe]
      %v7206 = vld [vmem:[#allocation2 + $0x6c] sm:$0xe]
      %v7207 = vld [vmem:[#allocation2 + $0x78] sm:$0xe]
      %v7208 = vld [vmem:[#allocation2 + $0x84] sm:$0xe]
      %v7209 = vld [vmem:[#allocation2 + $0x90] sm:$0xe]
      %v7210 = vld [vmem:[#allocation2 + $0x9c] sm:$0xe]
      %v7211 = vld [vmem:[#allocation2 + $0xa8] sm:$0xe]
      %v7212 = vld [vmem:[#allocation2 + $0xb4] sm:$0xe]
      %v7245 = vrot.slane %v7197, 5
      %v7246 = vrot.slane %v7245, 4
      %v7247 = vrot.slane %v6196, 5
      %v7248 = vsel %vm2012, %v7246, %v7247
      %v7249 = vrot.slane %v7247, 4
      %v7250 = vrot.slane %v6230, 5
      %v7251 = vsel %vm2012, %v7249, %v7250
      %v7252 = vrot.slane %v7198, 5
      %v7253 = vrot.slane %v7252, 4
      %v7254 = vrot.slane %v6198, 5
      %v7255 = vsel %vm2012, %v7253, %v7254
      %v7256 = vrot.slane %v7254, 4
      %v7257 = vrot.slane %v6231, 5
      %v7258 = vsel %vm2012, %v7256, %v7257
      %v7259 = vrot.slane %v7199, 5
      %v7260 = vrot.slane %v7259, 4
      %v7261 = vrot.slane %v6200, 5
      %v7262 = vsel %vm2012, %v7260, %v7261
      %v7263 = vrot.slane %v7261, 4
      %v7264 = vrot.slane %v6232, 5
      %v7265 = vsel %vm2012, %v7263, %v7264
      %v7266 = vrot.slane %v7200, 5
      %v7267 = vrot.slane %v7266, 4
      %v7268 = vrot.slane %v6202, 5
      %v7269 = vsel %vm2012, %v7267, %v7268
      %v7270 = vrot.slane %v7268, 4
      %v7271 = vrot.slane %v6233, 5
      %v7272 = vsel %vm2012, %v7270, %v7271
      %v7273 = vrot.slane %v7201, 5
      %v7274 = vrot.slane %v7273, 4
      %v7275 = vrot.slane %v6204, 5
      %v7276 = vsel %vm2012, %v7274, %v7275
      %v7277 = vrot.slane %v7275, 4
      %v7278 = vrot.slane %v6234, 5
      %v7279 = vsel %vm2012, %v7277, %v7278
      %v7280 = vrot.slane %v7202, 5
      %v7281 = vrot.slane %v7280, 4
      %v7282 = vrot.slane %v6206, 5
      %v7283 = vsel %vm2012, %v7281, %v7282
      %v7284 = vrot.slane %v7282, 4
      %v7285 = vrot.slane %v6235, 5
      %v7286 = vsel %vm2012, %v7284, %v7285
      %v7287 = vrot.slane %v7203, 5
      %v7288 = vrot.slane %v7287, 4
      %v7289 = vrot.slane %v6208, 5
      %v7290 = vsel %vm2012, %v7288, %v7289
      %v7291 = vrot.slane %v7289, 4
      %v7292 = vrot.slane %v6236, 5
      %v7293 = vsel %vm2012, %v7291, %v7292
      %v7294 = vrot.slane %v7204, 5
      %v7295 = vrot.slane %v7294, 4
      %v7296 = vrot.slane %v6210, 5
      %v7297 = vsel %vm2012, %v7295, %v7296
      %v7298 = vrot.slane %v7296, 4
      %v7299 = vrot.slane %v6237, 5
      %v7300 = vsel %vm2012, %v7298, %v7299
      %v7301 = vrot.slane %v7205, 5
      %v7302 = vrot.slane %v7301, 4
      %v7303 = vrot.slane %v6212, 5
      %v7304 = vsel %vm2012, %v7302, %v7303
      %v7305 = vrot.slane %v7303, 4
      %v7306 = vrot.slane %v6238, 5
      %v7307 = vsel %vm2012, %v7305, %v7306
      %v7308 = vrot.slane %v7206, 5
      %v7309 = vrot.slane %v7308, 4
      %v7310 = vrot.slane %v6214, 5
      %v7311 = vsel %vm2012, %v7309, %v7310
      %v7312 = vrot.slane %v7310, 4
      %v7313 = vrot.slane %v6239, 5
      %v7314 = vsel %vm2012, %v7312, %v7313
      %v7315 = vrot.slane %v7207, 5
      %v7316 = vrot.slane %v7315, 4
      %v7317 = vrot.slane %v6216, 5
      %v7318 = vsel %vm2012, %v7316, %v7317
      %v7319 = vrot.slane %v7317, 4
      %v7320 = vrot.slane %v6240, 5
      %v7321 = vsel %vm2012, %v7319, %v7320
      %v7322 = vrot.slane %v7208, 5
      %v7323 = vrot.slane %v7322, 4
      %v7324 = vrot.slane %v6218, 5
      %v7325 = vsel %vm2012, %v7323, %v7324
      %v7326 = vrot.slane %v7324, 4
      %v7327 = vrot.slane %v6241, 5
      %v7328 = vsel %vm2012, %v7326, %v7327
      %v7329 = vrot.slane %v7209, 5
      %v7330 = vrot.slane %v7329, 4
      %v7331 = vrot.slane %v6220, 5
      %v7332 = vsel %vm2012, %v7330, %v7331
      %v7333 = vrot.slane %v7331, 4
      %v7334 = vrot.slane %v6242, 5
      %v7335 = vsel %vm2012, %v7333, %v7334
      %v7336 = vrot.slane %v7210, 5
      %v7337 = vrot.slane %v7336, 4
      %v7338 = vrot.slane %v6222, 5
      %v7339 = vsel %vm2012, %v7337, %v7338
      %v7340 = vrot.slane %v7338, 4
      %v7341 = vrot.slane %v6243, 5
      %v7342 = vsel %vm2012, %v7340, %v7341
      %v7343 = vrot.slane %v7211, 5
      %v7344 = vrot.slane %v7343, 4
      %v7345 = vrot.slane %v6224, 5
      %v7346 = vsel %vm2012, %v7344, %v7345
      %v7347 = vrot.slane %v7345, 4
      %v7348 = vrot.slane %v6244, 5
      %v7349 = vsel %vm2012, %v7347, %v7348
      %v7350 = vrot.slane %v7212, 5
      %v7351 = vrot.slane %v7350, 4
      %v7352 = vrot.slane %v6226, 5
      %v7353 = vsel %vm2012, %v7351, %v7352
      %v7354 = vrot.slane %v7352, 4
      %v7355 = vrot.slane %v6245, 5
      %v7356 = vsel %vm2012, %v7354, %v7355
      %s7357 = scalar_lea.vmem %s1, 88
      %v7358 = vld [vmem:[%s7357] sm:$0xf]
      %v7359 = vld [vmem:[%s7357 + $0x4] sm:$0x3]
      %v7360 = vunpack.c.l.b16 %v7248
      %v7361 = vunpack.c.l.b16 %v7251
      %v7362 = vunpack.c.l.b16 %v7255
      %v7363 = vunpack.c.l.b16 %v7258
      %v7364 = vunpack.c.l.b16 %v7262
      %v7365 = vunpack.c.l.b16 %v7265
      %v7366 = vunpack.c.l.b16 %v7269
      %v7367 = vunpack.c.l.b16 %v7272
      %v7368 = vunpack.c.l.b16 %v7276
      %v7369 = vunpack.c.l.b16 %v7279
      %v7370 = vunpack.c.l.b16 %v7283
      %v7371 = vunpack.c.l.b16 %v7286
      %v7372 = vunpack.c.l.b16 %v7290
      %v7373 = vunpack.c.l.b16 %v7293
      %v7374 = vunpack.c.l.b16 %v7297
      %v7375 = vunpack.c.l.b16 %v7300
      %v7376 = vunpack.c.l.b16 %v7304
      %v7377 = vunpack.c.l.b16 %v7307
      %v7378 = vunpack.c.l.b16 %v7311
      %v7379 = vunpack.c.l.b16 %v7314
      %v7380 = vunpack.c.l.b16 %v7318
      %v7381 = vunpack.c.l.b16 %v7321
      %v7382 = vunpack.c.l.b16 %v7325
      %v7383 = vunpack.c.l.b16 %v7328
      %v7384 = vunpack.c.l.b16 %v7332
      %v7385 = vunpack.c.l.b16 %v7335
      %v7386 = vunpack.c.l.b16 %v7339
      %v7387 = vunpack.c.l.b16 %v7342
      %v7388 = vunpack.c.l.b16 %v7346
      %v7389 = vunpack.c.l.b16 %v7349
      %v7390 = vunpack.c.l.b16 %v7353
      %v7391 = vunpack.c.l.b16 %v7356
      %v7392 = vpack.c.b16 %v7361, %v7360
      %v7393 = vpack.c.b16 %v7363, %v7362
      %v7394 = vpack.c.b16 %v7365, %v7364
      %v7395 = vpack.c.b16 %v7367, %v7366
      %v7396 = vpack.c.b16 %v7369, %v7368
      %v7397 = vpack.c.b16 %v7371, %v7370
      %v7398 = vpack.c.b16 %v7373, %v7372
      %v7399 = vpack.c.b16 %v7375, %v7374
      %v7400 = vpack.c.b16 %v7377, %v7376
      %v7401 = vpack.c.b16 %v7379, %v7378
      %v7402 = vpack.c.b16 %v7381, %v7380
      %v7403 = vpack.c.b16 %v7383, %v7382
      %v7404 = vpack.c.b16 %v7385, %v7384
      %v7405 = vpack.c.b16 %v7387, %v7386
      %v7406 = vpack.c.b16 %v7389, %v7388
      %v7407 = vpack.c.b16 %v7391, %v7390
      %v7410 = vunpack.c.l.b16 %v7358
      %v7411 = vunpack.c.l.b16 %v7359
      %v7412 = vpack.c.b16 %v7411, %v7410
      %v7414 = vsel %vm6686, %v7392, 0
      %v7417 = vsel %vm6686, %v7393, 0
      %v7420 = vsel %vm6686, %v7394, 0
      %v7423 = vsel %vm6686, %v7395, 0
      %v7426 = vsel %vm6686, %v7396, 0
      %v7429 = vsel %vm6686, %v7397, 0
      %v7432 = vsel %vm6686, %v7398, 0
      %v7435 = vsel %vm6686, %v7399, 0
      %v7438 = vsel %vm6686, %v7400, 0
      %v7441 = vsel %vm6686, %v7401, 0
      %v7444 = vsel %vm6686, %v7402, 0
      %v7447 = vsel %vm6686, %v7403, 0
      %v7450 = vsel %vm6686, %v7404, 0
      %v7453 = vsel %vm6686, %v7405, 0
      %v7456 = vsel %vm6686, %v7406, 0
      %v7459 = vsel %vm6686, %v7407, 0
      %v7462 = vsel %vm6735, %v7412, 0
      %7464 = vmatprep.subr.bf16.mxu0 0
      %7465 = vmatpush1.bf16.msra.mxu0 0
      %7466 = vmatprep.subr.bf16.mxu0 0
      %7467 = vmatpush1.bf16.msra.mxu0 0
      %7468 = vmatprep.subr.bf16.mxu0 0
      %7469 = vmatpush1.bf16.msra.mxu0 0
      %7470 = vmatprep.subr.bf16.mxu0 0
      %7471 = vmatpush1.bf16.msra.mxu0 0
      %7472 = vmatprep.subr.bf16.mxu0 0
      %7473 = vmatpush1.bf16.msra.mxu0 0
      %7474 = vmatprep.subr.bf16.mxu0 0
      %7475 = vmatpush1.bf16.msra.mxu0 0
      %7476 = vmatprep.subr.bf16.mxu0 0
      %7477 = vmatpush1.bf16.msra.mxu0 0
      %7478 = vmatprep.subr.bf16.mxu0 0
      %7479 = vmatpush1.bf16.msra.mxu0 %v7462
      %7480 = vmatprep.subr.bf16.mxu0 0
      %7481 = vmatpush2.bf16.msra.mxu0 0
      %7482 = vmatprep.subr.bf16.mxu0 0
      %7483 = vmatpush2.bf16.msra.mxu0 0
      %7484 = vmatprep.subr.bf16.mxu0 0
      %7485 = vmatpush2.bf16.msra.mxu0 0
      %7486 = vmatprep.subr.bf16.mxu0 0
      %7487 = vmatpush2.bf16.msra.mxu0 0
      %7488 = vmatprep.subr.bf16.mxu0 0
      %7489 = vmatpush2.bf16.msra.mxu0 0
      %7490 = vmatprep.subr.bf16.mxu0 0
      %7491 = vmatpush2.bf16.msra.mxu0 0
      %7492 = vmatprep.subr.bf16.mxu0 0
      %7493 = vmatpush2.bf16.msra.mxu0 0
      %7494 = vmatprep.subr.bf16.mxu0 0
      %7495 = vmatpush2.bf16.msra.mxu0 0
      %7496 = vmatprep.mubr.bf16.mxu0 0
      %7497 = vmatmul.mubr.bf16.gmra.mxu0 %v7414
      %v7498 = vpop.f32.mrf.mxu0
      %v7499 = vadd.f32 0.0, %v7498
      %v7500 = vpop.f32.mrf.mxu0
      %v7501 = vpop.f32.mrf.mxu0
      %v7502 = vadd.f32 0.0, %v7501
      %v7503 = vpop.f32.mrf.mxu0
      %7504 = vmatprep.mubr.bf16.mxu0 0
      %7505 = vmatmul.mubr.bf16.gmra.mxu0 %v7417
      %v7506 = vpop.f32.mrf.mxu0
      %v7507 = vadd.f32 0.0, %v7506
      %v7508 = vpop.f32.mrf.mxu0
      %v7509 = vpop.f32.mrf.mxu0
      %v7510 = vadd.f32 0.0, %v7509
      %v7511 = vpop.f32.mrf.mxu0
      %7512 = vmatprep.mubr.bf16.mxu0 0
      %7513 = vmatmul.mubr.bf16.gmra.mxu0 %v7420
      %v7514 = vpop.f32.mrf.mxu0
      %v7515 = vadd.f32 0.0, %v7514
      %v7516 = vpop.f32.mrf.mxu0
      %v7517 = vpop.f32.mrf.mxu0
      %v7518 = vadd.f32 0.0, %v7517
      %v7519 = vpop.f32.mrf.mxu0
      %7520 = vmatprep.mubr.bf16.mxu0 0
      %7521 = vmatmul.mubr.bf16.gmra.mxu0 %v7423
      %v7522 = vpop.f32.mrf.mxu0
      %v7523 = vadd.f32 0.0, %v7522
      %v7524 = vpop.f32.mrf.mxu0
      %v7525 = vpop.f32.mrf.mxu0
      %v7526 = vadd.f32 0.0, %v7525
      %v7527 = vpop.f32.mrf.mxu0
      %7528 = vmatprep.mubr.bf16.mxu0 0
      %7529 = vmatmul.mubr.bf16.gmra.mxu0 %v7426
      %v7530 = vpop.f32.mrf.mxu0
      %v7531 = vadd.f32 0.0, %v7530
      %v7532 = vpop.f32.mrf.mxu0
      %v7533 = vpop.f32.mrf.mxu0
      %v7534 = vadd.f32 0.0, %v7533
      %v7535 = vpop.f32.mrf.mxu0
      %7536 = vmatprep.mubr.bf16.mxu0 0
      %7537 = vmatmul.mubr.bf16.gmra.mxu0 %v7429
      %v7538 = vpop.f32.mrf.mxu0
      %v7539 = vadd.f32 0.0, %v7538
      %v7540 = vpop.f32.mrf.mxu0
      %v7541 = vpop.f32.mrf.mxu0
      %v7542 = vadd.f32 0.0, %v7541
      %v7543 = vpop.f32.mrf.mxu0
      %7544 = vmatprep.mubr.bf16.mxu0 0
      %7545 = vmatmul.mubr.bf16.gmra.mxu0 %v7432
      %v7546 = vpop.f32.mrf.mxu0
      %v7547 = vadd.f32 0.0, %v7546
      %v7548 = vpop.f32.mrf.mxu0
      %v7549 = vpop.f32.mrf.mxu0
      %v7550 = vadd.f32 0.0, %v7549
      %v7551 = vpop.f32.mrf.mxu0
      %7552 = vmatprep.mubr.bf16.mxu0 0
      %7553 = vmatmul.mubr.bf16.gmra.mxu0 %v7435
      %v7554 = vpop.f32.mrf.mxu0
      %v7555 = vadd.f32 0.0, %v7554
      %v7556 = vpop.f32.mrf.mxu0
      %v7557 = vpop.f32.mrf.mxu0
      %v7558 = vadd.f32 0.0, %v7557
      %v7559 = vpop.f32.mrf.mxu0
      %7560 = vmatprep.mubr.bf16.mxu0 0
      %7561 = vmatmul.mubr.bf16.gmra.mxu0 %v7438
      %v7562 = vpop.f32.mrf.mxu0
      %v7563 = vadd.f32 0.0, %v7562
      %v7564 = vpop.f32.mrf.mxu0
      %v7565 = vpop.f32.mrf.mxu0
      %v7566 = vadd.f32 0.0, %v7565
      %v7567 = vpop.f32.mrf.mxu0
      %7568 = vmatprep.mubr.bf16.mxu0 0
      %7569 = vmatmul.mubr.bf16.gmra.mxu0 %v7441
      %v7570 = vpop.f32.mrf.mxu0
      %v7571 = vadd.f32 0.0, %v7570
      %v7572 = vpop.f32.mrf.mxu0
      %v7573 = vpop.f32.mrf.mxu0
      %v7574 = vadd.f32 0.0, %v7573
      %v7575 = vpop.f32.mrf.mxu0
      %7576 = vmatprep.mubr.bf16.mxu0 0
      %7577 = vmatmul.mubr.bf16.gmra.mxu0 %v7444
      %v7578 = vpop.f32.mrf.mxu0
      %v7579 = vadd.f32 0.0, %v7578
      %v7580 = vpop.f32.mrf.mxu0
      %v7581 = vpop.f32.mrf.mxu0
      %v7582 = vadd.f32 0.0, %v7581
      %v7583 = vpop.f32.mrf.mxu0
      %7584 = vmatprep.mubr.bf16.mxu0 0
      %7585 = vmatmul.mubr.bf16.gmra.mxu0 %v7447
      %v7586 = vpop.f32.mrf.mxu0
      %v7587 = vadd.f32 0.0, %v7586
      %v7588 = vpop.f32.mrf.mxu0
      %v7589 = vpop.f32.mrf.mxu0
      %v7590 = vadd.f32 0.0, %v7589
      %v7591 = vpop.f32.mrf.mxu0
      %7592 = vmatprep.mubr.bf16.mxu0 0
      %7593 = vmatmul.mubr.bf16.gmra.mxu0 %v7450
      %v7594 = vpop.f32.mrf.mxu0
      %v7595 = vadd.f32 0.0, %v7594
      %v7596 = vpop.f32.mrf.mxu0
      %v7597 = vpop.f32.mrf.mxu0
      %v7598 = vadd.f32 0.0, %v7597
      %v7599 = vpop.f32.mrf.mxu0
      %7600 = vmatprep.mubr.bf16.mxu0 0
      %7601 = vmatmul.mubr.bf16.gmra.mxu0 %v7453
      %v7602 = vpop.f32.mrf.mxu0
      %v7603 = vadd.f32 0.0, %v7602
      %v7604 = vpop.f32.mrf.mxu0
      %v7605 = vpop.f32.mrf.mxu0
      %v7606 = vadd.f32 0.0, %v7605
      %v7607 = vpop.f32.mrf.mxu0
      %7608 = vmatprep.mubr.bf16.mxu0 0
      %7609 = vmatmul.mubr.bf16.gmra.mxu0 %v7456
      %v7610 = vpop.f32.mrf.mxu0
      %v7611 = vadd.f32 0.0, %v7610
      %v7612 = vpop.f32.mrf.mxu0
      %v7613 = vpop.f32.mrf.mxu0
      %v7614 = vadd.f32 0.0, %v7613
      %v7615 = vpop.f32.mrf.mxu0
      %7616 = vmatprep.mubr.bf16.mxu0 0
      %7617 = vmatmul.mubr.bf16.gmra.mxu0 %v7459
      %v7618 = vpop.f32.mrf.mxu0
      %v7619 = vadd.f32 0.0, %v7618
      %v7620 = vpop.f32.mrf.mxu0
      %v7621 = vpop.f32.mrf.mxu0
      %v7622 = vadd.f32 0.0, %v7621
      %v7623 = vpop.f32.mrf.mxu0
      %7624 = vdwg.mxu0
      %v7625 = vadd.f32 %v7071, %v7499
      %v7626 = vadd.f32 %v7074, %v7502
      %v7627 = vadd.f32 %v7079, %v7507
      %v7628 = vadd.f32 %v7082, %v7510
      %v7629 = vadd.f32 %v7087, %v7515
      %v7630 = vadd.f32 %v7090, %v7518
      %v7631 = vadd.f32 %v7095, %v7523
      %v7632 = vadd.f32 %v7098, %v7526
      %v7633 = vadd.f32 %v7103, %v7531
      %v7634 = vadd.f32 %v7106, %v7534
      %v7635 = vadd.f32 %v7111, %v7539
      %v7636 = vadd.f32 %v7114, %v7542
      %v7637 = vadd.f32 %v7119, %v7547
      %v7638 = vadd.f32 %v7122, %v7550
      %v7639 = vadd.f32 %v7127, %v7555
      %v7640 = vadd.f32 %v7130, %v7558
      %v7641 = vadd.f32 %v7135, %v7563
      %v7642 = vadd.f32 %v7138, %v7566
      %v7643 = vadd.f32 %v7143, %v7571
      %v7644 = vadd.f32 %v7146, %v7574
      %v7645 = vadd.f32 %v7151, %v7579
      %v7646 = vadd.f32 %v7154, %v7582
      %v7647 = vadd.f32 %v7159, %v7587
      %v7648 = vadd.f32 %v7162, %v7590
      %v7649 = vadd.f32 %v7167, %v7595
      %v7650 = vadd.f32 %v7170, %v7598
      %v7651 = vadd.f32 %v7175, %v7603
      %v7652 = vadd.f32 %v7178, %v7606
      %v7653 = vadd.f32 %v7183, %v7611
      %v7654 = vadd.f32 %v7186, %v7614
      %v7655 = vadd.f32 %v7191, %v7619
      %v7656 = vadd.f32 %v7194, %v7622
      %v7657 = vld [vmem:[%s852] sm:$0xf]
      %v7658 = vld [vmem:[%s852 + $0x4] sm:$0xf]
      %v7659 = vld [vmem:[%s852 + $0xc] sm:$0xf]
      %v7660 = vld [vmem:[%s852 + $0x10] sm:$0xf]
      %v7661 = vld [vmem:[%s852 + $0x18] sm:$0xf]
      %v7662 = vld [vmem:[%s852 + $0x1c] sm:$0xf]
      %v7663 = vld [vmem:[%s852 + $0x24] sm:$0xf]
      %v7664 = vld [vmem:[%s852 + $0x28] sm:$0xf]
      %v7665 = vld [vmem:[%s852 + $0x30] sm:$0xf]
      %v7666 = vld [vmem:[%s852 + $0x34] sm:$0xf]
      %v7667 = vld [vmem:[%s852 + $0x3c] sm:$0xf]
      %v7668 = vld [vmem:[%s852 + $0x40] sm:$0xf]
      %v7669 = vld [vmem:[%s852 + $0x48] sm:$0xf]
      %v7670 = vld [vmem:[%s852 + $0x4c] sm:$0xf]
      %v7671 = vld [vmem:[%s852 + $0x54] sm:$0xf]
      %v7672 = vld [vmem:[%s852 + $0x58] sm:$0xf]
      %v7673 = vld [vmem:[%s852 + $0x60] sm:$0xf]
      %v7674 = vld [vmem:[%s852 + $0x64] sm:$0xf]
      %v7675 = vld [vmem:[%s852 + $0x6c] sm:$0xf]
      %v7676 = vld [vmem:[%s852 + $0x70] sm:$0xf]
      %v7677 = vld [vmem:[%s852 + $0x78] sm:$0xf]
      %v7678 = vld [vmem:[%s852 + $0x7c] sm:$0xf]
      %v7679 = vld [vmem:[%s852 + $0x84] sm:$0xf]
      %v7680 = vld [vmem:[%s852 + $0x88] sm:$0xf]
      %v7681 = vld [vmem:[%s852 + $0x90] sm:$0xf]
      %v7682 = vld [vmem:[%s852 + $0x94] sm:$0xf]
      %v7683 = vld [vmem:[%s852 + $0x9c] sm:$0xf]
      %v7684 = vld [vmem:[%s852 + $0xa0] sm:$0xf]
      %v7685 = vld [vmem:[%s852 + $0xa8] sm:$0xf]
      %v7686 = vld [vmem:[%s852 + $0xac] sm:$0xf]
      %v7687 = vld [vmem:[%s852 + $0xb4] sm:$0xf]
      %v7688 = vld [vmem:[%s852 + $0xb8] sm:$0xf]
      %s7689 = scalar_lea.vmem %s1, 96
      %v7690 = vld [vmem:[%s7689] sm:$0xf]
      %v7691 = vld [vmem:[%s7689 + $0x4] sm:$0x3]
      %v7724 = vunpack.c.l.b16 %v7657
      %v7725 = vunpack.c.l.b16 %v7658
      %v7726 = vunpack.c.l.b16 %v7659
      %v7727 = vunpack.c.l.b16 %v7660
      %v7728 = vunpack.c.l.b16 %v7661
      %v7729 = vunpack.c.l.b16 %v7662
      %v7730 = vunpack.c.l.b16 %v7663
      %v7731 = vunpack.c.l.b16 %v7664
      %v7732 = vunpack.c.l.b16 %v7665
      %v7733 = vunpack.c.l.b16 %v7666
      %v7734 = vunpack.c.l.b16 %v7667
      %v7735 = vunpack.c.l.b16 %v7668
      %v7736 = vunpack.c.l.b16 %v7669
      %v7737 = vunpack.c.l.b16 %v7670
      %v7738 = vunpack.c.l.b16 %v7671
      %v7739 = vunpack.c.l.b16 %v7672
      %v7740 = vunpack.c.l.b16 %v7673
      %v7741 = vunpack.c.l.b16 %v7674
      %v7742 = vunpack.c.l.b16 %v7675
      %v7743 = vunpack.c.l.b16 %v7676
      %v7744 = vunpack.c.l.b16 %v7677
      %v7745 = vunpack.c.l.b16 %v7678
      %v7746 = vunpack.c.l.b16 %v7679
      %v7747 = vunpack.c.l.b16 %v7680
      %v7748 = vunpack.c.l.b16 %v7681
      %v7749 = vunpack.c.l.b16 %v7682
      %v7750 = vunpack.c.l.b16 %v7683
      %v7751 = vunpack.c.l.b16 %v7684
      %v7752 = vunpack.c.l.b16 %v7685
      %v7753 = vunpack.c.l.b16 %v7686
      %v7754 = vunpack.c.l.b16 %v7687
      %v7755 = vunpack.c.l.b16 %v7688
      %v7756 = vpack.c.b16 %v7725, %v7724
      %v7757 = vpack.c.b16 %v7727, %v7726
      %v7758 = vpack.c.b16 %v7729, %v7728
      %v7759 = vpack.c.b16 %v7731, %v7730
      %v7760 = vpack.c.b16 %v7733, %v7732
      %v7761 = vpack.c.b16 %v7735, %v7734
      %v7762 = vpack.c.b16 %v7737, %v7736
      %v7763 = vpack.c.b16 %v7739, %v7738
      %v7764 = vpack.c.b16 %v7741, %v7740
      %v7765 = vpack.c.b16 %v7743, %v7742
      %v7766 = vpack.c.b16 %v7745, %v7744
      %v7767 = vpack.c.b16 %v7747, %v7746
      %v7768 = vpack.c.b16 %v7749, %v7748
      %v7769 = vpack.c.b16 %v7751, %v7750
      %v7770 = vpack.c.b16 %v7753, %v7752
      %v7771 = vpack.c.b16 %v7755, %v7754
      %v7774 = vunpack.c.l.b16 %v7690
      %v7775 = vunpack.c.l.b16 %v7691
      %v7776 = vpack.c.b16 %v7775, %v7774
      %v7778 = vsel %vm6686, %v7756, 0
      %v7781 = vsel %vm6686, %v7757, 0
      %v7784 = vsel %vm6686, %v7758, 0
      %v7787 = vsel %vm6686, %v7759, 0
      %v7790 = vsel %vm6686, %v7760, 0
      %v7793 = vsel %vm6686, %v7761, 0
      %v7796 = vsel %vm6686, %v7762, 0
      %v7799 = vsel %vm6686, %v7763, 0
      %v7802 = vsel %vm6686, %v7764, 0
      %v7805 = vsel %vm6686, %v7765, 0
      %v7808 = vsel %vm6686, %v7766, 0
      %v7811 = vsel %vm6686, %v7767, 0
      %v7814 = vsel %vm6686, %v7768, 0
      %v7817 = vsel %vm6686, %v7769, 0
      %v7820 = vsel %vm6686, %v7770, 0
      %v7823 = vsel %vm6686, %v7771, 0
      %v7826 = vsel %vm6735, %v7776, 0
      %7828 = vmatprep.subr.bf16.mxu0 0
      %7829 = vmatpush1.bf16.msra.mxu0 0
      %7830 = vmatprep.subr.bf16.mxu0 0
      %7831 = vmatpush1.bf16.msra.mxu0 0
      %7832 = vmatprep.subr.bf16.mxu0 0
      %7833 = vmatpush1.bf16.msra.mxu0 0
      %7834 = vmatprep.subr.bf16.mxu0 0
      %7835 = vmatpush1.bf16.msra.mxu0 0
      %7836 = vmatprep.subr.bf16.mxu0 0
      %7837 = vmatpush1.bf16.msra.mxu0 0
      %7838 = vmatprep.subr.bf16.mxu0 0
      %7839 = vmatpush1.bf16.msra.mxu0 0
      %7840 = vmatprep.subr.bf16.mxu0 0
      %7841 = vmatpush1.bf16.msra.mxu0 0
      %7842 = vmatprep.subr.bf16.mxu0 0
      %7843 = vmatpush1.bf16.msra.mxu0 %v7826
      %7844 = vmatprep.subr.bf16.mxu0 0
      %7845 = vmatpush2.bf16.msra.mxu0 0
      %7846 = vmatprep.subr.bf16.mxu0 0
      %7847 = vmatpush2.bf16.msra.mxu0 0
      %7848 = vmatprep.subr.bf16.mxu0 0
      %7849 = vmatpush2.bf16.msra.mxu0 0
      %7850 = vmatprep.subr.bf16.mxu0 0
      %7851 = vmatpush2.bf16.msra.mxu0 0
      %7852 = vmatprep.subr.bf16.mxu0 0
      %7853 = vmatpush2.bf16.msra.mxu0 0
      %7854 = vmatprep.subr.bf16.mxu0 0
      %7855 = vmatpush2.bf16.msra.mxu0 0
      %7856 = vmatprep.subr.bf16.mxu0 0
      %7857 = vmatpush2.bf16.msra.mxu0 0
      %7858 = vmatprep.subr.bf16.mxu0 0
      %7859 = vmatpush2.bf16.msra.mxu0 0
      %7860 = vmatprep.mubr.bf16.mxu0 0
      %7861 = vmatmul.mubr.bf16.gmra.mxu0 %v7778
      %v7862 = vpop.f32.mrf.mxu0
      %v7863 = vadd.f32 0.0, %v7862
      %v7864 = vpop.f32.mrf.mxu0
      %v7865 = vpop.f32.mrf.mxu0
      %v7866 = vadd.f32 0.0, %v7865
      %v7867 = vpop.f32.mrf.mxu0
      %7868 = vmatprep.mubr.bf16.mxu0 0
      %7869 = vmatmul.mubr.bf16.gmra.mxu0 %v7781
      %v7870 = vpop.f32.mrf.mxu0
      %v7871 = vadd.f32 0.0, %v7870
      %v7872 = vpop.f32.mrf.mxu0
      %v7873 = vpop.f32.mrf.mxu0
      %v7874 = vadd.f32 0.0, %v7873
      %v7875 = vpop.f32.mrf.mxu0
      %7876 = vmatprep.mubr.bf16.mxu0 0
      %7877 = vmatmul.mubr.bf16.gmra.mxu0 %v7784
      %v7878 = vpop.f32.mrf.mxu0
      %v7879 = vadd.f32 0.0, %v7878
      %v7880 = vpop.f32.mrf.mxu0
      %v7881 = vpop.f32.mrf.mxu0
      %v7882 = vadd.f32 0.0, %v7881
      %v7883 = vpop.f32.mrf.mxu0
      %7884 = vmatprep.mubr.bf16.mxu0 0
      %7885 = vmatmul.mubr.bf16.gmra.mxu0 %v7787
      %v7886 = vpop.f32.mrf.mxu0
      %v7887 = vadd.f32 0.0, %v7886
      %v7888 = vpop.f32.mrf.mxu0
      %v7889 = vpop.f32.mrf.mxu0
      %v7890 = vadd.f32 0.0, %v7889
      %v7891 = vpop.f32.mrf.mxu0
      %7892 = vmatprep.mubr.bf16.mxu0 0
      %7893 = vmatmul.mubr.bf16.gmra.mxu0 %v7790
      %v7894 = vpop.f32.mrf.mxu0
      %v7895 = vadd.f32 0.0, %v7894
      %v7896 = vpop.f32.mrf.mxu0
      %v7897 = vpop.f32.mrf.mxu0
      %v7898 = vadd.f32 0.0, %v7897
      %v7899 = vpop.f32.mrf.mxu0
      %7900 = vmatprep.mubr.bf16.mxu0 0
      %7901 = vmatmul.mubr.bf16.gmra.mxu0 %v7793
      %v7902 = vpop.f32.mrf.mxu0
      %v7903 = vadd.f32 0.0, %v7902
      %v7904 = vpop.f32.mrf.mxu0
      %v7905 = vpop.f32.mrf.mxu0
      %v7906 = vadd.f32 0.0, %v7905
      %v7907 = vpop.f32.mrf.mxu0
      %7908 = vmatprep.mubr.bf16.mxu0 0
      %7909 = vmatmul.mubr.bf16.gmra.mxu0 %v7796
      %v7910 = vpop.f32.mrf.mxu0
      %v7911 = vadd.f32 0.0, %v7910
      %v7912 = vpop.f32.mrf.mxu0
      %v7913 = vpop.f32.mrf.mxu0
      %v7914 = vadd.f32 0.0, %v7913
      %v7915 = vpop.f32.mrf.mxu0
      %7916 = vmatprep.mubr.bf16.mxu0 0
      %7917 = vmatmul.mubr.bf16.gmra.mxu0 %v7799
      %v7918 = vpop.f32.mrf.mxu0
      %v7919 = vadd.f32 0.0, %v7918
      %v7920 = vpop.f32.mrf.mxu0
      %v7921 = vpop.f32.mrf.mxu0
      %v7922 = vadd.f32 0.0, %v7921
      %v7923 = vpop.f32.mrf.mxu0
      %7924 = vmatprep.mubr.bf16.mxu0 0
      %7925 = vmatmul.mubr.bf16.gmra.mxu0 %v7802
      %v7926 = vpop.f32.mrf.mxu0
      %v7927 = vadd.f32 0.0, %v7926
      %v7928 = vpop.f32.mrf.mxu0
      %v7929 = vpop.f32.mrf.mxu0
      %v7930 = vadd.f32 0.0, %v7929
      %v7931 = vpop.f32.mrf.mxu0
      %7932 = vmatprep.mubr.bf16.mxu0 0
      %7933 = vmatmul.mubr.bf16.gmra.mxu0 %v7805
      %v7934 = vpop.f32.mrf.mxu0
      %v7935 = vadd.f32 0.0, %v7934
      %v7936 = vpop.f32.mrf.mxu0
      %v7937 = vpop.f32.mrf.mxu0
      %v7938 = vadd.f32 0.0, %v7937
      %v7939 = vpop.f32.mrf.mxu0
      %7940 = vmatprep.mubr.bf16.mxu0 0
      %7941 = vmatmul.mubr.bf16.gmra.mxu0 %v7808
      %v7942 = vpop.f32.mrf.mxu0
      %v7943 = vadd.f32 0.0, %v7942
      %v7944 = vpop.f32.mrf.mxu0
      %v7945 = vpop.f32.mrf.mxu0
      %v7946 = vadd.f32 0.0, %v7945
      %v7947 = vpop.f32.mrf.mxu0
      %7948 = vmatprep.mubr.bf16.mxu0 0
      %7949 = vmatmul.mubr.bf16.gmra.mxu0 %v7811
      %v7950 = vpop.f32.mrf.mxu0
      %v7951 = vadd.f32 0.0, %v7950
      %v7952 = vpop.f32.mrf.mxu0
      %v7953 = vpop.f32.mrf.mxu0
      %v7954 = vadd.f32 0.0, %v7953
      %v7955 = vpop.f32.mrf.mxu0
      %7956 = vmatprep.mubr.bf16.mxu0 0
      %7957 = vmatmul.mubr.bf16.gmra.mxu0 %v7814
      %v7958 = vpop.f32.mrf.mxu0
      %v7959 = vadd.f32 0.0, %v7958
      %v7960 = vpop.f32.mrf.mxu0
      %v7961 = vpop.f32.mrf.mxu0
      %v7962 = vadd.f32 0.0, %v7961
      %v7963 = vpop.f32.mrf.mxu0
      %7964 = vmatprep.mubr.bf16.mxu0 0
      %7965 = vmatmul.mubr.bf16.gmra.mxu0 %v7817
      %v7966 = vpop.f32.mrf.mxu0
      %v7967 = vadd.f32 0.0, %v7966
      %v7968 = vpop.f32.mrf.mxu0
      %v7969 = vpop.f32.mrf.mxu0
      %v7970 = vadd.f32 0.0, %v7969
      %v7971 = vpop.f32.mrf.mxu0
      %7972 = vmatprep.mubr.bf16.mxu0 0
      %7973 = vmatmul.mubr.bf16.gmra.mxu0 %v7820
      %v7974 = vpop.f32.mrf.mxu0
      %v7975 = vadd.f32 0.0, %v7974
      %v7976 = vpop.f32.mrf.mxu0
      %v7977 = vpop.f32.mrf.mxu0
      %v7978 = vadd.f32 0.0, %v7977
      %v7979 = vpop.f32.mrf.mxu0
      %7980 = vmatprep.mubr.bf16.mxu0 0
      %7981 = vmatmul.mubr.bf16.gmra.mxu0 %v7823
      %v7982 = vpop.f32.mrf.mxu0
      %v7983 = vadd.f32 0.0, %v7982
      %v7984 = vpop.f32.mrf.mxu0
      %v7985 = vpop.f32.mrf.mxu0
      %v7986 = vadd.f32 0.0, %v7985
      %v7987 = vpop.f32.mrf.mxu0
      %7988 = vdwg.mxu0
      %v7989 = vadd.f32 %v7625, %v7863
      %v7990 = vadd.f32 %v7626, %v7866
      %v7991 = vadd.f32 %v7627, %v7871
      %v7992 = vadd.f32 %v7628, %v7874
      %v7993 = vadd.f32 %v7629, %v7879
      %v7994 = vadd.f32 %v7630, %v7882
      %v7995 = vadd.f32 %v7631, %v7887
      %v7996 = vadd.f32 %v7632, %v7890
      %v7997 = vadd.f32 %v7633, %v7895
      %v7998 = vadd.f32 %v7634, %v7898
      %v7999 = vadd.f32 %v7635, %v7903
      %v8000 = vadd.f32 %v7636, %v7906
      %v8001 = vadd.f32 %v7637, %v7911
      %v8002 = vadd.f32 %v7638, %v7914
      %v8003 = vadd.f32 %v7639, %v7919
      %v8004 = vadd.f32 %v7640, %v7922
      %v8005 = vadd.f32 %v7641, %v7927
      %v8006 = vadd.f32 %v7642, %v7930
      %v8007 = vadd.f32 %v7643, %v7935
      %v8008 = vadd.f32 %v7644, %v7938
      %v8009 = vadd.f32 %v7645, %v7943
      %v8010 = vadd.f32 %v7646, %v7946
      %v8011 = vadd.f32 %v7647, %v7951
      %v8012 = vadd.f32 %v7648, %v7954
      %v8013 = vadd.f32 %v7649, %v7959
      %v8014 = vadd.f32 %v7650, %v7962
      %v8015 = vadd.f32 %v7651, %v7967
      %v8016 = vadd.f32 %v7652, %v7970
      %v8017 = vadd.f32 %v7653, %v7975
      %v8018 = vadd.f32 %v7654, %v7978
      %v8019 = vadd.f32 %v7655, %v7983
      %v8020 = vadd.f32 %v7656, %v7986
      %v8021 = vld [vmem:[%s852] sm:$0xf]
      %v8022 = vld [vmem:[%s852 + $0x4] sm:$0xf]
      %v8023 = vld [vmem:[%s852 + $0x8] sm:$0x1]
      %v8024 = vld [vmem:[%s852 + $0xc] sm:$0xf]
      %v8025 = vld [vmem:[%s852 + $0x10] sm:$0xf]
      %v8026 = vld [vmem:[%s852 + $0x14] sm:$0x1]
      %v8027 = vld [vmem:[%s852 + $0x18] sm:$0xf]
      %v8028 = vld [vmem:[%s852 + $0x1c] sm:$0xf]
      %v8029 = vld [vmem:[%s852 + $0x20] sm:$0x1]
      %v8030 = vld [vmem:[%s852 + $0x24] sm:$0xf]
      %v8031 = vld [vmem:[%s852 + $0x28] sm:$0xf]
      %v8032 = vld [vmem:[%s852 + $0x2c] sm:$0x1]
      %v8033 = vld [vmem:[%s852 + $0x30] sm:$0xf]
      %v8034 = vld [vmem:[%s852 + $0x34] sm:$0xf]
      %v8035 = vld [vmem:[%s852 + $0x38] sm:$0x1]
      %v8036 = vld [vmem:[%s852 + $0x3c] sm:$0xf]
      %v8037 = vld [vmem:[%s852 + $0x40] sm:$0xf]
      %v8038 = vld [vmem:[%s852 + $0x44] sm:$0x1]
      %v8039 = vld [vmem:[%s852 + $0x48] sm:$0xf]
      %v8040 = vld [vmem:[%s852 + $0x4c] sm:$0xf]
      %v8041 = vld [vmem:[%s852 + $0x50] sm:$0x1]
      %v8042 = vld [vmem:[%s852 + $0x54] sm:$0xf]
      %v8043 = vld [vmem:[%s852 + $0x58] sm:$0xf]
      %v8044 = vld [vmem:[%s852 + $0x5c] sm:$0x1]
      %v8045 = vld [vmem:[%s852 + $0x60] sm:$0xf]
      %v8046 = vld [vmem:[%s852 + $0x64] sm:$0xf]
      %v8047 = vld [vmem:[%s852 + $0x68] sm:$0x1]
      %v8048 = vld [vmem:[%s852 + $0x6c] sm:$0xf]
      %v8049 = vld [vmem:[%s852 + $0x70] sm:$0xf]
      %v8050 = vld [vmem:[%s852 + $0x74] sm:$0x1]
      %v8051 = vld [vmem:[%s852 + $0x78] sm:$0xf]
      %v8052 = vld [vmem:[%s852 + $0x7c] sm:$0xf]
      %v8053 = vld [vmem:[%s852 + $0x80] sm:$0x1]
      %v8054 = vld [vmem:[%s852 + $0x84] sm:$0xf]
      %v8055 = vld [vmem:[%s852 + $0x88] sm:$0xf]
      %v8056 = vld [vmem:[%s852 + $0x8c] sm:$0x1]
      %v8057 = vld [vmem:[%s852 + $0x90] sm:$0xf]
      %v8058 = vld [vmem:[%s852 + $0x94] sm:$0xf]
      %v8059 = vld [vmem:[%s852 + $0x98] sm:$0x1]
      %v8060 = vld [vmem:[%s852 + $0x9c] sm:$0xf]
      %v8061 = vld [vmem:[%s852 + $0xa0] sm:$0xf]
      %v8062 = vld [vmem:[%s852 + $0xa4] sm:$0x1]
      %v8063 = vld [vmem:[%s852 + $0xa8] sm:$0xf]
      %v8064 = vld [vmem:[%s852 + $0xac] sm:$0xf]
      %v8065 = vld [vmem:[%s852 + $0xb0] sm:$0x1]
      %v8066 = vld [vmem:[%s852 + $0xb4] sm:$0xf]
      %v8067 = vld [vmem:[%s852 + $0xb8] sm:$0xf]
      %v8068 = vld [vmem:[%s852 + $0xbc] sm:$0x1]
      %v8070 = vshrl.u32 %v8021, 16
      %v8072 = vrot.slane %v8070, 4
      %v8073 = vshll.u32 %v8021, 16
      %v8075 = vrot.slane %v8073, 5
      %v8076 = vor.u32 %v8072, %v8075
      %v8077 = vrot.slane %v8076, 4
      %v8079 = vshll.u32 %v8022, 16
      %v8081 = vrot.slane %v8079, 5
      %v8082 = vsel %vm1021, %v8077, %v8081
      %v8083 = vshrl.u32 %v8022, 16
      %v8085 = vrot.slane %v8083, 4
      %v8086 = vor.u32 %v8085, %v8081
      %v8087 = vrot.slane %v8086, 4
      %v8089 = vshll.u32 %v8023, 16
      %v8091 = vrot.slane %v8089, 5
      %v8092 = vsel %vm1021, %v8087, %v8091
      %v8094 = vshrl.u32 %v8024, 16
      %v8096 = vrot.slane %v8094, 4
      %v8097 = vshll.u32 %v8024, 16
      %v8099 = vrot.slane %v8097, 5
      %v8100 = vor.u32 %v8096, %v8099
      %v8101 = vrot.slane %v8100, 4
      %v8103 = vshll.u32 %v8025, 16
      %v8105 = vrot.slane %v8103, 5
      %v8106 = vsel %vm1021, %v8101, %v8105
      %v8107 = vshrl.u32 %v8025, 16
      %v8109 = vrot.slane %v8107, 4
      %v8110 = vor.u32 %v8109, %v8105
      %v8111 = vrot.slane %v8110, 4
      %v8113 = vshll.u32 %v8026, 16
      %v8115 = vrot.slane %v8113, 5
      %v8116 = vsel %vm1021, %v8111, %v8115
      %v8118 = vshrl.u32 %v8027, 16
      %v8120 = vrot.slane %v8118, 4
      %v8121 = vshll.u32 %v8027, 16
      %v8123 = vrot.slane %v8121, 5
      %v8124 = vor.u32 %v8120, %v8123
      %v8125 = vrot.slane %v8124, 4
      %v8127 = vshll.u32 %v8028, 16
      %v8129 = vrot.slane %v8127, 5
      %v8130 = vsel %vm1021, %v8125, %v8129
      %v8131 = vshrl.u32 %v8028, 16
      %v8133 = vrot.slane %v8131, 4
      %v8134 = vor.u32 %v8133, %v8129
      %v8135 = vrot.slane %v8134, 4
      %v8137 = vshll.u32 %v8029, 16
      %v8139 = vrot.slane %v8137, 5
      %v8140 = vsel %vm1021, %v8135, %v8139
      %v8142 = vshrl.u32 %v8030, 16
      %v8144 = vrot.slane %v8142, 4
      %v8145 = vshll.u32 %v8030, 16
      %v8147 = vrot.slane %v8145, 5
      %v8148 = vor.u32 %v8144, %v8147
      %v8149 = vrot.slane %v8148, 4
      %v8151 = vshll.u32 %v8031, 16
      %v8153 = vrot.slane %v8151, 5
      %v8154 = vsel %vm1021, %v8149, %v8153
      %v8155 = vshrl.u32 %v8031, 16
      %v8157 = vrot.slane %v8155, 4
      %v8158 = vor.u32 %v8157, %v8153
      %v8159 = vrot.slane %v8158, 4
      %v8161 = vshll.u32 %v8032, 16
      %v8163 = vrot.slane %v8161, 5
      %v8164 = vsel %vm1021, %v8159, %v8163
      %v8166 = vshrl.u32 %v8033, 16
      %v8168 = vrot.slane %v8166, 4
      %v8169 = vshll.u32 %v8033, 16
      %v8171 = vrot.slane %v8169, 5
      %v8172 = vor.u32 %v8168, %v8171
      %v8173 = vrot.slane %v8172, 4
      %v8175 = vshll.u32 %v8034, 16
      %v8177 = vrot.slane %v8175, 5
      %v8178 = vsel %vm1021, %v8173, %v8177
      %v8179 = vshrl.u32 %v8034, 16
      %v8181 = vrot.slane %v8179, 4
      %v8182 = vor.u32 %v8181, %v8177
      %v8183 = vrot.slane %v8182, 4
      %v8185 = vshll.u32 %v8035, 16
      %v8187 = vrot.slane %v8185, 5
      %v8188 = vsel %vm1021, %v8183, %v8187
      %v8190 = vshrl.u32 %v8036, 16
      %v8192 = vrot.slane %v8190, 4
      %v8193 = vshll.u32 %v8036, 16
      %v8195 = vrot.slane %v8193, 5
      %v8196 = vor.u32 %v8192, %v8195
      %v8197 = vrot.slane %v8196, 4
      %v8199 = vshll.u32 %v8037, 16
      %v8201 = vrot.slane %v8199, 5
      %v8202 = vsel %vm1021, %v8197, %v8201
      %v8203 = vshrl.u32 %v8037, 16
      %v8205 = vrot.slane %v8203, 4
      %v8206 = vor.u32 %v8205, %v8201
      %v8207 = vrot.slane %v8206, 4
      %v8209 = vshll.u32 %v8038, 16
      %v8211 = vrot.slane %v8209, 5
      %v8212 = vsel %vm1021, %v8207, %v8211
      %v8214 = vshrl.u32 %v8039, 16
      %v8216 = vrot.slane %v8214, 4
      %v8217 = vshll.u32 %v8039, 16
      %v8219 = vrot.slane %v8217, 5
      %v8220 = vor.u32 %v8216, %v8219
      %v8221 = vrot.slane %v8220, 4
      %v8223 = vshll.u32 %v8040, 16
      %v8225 = vrot.slane %v8223, 5
      %v8226 = vsel %vm1021, %v8221, %v8225
      %v8227 = vshrl.u32 %v8040, 16
      %v8229 = vrot.slane %v8227, 4
      %v8230 = vor.u32 %v8229, %v8225
      %v8231 = vrot.slane %v8230, 4
      %v8233 = vshll.u32 %v8041, 16
      %v8235 = vrot.slane %v8233, 5
      %v8236 = vsel %vm1021, %v8231, %v8235
      %v8238 = vshrl.u32 %v8042, 16
      %v8240 = vrot.slane %v8238, 4
      %v8241 = vshll.u32 %v8042, 16
      %v8243 = vrot.slane %v8241, 5
      %v8244 = vor.u32 %v8240, %v8243
      %v8245 = vrot.slane %v8244, 4
      %v8247 = vshll.u32 %v8043, 16
      %v8249 = vrot.slane %v8247, 5
      %v8250 = vsel %vm1021, %v8245, %v8249
      %v8251 = vshrl.u32 %v8043, 16
      %v8253 = vrot.slane %v8251, 4
      %v8254 = vor.u32 %v8253, %v8249
      %v8255 = vrot.slane %v8254, 4
      %v8257 = vshll.u32 %v8044, 16
      %v8259 = vrot.slane %v8257, 5
      %v8260 = vsel %vm1021, %v8255, %v8259
      %v8262 = vshrl.u32 %v8045, 16
      %v8264 = vrot.slane %v8262, 4
      %v8265 = vshll.u32 %v8045, 16
      %v8267 = vrot.slane %v8265, 5
      %v8268 = vor.u32 %v8264, %v8267
      %v8269 = vrot.slane %v8268, 4
      %v8271 = vshll.u32 %v8046, 16
      %v8273 = vrot.slane %v8271, 5
      %v8274 = vsel %vm1021, %v8269, %v8273
      %v8275 = vshrl.u32 %v8046, 16
      %v8277 = vrot.slane %v8275, 4
      %v8278 = vor.u32 %v8277, %v8273
      %v8279 = vrot.slane %v8278, 4
      %v8281 = vshll.u32 %v8047, 16
      %v8283 = vrot.slane %v8281, 5
      %v8284 = vsel %vm1021, %v8279, %v8283
      %v8286 = vshrl.u32 %v8048, 16
      %v8288 = vrot.slane %v8286, 4
      %v8289 = vshll.u32 %v8048, 16
      %v8291 = vrot.slane %v8289, 5
      %v8292 = vor.u32 %v8288, %v8291
      %v8293 = vrot.slane %v8292, 4
      %v8295 = vshll.u32 %v8049, 16
      %v8297 = vrot.slane %v8295, 5
      %v8298 = vsel %vm1021, %v8293, %v8297
      %v8299 = vshrl.u32 %v8049, 16
      %v8301 = vrot.slane %v8299, 4
      %v8302 = vor.u32 %v8301, %v8297
      %v8303 = vrot.slane %v8302, 4
      %v8305 = vshll.u32 %v8050, 16
      %v8307 = vrot.slane %v8305, 5
      %v8308 = vsel %vm1021, %v8303, %v8307
      %v8310 = vshrl.u32 %v8051, 16
      %v8312 = vrot.slane %v8310, 4
      %v8313 = vshll.u32 %v8051, 16
      %v8315 = vrot.slane %v8313, 5
      %v8316 = vor.u32 %v8312, %v8315
      %v8317 = vrot.slane %v8316, 4
      %v8319 = vshll.u32 %v8052, 16
      %v8321 = vrot.slane %v8319, 5
      %v8322 = vsel %vm1021, %v8317, %v8321
      %v8323 = vshrl.u32 %v8052, 16
      %v8325 = vrot.slane %v8323, 4
      %v8326 = vor.u32 %v8325, %v8321
      %v8327 = vrot.slane %v8326, 4
      %v8329 = vshll.u32 %v8053, 16
      %v8331 = vrot.slane %v8329, 5
      %v8332 = vsel %vm1021, %v8327, %v8331
      %v8334 = vshrl.u32 %v8054, 16
      %v8336 = vrot.slane %v8334, 4
      %v8337 = vshll.u32 %v8054, 16
      %v8339 = vrot.slane %v8337, 5
      %v8340 = vor.u32 %v8336, %v8339
      %v8341 = vrot.slane %v8340, 4
      %v8343 = vshll.u32 %v8055, 16
      %v8345 = vrot.slane %v8343, 5
      %v8346 = vsel %vm1021, %v8341, %v8345
      %v8347 = vshrl.u32 %v8055, 16
      %v8349 = vrot.slane %v8347, 4
      %v8350 = vor.u32 %v8349, %v8345
      %v8351 = vrot.slane %v8350, 4
      %v8353 = vshll.u32 %v8056, 16
      %v8355 = vrot.slane %v8353, 5
      %v8356 = vsel %vm1021, %v8351, %v8355
      %v8358 = vshrl.u32 %v8057, 16
      %v8360 = vrot.slane %v8358, 4
      %v8361 = vshll.u32 %v8057, 16
      %v8363 = vrot.slane %v8361, 5
      %v8364 = vor.u32 %v8360, %v8363
      %v8365 = vrot.slane %v8364, 4
      %v8367 = vshll.u32 %v8058, 16
      %v8369 = vrot.slane %v8367, 5
      %v8370 = vsel %vm1021, %v8365, %v8369
      %v8371 = vshrl.u32 %v8058, 16
      %v8373 = vrot.slane %v8371, 4
      %v8374 = vor.u32 %v8373, %v8369
      %v8375 = vrot.slane %v8374, 4
      %v8377 = vshll.u32 %v8059, 16
      %v8379 = vrot.slane %v8377, 5
      %v8380 = vsel %vm1021, %v8375, %v8379
      %v8382 = vshrl.u32 %v8060, 16
      %v8384 = vrot.slane %v8382, 4
      %v8385 = vshll.u32 %v8060, 16
      %v8387 = vrot.slane %v8385, 5
      %v8388 = vor.u32 %v8384, %v8387
      %v8389 = vrot.slane %v8388, 4
      %v8391 = vshll.u32 %v8061, 16
      %v8393 = vrot.slane %v8391, 5
      %v8394 = vsel %vm1021, %v8389, %v8393
      %v8395 = vshrl.u32 %v8061, 16
      %v8397 = vrot.slane %v8395, 4
      %v8398 = vor.u32 %v8397, %v8393
      %v8399 = vrot.slane %v8398, 4
      %v8401 = vshll.u32 %v8062, 16
      %v8403 = vrot.slane %v8401, 5
      %v8404 = vsel %vm1021, %v8399, %v8403
      %v8406 = vshrl.u32 %v8063, 16
      %v8408 = vrot.slane %v8406, 4
      %v8409 = vshll.u32 %v8063, 16
      %v8411 = vrot.slane %v8409, 5
      %v8412 = vor.u32 %v8408, %v8411
      %v8413 = vrot.slane %v8412, 4
      %v8415 = vshll.u32 %v8064, 16
      %v8417 = vrot.slane %v8415, 5
      %v8418 = vsel %vm1021, %v8413, %v8417
      %v8419 = vshrl.u32 %v8064, 16
      %v8421 = vrot.slane %v8419, 4
      %v8422 = vor.u32 %v8421, %v8417
      %v8423 = vrot.slane %v8422, 4
      %v8425 = vshll.u32 %v8065, 16
      %v8427 = vrot.slane %v8425, 5
      %v8428 = vsel %vm1021, %v8423, %v8427
      %v8430 = vshrl.u32 %v8066, 16
      %v8432 = vrot.slane %v8430, 4
      %v8433 = vshll.u32 %v8066, 16
      %v8435 = vrot.slane %v8433, 5
      %v8436 = vor.u32 %v8432, %v8435
      %v8437 = vrot.slane %v8436, 4
      %v8439 = vshll.u32 %v8067, 16
      %v8441 = vrot.slane %v8439, 5
      %v8442 = vsel %vm1021, %v8437, %v8441
      %v8443 = vshrl.u32 %v8067, 16
      %v8445 = vrot.slane %v8443, 4
      %v8446 = vor.u32 %v8445, %v8441
      %v8447 = vrot.slane %v8446, 4
      %v8449 = vshll.u32 %v8068, 16
      %v8451 = vrot.slane %v8449, 5
      %v8452 = vsel %vm1021, %v8447, %v8451
      %s8453 = scalar_lea.vmem %s1, 104
      %v8454 = vld [vmem:[%s8453] sm:$0xf]
      %v8455 = vld [vmem:[%s8453 + $0x4] sm:$0x3]
      %v8456 = vunpack.c.l.b16 %v8082
      %v8457 = vunpack.c.l.b16 %v8092
      %v8458 = vunpack.c.l.b16 %v8106
      %v8459 = vunpack.c.l.b16 %v8116
      %v8460 = vunpack.c.l.b16 %v8130
      %v8461 = vunpack.c.l.b16 %v8140
      %v8462 = vunpack.c.l.b16 %v8154
      %v8463 = vunpack.c.l.b16 %v8164
      %v8464 = vunpack.c.l.b16 %v8178
      %v8465 = vunpack.c.l.b16 %v8188
      %v8466 = vunpack.c.l.b16 %v8202
      %v8467 = vunpack.c.l.b16 %v8212
      %v8468 = vunpack.c.l.b16 %v8226
      %v8469 = vunpack.c.l.b16 %v8236
      %v8470 = vunpack.c.l.b16 %v8250
      %v8471 = vunpack.c.l.b16 %v8260
      %v8472 = vunpack.c.l.b16 %v8274
      %v8473 = vunpack.c.l.b16 %v8284
      %v8474 = vunpack.c.l.b16 %v8298
      %v8475 = vunpack.c.l.b16 %v8308
      %v8476 = vunpack.c.l.b16 %v8322
      %v8477 = vunpack.c.l.b16 %v8332
      %v8478 = vunpack.c.l.b16 %v8346
      %v8479 = vunpack.c.l.b16 %v8356
      %v8480 = vunpack.c.l.b16 %v8370
      %v8481 = vunpack.c.l.b16 %v8380
      %v8482 = vunpack.c.l.b16 %v8394
      %v8483 = vunpack.c.l.b16 %v8404
      %v8484 = vunpack.c.l.b16 %v8418
      %v8485 = vunpack.c.l.b16 %v8428
      %v8486 = vunpack.c.l.b16 %v8442
      %v8487 = vunpack.c.l.b16 %v8452
      %v8488 = vpack.c.b16 %v8457, %v8456
      %v8489 = vpack.c.b16 %v8459, %v8458
      %v8490 = vpack.c.b16 %v8461, %v8460
      %v8491 = vpack.c.b16 %v8463, %v8462
      %v8492 = vpack.c.b16 %v8465, %v8464
      %v8493 = vpack.c.b16 %v8467, %v8466
      %v8494 = vpack.c.b16 %v8469, %v8468
      %v8495 = vpack.c.b16 %v8471, %v8470
      %v8496 = vpack.c.b16 %v8473, %v8472
      %v8497 = vpack.c.b16 %v8475, %v8474
      %v8498 = vpack.c.b16 %v8477, %v8476
      %v8499 = vpack.c.b16 %v8479, %v8478
      %v8500 = vpack.c.b16 %v8481, %v8480
      %v8501 = vpack.c.b16 %v8483, %v8482
      %v8502 = vpack.c.b16 %v8485, %v8484
      %v8503 = vpack.c.b16 %v8487, %v8486
      %v8506 = vunpack.c.l.b16 %v8454
      %v8507 = vunpack.c.l.b16 %v8455
      %v8508 = vpack.c.b16 %v8507, %v8506
      %v8510 = vsel %vm6686, %v8488, 0
      %v8513 = vsel %vm6686, %v8489, 0
      %v8516 = vsel %vm6686, %v8490, 0
      %v8519 = vsel %vm6686, %v8491, 0
      %v8522 = vsel %vm6686, %v8492, 0
      %v8525 = vsel %vm6686, %v8493, 0
      %v8528 = vsel %vm6686, %v8494, 0
      %v8531 = vsel %vm6686, %v8495, 0
      %v8534 = vsel %vm6686, %v8496, 0
      %v8537 = vsel %vm6686, %v8497, 0
      %v8540 = vsel %vm6686, %v8498, 0
      %v8543 = vsel %vm6686, %v8499, 0
      %v8546 = vsel %vm6686, %v8500, 0
      %v8549 = vsel %vm6686, %v8501, 0
      %v8552 = vsel %vm6686, %v8502, 0
      %v8555 = vsel %vm6686, %v8503, 0
      %v8558 = vsel %vm6735, %v8508, 0
      %8560 = vmatprep.subr.bf16.mxu0 0
      %8561 = vmatpush1.bf16.msra.mxu0 0
      %8562 = vmatprep.subr.bf16.mxu0 0
      %8563 = vmatpush1.bf16.msra.mxu0 0
      %8564 = vmatprep.subr.bf16.mxu0 0
      %8565 = vmatpush1.bf16.msra.mxu0 0
      %8566 = vmatprep.subr.bf16.mxu0 0
      %8567 = vmatpush1.bf16.msra.mxu0 0
      %8568 = vmatprep.subr.bf16.mxu0 0
      %8569 = vmatpush1.bf16.msra.mxu0 0
      %8570 = vmatprep.subr.bf16.mxu0 0
      %8571 = vmatpush1.bf16.msra.mxu0 0
      %8572 = vmatprep.subr.bf16.mxu0 0
      %8573 = vmatpush1.bf16.msra.mxu0 0
      %8574 = vmatprep.subr.bf16.mxu0 0
      %8575 = vmatpush1.bf16.msra.mxu0 %v8558
      %8576 = vmatprep.subr.bf16.mxu0 0
      %8577 = vmatpush2.bf16.msra.mxu0 0
      %8578 = vmatprep.subr.bf16.mxu0 0
      %8579 = vmatpush2.bf16.msra.mxu0 0
      %8580 = vmatprep.subr.bf16.mxu0 0
      %8581 = vmatpush2.bf16.msra.mxu0 0
      %8582 = vmatprep.subr.bf16.mxu0 0
      %8583 = vmatpush2.bf16.msra.mxu0 0
      %8584 = vmatprep.subr.bf16.mxu0 0
      %8585 = vmatpush2.bf16.msra.mxu0 0
      %8586 = vmatprep.subr.bf16.mxu0 0
      %8587 = vmatpush2.bf16.msra.mxu0 0
      %8588 = vmatprep.subr.bf16.mxu0 0
      %8589 = vmatpush2.bf16.msra.mxu0 0
      %8590 = vmatprep.subr.bf16.mxu0 0
      %8591 = vmatpush2.bf16.msra.mxu0 0
      %8592 = vmatprep.mubr.bf16.mxu0 0
      %8593 = vmatmul.mubr.bf16.gmra.mxu0 %v8510
      %v8594 = vpop.f32.mrf.mxu0
      %v8595 = vadd.f32 0.0, %v8594
      %v8596 = vpop.f32.mrf.mxu0
      %v8597 = vpop.f32.mrf.mxu0
      %v8598 = vadd.f32 0.0, %v8597
      %v8599 = vpop.f32.mrf.mxu0
      %8600 = vmatprep.mubr.bf16.mxu0 0
      %8601 = vmatmul.mubr.bf16.gmra.mxu0 %v8513
      %v8602 = vpop.f32.mrf.mxu0
      %v8603 = vadd.f32 0.0, %v8602
      %v8604 = vpop.f32.mrf.mxu0
      %v8605 = vpop.f32.mrf.mxu0
      %v8606 = vadd.f32 0.0, %v8605
      %v8607 = vpop.f32.mrf.mxu0
      %8608 = vmatprep.mubr.bf16.mxu0 0
      %8609 = vmatmul.mubr.bf16.gmra.mxu0 %v8516
      %v8610 = vpop.f32.mrf.mxu0
      %v8611 = vadd.f32 0.0, %v8610
      %v8612 = vpop.f32.mrf.mxu0
      %v8613 = vpop.f32.mrf.mxu0
      %v8614 = vadd.f32 0.0, %v8613
      %v8615 = vpop.f32.mrf.mxu0
      %8616 = vmatprep.mubr.bf16.mxu0 0
      %8617 = vmatmul.mubr.bf16.gmra.mxu0 %v8519
      %v8618 = vpop.f32.mrf.mxu0
      %v8619 = vadd.f32 0.0, %v8618
      %v8620 = vpop.f32.mrf.mxu0
      %v8621 = vpop.f32.mrf.mxu0
      %v8622 = vadd.f32 0.0, %v8621
      %v8623 = vpop.f32.mrf.mxu0
      %8624 = vmatprep.mubr.bf16.mxu0 0
      %8625 = vmatmul.mubr.bf16.gmra.mxu0 %v8522
      %v8626 = vpop.f32.mrf.mxu0
      %v8627 = vadd.f32 0.0, %v8626
      %v8628 = vpop.f32.mrf.mxu0
      %v8629 = vpop.f32.mrf.mxu0
      %v8630 = vadd.f32 0.0, %v8629
      %v8631 = vpop.f32.mrf.mxu0
      %8632 = vmatprep.mubr.bf16.mxu0 0
      %8633 = vmatmul.mubr.bf16.gmra.mxu0 %v8525
      %v8634 = vpop.f32.mrf.mxu0
      %v8635 = vadd.f32 0.0, %v8634
      %v8636 = vpop.f32.mrf.mxu0
      %v8637 = vpop.f32.mrf.mxu0
      %v8638 = vadd.f32 0.0, %v8637
      %v8639 = vpop.f32.mrf.mxu0
      %8640 = vmatprep.mubr.bf16.mxu0 0
      %8641 = vmatmul.mubr.bf16.gmra.mxu0 %v8528
      %v8642 = vpop.f32.mrf.mxu0
      %v8643 = vadd.f32 0.0, %v8642
      %v8644 = vpop.f32.mrf.mxu0
      %v8645 = vpop.f32.mrf.mxu0
      %v8646 = vadd.f32 0.0, %v8645
      %v8647 = vpop.f32.mrf.mxu0
      %8648 = vmatprep.mubr.bf16.mxu0 0
      %8649 = vmatmul.mubr.bf16.gmra.mxu0 %v8531
      %v8650 = vpop.f32.mrf.mxu0
      %v8651 = vadd.f32 0.0, %v8650
      %v8652 = vpop.f32.mrf.mxu0
      %v8653 = vpop.f32.mrf.mxu0
      %v8654 = vadd.f32 0.0, %v8653
      %v8655 = vpop.f32.mrf.mxu0
      %8656 = vmatprep.mubr.bf16.mxu0 0
      %8657 = vmatmul.mubr.bf16.gmra.mxu0 %v8534
      %v8658 = vpop.f32.mrf.mxu0
      %v8659 = vadd.f32 0.0, %v8658
      %v8660 = vpop.f32.mrf.mxu0
      %v8661 = vpop.f32.mrf.mxu0
      %v8662 = vadd.f32 0.0, %v8661
      %v8663 = vpop.f32.mrf.mxu0
      %8664 = vmatprep.mubr.bf16.mxu0 0
      %8665 = vmatmul.mubr.bf16.gmra.mxu0 %v8537
      %v8666 = vpop.f32.mrf.mxu0
      %v8667 = vadd.f32 0.0, %v8666
      %v8668 = vpop.f32.mrf.mxu0
      %v8669 = vpop.f32.mrf.mxu0
      %v8670 = vadd.f32 0.0, %v8669
      %v8671 = vpop.f32.mrf.mxu0
      %8672 = vmatprep.mubr.bf16.mxu0 0
      %8673 = vmatmul.mubr.bf16.gmra.mxu0 %v8540
      %v8674 = vpop.f32.mrf.mxu0
      %v8675 = vadd.f32 0.0, %v8674
      %v8676 = vpop.f32.mrf.mxu0
      %v8677 = vpop.f32.mrf.mxu0
      %v8678 = vadd.f32 0.0, %v8677
      %v8679 = vpop.f32.mrf.mxu0
      %8680 = vmatprep.mubr.bf16.mxu0 0
      %8681 = vmatmul.mubr.bf16.gmra.mxu0 %v8543
      %v8682 = vpop.f32.mrf.mxu0
      %v8683 = vadd.f32 0.0, %v8682
      %v8684 = vpop.f32.mrf.mxu0
      %v8685 = vpop.f32.mrf.mxu0
      %v8686 = vadd.f32 0.0, %v8685
      %v8687 = vpop.f32.mrf.mxu0
      %8688 = vmatprep.mubr.bf16.mxu0 0
      %8689 = vmatmul.mubr.bf16.gmra.mxu0 %v8546
      %v8690 = vpop.f32.mrf.mxu0
      %v8691 = vadd.f32 0.0, %v8690
      %v8692 = vpop.f32.mrf.mxu0
      %v8693 = vpop.f32.mrf.mxu0
      %v8694 = vadd.f32 0.0, %v8693
      %v8695 = vpop.f32.mrf.mxu0
      %8696 = vmatprep.mubr.bf16.mxu0 0
      %8697 = vmatmul.mubr.bf16.gmra.mxu0 %v8549
      %v8698 = vpop.f32.mrf.mxu0
      %v8699 = vadd.f32 0.0, %v8698
      %v8700 = vpop.f32.mrf.mxu0
      %v8701 = vpop.f32.mrf.mxu0
      %v8702 = vadd.f32 0.0, %v8701
      %v8703 = vpop.f32.mrf.mxu0
      %8704 = vmatprep.mubr.bf16.mxu0 0
      %8705 = vmatmul.mubr.bf16.gmra.mxu0 %v8552
      %v8706 = vpop.f32.mrf.mxu0
      %v8707 = vadd.f32 0.0, %v8706
      %v8708 = vpop.f32.mrf.mxu0
      %v8709 = vpop.f32.mrf.mxu0
      %v8710 = vadd.f32 0.0, %v8709
      %v8711 = vpop.f32.mrf.mxu0
      %8712 = vmatprep.mubr.bf16.mxu0 0
      %8713 = vmatmul.mubr.bf16.gmra.mxu0 %v8555
      %v8714 = vpop.f32.mrf.mxu0
      %v8715 = vadd.f32 0.0, %v8714
      %v8716 = vpop.f32.mrf.mxu0
      %v8717 = vpop.f32.mrf.mxu0
      %v8718 = vadd.f32 0.0, %v8717
      %v8719 = vpop.f32.mrf.mxu0
      %8720 = vdwg.mxu0
      %v8721 = vadd.f32 %v7989, %v8595
      %v8722 = vadd.f32 %v7990, %v8598
      %v8723 = vadd.f32 %v7991, %v8603
      %v8724 = vadd.f32 %v7992, %v8606
      %v8725 = vadd.f32 %v7993, %v8611
      %v8726 = vadd.f32 %v7994, %v8614
      %v8727 = vadd.f32 %v7995, %v8619
      %v8728 = vadd.f32 %v7996, %v8622
      %v8729 = vadd.f32 %v7997, %v8627
      %v8730 = vadd.f32 %v7998, %v8630
      %v8731 = vadd.f32 %v7999, %v8635
      %v8732 = vadd.f32 %v8000, %v8638
      %v8733 = vadd.f32 %v8001, %v8643
      %v8734 = vadd.f32 %v8002, %v8646
      %v8735 = vadd.f32 %v8003, %v8651
      %v8736 = vadd.f32 %v8004, %v8654
      %v8737 = vadd.f32 %v8005, %v8659
      %v8738 = vadd.f32 %v8006, %v8662
      %v8739 = vadd.f32 %v8007, %v8667
      %v8740 = vadd.f32 %v8008, %v8670
      %v8741 = vadd.f32 %v8009, %v8675
      %v8742 = vadd.f32 %v8010, %v8678
      %v8743 = vadd.f32 %v8011, %v8683
      %v8744 = vadd.f32 %v8012, %v8686
      %v8745 = vadd.f32 %v8013, %v8691
      %v8746 = vadd.f32 %v8014, %v8694
      %v8747 = vadd.f32 %v8015, %v8699
      %v8748 = vadd.f32 %v8016, %v8702
      %v8749 = vadd.f32 %v8017, %v8707
      %v8750 = vadd.f32 %v8018, %v8710
      %v8751 = vadd.f32 %v8019, %v8715
      %v8752 = vadd.f32 %v8020, %v8718
      %v8753 = vld [vmem:[%s852] sm:$0xe]
      %v8754 = vld [vmem:[%s852 + $0xc] sm:$0xe]
      %v8755 = vld [vmem:[%s852 + $0x18] sm:$0xe]
      %v8756 = vld [vmem:[%s852 + $0x24] sm:$0xe]
      %v8757 = vld [vmem:[%s852 + $0x30] sm:$0xe]
      %v8758 = vld [vmem:[%s852 + $0x3c] sm:$0xe]
      %v8759 = vld [vmem:[%s852 + $0x48] sm:$0xe]
      %v8760 = vld [vmem:[%s852 + $0x54] sm:$0xe]
      %v8761 = vld [vmem:[%s852 + $0x60] sm:$0xe]
      %v8762 = vld [vmem:[%s852 + $0x6c] sm:$0xe]
      %v8763 = vld [vmem:[%s852 + $0x78] sm:$0xe]
      %v8764 = vld [vmem:[%s852 + $0x84] sm:$0xe]
      %v8765 = vld [vmem:[%s852 + $0x90] sm:$0xe]
      %v8766 = vld [vmem:[%s852 + $0x9c] sm:$0xe]
      %v8767 = vld [vmem:[%s852 + $0xa8] sm:$0xe]
      %v8768 = vld [vmem:[%s852 + $0xb4] sm:$0xe]
      %v8817 = vrot.slane %v8753, 5
      %v8818 = vrot.slane %v8817, 4
      %v8819 = vrot.slane %v8022, 5
      %v8820 = vsel %vm2012, %v8818, %v8819
      %v8821 = vrot.slane %v8819, 4
      %v8822 = vrot.slane %v8023, 5
      %v8823 = vsel %vm2012, %v8821, %v8822
      %v8824 = vrot.slane %v8754, 5
      %v8825 = vrot.slane %v8824, 4
      %v8826 = vrot.slane %v8025, 5
      %v8827 = vsel %vm2012, %v8825, %v8826
      %v8828 = vrot.slane %v8826, 4
      %v8829 = vrot.slane %v8026, 5
      %v8830 = vsel %vm2012, %v8828, %v8829
      %v8831 = vrot.slane %v8755, 5
      %v8832 = vrot.slane %v8831, 4
      %v8833 = vrot.slane %v8028, 5
      %v8834 = vsel %vm2012, %v8832, %v8833
      %v8835 = vrot.slane %v8833, 4
      %v8836 = vrot.slane %v8029, 5
      %v8837 = vsel %vm2012, %v8835, %v8836
      %v8838 = vrot.slane %v8756, 5
      %v8839 = vrot.slane %v8838, 4
      %v8840 = vrot.slane %v8031, 5
      %v8841 = vsel %vm2012, %v8839, %v8840
      %v8842 = vrot.slane %v8840, 4
      %v8843 = vrot.slane %v8032, 5
      %v8844 = vsel %vm2012, %v8842, %v8843
      %v8845 = vrot.slane %v8757, 5
      %v8846 = vrot.slane %v8845, 4
      %v8847 = vrot.slane %v8034, 5
      %v8848 = vsel %vm2012, %v8846, %v8847
      %v8849 = vrot.slane %v8847, 4
      %v8850 = vrot.slane %v8035, 5
      %v8851 = vsel %vm2012, %v8849, %v8850
      %v8852 = vrot.slane %v8758, 5
      %v8853 = vrot.slane %v8852, 4
      %v8854 = vrot.slane %v8037, 5
      %v8855 = vsel %vm2012, %v8853, %v8854
      %v8856 = vrot.slane %v8854, 4
      %v8857 = vrot.slane %v8038, 5
      %v8858 = vsel %vm2012, %v8856, %v8857
      %v8859 = vrot.slane %v8759, 5
      %v8860 = vrot.slane %v8859, 4
      %v8861 = vrot.slane %v8040, 5
      %v8862 = vsel %vm2012, %v8860, %v8861
      %v8863 = vrot.slane %v8861, 4
      %v8864 = vrot.slane %v8041, 5
      %v8865 = vsel %vm2012, %v8863, %v8864
      %v8866 = vrot.slane %v8760, 5
      %v8867 = vrot.slane %v8866, 4
      %v8868 = vrot.slane %v8043, 5
      %v8869 = vsel %vm2012, %v8867, %v8868
      %v8870 = vrot.slane %v8868, 4
      %v8871 = vrot.slane %v8044, 5
      %v8872 = vsel %vm2012, %v8870, %v8871
      %v8873 = vrot.slane %v8761, 5
      %v8874 = vrot.slane %v8873, 4
      %v8875 = vrot.slane %v8046, 5
      %v8876 = vsel %vm2012, %v8874, %v8875
      %v8877 = vrot.slane %v8875, 4
      %v8878 = vrot.slane %v8047, 5
      %v8879 = vsel %vm2012, %v8877, %v8878
      %v8880 = vrot.slane %v8762, 5
      %v8881 = vrot.slane %v8880, 4
      %v8882 = vrot.slane %v8049, 5
      %v8883 = vsel %vm2012, %v8881, %v8882
      %v8884 = vrot.slane %v8882, 4
      %v8885 = vrot.slane %v8050, 5
      %v8886 = vsel %vm2012, %v8884, %v8885
      %v8887 = vrot.slane %v8763, 5
      %v8888 = vrot.slane %v8887, 4
      %v8889 = vrot.slane %v8052, 5
      %v8890 = vsel %vm2012, %v8888, %v8889
      %v8891 = vrot.slane %v8889, 4
      %v8892 = vrot.slane %v8053, 5
      %v8893 = vsel %vm2012, %v8891, %v8892
      %v8894 = vrot.slane %v8764, 5
      %v8895 = vrot.slane %v8894, 4
      %v8896 = vrot.slane %v8055, 5
      %v8897 = vsel %vm2012, %v8895, %v8896
      %v8898 = vrot.slane %v8896, 4
      %v8899 = vrot.slane %v8056, 5
      %v8900 = vsel %vm2012, %v8898, %v8899
      %v8901 = vrot.slane %v8765, 5
      %v8902 = vrot.slane %v8901, 4
      %v8903 = vrot.slane %v8058, 5
      %v8904 = vsel %vm2012, %v8902, %v8903
      %v8905 = vrot.slane %v8903, 4
      %v8906 = vrot.slane %v8059, 5
      %v8907 = vsel %vm2012, %v8905, %v8906
      %v8908 = vrot.slane %v8766, 5
      %v8909 = vrot.slane %v8908, 4
      %v8910 = vrot.slane %v8061, 5
      %v8911 = vsel %vm2012, %v8909, %v8910
      %v8912 = vrot.slane %v8910, 4
      %v8913 = vrot.slane %v8062, 5
      %v8914 = vsel %vm2012, %v8912, %v8913
      %v8915 = vrot.slane %v8767, 5
      %v8916 = vrot.slane %v8915, 4
      %v8917 = vrot.slane %v8064, 5
      %v8918 = vsel %vm2012, %v8916, %v8917
      %v8919 = vrot.slane %v8917, 4
      %v8920 = vrot.slane %v8065, 5
      %v8921 = vsel %vm2012, %v8919, %v8920
      %v8922 = vrot.slane %v8768, 5
      %v8923 = vrot.slane %v8922, 4
      %v8924 = vrot.slane %v8067, 5
      %v8925 = vsel %vm2012, %v8923, %v8924
      %v8926 = vrot.slane %v8924, 4
      %v8927 = vrot.slane %v8068, 5
      %v8928 = vsel %vm2012, %v8926, %v8927
      %s8929 = scalar_lea.vmem %s1, 112
      %v8930 = vld [vmem:[%s8929] sm:$0xf]
      %v8931 = vld [vmem:[%s8929 + $0x4] sm:$0x3]
      %v8932 = vunpack.c.l.b16 %v8820
      %v8933 = vunpack.c.l.b16 %v8823
      %v8934 = vunpack.c.l.b16 %v8827
      %v8935 = vunpack.c.l.b16 %v8830
      %v8936 = vunpack.c.l.b16 %v8834
      %v8937 = vunpack.c.l.b16 %v8837
      %v8938 = vunpack.c.l.b16 %v8841
      %v8939 = vunpack.c.l.b16 %v8844
      %v8940 = vunpack.c.l.b16 %v8848
      %v8941 = vunpack.c.l.b16 %v8851
      %v8942 = vunpack.c.l.b16 %v8855
      %v8943 = vunpack.c.l.b16 %v8858
      %v8944 = vunpack.c.l.b16 %v8862
      %v8945 = vunpack.c.l.b16 %v8865
      %v8946 = vunpack.c.l.b16 %v8869
      %v8947 = vunpack.c.l.b16 %v8872
      %v8948 = vunpack.c.l.b16 %v8876
      %v8949 = vunpack.c.l.b16 %v8879
      %v8950 = vunpack.c.l.b16 %v8883
      %v8951 = vunpack.c.l.b16 %v8886
      %v8952 = vunpack.c.l.b16 %v8890
      %v8953 = vunpack.c.l.b16 %v8893
      %v8954 = vunpack.c.l.b16 %v8897
      %v8955 = vunpack.c.l.b16 %v8900
      %v8956 = vunpack.c.l.b16 %v8904
      %v8957 = vunpack.c.l.b16 %v8907
      %v8958 = vunpack.c.l.b16 %v8911
      %v8959 = vunpack.c.l.b16 %v8914
      %v8960 = vunpack.c.l.b16 %v8918
      %v8961 = vunpack.c.l.b16 %v8921
      %v8962 = vunpack.c.l.b16 %v8925
      %v8963 = vunpack.c.l.b16 %v8928
      %v8964 = vpack.c.b16 %v8933, %v8932
      %v8965 = vpack.c.b16 %v8935, %v8934
      %v8966 = vpack.c.b16 %v8937, %v8936
      %v8967 = vpack.c.b16 %v8939, %v8938
      %v8968 = vpack.c.b16 %v8941, %v8940
      %v8969 = vpack.c.b16 %v8943, %v8942
      %v8970 = vpack.c.b16 %v8945, %v8944
      %v8971 = vpack.c.b16 %v8947, %v8946
      %v8972 = vpack.c.b16 %v8949, %v8948
      %v8973 = vpack.c.b16 %v8951, %v8950
      %v8974 = vpack.c.b16 %v8953, %v8952
      %v8975 = vpack.c.b16 %v8955, %v8954
      %v8976 = vpack.c.b16 %v8957, %v8956
      %v8977 = vpack.c.b16 %v8959, %v8958
      %v8978 = vpack.c.b16 %v8961, %v8960
      %v8979 = vpack.c.b16 %v8963, %v8962
      %v8982 = vunpack.c.l.b16 %v8930
      %v8983 = vunpack.c.l.b16 %v8931
      %v8984 = vpack.c.b16 %v8983, %v8982
      %v8986 = vsel %vm6686, %v8964, 0
      %v8989 = vsel %vm6686, %v8965, 0
      %v8992 = vsel %vm6686, %v8966, 0
      %v8995 = vsel %vm6686, %v8967, 0
      %v8998 = vsel %vm6686, %v8968, 0
      %v9001 = vsel %vm6686, %v8969, 0
      %v9004 = vsel %vm6686, %v8970, 0
      %v9007 = vsel %vm6686, %v8971, 0
      %v9010 = vsel %vm6686, %v8972, 0
      %v9013 = vsel %vm6686, %v8973, 0
      %v9016 = vsel %vm6686, %v8974, 0
      %v9019 = vsel %vm6686, %v8975, 0
      %v9022 = vsel %vm6686, %v8976, 0
      %v9025 = vsel %vm6686, %v8977, 0
      %v9028 = vsel %vm6686, %v8978, 0
      %v9031 = vsel %vm6686, %v8979, 0
      %v9034 = vsel %vm6735, %v8984, 0
      %9036 = vmatprep.subr.bf16.mxu0 0
      %9037 = vmatpush1.bf16.msra.mxu0 0
      %9038 = vmatprep.subr.bf16.mxu0 0
      %9039 = vmatpush1.bf16.msra.mxu0 0
      %9040 = vmatprep.subr.bf16.mxu0 0
      %9041 = vmatpush1.bf16.msra.mxu0 0
      %9042 = vmatprep.subr.bf16.mxu0 0
      %9043 = vmatpush1.bf16.msra.mxu0 0
      %9044 = vmatprep.subr.bf16.mxu0 0
      %9045 = vmatpush1.bf16.msra.mxu0 0
      %9046 = vmatprep.subr.bf16.mxu0 0
      %9047 = vmatpush1.bf16.msra.mxu0 0
      %9048 = vmatprep.subr.bf16.mxu0 0
      %9049 = vmatpush1.bf16.msra.mxu0 0
      %9050 = vmatprep.subr.bf16.mxu0 0
      %9051 = vmatpush1.bf16.msra.mxu0 %v9034
      %9052 = vmatprep.subr.bf16.mxu0 0
      %9053 = vmatpush2.bf16.msra.mxu0 0
      %9054 = vmatprep.subr.bf16.mxu0 0
      %9055 = vmatpush2.bf16.msra.mxu0 0
      %9056 = vmatprep.subr.bf16.mxu0 0
      %9057 = vmatpush2.bf16.msra.mxu0 0
      %9058 = vmatprep.subr.bf16.mxu0 0
      %9059 = vmatpush2.bf16.msra.mxu0 0
      %9060 = vmatprep.subr.bf16.mxu0 0
      %9061 = vmatpush2.bf16.msra.mxu0 0
      %9062 = vmatprep.subr.bf16.mxu0 0
      %9063 = vmatpush2.bf16.msra.mxu0 0
      %9064 = vmatprep.subr.bf16.mxu0 0
      %9065 = vmatpush2.bf16.msra.mxu0 0
      %9066 = vmatprep.subr.bf16.mxu0 0
      %9067 = vmatpush2.bf16.msra.mxu0 0
      %9068 = vmatprep.mubr.bf16.mxu0 0
      %9069 = vmatmul.mubr.bf16.gmra.mxu0 %v8986
      %v9070 = vpop.f32.mrf.mxu0
      %v9071 = vadd.f32 0.0, %v9070
      %v9072 = vpop.f32.mrf.mxu0
      %v9073 = vpop.f32.mrf.mxu0
      %v9074 = vadd.f32 0.0, %v9073
      %v9075 = vpop.f32.mrf.mxu0
      %9076 = vmatprep.mubr.bf16.mxu0 0
      %9077 = vmatmul.mubr.bf16.gmra.mxu0 %v8989
      %v9078 = vpop.f32.mrf.mxu0
      %v9079 = vadd.f32 0.0, %v9078
      %v9080 = vpop.f32.mrf.mxu0
      %v9081 = vpop.f32.mrf.mxu0
      %v9082 = vadd.f32 0.0, %v9081
      %v9083 = vpop.f32.mrf.mxu0
      %9084 = vmatprep.mubr.bf16.mxu0 0
      %9085 = vmatmul.mubr.bf16.gmra.mxu0 %v8992
      %v9086 = vpop.f32.mrf.mxu0
      %v9087 = vadd.f32 0.0, %v9086
      %v9088 = vpop.f32.mrf.mxu0
      %v9089 = vpop.f32.mrf.mxu0
      %v9090 = vadd.f32 0.0, %v9089
      %v9091 = vpop.f32.mrf.mxu0
      %9092 = vmatprep.mubr.bf16.mxu0 0
      %9093 = vmatmul.mubr.bf16.gmra.mxu0 %v8995
      %v9094 = vpop.f32.mrf.mxu0
      %v9095 = vadd.f32 0.0, %v9094
      %v9096 = vpop.f32.mrf.mxu0
      %v9097 = vpop.f32.mrf.mxu0
      %v9098 = vadd.f32 0.0, %v9097
      %v9099 = vpop.f32.mrf.mxu0
      %9100 = vmatprep.mubr.bf16.mxu0 0
      %9101 = vmatmul.mubr.bf16.gmra.mxu0 %v8998
      %v9102 = vpop.f32.mrf.mxu0
      %v9103 = vadd.f32 0.0, %v9102
      %v9104 = vpop.f32.mrf.mxu0
      %v9105 = vpop.f32.mrf.mxu0
      %v9106 = vadd.f32 0.0, %v9105
      %v9107 = vpop.f32.mrf.mxu0
      %9108 = vmatprep.mubr.bf16.mxu0 0
      %9109 = vmatmul.mubr.bf16.gmra.mxu0 %v9001
      %v9110 = vpop.f32.mrf.mxu0
      %v9111 = vadd.f32 0.0, %v9110
      %v9112 = vpop.f32.mrf.mxu0
      %v9113 = vpop.f32.mrf.mxu0
      %v9114 = vadd.f32 0.0, %v9113
      %v9115 = vpop.f32.mrf.mxu0
      %9116 = vmatprep.mubr.bf16.mxu0 0
      %9117 = vmatmul.mubr.bf16.gmra.mxu0 %v9004
      %v9118 = vpop.f32.mrf.mxu0
      %v9119 = vadd.f32 0.0, %v9118
      %v9120 = vpop.f32.mrf.mxu0
      %v9121 = vpop.f32.mrf.mxu0
      %v9122 = vadd.f32 0.0, %v9121
      %v9123 = vpop.f32.mrf.mxu0
      %9124 = vmatprep.mubr.bf16.mxu0 0
      %9125 = vmatmul.mubr.bf16.gmra.mxu0 %v9007
      %v9126 = vpop.f32.mrf.mxu0
      %v9127 = vadd.f32 0.0, %v9126
      %v9128 = vpop.f32.mrf.mxu0
      %v9129 = vpop.f32.mrf.mxu0
      %v9130 = vadd.f32 0.0, %v9129
      %v9131 = vpop.f32.mrf.mxu0
      %9132 = vmatprep.mubr.bf16.mxu0 0
      %9133 = vmatmul.mubr.bf16.gmra.mxu0 %v9010
      %v9134 = vpop.f32.mrf.mxu0
      %v9135 = vadd.f32 0.0, %v9134
      %v9136 = vpop.f32.mrf.mxu0
      %v9137 = vpop.f32.mrf.mxu0
      %v9138 = vadd.f32 0.0, %v9137
      %v9139 = vpop.f32.mrf.mxu0
      %9140 = vmatprep.mubr.bf16.mxu0 0
      %9141 = vmatmul.mubr.bf16.gmra.mxu0 %v9013
      %v9142 = vpop.f32.mrf.mxu0
      %v9143 = vadd.f32 0.0, %v9142
      %v9144 = vpop.f32.mrf.mxu0
      %v9145 = vpop.f32.mrf.mxu0
      %v9146 = vadd.f32 0.0, %v9145
      %v9147 = vpop.f32.mrf.mxu0
      %9148 = vmatprep.mubr.bf16.mxu0 0
      %9149 = vmatmul.mubr.bf16.gmra.mxu0 %v9016
      %v9150 = vpop.f32.mrf.mxu0
      %v9151 = vadd.f32 0.0, %v9150
      %v9152 = vpop.f32.mrf.mxu0
      %v9153 = vpop.f32.mrf.mxu0
      %v9154 = vadd.f32 0.0, %v9153
      %v9155 = vpop.f32.mrf.mxu0
      %9156 = vmatprep.mubr.bf16.mxu0 0
      %9157 = vmatmul.mubr.bf16.gmra.mxu0 %v9019
      %v9158 = vpop.f32.mrf.mxu0
      %v9159 = vadd.f32 0.0, %v9158
      %v9160 = vpop.f32.mrf.mxu0
      %v9161 = vpop.f32.mrf.mxu0
      %v9162 = vadd.f32 0.0, %v9161
      %v9163 = vpop.f32.mrf.mxu0
      %9164 = vmatprep.mubr.bf16.mxu0 0
      %9165 = vmatmul.mubr.bf16.gmra.mxu0 %v9022
      %v9166 = vpop.f32.mrf.mxu0
      %v9167 = vadd.f32 0.0, %v9166
      %v9168 = vpop.f32.mrf.mxu0
      %v9169 = vpop.f32.mrf.mxu0
      %v9170 = vadd.f32 0.0, %v9169
      %v9171 = vpop.f32.mrf.mxu0
      %9172 = vmatprep.mubr.bf16.mxu0 0
      %9173 = vmatmul.mubr.bf16.gmra.mxu0 %v9025
      %v9174 = vpop.f32.mrf.mxu0
      %v9175 = vadd.f32 0.0, %v9174
      %v9176 = vpop.f32.mrf.mxu0
      %v9177 = vpop.f32.mrf.mxu0
      %v9178 = vadd.f32 0.0, %v9177
      %v9179 = vpop.f32.mrf.mxu0
      %9180 = vmatprep.mubr.bf16.mxu0 0
      %9181 = vmatmul.mubr.bf16.gmra.mxu0 %v9028
      %v9182 = vpop.f32.mrf.mxu0
      %v9183 = vadd.f32 0.0, %v9182
      %v9184 = vpop.f32.mrf.mxu0
      %v9185 = vpop.f32.mrf.mxu0
      %v9186 = vadd.f32 0.0, %v9185
      %v9187 = vpop.f32.mrf.mxu0
      %9188 = vmatprep.mubr.bf16.mxu0 0
      %9189 = vmatmul.mubr.bf16.gmra.mxu0 %v9031
      %v9190 = vpop.f32.mrf.mxu0
      %v9191 = vadd.f32 0.0, %v9190
      %v9192 = vpop.f32.mrf.mxu0
      %v9193 = vpop.f32.mrf.mxu0
      %v9194 = vadd.f32 0.0, %v9193
      %v9195 = vpop.f32.mrf.mxu0
      %9196 = vdwg.mxu0
      %v9197 = vadd.f32 %v8721, %v9071
      %v9198 = vadd.f32 %v8722, %v9074
      %v9199 = vadd.f32 %v8723, %v9079
      %v9200 = vadd.f32 %v8724, %v9082
      %v9201 = vadd.f32 %v8725, %v9087
      %v9202 = vadd.f32 %v8726, %v9090
      %v9203 = vadd.f32 %v8727, %v9095
      %v9204 = vadd.f32 %v8728, %v9098
      %v9205 = vadd.f32 %v8729, %v9103
      %v9206 = vadd.f32 %v8730, %v9106
      %v9207 = vadd.f32 %v8731, %v9111
      %v9208 = vadd.f32 %v8732, %v9114
      %v9209 = vadd.f32 %v8733, %v9119
      %v9210 = vadd.f32 %v8734, %v9122
      %v9211 = vadd.f32 %v8735, %v9127
      %v9212 = vadd.f32 %v8736, %v9130
      %v9213 = vadd.f32 %v8737, %v9135
      %v9214 = vadd.f32 %v8738, %v9138
      %v9215 = vadd.f32 %v8739, %v9143
      %v9216 = vadd.f32 %v8740, %v9146
      %v9217 = vadd.f32 %v8741, %v9151
      %v9218 = vadd.f32 %v8742, %v9154
      %v9219 = vadd.f32 %v8743, %v9159
      %v9220 = vadd.f32 %v8744, %v9162
      %v9221 = vadd.f32 %v8745, %v9167
      %v9222 = vadd.f32 %v8746, %v9170
      %v9223 = vadd.f32 %v8747, %v9175
      %v9224 = vadd.f32 %v8748, %v9178
      %v9225 = vadd.f32 %v8749, %v9183
      %v9226 = vadd.f32 %v8750, %v9186
      %v9227 = vadd.f32 %v8751, %v9191
      %v9228 = vadd.f32 %v8752, %v9194
      %v9229 = vld [vmem:[%s3973] sm:$0xf]
      %v9230 = vld [vmem:[%s3973 + $0x4] sm:$0xf]
      %v9231 = vld [vmem:[%s3973 + $0xc] sm:$0xf]
      %v9232 = vld [vmem:[%s3973 + $0x10] sm:$0xf]
      %v9233 = vld [vmem:[%s3973 + $0x18] sm:$0xf]
      %v9234 = vld [vmem:[%s3973 + $0x1c] sm:$0xf]
      %v9235 = vld [vmem:[%s3973 + $0x24] sm:$0xf]
      %v9236 = vld [vmem:[%s3973 + $0x28] sm:$0xf]
      %v9237 = vld [vmem:[%s3973 + $0x30] sm:$0xf]
      %v9238 = vld [vmem:[%s3973 + $0x34] sm:$0xf]
      %v9239 = vld [vmem:[%s3973 + $0x3c] sm:$0xf]
      %v9240 = vld [vmem:[%s3973 + $0x40] sm:$0xf]
      %v9241 = vld [vmem:[%s3973 + $0x48] sm:$0xf]
      %v9242 = vld [vmem:[%s3973 + $0x4c] sm:$0xf]
      %v9243 = vld [vmem:[%s3973 + $0x54] sm:$0xf]
      %v9244 = vld [vmem:[%s3973 + $0x58] sm:$0xf]
      %v9245 = vld [vmem:[%s3973 + $0x60] sm:$0xf]
      %v9246 = vld [vmem:[%s3973 + $0x64] sm:$0xf]
      %v9247 = vld [vmem:[%s3973 + $0x6c] sm:$0xf]
      %v9248 = vld [vmem:[%s3973 + $0x70] sm:$0xf]
      %v9249 = vld [vmem:[%s3973 + $0x78] sm:$0xf]
      %v9250 = vld [vmem:[%s3973 + $0x7c] sm:$0xf]
      %v9251 = vld [vmem:[%s3973 + $0x84] sm:$0xf]
      %v9252 = vld [vmem:[%s3973 + $0x88] sm:$0xf]
      %v9253 = vld [vmem:[%s3973 + $0x90] sm:$0xf]
      %v9254 = vld [vmem:[%s3973 + $0x94] sm:$0xf]
      %v9255 = vld [vmem:[%s3973 + $0x9c] sm:$0xf]
      %v9256 = vld [vmem:[%s3973 + $0xa0] sm:$0xf]
      %v9257 = vld [vmem:[%s3973 + $0xa8] sm:$0xf]
      %v9258 = vld [vmem:[%s3973 + $0xac] sm:$0xf]
      %v9259 = vld [vmem:[%s3973 + $0xb4] sm:$0xf]
      %v9260 = vld [vmem:[%s3973 + $0xb8] sm:$0xf]
      %s9261 = scalar_lea.vmem %s1, 120
      %v9262 = vld [vmem:[%s9261] sm:$0xf]
      %v9263 = vld [vmem:[%s9261 + $0x4] sm:$0x3]
      %v9296 = vunpack.c.l.b16 %v9229
      %v9297 = vunpack.c.l.b16 %v9230
      %v9298 = vunpack.c.l.b16 %v9231
      %v9299 = vunpack.c.l.b16 %v9232
      %v9300 = vunpack.c.l.b16 %v9233
      %v9301 = vunpack.c.l.b16 %v9234
      %v9302 = vunpack.c.l.b16 %v9235
      %v9303 = vunpack.c.l.b16 %v9236
      %v9304 = vunpack.c.l.b16 %v9237
      %v9305 = vunpack.c.l.b16 %v9238
      %v9306 = vunpack.c.l.b16 %v9239
      %v9307 = vunpack.c.l.b16 %v9240
      %v9308 = vunpack.c.l.b16 %v9241
      %v9309 = vunpack.c.l.b16 %v9242
      %v9310 = vunpack.c.l.b16 %v9243
      %v9311 = vunpack.c.l.b16 %v9244
      %v9312 = vunpack.c.l.b16 %v9245
      %v9313 = vunpack.c.l.b16 %v9246
      %v9314 = vunpack.c.l.b16 %v9247
      %v9315 = vunpack.c.l.b16 %v9248
      %v9316 = vunpack.c.l.b16 %v9249
      %v9317 = vunpack.c.l.b16 %v9250
      %v9318 = vunpack.c.l.b16 %v9251
      %v9319 = vunpack.c.l.b16 %v9252
      %v9320 = vunpack.c.l.b16 %v9253
      %v9321 = vunpack.c.l.b16 %v9254
      %v9322 = vunpack.c.l.b16 %v9255
      %v9323 = vunpack.c.l.b16 %v9256
      %v9324 = vunpack.c.l.b16 %v9257
      %v9325 = vunpack.c.l.b16 %v9258
      %v9326 = vunpack.c.l.b16 %v9259
      %v9327 = vunpack.c.l.b16 %v9260
      %v9328 = vpack.c.b16 %v9297, %v9296
      %v9329 = vpack.c.b16 %v9299, %v9298
      %v9330 = vpack.c.b16 %v9301, %v9300
      %v9331 = vpack.c.b16 %v9303, %v9302
      %v9332 = vpack.c.b16 %v9305, %v9304
      %v9333 = vpack.c.b16 %v9307, %v9306
      %v9334 = vpack.c.b16 %v9309, %v9308
      %v9335 = vpack.c.b16 %v9311, %v9310
      %v9336 = vpack.c.b16 %v9313, %v9312
      %v9337 = vpack.c.b16 %v9315, %v9314
      %v9338 = vpack.c.b16 %v9317, %v9316
      %v9339 = vpack.c.b16 %v9319, %v9318
      %v9340 = vpack.c.b16 %v9321, %v9320
      %v9341 = vpack.c.b16 %v9323, %v9322
      %v9342 = vpack.c.b16 %v9325, %v9324
      %v9343 = vpack.c.b16 %v9327, %v9326
      %v9346 = vunpack.c.l.b16 %v9262
      %v9347 = vunpack.c.l.b16 %v9263
      %v9348 = vpack.c.b16 %v9347, %v9346
      %v9350 = vsel %vm6686, %v9328, 0
      %v9353 = vsel %vm6686, %v9329, 0
      %v9356 = vsel %vm6686, %v9330, 0
      %v9359 = vsel %vm6686, %v9331, 0
      %v9362 = vsel %vm6686, %v9332, 0
      %v9365 = vsel %vm6686, %v9333, 0
      %v9368 = vsel %vm6686, %v9334, 0
      %v9371 = vsel %vm6686, %v9335, 0
      %v9374 = vsel %vm6686, %v9336, 0
      %v9377 = vsel %vm6686, %v9337, 0
      %v9380 = vsel %vm6686, %v9338, 0
      %v9383 = vsel %vm6686, %v9339, 0
      %v9386 = vsel %vm6686, %v9340, 0
      %v9389 = vsel %vm6686, %v9341, 0
      %v9392 = vsel %vm6686, %v9342, 0
      %v9395 = vsel %vm6686, %v9343, 0
      %v9398 = vsel %vm6735, %v9348, 0
      %9400 = vmatprep.subr.bf16.mxu0 0
      %9401 = vmatpush1.bf16.msra.mxu0 0
      %9402 = vmatprep.subr.bf16.mxu0 0
      %9403 = vmatpush1.bf16.msra.mxu0 0
      %9404 = vmatprep.subr.bf16.mxu0 0
      %9405 = vmatpush1.bf16.msra.mxu0 0
      %9406 = vmatprep.subr.bf16.mxu0 0
      %9407 = vmatpush1.bf16.msra.mxu0 0
      %9408 = vmatprep.subr.bf16.mxu0 0
      %9409 = vmatpush1.bf16.msra.mxu0 0
      %9410 = vmatprep.subr.bf16.mxu0 0
      %9411 = vmatpush1.bf16.msra.mxu0 0
      %9412 = vmatprep.subr.bf16.mxu0 0
      %9413 = vmatpush1.bf16.msra.mxu0 0
      %9414 = vmatprep.subr.bf16.mxu0 0
      %9415 = vmatpush1.bf16.msra.mxu0 %v9398
      %9416 = vmatprep.subr.bf16.mxu0 0
      %9417 = vmatpush2.bf16.msra.mxu0 0
      %9418 = vmatprep.subr.bf16.mxu0 0
      %9419 = vmatpush2.bf16.msra.mxu0 0
      %9420 = vmatprep.subr.bf16.mxu0 0
      %9421 = vmatpush2.bf16.msra.mxu0 0
      %9422 = vmatprep.subr.bf16.mxu0 0
      %9423 = vmatpush2.bf16.msra.mxu0 0
      %9424 = vmatprep.subr.bf16.mxu0 0
      %9425 = vmatpush2.bf16.msra.mxu0 0
      %9426 = vmatprep.subr.bf16.mxu0 0
      %9427 = vmatpush2.bf16.msra.mxu0 0
      %9428 = vmatprep.subr.bf16.mxu0 0
      %9429 = vmatpush2.bf16.msra.mxu0 0
      %9430 = vmatprep.subr.bf16.mxu0 0
      %9431 = vmatpush2.bf16.msra.mxu0 0
      %9432 = vmatprep.mubr.bf16.mxu0 0
      %9433 = vmatmul.mubr.bf16.gmra.mxu0 %v9350
      %v9434 = vpop.f32.mrf.mxu0
      %v9435 = vadd.f32 0.0, %v9434
      %v9436 = vpop.f32.mrf.mxu0
      %v9437 = vpop.f32.mrf.mxu0
      %v9438 = vadd.f32 0.0, %v9437
      %v9439 = vpop.f32.mrf.mxu0
      %9440 = vmatprep.mubr.bf16.mxu0 0
      %9441 = vmatmul.mubr.bf16.gmra.mxu0 %v9353
      %v9442 = vpop.f32.mrf.mxu0
      %v9443 = vadd.f32 0.0, %v9442
      %v9444 = vpop.f32.mrf.mxu0
      %v9445 = vpop.f32.mrf.mxu0
      %v9446 = vadd.f32 0.0, %v9445
      %v9447 = vpop.f32.mrf.mxu0
      %9448 = vmatprep.mubr.bf16.mxu0 0
      %9449 = vmatmul.mubr.bf16.gmra.mxu0 %v9356
      %v9450 = vpop.f32.mrf.mxu0
      %v9451 = vadd.f32 0.0, %v9450
      %v9452 = vpop.f32.mrf.mxu0
      %v9453 = vpop.f32.mrf.mxu0
      %v9454 = vadd.f32 0.0, %v9453
      %v9455 = vpop.f32.mrf.mxu0
      %9456 = vmatprep.mubr.bf16.mxu0 0
      %9457 = vmatmul.mubr.bf16.gmra.mxu0 %v9359
      %v9458 = vpop.f32.mrf.mxu0
      %v9459 = vadd.f32 0.0, %v9458
      %v9460 = vpop.f32.mrf.mxu0
      %v9461 = vpop.f32.mrf.mxu0
      %v9462 = vadd.f32 0.0, %v9461
      %v9463 = vpop.f32.mrf.mxu0
      %9464 = vmatprep.mubr.bf16.mxu0 0
      %9465 = vmatmul.mubr.bf16.gmra.mxu0 %v9362
      %v9466 = vpop.f32.mrf.mxu0
      %v9467 = vadd.f32 0.0, %v9466
      %v9468 = vpop.f32.mrf.mxu0
      %v9469 = vpop.f32.mrf.mxu0
      %v9470 = vadd.f32 0.0, %v9469
      %v9471 = vpop.f32.mrf.mxu0
      %9472 = vmatprep.mubr.bf16.mxu0 0
      %9473 = vmatmul.mubr.bf16.gmra.mxu0 %v9365
      %v9474 = vpop.f32.mrf.mxu0
      %v9475 = vadd.f32 0.0, %v9474
      %v9476 = vpop.f32.mrf.mxu0
      %v9477 = vpop.f32.mrf.mxu0
      %v9478 = vadd.f32 0.0, %v9477
      %v9479 = vpop.f32.mrf.mxu0
      %9480 = vmatprep.mubr.bf16.mxu0 0
      %9481 = vmatmul.mubr.bf16.gmra.mxu0 %v9368
      %v9482 = vpop.f32.mrf.mxu0
      %v9483 = vadd.f32 0.0, %v9482
      %v9484 = vpop.f32.mrf.mxu0
      %v9485 = vpop.f32.mrf.mxu0
      %v9486 = vadd.f32 0.0, %v9485
      %v9487 = vpop.f32.mrf.mxu0
      %9488 = vmatprep.mubr.bf16.mxu0 0
      %9489 = vmatmul.mubr.bf16.gmra.mxu0 %v9371
      %v9490 = vpop.f32.mrf.mxu0
      %v9491 = vadd.f32 0.0, %v9490
      %v9492 = vpop.f32.mrf.mxu0
      %v9493 = vpop.f32.mrf.mxu0
      %v9494 = vadd.f32 0.0, %v9493
      %v9495 = vpop.f32.mrf.mxu0
      %9496 = vmatprep.mubr.bf16.mxu0 0
      %9497 = vmatmul.mubr.bf16.gmra.mxu0 %v9374
      %v9498 = vpop.f32.mrf.mxu0
      %v9499 = vadd.f32 0.0, %v9498
      %v9500 = vpop.f32.mrf.mxu0
      %v9501 = vpop.f32.mrf.mxu0
      %v9502 = vadd.f32 0.0, %v9501
      %v9503 = vpop.f32.mrf.mxu0
      %9504 = vmatprep.mubr.bf16.mxu0 0
      %9505 = vmatmul.mubr.bf16.gmra.mxu0 %v9377
      %v9506 = vpop.f32.mrf.mxu0
      %v9507 = vadd.f32 0.0, %v9506
      %v9508 = vpop.f32.mrf.mxu0
      %v9509 = vpop.f32.mrf.mxu0
      %v9510 = vadd.f32 0.0, %v9509
      %v9511 = vpop.f32.mrf.mxu0
      %9512 = vmatprep.mubr.bf16.mxu0 0
      %9513 = vmatmul.mubr.bf16.gmra.mxu0 %v9380
      %v9514 = vpop.f32.mrf.mxu0
      %v9515 = vadd.f32 0.0, %v9514
      %v9516 = vpop.f32.mrf.mxu0
      %v9517 = vpop.f32.mrf.mxu0
      %v9518 = vadd.f32 0.0, %v9517
      %v9519 = vpop.f32.mrf.mxu0
      %9520 = vmatprep.mubr.bf16.mxu0 0
      %9521 = vmatmul.mubr.bf16.gmra.mxu0 %v9383
      %v9522 = vpop.f32.mrf.mxu0
      %v9523 = vadd.f32 0.0, %v9522
      %v9524 = vpop.f32.mrf.mxu0
      %v9525 = vpop.f32.mrf.mxu0
      %v9526 = vadd.f32 0.0, %v9525
      %v9527 = vpop.f32.mrf.mxu0
      %9528 = vmatprep.mubr.bf16.mxu0 0
      %9529 = vmatmul.mubr.bf16.gmra.mxu0 %v9386
      %v9530 = vpop.f32.mrf.mxu0
      %v9531 = vadd.f32 0.0, %v9530
      %v9532 = vpop.f32.mrf.mxu0
      %v9533 = vpop.f32.mrf.mxu0
      %v9534 = vadd.f32 0.0, %v9533
      %v9535 = vpop.f32.mrf.mxu0
      %9536 = vmatprep.mubr.bf16.mxu0 0
      %9537 = vmatmul.mubr.bf16.gmra.mxu0 %v9389
      %v9538 = vpop.f32.mrf.mxu0
      %v9539 = vadd.f32 0.0, %v9538
      %v9540 = vpop.f32.mrf.mxu0
      %v9541 = vpop.f32.mrf.mxu0
      %v9542 = vadd.f32 0.0, %v9541
      %v9543 = vpop.f32.mrf.mxu0
      %9544 = vmatprep.mubr.bf16.mxu0 0
      %9545 = vmatmul.mubr.bf16.gmra.mxu0 %v9392
      %v9546 = vpop.f32.mrf.mxu0
      %v9547 = vadd.f32 0.0, %v9546
      %v9548 = vpop.f32.mrf.mxu0
      %v9549 = vpop.f32.mrf.mxu0
      %v9550 = vadd.f32 0.0, %v9549
      %v9551 = vpop.f32.mrf.mxu0
      %9552 = vmatprep.mubr.bf16.mxu0 0
      %9553 = vmatmul.mubr.bf16.gmra.mxu0 %v9395
      %v9554 = vpop.f32.mrf.mxu0
      %v9555 = vadd.f32 0.0, %v9554
      %v9556 = vpop.f32.mrf.mxu0
      %v9557 = vpop.f32.mrf.mxu0
      %v9558 = vadd.f32 0.0, %v9557
      %v9559 = vpop.f32.mrf.mxu0
      %9560 = vdwg.mxu0
      %v9561 = vadd.f32 %v9197, %v9435
      %v9562 = vadd.f32 %v9198, %v9438
      %v9563 = vadd.f32 %v9199, %v9443
      %v9564 = vadd.f32 %v9200, %v9446
      %v9565 = vadd.f32 %v9201, %v9451
      %v9566 = vadd.f32 %v9202, %v9454
      %v9567 = vadd.f32 %v9203, %v9459
      %v9568 = vadd.f32 %v9204, %v9462
      %v9569 = vadd.f32 %v9205, %v9467
      %v9570 = vadd.f32 %v9206, %v9470
      %v9571 = vadd.f32 %v9207, %v9475
      %v9572 = vadd.f32 %v9208, %v9478
      %v9573 = vadd.f32 %v9209, %v9483
      %v9574 = vadd.f32 %v9210, %v9486
      %v9575 = vadd.f32 %v9211, %v9491
      %v9576 = vadd.f32 %v9212, %v9494
      %v9577 = vadd.f32 %v9213, %v9499
      %v9578 = vadd.f32 %v9214, %v9502
      %v9579 = vadd.f32 %v9215, %v9507
      %v9580 = vadd.f32 %v9216, %v9510
      %v9581 = vadd.f32 %v9217, %v9515
      %v9582 = vadd.f32 %v9218, %v9518
      %v9583 = vadd.f32 %v9219, %v9523
      %v9584 = vadd.f32 %v9220, %v9526
      %v9585 = vadd.f32 %v9221, %v9531
      %v9586 = vadd.f32 %v9222, %v9534
      %v9587 = vadd.f32 %v9223, %v9539
      %v9588 = vadd.f32 %v9224, %v9542
      %v9589 = vadd.f32 %v9225, %v9547
      %v9590 = vadd.f32 %v9226, %v9550
      %v9591 = vadd.f32 %v9227, %v9555
      %v9592 = vadd.f32 %v9228, %v9558
      %v9593 = vld [vmem:[%s3973] sm:$0xf]
      %v9594 = vld [vmem:[%s3973 + $0x4] sm:$0xf]
      %v9595 = vld [vmem:[%s3973 + $0x8] sm:$0x1]
      %v9596 = vld [vmem:[%s3973 + $0xc] sm:$0xf]
      %v9597 = vld [vmem:[%s3973 + $0x10] sm:$0xf]
      %v9598 = vld [vmem:[%s3973 + $0x14] sm:$0x1]
      %v9599 = vld [vmem:[%s3973 + $0x18] sm:$0xf]
      %v9600 = vld [vmem:[%s3973 + $0x1c] sm:$0xf]
      %v9601 = vld [vmem:[%s3973 + $0x20] sm:$0x1]
      %v9602 = vld [vmem:[%s3973 + $0x24] sm:$0xf]
      %v9603 = vld [vmem:[%s3973 + $0x28] sm:$0xf]
      %v9604 = vld [vmem:[%s3973 + $0x2c] sm:$0x1]
      %v9605 = vld [vmem:[%s3973 + $0x30] sm:$0xf]
      %v9606 = vld [vmem:[%s3973 + $0x34] sm:$0xf]
      %v9607 = vld [vmem:[%s3973 + $0x38] sm:$0x1]
      %v9608 = vld [vmem:[%s3973 + $0x3c] sm:$0xf]
      %v9609 = vld [vmem:[%s3973 + $0x40] sm:$0xf]
      %v9610 = vld [vmem:[%s3973 + $0x44] sm:$0x1]
      %v9611 = vld [vmem:[%s3973 + $0x48] sm:$0xf]
      %v9612 = vld [vmem:[%s3973 + $0x4c] sm:$0xf]
      %v9613 = vld [vmem:[%s3973 + $0x50] sm:$0x1]
      %v9614 = vld [vmem:[%s3973 + $0x54] sm:$0xf]
      %v9615 = vld [vmem:[%s3973 + $0x58] sm:$0xf]
      %v9616 = vld [vmem:[%s3973 + $0x5c] sm:$0x1]
      %v9617 = vld [vmem:[%s3973 + $0x60] sm:$0xf]
      %v9618 = vld [vmem:[%s3973 + $0x64] sm:$0xf]
      %v9619 = vld [vmem:[%s3973 + $0x68] sm:$0x1]
      %v9620 = vld [vmem:[%s3973 + $0x6c] sm:$0xf]
      %v9621 = vld [vmem:[%s3973 + $0x70] sm:$0xf]
      %v9622 = vld [vmem:[%s3973 + $0x74] sm:$0x1]
      %v9623 = vld [vmem:[%s3973 + $0x78] sm:$0xf]
      %v9624 = vld [vmem:[%s3973 + $0x7c] sm:$0xf]
      %v9625 = vld [vmem:[%s3973 + $0x80] sm:$0x1]
      %v9626 = vld [vmem:[%s3973 + $0x84] sm:$0xf]
      %v9627 = vld [vmem:[%s3973 + $0x88] sm:$0xf]
      %v9628 = vld [vmem:[%s3973 + $0x8c] sm:$0x1]
      %v9629 = vld [vmem:[%s3973 + $0x90] sm:$0xf]
      %v9630 = vld [vmem:[%s3973 + $0x94] sm:$0xf]
      %v9631 = vld [vmem:[%s3973 + $0x98] sm:$0x1]
      %v9632 = vld [vmem:[%s3973 + $0x9c] sm:$0xf]
      %v9633 = vld [vmem:[%s3973 + $0xa0] sm:$0xf]
      %v9634 = vld [vmem:[%s3973 + $0xa4] sm:$0x1]
      %v9635 = vld [vmem:[%s3973 + $0xa8] sm:$0xf]
      %v9636 = vld [vmem:[%s3973 + $0xac] sm:$0xf]
      %v9637 = vld [vmem:[%s3973 + $0xb0] sm:$0x1]
      %v9638 = vld [vmem:[%s3973 + $0xb4] sm:$0xf]
      %v9639 = vld [vmem:[%s3973 + $0xb8] sm:$0xf]
      %v9640 = vld [vmem:[%s3973 + $0xbc] sm:$0x1]
      %v9642 = vshrl.u32 %v9593, 16
      %v9644 = vrot.slane %v9642, 4
      %v9645 = vshll.u32 %v9593, 16
      %v9647 = vrot.slane %v9645, 5
      %v9648 = vor.u32 %v9644, %v9647
      %v9649 = vrot.slane %v9648, 4
      %v9651 = vshll.u32 %v9594, 16
      %v9653 = vrot.slane %v9651, 5
      %v9654 = vsel %vm1021, %v9649, %v9653
      %v9655 = vshrl.u32 %v9594, 16
      %v9657 = vrot.slane %v9655, 4
      %v9658 = vor.u32 %v9657, %v9653
      %v9659 = vrot.slane %v9658, 4
      %v9661 = vshll.u32 %v9595, 16
      %v9663 = vrot.slane %v9661, 5
      %v9664 = vsel %vm1021, %v9659, %v9663
      %v9666 = vshrl.u32 %v9596, 16
      %v9668 = vrot.slane %v9666, 4
      %v9669 = vshll.u32 %v9596, 16
      %v9671 = vrot.slane %v9669, 5
      %v9672 = vor.u32 %v9668, %v9671
      %v9673 = vrot.slane %v9672, 4
      %v9675 = vshll.u32 %v9597, 16
      %v9677 = vrot.slane %v9675, 5
      %v9678 = vsel %vm1021, %v9673, %v9677
      %v9679 = vshrl.u32 %v9597, 16
      %v9681 = vrot.slane %v9679, 4
      %v9682 = vor.u32 %v9681, %v9677
      %v9683 = vrot.slane %v9682, 4
      %v9685 = vshll.u32 %v9598, 16
      %v9687 = vrot.slane %v9685, 5
      %v9688 = vsel %vm1021, %v9683, %v9687
      %v9690 = vshrl.u32 %v9599, 16
      %v9692 = vrot.slane %v9690, 4
      %v9693 = vshll.u32 %v9599, 16
      %v9695 = vrot.slane %v9693, 5
      %v9696 = vor.u32 %v9692, %v9695
      %v9697 = vrot.slane %v9696, 4
      %v9699 = vshll.u32 %v9600, 16
      %v9701 = vrot.slane %v9699, 5
      %v9702 = vsel %vm1021, %v9697, %v9701
      %v9703 = vshrl.u32 %v9600, 16
      %v9705 = vrot.slane %v9703, 4
      %v9706 = vor.u32 %v9705, %v9701
      %v9707 = vrot.slane %v9706, 4
      %v9709 = vshll.u32 %v9601, 16
      %v9711 = vrot.slane %v9709, 5
      %v9712 = vsel %vm1021, %v9707, %v9711
      %v9714 = vshrl.u32 %v9602, 16
      %v9716 = vrot.slane %v9714, 4
      %v9717 = vshll.u32 %v9602, 16
      %v9719 = vrot.slane %v9717, 5
      %v9720 = vor.u32 %v9716, %v9719
      %v9721 = vrot.slane %v9720, 4
      %v9723 = vshll.u32 %v9603, 16
      %v9725 = vrot.slane %v9723, 5
      %v9726 = vsel %vm1021, %v9721, %v9725
      %v9727 = vshrl.u32 %v9603, 16
      %v9729 = vrot.slane %v9727, 4
      %v9730 = vor.u32 %v9729, %v9725
      %v9731 = vrot.slane %v9730, 4
      %v9733 = vshll.u32 %v9604, 16
      %v9735 = vrot.slane %v9733, 5
      %v9736 = vsel %vm1021, %v9731, %v9735
      %v9738 = vshrl.u32 %v9605, 16
      %v9740 = vrot.slane %v9738, 4
      %v9741 = vshll.u32 %v9605, 16
      %v9743 = vrot.slane %v9741, 5
      %v9744 = vor.u32 %v9740, %v9743
      %v9745 = vrot.slane %v9744, 4
      %v9747 = vshll.u32 %v9606, 16
      %v9749 = vrot.slane %v9747, 5
      %v9750 = vsel %vm1021, %v9745, %v9749
      %v9751 = vshrl.u32 %v9606, 16
      %v9753 = vrot.slane %v9751, 4
      %v9754 = vor.u32 %v9753, %v9749
      %v9755 = vrot.slane %v9754, 4
      %v9757 = vshll.u32 %v9607, 16
      %v9759 = vrot.slane %v9757, 5
      %v9760 = vsel %vm1021, %v9755, %v9759
      %v9762 = vshrl.u32 %v9608, 16
      %v9764 = vrot.slane %v9762, 4
      %v9765 = vshll.u32 %v9608, 16
      %v9767 = vrot.slane %v9765, 5
      %v9768 = vor.u32 %v9764, %v9767
      %v9769 = vrot.slane %v9768, 4
      %v9771 = vshll.u32 %v9609, 16
      %v9773 = vrot.slane %v9771, 5
      %v9774 = vsel %vm1021, %v9769, %v9773
      %v9775 = vshrl.u32 %v9609, 16
      %v9777 = vrot.slane %v9775, 4
      %v9778 = vor.u32 %v9777, %v9773
      %v9779 = vrot.slane %v9778, 4
      %v9781 = vshll.u32 %v9610, 16
      %v9783 = vrot.slane %v9781, 5
      %v9784 = vsel %vm1021, %v9779, %v9783
      %v9786 = vshrl.u32 %v9611, 16
      %v9788 = vrot.slane %v9786, 4
      %v9789 = vshll.u32 %v9611, 16
      %v9791 = vrot.slane %v9789, 5
      %v9792 = vor.u32 %v9788, %v9791
      %v9793 = vrot.slane %v9792, 4
      %v9795 = vshll.u32 %v9612, 16
      %v9797 = vrot.slane %v9795, 5
      %v9798 = vsel %vm1021, %v9793, %v9797
      %v9799 = vshrl.u32 %v9612, 16
      %v9801 = vrot.slane %v9799, 4
      %v9802 = vor.u32 %v9801, %v9797
      %v9803 = vrot.slane %v9802, 4
      %v9805 = vshll.u32 %v9613, 16
      %v9807 = vrot.slane %v9805, 5
      %v9808 = vsel %vm1021, %v9803, %v9807
      %v9810 = vshrl.u32 %v9614, 16
      %v9812 = vrot.slane %v9810, 4
      %v9813 = vshll.u32 %v9614, 16
      %v9815 = vrot.slane %v9813, 5
      %v9816 = vor.u32 %v9812, %v9815
      %v9817 = vrot.slane %v9816, 4
      %v9819 = vshll.u32 %v9615, 16
      %v9821 = vrot.slane %v9819, 5
      %v9822 = vsel %vm1021, %v9817, %v9821
      %v9823 = vshrl.u32 %v9615, 16
      %v9825 = vrot.slane %v9823, 4
      %v9826 = vor.u32 %v9825, %v9821
      %v9827 = vrot.slane %v9826, 4
      %v9829 = vshll.u32 %v9616, 16
      %v9831 = vrot.slane %v9829, 5
      %v9832 = vsel %vm1021, %v9827, %v9831
      %v9834 = vshrl.u32 %v9617, 16
      %v9836 = vrot.slane %v9834, 4
      %v9837 = vshll.u32 %v9617, 16
      %v9839 = vrot.slane %v9837, 5
      %v9840 = vor.u32 %v9836, %v9839
      %v9841 = vrot.slane %v9840, 4
      %v9843 = vshll.u32 %v9618, 16
      %v9845 = vrot.slane %v9843, 5
      %v9846 = vsel %vm1021, %v9841, %v9845
      %v9847 = vshrl.u32 %v9618, 16
      %v9849 = vrot.slane %v9847, 4
      %v9850 = vor.u32 %v9849, %v9845
      %v9851 = vrot.slane %v9850, 4
      %v9853 = vshll.u32 %v9619, 16
      %v9855 = vrot.slane %v9853, 5
      %v9856 = vsel %vm1021, %v9851, %v9855
      %v9858 = vshrl.u32 %v9620, 16
      %v9860 = vrot.slane %v9858, 4
      %v9861 = vshll.u32 %v9620, 16
      %v9863 = vrot.slane %v9861, 5
      %v9864 = vor.u32 %v9860, %v9863
      %v9865 = vrot.slane %v9864, 4
      %v9867 = vshll.u32 %v9621, 16
      %v9869 = vrot.slane %v9867, 5
      %v9870 = vsel %vm1021, %v9865, %v9869
      %v9871 = vshrl.u32 %v9621, 16
      %v9873 = vrot.slane %v9871, 4
      %v9874 = vor.u32 %v9873, %v9869
      %v9875 = vrot.slane %v9874, 4
      %v9877 = vshll.u32 %v9622, 16
      %v9879 = vrot.slane %v9877, 5
      %v9880 = vsel %vm1021, %v9875, %v9879
      %v9882 = vshrl.u32 %v9623, 16
      %v9884 = vrot.slane %v9882, 4
      %v9885 = vshll.u32 %v9623, 16
      %v9887 = vrot.slane %v9885, 5
      %v9888 = vor.u32 %v9884, %v9887
      %v9889 = vrot.slane %v9888, 4
      %v9891 = vshll.u32 %v9624, 16
      %v9893 = vrot.slane %v9891, 5
      %v9894 = vsel %vm1021, %v9889, %v9893
      %v9895 = vshrl.u32 %v9624, 16
      %v9897 = vrot.slane %v9895, 4
      %v9898 = vor.u32 %v9897, %v9893
      %v9899 = vrot.slane %v9898, 4
      %v9901 = vshll.u32 %v9625, 16
      %v9903 = vrot.slane %v9901, 5
      %v9904 = vsel %vm1021, %v9899, %v9903
      %v9906 = vshrl.u32 %v9626, 16
      %v9908 = vrot.slane %v9906, 4
      %v9909 = vshll.u32 %v9626, 16
      %v9911 = vrot.slane %v9909, 5
      %v9912 = vor.u32 %v9908, %v9911
      %v9913 = vrot.slane %v9912, 4
      %v9915 = vshll.u32 %v9627, 16
      %v9917 = vrot.slane %v9915, 5
      %v9918 = vsel %vm1021, %v9913, %v9917
      %v9919 = vshrl.u32 %v9627, 16
      %v9921 = vrot.slane %v9919, 4
      %v9922 = vor.u32 %v9921, %v9917
      %v9923 = vrot.slane %v9922, 4
      %v9925 = vshll.u32 %v9628, 16
      %v9927 = vrot.slane %v9925, 5
      %v9928 = vsel %vm1021, %v9923, %v9927
      %v9930 = vshrl.u32 %v9629, 16
      %v9932 = vrot.slane %v9930, 4
      %v9933 = vshll.u32 %v9629, 16
      %v9935 = vrot.slane %v9933, 5
      %v9936 = vor.u32 %v9932, %v9935
      %v9937 = vrot.slane %v9936, 4
      %v9939 = vshll.u32 %v9630, 16
      %v9941 = vrot.slane %v9939, 5
      %v9942 = vsel %vm1021, %v9937, %v9941
      %v9943 = vshrl.u32 %v9630, 16
      %v9945 = vrot.slane %v9943, 4
      %v9946 = vor.u32 %v9945, %v9941
      %v9947 = vrot.slane %v9946, 4
      %v9949 = vshll.u32 %v9631, 16
      %v9951 = vrot.slane %v9949, 5
      %v9952 = vsel %vm1021, %v9947, %v9951
      %v9954 = vshrl.u32 %v9632, 16
      %v9956 = vrot.slane %v9954, 4
      %v9957 = vshll.u32 %v9632, 16
      %v9959 = vrot.slane %v9957, 5
      %v9960 = vor.u32 %v9956, %v9959
      %v9961 = vrot.slane %v9960, 4
      %v9963 = vshll.u32 %v9633, 16
      %v9965 = vrot.slane %v9963, 5
      %v9966 = vsel %vm1021, %v9961, %v9965
      %v9967 = vshrl.u32 %v9633, 16
      %v9969 = vrot.slane %v9967, 4
      %v9970 = vor.u32 %v9969, %v9965
      %v9971 = vrot.slane %v9970, 4
      %v9973 = vshll.u32 %v9634, 16
      %v9975 = vrot.slane %v9973, 5
      %v9976 = vsel %vm1021, %v9971, %v9975
      %v9978 = vshrl.u32 %v9635, 16
      %v9980 = vrot.slane %v9978, 4
      %v9981 = vshll.u32 %v9635, 16
      %v9983 = vrot.slane %v9981, 5
      %v9984 = vor.u32 %v9980, %v9983
      %v9985 = vrot.slane %v9984, 4
      %v9987 = vshll.u32 %v9636, 16
      %v9989 = vrot.slane %v9987, 5
      %v9990 = vsel %vm1021, %v9985, %v9989
      %v9991 = vshrl.u32 %v9636, 16
      %v9993 = vrot.slane %v9991, 4
      %v9994 = vor.u32 %v9993, %v9989
      %v9995 = vrot.slane %v9994, 4
      %v9997 = vshll.u32 %v9637, 16
      %v9999 = vrot.slane %v9997, 5
      %v10000 = vsel %vm1021, %v9995, %v9999
      %v10002 = vshrl.u32 %v9638, 16
      %v10004 = vrot.slane %v10002, 4
      %v10005 = vshll.u32 %v9638, 16
      %v10007 = vrot.slane %v10005, 5
      %v10008 = vor.u32 %v10004, %v10007
      %v10009 = vrot.slane %v10008, 4
      %v10011 = vshll.u32 %v9639, 16
      %v10013 = vrot.slane %v10011, 5
      %v10014 = vsel %vm1021, %v10009, %v10013
      %v10015 = vshrl.u32 %v9639, 16
      %v10017 = vrot.slane %v10015, 4
      %v10018 = vor.u32 %v10017, %v10013
      %v10019 = vrot.slane %v10018, 4
      %v10021 = vshll.u32 %v9640, 16
      %v10023 = vrot.slane %v10021, 5
      %v10024 = vsel %vm1021, %v10019, %v10023
      %s10025 = scalar_lea.vmem %s1, 128
      %v10026 = vld [vmem:[%s10025] sm:$0xf]
      %v10027 = vld [vmem:[%s10025 + $0x4] sm:$0x3]
      %v10028 = vunpack.c.l.b16 %v9654
      %v10029 = vunpack.c.l.b16 %v9664
      %v10030 = vunpack.c.l.b16 %v9678
      %v10031 = vunpack.c.l.b16 %v9688
      %v10032 = vunpack.c.l.b16 %v9702
      %v10033 = vunpack.c.l.b16 %v9712
      %v10034 = vunpack.c.l.b16 %v9726
      %v10035 = vunpack.c.l.b16 %v9736
      %v10036 = vunpack.c.l.b16 %v9750
      %v10037 = vunpack.c.l.b16 %v9760
      %v10038 = vunpack.c.l.b16 %v9774
      %v10039 = vunpack.c.l.b16 %v9784
      %v10040 = vunpack.c.l.b16 %v9798
      %v10041 = vunpack.c.l.b16 %v9808
      %v10042 = vunpack.c.l.b16 %v9822
      %v10043 = vunpack.c.l.b16 %v9832
      %v10044 = vunpack.c.l.b16 %v9846
      %v10045 = vunpack.c.l.b16 %v9856
      %v10046 = vunpack.c.l.b16 %v9870
      %v10047 = vunpack.c.l.b16 %v9880
      %v10048 = vunpack.c.l.b16 %v9894
      %v10049 = vunpack.c.l.b16 %v9904
      %v10050 = vunpack.c.l.b16 %v9918
      %v10051 = vunpack.c.l.b16 %v9928
      %v10052 = vunpack.c.l.b16 %v9942
      %v10053 = vunpack.c.l.b16 %v9952
      %v10054 = vunpack.c.l.b16 %v9966
      %v10055 = vunpack.c.l.b16 %v9976
      %v10056 = vunpack.c.l.b16 %v9990
      %v10057 = vunpack.c.l.b16 %v10000
      %v10058 = vunpack.c.l.b16 %v10014
      %v10059 = vunpack.c.l.b16 %v10024
      %v10060 = vpack.c.b16 %v10029, %v10028
      %v10061 = vpack.c.b16 %v10031, %v10030
      %v10062 = vpack.c.b16 %v10033, %v10032
      %v10063 = vpack.c.b16 %v10035, %v10034
      %v10064 = vpack.c.b16 %v10037, %v10036
      %v10065 = vpack.c.b16 %v10039, %v10038
      %v10066 = vpack.c.b16 %v10041, %v10040
      %v10067 = vpack.c.b16 %v10043, %v10042
      %v10068 = vpack.c.b16 %v10045, %v10044
      %v10069 = vpack.c.b16 %v10047, %v10046
      %v10070 = vpack.c.b16 %v10049, %v10048
      %v10071 = vpack.c.b16 %v10051, %v10050
      %v10072 = vpack.c.b16 %v10053, %v10052
      %v10073 = vpack.c.b16 %v10055, %v10054
      %v10074 = vpack.c.b16 %v10057, %v10056
      %v10075 = vpack.c.b16 %v10059, %v10058
      %v10078 = vunpack.c.l.b16 %v10026
      %v10079 = vunpack.c.l.b16 %v10027
      %v10080 = vpack.c.b16 %v10079, %v10078
      %v10082 = vsel %vm6686, %v10060, 0
      %v10085 = vsel %vm6686, %v10061, 0
      %v10088 = vsel %vm6686, %v10062, 0
      %v10091 = vsel %vm6686, %v10063, 0
      %v10094 = vsel %vm6686, %v10064, 0
      %v10097 = vsel %vm6686, %v10065, 0
      %v10100 = vsel %vm6686, %v10066, 0
      %v10103 = vsel %vm6686, %v10067, 0
      %v10106 = vsel %vm6686, %v10068, 0
      %v10109 = vsel %vm6686, %v10069, 0
      %v10112 = vsel %vm6686, %v10070, 0
      %v10115 = vsel %vm6686, %v10071, 0
      %v10118 = vsel %vm6686, %v10072, 0
      %v10121 = vsel %vm6686, %v10073, 0
      %v10124 = vsel %vm6686, %v10074, 0
      %v10127 = vsel %vm6686, %v10075, 0
      %v10130 = vsel %vm6735, %v10080, 0
      %10132 = vmatprep.subr.bf16.mxu0 0
      %10133 = vmatpush1.bf16.msra.mxu0 0
      %10134 = vmatprep.subr.bf16.mxu0 0
      %10135 = vmatpush1.bf16.msra.mxu0 0
      %10136 = vmatprep.subr.bf16.mxu0 0
      %10137 = vmatpush1.bf16.msra.mxu0 0
      %10138 = vmatprep.subr.bf16.mxu0 0
      %10139 = vmatpush1.bf16.msra.mxu0 0
      %10140 = vmatprep.subr.bf16.mxu0 0
      %10141 = vmatpush1.bf16.msra.mxu0 0
      %10142 = vmatprep.subr.bf16.mxu0 0
      %10143 = vmatpush1.bf16.msra.mxu0 0
      %10144 = vmatprep.subr.bf16.mxu0 0
      %10145 = vmatpush1.bf16.msra.mxu0 0
      %10146 = vmatprep.subr.bf16.mxu0 0
      %10147 = vmatpush1.bf16.msra.mxu0 %v10130
      %10148 = vmatprep.subr.bf16.mxu0 0
      %10149 = vmatpush2.bf16.msra.mxu0 0
      %10150 = vmatprep.subr.bf16.mxu0 0
      %10151 = vmatpush2.bf16.msra.mxu0 0
      %10152 = vmatprep.subr.bf16.mxu0 0
      %10153 = vmatpush2.bf16.msra.mxu0 0
      %10154 = vmatprep.subr.bf16.mxu0 0
      %10155 = vmatpush2.bf16.msra.mxu0 0
      %10156 = vmatprep.subr.bf16.mxu0 0
      %10157 = vmatpush2.bf16.msra.mxu0 0
      %10158 = vmatprep.subr.bf16.mxu0 0
      %10159 = vmatpush2.bf16.msra.mxu0 0
      %10160 = vmatprep.subr.bf16.mxu0 0
      %10161 = vmatpush2.bf16.msra.mxu0 0
      %10162 = vmatprep.subr.bf16.mxu0 0
      %10163 = vmatpush2.bf16.msra.mxu0 0
      %10164 = vmatprep.mubr.bf16.mxu0 0
      %10165 = vmatmul.mubr.bf16.gmra.mxu0 %v10082
      %v10166 = vpop.f32.mrf.mxu0
      %v10167 = vadd.f32 0.0, %v10166
      %v10168 = vpop.f32.mrf.mxu0
      %v10169 = vpop.f32.mrf.mxu0
      %v10170 = vadd.f32 0.0, %v10169
      %v10171 = vpop.f32.mrf.mxu0
      %10172 = vmatprep.mubr.bf16.mxu0 0
      %10173 = vmatmul.mubr.bf16.gmra.mxu0 %v10085
      %v10174 = vpop.f32.mrf.mxu0
      %v10175 = vadd.f32 0.0, %v10174
      %v10176 = vpop.f32.mrf.mxu0
      %v10177 = vpop.f32.mrf.mxu0
      %v10178 = vadd.f32 0.0, %v10177
      %v10179 = vpop.f32.mrf.mxu0
      %10180 = vmatprep.mubr.bf16.mxu0 0
      %10181 = vmatmul.mubr.bf16.gmra.mxu0 %v10088
      %v10182 = vpop.f32.mrf.mxu0
      %v10183 = vadd.f32 0.0, %v10182
      %v10184 = vpop.f32.mrf.mxu0
      %v10185 = vpop.f32.mrf.mxu0
      %v10186 = vadd.f32 0.0, %v10185
      %v10187 = vpop.f32.mrf.mxu0
      %10188 = vmatprep.mubr.bf16.mxu0 0
      %10189 = vmatmul.mubr.bf16.gmra.mxu0 %v10091
      %v10190 = vpop.f32.mrf.mxu0
      %v10191 = vadd.f32 0.0, %v10190
      %v10192 = vpop.f32.mrf.mxu0
      %v10193 = vpop.f32.mrf.mxu0
      %v10194 = vadd.f32 0.0, %v10193
      %v10195 = vpop.f32.mrf.mxu0
      %10196 = vmatprep.mubr.bf16.mxu0 0
      %10197 = vmatmul.mubr.bf16.gmra.mxu0 %v10094
      %v10198 = vpop.f32.mrf.mxu0
      %v10199 = vadd.f32 0.0, %v10198
      %v10200 = vpop.f32.mrf.mxu0
      %v10201 = vpop.f32.mrf.mxu0
      %v10202 = vadd.f32 0.0, %v10201
      %v10203 = vpop.f32.mrf.mxu0
      %10204 = vmatprep.mubr.bf16.mxu0 0
      %10205 = vmatmul.mubr.bf16.gmra.mxu0 %v10097
      %v10206 = vpop.f32.mrf.mxu0
      %v10207 = vadd.f32 0.0, %v10206
      %v10208 = vpop.f32.mrf.mxu0
      %v10209 = vpop.f32.mrf.mxu0
      %v10210 = vadd.f32 0.0, %v10209
      %v10211 = vpop.f32.mrf.mxu0
      %10212 = vmatprep.mubr.bf16.mxu0 0
      %10213 = vmatmul.mubr.bf16.gmra.mxu0 %v10100
      %v10214 = vpop.f32.mrf.mxu0
      %v10215 = vadd.f32 0.0, %v10214
      %v10216 = vpop.f32.mrf.mxu0
      %v10217 = vpop.f32.mrf.mxu0
      %v10218 = vadd.f32 0.0, %v10217
      %v10219 = vpop.f32.mrf.mxu0
      %10220 = vmatprep.mubr.bf16.mxu0 0
      %10221 = vmatmul.mubr.bf16.gmra.mxu0 %v10103
      %v10222 = vpop.f32.mrf.mxu0
      %v10223 = vadd.f32 0.0, %v10222
      %v10224 = vpop.f32.mrf.mxu0
      %v10225 = vpop.f32.mrf.mxu0
      %v10226 = vadd.f32 0.0, %v10225
      %v10227 = vpop.f32.mrf.mxu0
      %10228 = vmatprep.mubr.bf16.mxu0 0
      %10229 = vmatmul.mubr.bf16.gmra.mxu0 %v10106
      %v10230 = vpop.f32.mrf.mxu0
      %v10231 = vadd.f32 0.0, %v10230
      %v10232 = vpop.f32.mrf.mxu0
      %v10233 = vpop.f32.mrf.mxu0
      %v10234 = vadd.f32 0.0, %v10233
      %v10235 = vpop.f32.mrf.mxu0
      %10236 = vmatprep.mubr.bf16.mxu0 0
      %10237 = vmatmul.mubr.bf16.gmra.mxu0 %v10109
      %v10238 = vpop.f32.mrf.mxu0
      %v10239 = vadd.f32 0.0, %v10238
      %v10240 = vpop.f32.mrf.mxu0
      %v10241 = vpop.f32.mrf.mxu0
      %v10242 = vadd.f32 0.0, %v10241
      %v10243 = vpop.f32.mrf.mxu0
      %10244 = vmatprep.mubr.bf16.mxu0 0
      %10245 = vmatmul.mubr.bf16.gmra.mxu0 %v10112
      %v10246 = vpop.f32.mrf.mxu0
      %v10247 = vadd.f32 0.0, %v10246
      %v10248 = vpop.f32.mrf.mxu0
      %v10249 = vpop.f32.mrf.mxu0
      %v10250 = vadd.f32 0.0, %v10249
      %v10251 = vpop.f32.mrf.mxu0
      %10252 = vmatprep.mubr.bf16.mxu0 0
      %10253 = vmatmul.mubr.bf16.gmra.mxu0 %v10115
      %v10254 = vpop.f32.mrf.mxu0
      %v10255 = vadd.f32 0.0, %v10254
      %v10256 = vpop.f32.mrf.mxu0
      %v10257 = vpop.f32.mrf.mxu0
      %v10258 = vadd.f32 0.0, %v10257
      %v10259 = vpop.f32.mrf.mxu0
      %10260 = vmatprep.mubr.bf16.mxu0 0
      %10261 = vmatmul.mubr.bf16.gmra.mxu0 %v10118
      %v10262 = vpop.f32.mrf.mxu0
      %v10263 = vadd.f32 0.0, %v10262
      %v10264 = vpop.f32.mrf.mxu0
      %v10265 = vpop.f32.mrf.mxu0
      %v10266 = vadd.f32 0.0, %v10265
      %v10267 = vpop.f32.mrf.mxu0
      %10268 = vmatprep.mubr.bf16.mxu0 0
      %10269 = vmatmul.mubr.bf16.gmra.mxu0 %v10121
      %v10270 = vpop.f32.mrf.mxu0
      %v10271 = vadd.f32 0.0, %v10270
      %v10272 = vpop.f32.mrf.mxu0
      %v10273 = vpop.f32.mrf.mxu0
      %v10274 = vadd.f32 0.0, %v10273
      %v10275 = vpop.f32.mrf.mxu0
      %10276 = vmatprep.mubr.bf16.mxu0 0
      %10277 = vmatmul.mubr.bf16.gmra.mxu0 %v10124
      %v10278 = vpop.f32.mrf.mxu0
      %v10279 = vadd.f32 0.0, %v10278
      %v10280 = vpop.f32.mrf.mxu0
      %v10281 = vpop.f32.mrf.mxu0
      %v10282 = vadd.f32 0.0, %v10281
      %v10283 = vpop.f32.mrf.mxu0
      %10284 = vmatprep.mubr.bf16.mxu0 0
      %10285 = vmatmul.mubr.bf16.gmra.mxu0 %v10127
      %v10286 = vpop.f32.mrf.mxu0
      %v10287 = vadd.f32 0.0, %v10286
      %v10288 = vpop.f32.mrf.mxu0
      %v10289 = vpop.f32.mrf.mxu0
      %v10290 = vadd.f32 0.0, %v10289
      %v10291 = vpop.f32.mrf.mxu0
      %10292 = vdwg.mxu0
      %v10293 = vadd.f32 %v9561, %v10167
      %v10294 = vadd.f32 %v9562, %v10170
      %v10295 = vadd.f32 %v9563, %v10175
      %v10296 = vadd.f32 %v9564, %v10178
      %v10297 = vadd.f32 %v9565, %v10183
      %v10298 = vadd.f32 %v9566, %v10186
      %v10299 = vadd.f32 %v9567, %v10191
      %v10300 = vadd.f32 %v9568, %v10194
      %v10301 = vadd.f32 %v9569, %v10199
      %v10302 = vadd.f32 %v9570, %v10202
      %v10303 = vadd.f32 %v9571, %v10207
      %v10304 = vadd.f32 %v9572, %v10210
      %v10305 = vadd.f32 %v9573, %v10215
      %v10306 = vadd.f32 %v9574, %v10218
      %v10307 = vadd.f32 %v9575, %v10223
      %v10308 = vadd.f32 %v9576, %v10226
      %v10309 = vadd.f32 %v9577, %v10231
      %v10310 = vadd.f32 %v9578, %v10234
      %v10311 = vadd.f32 %v9579, %v10239
      %v10312 = vadd.f32 %v9580, %v10242
      %v10313 = vadd.f32 %v9581, %v10247
      %v10314 = vadd.f32 %v9582, %v10250
      %v10315 = vadd.f32 %v9583, %v10255
      %v10316 = vadd.f32 %v9584, %v10258
      %v10317 = vadd.f32 %v9585, %v10263
      %v10318 = vadd.f32 %v9586, %v10266
      %v10319 = vadd.f32 %v9587, %v10271
      %v10320 = vadd.f32 %v9588, %v10274
      %v10321 = vadd.f32 %v9589, %v10279
      %v10322 = vadd.f32 %v9590, %v10282
      %v10323 = vadd.f32 %v9591, %v10287
      %v10324 = vadd.f32 %v9592, %v10290
      %v10325 = vld [vmem:[%s3973] sm:$0xe]
      %v10326 = vld [vmem:[%s3973 + $0xc] sm:$0xe]
      %v10327 = vld [vmem:[%s3973 + $0x18] sm:$0xe]
      %v10328 = vld [vmem:[%s3973 + $0x24] sm:$0xe]
      %v10329 = vld [vmem:[%s3973 + $0x30] sm:$0xe]
      %v10330 = vld [vmem:[%s3973 + $0x3c] sm:$0xe]
      %v10331 = vld [vmem:[%s3973 + $0x48] sm:$0xe]
      %v10332 = vld [vmem:[%s3973 + $0x54] sm:$0xe]
      %v10333 = vld [vmem:[%s3973 + $0x60] sm:$0xe]
      %v10334 = vld [vmem:[%s3973 + $0x6c] sm:$0xe]
      %v10335 = vld [vmem:[%s3973 + $0x78] sm:$0xe]
      %v10336 = vld [vmem:[%s3973 + $0x84] sm:$0xe]
      %v10337 = vld [vmem:[%s3973 + $0x90] sm:$0xe]
      %v10338 = vld [vmem:[%s3973 + $0x9c] sm:$0xe]
      %v10339 = vld [vmem:[%s3973 + $0xa8] sm:$0xe]
      %v10340 = vld [vmem:[%s3973 + $0xb4] sm:$0xe]
      %v10389 = vrot.slane %v10325, 5
      %v10390 = vrot.slane %v10389, 4
      %v10391 = vrot.slane %v9594, 5
      %v10392 = vsel %vm2012, %v10390, %v10391
      %v10393 = vrot.slane %v10391, 4
      %v10394 = vrot.slane %v9595, 5
      %v10395 = vsel %vm2012, %v10393, %v10394
      %v10396 = vrot.slane %v10326, 5
      %v10397 = vrot.slane %v10396, 4
      %v10398 = vrot.slane %v9597, 5
      %v10399 = vsel %vm2012, %v10397, %v10398
      %v10400 = vrot.slane %v10398, 4
      %v10401 = vrot.slane %v9598, 5
      %v10402 = vsel %vm2012, %v10400, %v10401
      %v10403 = vrot.slane %v10327, 5
      %v10404 = vrot.slane %v10403, 4
      %v10405 = vrot.slane %v9600, 5
      %v10406 = vsel %vm2012, %v10404, %v10405
      %v10407 = vrot.slane %v10405, 4
      %v10408 = vrot.slane %v9601, 5
      %v10409 = vsel %vm2012, %v10407, %v10408
      %v10410 = vrot.slane %v10328, 5
      %v10411 = vrot.slane %v10410, 4
      %v10412 = vrot.slane %v9603, 5
      %v10413 = vsel %vm2012, %v10411, %v10412
      %v10414 = vrot.slane %v10412, 4
      %v10415 = vrot.slane %v9604, 5
      %v10416 = vsel %vm2012, %v10414, %v10415
      %v10417 = vrot.slane %v10329, 5
      %v10418 = vrot.slane %v10417, 4
      %v10419 = vrot.slane %v9606, 5
      %v10420 = vsel %vm2012, %v10418, %v10419
      %v10421 = vrot.slane %v10419, 4
      %v10422 = vrot.slane %v9607, 5
      %v10423 = vsel %vm2012, %v10421, %v10422
      %v10424 = vrot.slane %v10330, 5
      %v10425 = vrot.slane %v10424, 4
      %v10426 = vrot.slane %v9609, 5
      %v10427 = vsel %vm2012, %v10425, %v10426
      %v10428 = vrot.slane %v10426, 4
      %v10429 = vrot.slane %v9610, 5
      %v10430 = vsel %vm2012, %v10428, %v10429
      %v10431 = vrot.slane %v10331, 5
      %v10432 = vrot.slane %v10431, 4
      %v10433 = vrot.slane %v9612, 5
      %v10434 = vsel %vm2012, %v10432, %v10433
      %v10435 = vrot.slane %v10433, 4
      %v10436 = vrot.slane %v9613, 5
      %v10437 = vsel %vm2012, %v10435, %v10436
      %v10438 = vrot.slane %v10332, 5
      %v10439 = vrot.slane %v10438, 4
      %v10440 = vrot.slane %v9615, 5
      %v10441 = vsel %vm2012, %v10439, %v10440
      %v10442 = vrot.slane %v10440, 4
      %v10443 = vrot.slane %v9616, 5
      %v10444 = vsel %vm2012, %v10442, %v10443
      %v10445 = vrot.slane %v10333, 5
      %v10446 = vrot.slane %v10445, 4
      %v10447 = vrot.slane %v9618, 5
      %v10448 = vsel %vm2012, %v10446, %v10447
      %v10449 = vrot.slane %v10447, 4
      %v10450 = vrot.slane %v9619, 5
      %v10451 = vsel %vm2012, %v10449, %v10450
      %v10452 = vrot.slane %v10334, 5
      %v10453 = vrot.slane %v10452, 4
      %v10454 = vrot.slane %v9621, 5
      %v10455 = vsel %vm2012, %v10453, %v10454
      %v10456 = vrot.slane %v10454, 4
      %v10457 = vrot.slane %v9622, 5
      %v10458 = vsel %vm2012, %v10456, %v10457
      %v10459 = vrot.slane %v10335, 5
      %v10460 = vrot.slane %v10459, 4
      %v10461 = vrot.slane %v9624, 5
      %v10462 = vsel %vm2012, %v10460, %v10461
      %v10463 = vrot.slane %v10461, 4
      %v10464 = vrot.slane %v9625, 5
      %v10465 = vsel %vm2012, %v10463, %v10464
      %v10466 = vrot.slane %v10336, 5
      %v10467 = vrot.slane %v10466, 4
      %v10468 = vrot.slane %v9627, 5
      %v10469 = vsel %vm2012, %v10467, %v10468
      %v10470 = vrot.slane %v10468, 4
      %v10471 = vrot.slane %v9628, 5
      %v10472 = vsel %vm2012, %v10470, %v10471
      %v10473 = vrot.slane %v10337, 5
      %v10474 = vrot.slane %v10473, 4
      %v10475 = vrot.slane %v9630, 5
      %v10476 = vsel %vm2012, %v10474, %v10475
      %v10477 = vrot.slane %v10475, 4
      %v10478 = vrot.slane %v9631, 5
      %v10479 = vsel %vm2012, %v10477, %v10478
      %v10480 = vrot.slane %v10338, 5
      %v10481 = vrot.slane %v10480, 4
      %v10482 = vrot.slane %v9633, 5
      %v10483 = vsel %vm2012, %v10481, %v10482
      %v10484 = vrot.slane %v10482, 4
      %v10485 = vrot.slane %v9634, 5
      %v10486 = vsel %vm2012, %v10484, %v10485
      %v10487 = vrot.slane %v10339, 5
      %v10488 = vrot.slane %v10487, 4
      %v10489 = vrot.slane %v9636, 5
      %v10490 = vsel %vm2012, %v10488, %v10489
      %v10491 = vrot.slane %v10489, 4
      %v10492 = vrot.slane %v9637, 5
      %v10493 = vsel %vm2012, %v10491, %v10492
      %v10494 = vrot.slane %v10340, 5
      %v10495 = vrot.slane %v10494, 4
      %v10496 = vrot.slane %v9639, 5
      %v10497 = vsel %vm2012, %v10495, %v10496
      %v10498 = vrot.slane %v10496, 4
      %v10499 = vrot.slane %v9640, 5
      %v10500 = vsel %vm2012, %v10498, %v10499
      %s10501 = scalar_lea.vmem %s1, 136
      %v10502 = vld [vmem:[%s10501] sm:$0xf]
      %v10503 = vld [vmem:[%s10501 + $0x4] sm:$0x3]
      %v10504 = vunpack.c.l.b16 %v10392
      %v10505 = vunpack.c.l.b16 %v10395
      %v10506 = vunpack.c.l.b16 %v10399
      %v10507 = vunpack.c.l.b16 %v10402
      %v10508 = vunpack.c.l.b16 %v10406
      %v10509 = vunpack.c.l.b16 %v10409
      %v10510 = vunpack.c.l.b16 %v10413
      %v10511 = vunpack.c.l.b16 %v10416
      %v10512 = vunpack.c.l.b16 %v10420
      %v10513 = vunpack.c.l.b16 %v10423
      %v10514 = vunpack.c.l.b16 %v10427
      %v10515 = vunpack.c.l.b16 %v10430
      %v10516 = vunpack.c.l.b16 %v10434
      %v10517 = vunpack.c.l.b16 %v10437
      %v10518 = vunpack.c.l.b16 %v10441
      %v10519 = vunpack.c.l.b16 %v10444
      %v10520 = vunpack.c.l.b16 %v10448
      %v10521 = vunpack.c.l.b16 %v10451
      %v10522 = vunpack.c.l.b16 %v10455
      %v10523 = vunpack.c.l.b16 %v10458
      %v10524 = vunpack.c.l.b16 %v10462
      %v10525 = vunpack.c.l.b16 %v10465
      %v10526 = vunpack.c.l.b16 %v10469
      %v10527 = vunpack.c.l.b16 %v10472
      %v10528 = vunpack.c.l.b16 %v10476
      %v10529 = vunpack.c.l.b16 %v10479
      %v10530 = vunpack.c.l.b16 %v10483
      %v10531 = vunpack.c.l.b16 %v10486
      %v10532 = vunpack.c.l.b16 %v10490
      %v10533 = vunpack.c.l.b16 %v10493
      %v10534 = vunpack.c.l.b16 %v10497
      %v10535 = vunpack.c.l.b16 %v10500
      %v10536 = vpack.c.b16 %v10505, %v10504
      %v10537 = vpack.c.b16 %v10507, %v10506
      %v10538 = vpack.c.b16 %v10509, %v10508
      %v10539 = vpack.c.b16 %v10511, %v10510
      %v10540 = vpack.c.b16 %v10513, %v10512
      %v10541 = vpack.c.b16 %v10515, %v10514
      %v10542 = vpack.c.b16 %v10517, %v10516
      %v10543 = vpack.c.b16 %v10519, %v10518
      %v10544 = vpack.c.b16 %v10521, %v10520
      %v10545 = vpack.c.b16 %v10523, %v10522
      %v10546 = vpack.c.b16 %v10525, %v10524
      %v10547 = vpack.c.b16 %v10527, %v10526
      %v10548 = vpack.c.b16 %v10529, %v10528
      %v10549 = vpack.c.b16 %v10531, %v10530
      %v10550 = vpack.c.b16 %v10533, %v10532
      %v10551 = vpack.c.b16 %v10535, %v10534
      %v10554 = vunpack.c.l.b16 %v10502
      %v10555 = vunpack.c.l.b16 %v10503
      %v10556 = vpack.c.b16 %v10555, %v10554
      %v10558 = vsel %vm6686, %v10536, 0
      %v10561 = vsel %vm6686, %v10537, 0
      %v10564 = vsel %vm6686, %v10538, 0
      %v10567 = vsel %vm6686, %v10539, 0
      %v10570 = vsel %vm6686, %v10540, 0
      %v10573 = vsel %vm6686, %v10541, 0
      %v10576 = vsel %vm6686, %v10542, 0
      %v10579 = vsel %vm6686, %v10543, 0
      %v10582 = vsel %vm6686, %v10544, 0
      %v10585 = vsel %vm6686, %v10545, 0
      %v10588 = vsel %vm6686, %v10546, 0
      %v10591 = vsel %vm6686, %v10547, 0
      %v10594 = vsel %vm6686, %v10548, 0
      %v10597 = vsel %vm6686, %v10549, 0
      %v10600 = vsel %vm6686, %v10550, 0
      %v10603 = vsel %vm6686, %v10551, 0
      %v10606 = vsel %vm6735, %v10556, 0
      %10608 = vmatprep.subr.bf16.mxu0 0
      %10609 = vmatpush1.bf16.msra.mxu0 0
      %10610 = vmatprep.subr.bf16.mxu0 0
      %10611 = vmatpush1.bf16.msra.mxu0 0
      %10612 = vmatprep.subr.bf16.mxu0 0
      %10613 = vmatpush1.bf16.msra.mxu0 0
      %10614 = vmatprep.subr.bf16.mxu0 0
      %10615 = vmatpush1.bf16.msra.mxu0 0
      %10616 = vmatprep.subr.bf16.mxu0 0
      %10617 = vmatpush1.bf16.msra.mxu0 0
      %10618 = vmatprep.subr.bf16.mxu0 0
      %10619 = vmatpush1.bf16.msra.mxu0 0
      %10620 = vmatprep.subr.bf16.mxu0 0
      %10621 = vmatpush1.bf16.msra.mxu0 0
      %10622 = vmatprep.subr.bf16.mxu0 0
      %10623 = vmatpush1.bf16.msra.mxu0 %v10606
      %10624 = vmatprep.subr.bf16.mxu0 0
      %10625 = vmatpush2.bf16.msra.mxu0 0
      %10626 = vmatprep.subr.bf16.mxu0 0
      %10627 = vmatpush2.bf16.msra.mxu0 0
      %10628 = vmatprep.subr.bf16.mxu0 0
      %10629 = vmatpush2.bf16.msra.mxu0 0
      %10630 = vmatprep.subr.bf16.mxu0 0
      %10631 = vmatpush2.bf16.msra.mxu0 0
      %10632 = vmatprep.subr.bf16.mxu0 0
      %10633 = vmatpush2.bf16.msra.mxu0 0
      %10634 = vmatprep.subr.bf16.mxu0 0
      %10635 = vmatpush2.bf16.msra.mxu0 0
      %10636 = vmatprep.subr.bf16.mxu0 0
      %10637 = vmatpush2.bf16.msra.mxu0 0
      %10638 = vmatprep.subr.bf16.mxu0 0
      %10639 = vmatpush2.bf16.msra.mxu0 0
      %10640 = vmatprep.mubr.bf16.mxu0 0
      %10641 = vmatmul.mubr.bf16.gmra.mxu0 %v10558
      %v10642 = vpop.f32.mrf.mxu0
      %v10643 = vadd.f32 0.0, %v10642
      %v10644 = vpop.f32.mrf.mxu0
      %v10645 = vpop.f32.mrf.mxu0
      %v10646 = vadd.f32 0.0, %v10645
      %v10647 = vpop.f32.mrf.mxu0
      %10648 = vmatprep.mubr.bf16.mxu0 0
      %10649 = vmatmul.mubr.bf16.gmra.mxu0 %v10561
      %v10650 = vpop.f32.mrf.mxu0
      %v10651 = vadd.f32 0.0, %v10650
      %v10652 = vpop.f32.mrf.mxu0
      %v10653 = vpop.f32.mrf.mxu0
      %v10654 = vadd.f32 0.0, %v10653
      %v10655 = vpop.f32.mrf.mxu0
      %10656 = vmatprep.mubr.bf16.mxu0 0
      %10657 = vmatmul.mubr.bf16.gmra.mxu0 %v10564
      %v10658 = vpop.f32.mrf.mxu0
      %v10659 = vadd.f32 0.0, %v10658
      %v10660 = vpop.f32.mrf.mxu0
      %v10661 = vpop.f32.mrf.mxu0
      %v10662 = vadd.f32 0.0, %v10661
      %v10663 = vpop.f32.mrf.mxu0
      %10664 = vmatprep.mubr.bf16.mxu0 0
      %10665 = vmatmul.mubr.bf16.gmra.mxu0 %v10567
      %v10666 = vpop.f32.mrf.mxu0
      %v10667 = vadd.f32 0.0, %v10666
      %v10668 = vpop.f32.mrf.mxu0
      %v10669 = vpop.f32.mrf.mxu0
      %v10670 = vadd.f32 0.0, %v10669
      %v10671 = vpop.f32.mrf.mxu0
      %10672 = vmatprep.mubr.bf16.mxu0 0
      %10673 = vmatmul.mubr.bf16.gmra.mxu0 %v10570
      %v10674 = vpop.f32.mrf.mxu0
      %v10675 = vadd.f32 0.0, %v10674
      %v10676 = vpop.f32.mrf.mxu0
      %v10677 = vpop.f32.mrf.mxu0
      %v10678 = vadd.f32 0.0, %v10677
      %v10679 = vpop.f32.mrf.mxu0
      %10680 = vmatprep.mubr.bf16.mxu0 0
      %10681 = vmatmul.mubr.bf16.gmra.mxu0 %v10573
      %v10682 = vpop.f32.mrf.mxu0
      %v10683 = vadd.f32 0.0, %v10682
      %v10684 = vpop.f32.mrf.mxu0
      %v10685 = vpop.f32.mrf.mxu0
      %v10686 = vadd.f32 0.0, %v10685
      %v10687 = vpop.f32.mrf.mxu0
      %10688 = vmatprep.mubr.bf16.mxu0 0
      %10689 = vmatmul.mubr.bf16.gmra.mxu0 %v10576
      %v10690 = vpop.f32.mrf.mxu0
      %v10691 = vadd.f32 0.0, %v10690
      %v10692 = vpop.f32.mrf.mxu0
      %v10693 = vpop.f32.mrf.mxu0
      %v10694 = vadd.f32 0.0, %v10693
      %v10695 = vpop.f32.mrf.mxu0
      %10696 = vmatprep.mubr.bf16.mxu0 0
      %10697 = vmatmul.mubr.bf16.gmra.mxu0 %v10579
      %v10698 = vpop.f32.mrf.mxu0
      %v10699 = vadd.f32 0.0, %v10698
      %v10700 = vpop.f32.mrf.mxu0
      %v10701 = vpop.f32.mrf.mxu0
      %v10702 = vadd.f32 0.0, %v10701
      %v10703 = vpop.f32.mrf.mxu0
      %10704 = vmatprep.mubr.bf16.mxu0 0
      %10705 = vmatmul.mubr.bf16.gmra.mxu0 %v10582
      %v10706 = vpop.f32.mrf.mxu0
      %v10707 = vadd.f32 0.0, %v10706
      %v10708 = vpop.f32.mrf.mxu0
      %v10709 = vpop.f32.mrf.mxu0
      %v10710 = vadd.f32 0.0, %v10709
      %v10711 = vpop.f32.mrf.mxu0
      %10712 = vmatprep.mubr.bf16.mxu0 0
      %10713 = vmatmul.mubr.bf16.gmra.mxu0 %v10585
      %v10714 = vpop.f32.mrf.mxu0
      %v10715 = vadd.f32 0.0, %v10714
      %v10716 = vpop.f32.mrf.mxu0
      %v10717 = vpop.f32.mrf.mxu0
      %v10718 = vadd.f32 0.0, %v10717
      %v10719 = vpop.f32.mrf.mxu0
      %10720 = vmatprep.mubr.bf16.mxu0 0
      %10721 = vmatmul.mubr.bf16.gmra.mxu0 %v10588
      %v10722 = vpop.f32.mrf.mxu0
      %v10723 = vadd.f32 0.0, %v10722
      %v10724 = vpop.f32.mrf.mxu0
      %v10725 = vpop.f32.mrf.mxu0
      %v10726 = vadd.f32 0.0, %v10725
      %v10727 = vpop.f32.mrf.mxu0
      %10728 = vmatprep.mubr.bf16.mxu0 0
      %10729 = vmatmul.mubr.bf16.gmra.mxu0 %v10591
      %v10730 = vpop.f32.mrf.mxu0
      %v10731 = vadd.f32 0.0, %v10730
      %v10732 = vpop.f32.mrf.mxu0
      %v10733 = vpop.f32.mrf.mxu0
      %v10734 = vadd.f32 0.0, %v10733
      %v10735 = vpop.f32.mrf.mxu0
      %10736 = vmatprep.mubr.bf16.mxu0 0
      %10737 = vmatmul.mubr.bf16.gmra.mxu0 %v10594
      %v10738 = vpop.f32.mrf.mxu0
      %v10739 = vadd.f32 0.0, %v10738
      %v10740 = vpop.f32.mrf.mxu0
      %v10741 = vpop.f32.mrf.mxu0
      %v10742 = vadd.f32 0.0, %v10741
      %v10743 = vpop.f32.mrf.mxu0
      %10744 = vmatprep.mubr.bf16.mxu0 0
      %10745 = vmatmul.mubr.bf16.gmra.mxu0 %v10597
      %v10746 = vpop.f32.mrf.mxu0
      %v10747 = vadd.f32 0.0, %v10746
      %v10748 = vpop.f32.mrf.mxu0
      %v10749 = vpop.f32.mrf.mxu0
      %v10750 = vadd.f32 0.0, %v10749
      %v10751 = vpop.f32.mrf.mxu0
      %10752 = vmatprep.mubr.bf16.mxu0 0
      %10753 = vmatmul.mubr.bf16.gmra.mxu0 %v10600
      %v10754 = vpop.f32.mrf.mxu0
      %v10755 = vadd.f32 0.0, %v10754
      %v10756 = vpop.f32.mrf.mxu0
      %v10757 = vpop.f32.mrf.mxu0
      %v10758 = vadd.f32 0.0, %v10757
      %v10759 = vpop.f32.mrf.mxu0
      %10760 = vmatprep.mubr.bf16.mxu0 0
      %10761 = vmatmul.mubr.bf16.gmra.mxu0 %v10603
      %v10762 = vpop.f32.mrf.mxu0
      %v10763 = vadd.f32 0.0, %v10762
      %v10764 = vpop.f32.mrf.mxu0
      %v10765 = vpop.f32.mrf.mxu0
      %v10766 = vadd.f32 0.0, %v10765
      %v10767 = vpop.f32.mrf.mxu0
      %10768 = vdwg.mxu0
      %v10769 = vadd.f32 %v10293, %v10643
      %v10770 = vadd.f32 %v10294, %v10646
      %v10771 = vadd.f32 %v10295, %v10651
      %v10772 = vadd.f32 %v10296, %v10654
      %v10773 = vadd.f32 %v10297, %v10659
      %v10774 = vadd.f32 %v10298, %v10662
      %v10775 = vadd.f32 %v10299, %v10667
      %v10776 = vadd.f32 %v10300, %v10670
      %v10777 = vadd.f32 %v10301, %v10675
      %v10778 = vadd.f32 %v10302, %v10678
      %v10779 = vadd.f32 %v10303, %v10683
      %v10780 = vadd.f32 %v10304, %v10686
      %v10781 = vadd.f32 %v10305, %v10691
      %v10782 = vadd.f32 %v10306, %v10694
      %v10783 = vadd.f32 %v10307, %v10699
      %v10784 = vadd.f32 %v10308, %v10702
      %v10785 = vadd.f32 %v10309, %v10707
      %v10786 = vadd.f32 %v10310, %v10710
      %v10787 = vadd.f32 %v10311, %v10715
      %v10788 = vadd.f32 %v10312, %v10718
      %v10789 = vadd.f32 %v10313, %v10723
      %v10790 = vadd.f32 %v10314, %v10726
      %v10791 = vadd.f32 %v10315, %v10731
      %v10792 = vadd.f32 %v10316, %v10734
      %v10793 = vadd.f32 %v10317, %v10739
      %v10794 = vadd.f32 %v10318, %v10742
      %v10795 = vadd.f32 %v10319, %v10747
      %v10796 = vadd.f32 %v10320, %v10750
      %v10797 = vadd.f32 %v10321, %v10755
      %v10798 = vadd.f32 %v10322, %v10758
      %v10799 = vadd.f32 %v10323, %v10763
      %v10800 = vadd.f32 %v10324, %v10766
      %s10801 = scalar_lea.vmem %s2, 1
      %v10802 = vld [vmem:[%s10801] sm:$0x1]
      %v10804 = vlaneseq
      %v10805 = vshrl.u32 %v10804, 7
      %v10806 = vsub.s32 0, %v10805
      %v10807 = vrot.slane %v10802, %v10806
      %v10809 = vadd.f32 %v10769, %v10807
      %v10810 = vadd.f32 %v10770, %v10807
      %v10811 = vadd.f32 %v10771, %v10807
      %v10812 = vadd.f32 %v10772, %v10807
      %v10813 = vadd.f32 %v10773, %v10807
      %v10814 = vadd.f32 %v10774, %v10807
      %v10815 = vadd.f32 %v10775, %v10807
      %v10816 = vadd.f32 %v10776, %v10807
      %v10817 = vadd.f32 %v10777, %v10807
      %v10818 = vadd.f32 %v10778, %v10807
      %v10819 = vadd.f32 %v10779, %v10807
      %v10820 = vadd.f32 %v10780, %v10807
      %v10821 = vadd.f32 %v10781, %v10807
      %v10822 = vadd.f32 %v10782, %v10807
      %v10823 = vadd.f32 %v10783, %v10807
      %v10824 = vadd.f32 %v10784, %v10807
      %v10825 = vadd.f32 %v10785, %v10807
      %v10826 = vadd.f32 %v10786, %v10807
      %v10827 = vadd.f32 %v10787, %v10807
      %v10828 = vadd.f32 %v10788, %v10807
      %v10829 = vadd.f32 %v10789, %v10807
      %v10830 = vadd.f32 %v10790, %v10807
      %v10831 = vadd.f32 %v10791, %v10807
      %v10832 = vadd.f32 %v10792, %v10807
      %v10833 = vadd.f32 %v10793, %v10807
      %v10834 = vadd.f32 %v10794, %v10807
      %v10835 = vadd.f32 %v10795, %v10807
      %v10836 = vadd.f32 %v10796, %v10807
      %v10837 = vadd.f32 %v10797, %v10807
      %v10838 = vadd.f32 %v10798, %v10807
      %v10839 = vadd.f32 %v10799, %v10807
      %v10840 = vadd.f32 %v10800, %v10807
      %v10841 = vpack.c.bf16 %v10810, %v10809
      %v10842 = vpack.c.bf16 %v10812, %v10811
      %v10843 = vpack.c.bf16 %v10814, %v10813
      %v10844 = vpack.c.bf16 %v10816, %v10815
      %v10845 = vpack.c.bf16 %v10818, %v10817
      %v10846 = vpack.c.bf16 %v10820, %v10819
      %v10847 = vpack.c.bf16 %v10822, %v10821
      %v10848 = vpack.c.bf16 %v10824, %v10823
      %v10849 = vpack.c.bf16 %v10826, %v10825
      %v10850 = vpack.c.bf16 %v10828, %v10827
      %v10851 = vpack.c.bf16 %v10830, %v10829
      %v10852 = vpack.c.bf16 %v10832, %v10831
      %v10853 = vpack.c.bf16 %v10834, %v10833
      %v10854 = vpack.c.bf16 %v10836, %v10835
      %v10855 = vpack.c.bf16 %v10838, %v10837
      %v10856 = vpack.c.bf16 %v10840, %v10839
      %v10873 = vunpack.c.l.b16 %v10841
      %v10874 = vunpack.c.h.b16 %v10841
      %v10875 = vunpack.c.l.b16 %v10842
      %v10876 = vunpack.c.h.b16 %v10842
      %v10877 = vunpack.c.l.b16 %v10843
      %v10878 = vunpack.c.h.b16 %v10843
      %v10879 = vunpack.c.l.b16 %v10844
      %v10880 = vunpack.c.h.b16 %v10844
      %v10881 = vunpack.c.l.b16 %v10845
      %v10882 = vunpack.c.h.b16 %v10845
      %v10883 = vunpack.c.l.b16 %v10846
      %v10884 = vunpack.c.h.b16 %v10846
      %v10885 = vunpack.c.l.b16 %v10847
      %v10886 = vunpack.c.h.b16 %v10847
      %v10887 = vunpack.c.l.b16 %v10848
      %v10888 = vunpack.c.h.b16 %v10848
      %v10889 = vunpack.c.l.b16 %v10849
      %v10890 = vunpack.c.h.b16 %v10849
      %v10891 = vunpack.c.l.b16 %v10850
      %v10892 = vunpack.c.h.b16 %v10850
      %v10893 = vunpack.c.l.b16 %v10851
      %v10894 = vunpack.c.h.b16 %v10851
      %v10895 = vunpack.c.l.b16 %v10852
      %v10896 = vunpack.c.h.b16 %v10852
      %v10897 = vunpack.c.l.b16 %v10853
      %v10898 = vunpack.c.h.b16 %v10853
      %v10899 = vunpack.c.l.b16 %v10854
      %v10900 = vunpack.c.h.b16 %v10854
      %v10901 = vunpack.c.l.b16 %v10855
      %v10902 = vunpack.c.h.b16 %v10855
      %v10903 = vunpack.c.l.b16 %v10856
      %v10904 = vunpack.c.h.b16 %v10856
      %v10905 = vpack.c.b16 %v10873, %v10873
      %v10906 = vpack.c.b16 %v10874, %v10874
      %v10907 = vpack.c.b16 %v10875, %v10875
      %v10908 = vpack.c.b16 %v10876, %v10876
      %v10909 = vpack.c.b16 %v10877, %v10877
      %v10910 = vpack.c.b16 %v10878, %v10878
      %v10911 = vpack.c.b16 %v10879, %v10879
      %v10912 = vpack.c.b16 %v10880, %v10880
      %v10913 = vpack.c.b16 %v10881, %v10881
      %v10914 = vpack.c.b16 %v10882, %v10882
      %v10915 = vpack.c.b16 %v10883, %v10883
      %v10916 = vpack.c.b16 %v10884, %v10884
      %v10917 = vpack.c.b16 %v10885, %v10885
      %v10918 = vpack.c.b16 %v10886, %v10886
      %v10919 = vpack.c.b16 %v10887, %v10887
      %v10920 = vpack.c.b16 %v10888, %v10888
      %v10921 = vpack.c.b16 %v10889, %v10889
      %v10922 = vpack.c.b16 %v10890, %v10890
      %v10923 = vpack.c.b16 %v10891, %v10891
      %v10924 = vpack.c.b16 %v10892, %v10892
      %v10925 = vpack.c.b16 %v10893, %v10893
      %v10926 = vpack.c.b16 %v10894, %v10894
      %v10927 = vpack.c.b16 %v10895, %v10895
      %v10928 = vpack.c.b16 %v10896, %v10896
      %v10929 = vpack.c.b16 %v10897, %v10897
      %v10930 = vpack.c.b16 %v10898, %v10898
      %v10931 = vpack.c.b16 %v10899, %v10899
      %v10932 = vpack.c.b16 %v10900, %v10900
      %v10933 = vpack.c.b16 %v10901, %v10901
      %v10934 = vpack.c.b16 %v10902, %v10902
      %v10935 = vpack.c.b16 %v10903, %v10903
      %v10936 = vpack.c.b16 %v10904, %v10904
      %v10938 = vshrl.u32 %v10905, 16
      %v10940 = vrot.slane %v10938, 7
      %v10941 = vshll.u32 %v10905, 16
      %v10943 = vor.u32 %v10940, %v10941
      %v10944 = vrot.slane %v10940, 4
      %v10946 = vshrl.u32 %v10906, 16
      %v10948 = vrot.slane %v10946, 7
      %v10949 = vshll.u32 %v10906, 16
      %v10951 = vor.u32 %v10948, %v10949
      %v10952 = vsel %vm531, %v10944, %v10951
      %v10953 = vrot.slane %v10948, 4
      %v10955 = vshrl.u32 %v10907, 16
      %v10957 = vrot.slane %v10955, 7
      %v10958 = vshll.u32 %v10907, 16
      %v10960 = vor.u32 %v10957, %v10958
      %v10961 = vrot.slane %v10957, 4
      %v10963 = vshrl.u32 %v10908, 16
      %v10965 = vrot.slane %v10963, 7
      %v10966 = vshll.u32 %v10908, 16
      %v10968 = vor.u32 %v10965, %v10966
      %v10969 = vsel %vm531, %v10961, %v10968
      %v10970 = vrot.slane %v10965, 4
      %v10972 = vshrl.u32 %v10909, 16
      %v10974 = vrot.slane %v10972, 7
      %v10975 = vshll.u32 %v10909, 16
      %v10977 = vor.u32 %v10974, %v10975
      %v10978 = vrot.slane %v10974, 4
      %v10980 = vshrl.u32 %v10910, 16
      %v10982 = vrot.slane %v10980, 7
      %v10983 = vshll.u32 %v10910, 16
      %v10985 = vor.u32 %v10982, %v10983
      %v10986 = vsel %vm531, %v10978, %v10985
      %v10987 = vrot.slane %v10982, 4
      %v10989 = vshrl.u32 %v10911, 16
      %v10991 = vrot.slane %v10989, 7
      %v10992 = vshll.u32 %v10911, 16
      %v10994 = vor.u32 %v10991, %v10992
      %v10995 = vrot.slane %v10991, 4
      %v10997 = vshrl.u32 %v10912, 16
      %v10999 = vrot.slane %v10997, 7
      %v11000 = vshll.u32 %v10912, 16
      %v11002 = vor.u32 %v10999, %v11000
      %v11003 = vsel %vm531, %v10995, %v11002
      %v11004 = vrot.slane %v10999, 4
      %v11006 = vshrl.u32 %v10913, 16
      %v11008 = vrot.slane %v11006, 7
      %v11009 = vshll.u32 %v10913, 16
      %v11011 = vor.u32 %v11008, %v11009
      %v11012 = vrot.slane %v11008, 4
      %v11014 = vshrl.u32 %v10914, 16
      %v11016 = vrot.slane %v11014, 7
      %v11017 = vshll.u32 %v10914, 16
      %v11019 = vor.u32 %v11016, %v11017
      %v11020 = vsel %vm531, %v11012, %v11019
      %v11021 = vrot.slane %v11016, 4
      %v11023 = vshrl.u32 %v10915, 16
      %v11025 = vrot.slane %v11023, 7
      %v11026 = vshll.u32 %v10915, 16
      %v11028 = vor.u32 %v11025, %v11026
      %v11029 = vrot.slane %v11025, 4
      %v11031 = vshrl.u32 %v10916, 16
      %v11033 = vrot.slane %v11031, 7
      %v11034 = vshll.u32 %v10916, 16
      %v11036 = vor.u32 %v11033, %v11034
      %v11037 = vsel %vm531, %v11029, %v11036
      %v11038 = vrot.slane %v11033, 4
      %v11040 = vshrl.u32 %v10917, 16
      %v11042 = vrot.slane %v11040, 7
      %v11043 = vshll.u32 %v10917, 16
      %v11045 = vor.u32 %v11042, %v11043
      %v11046 = vrot.slane %v11042, 4
      %v11048 = vshrl.u32 %v10918, 16
      %v11050 = vrot.slane %v11048, 7
      %v11051 = vshll.u32 %v10918, 16
      %v11053 = vor.u32 %v11050, %v11051
      %v11054 = vsel %vm531, %v11046, %v11053
      %v11055 = vrot.slane %v11050, 4
      %v11057 = vshrl.u32 %v10919, 16
      %v11059 = vrot.slane %v11057, 7
      %v11060 = vshll.u32 %v10919, 16
      %v11062 = vor.u32 %v11059, %v11060
      %v11063 = vrot.slane %v11059, 4
      %v11065 = vshrl.u32 %v10920, 16
      %v11067 = vrot.slane %v11065, 7
      %v11068 = vshll.u32 %v10920, 16
      %v11070 = vor.u32 %v11067, %v11068
      %v11071 = vsel %vm531, %v11063, %v11070
      %v11072 = vrot.slane %v11067, 4
      %v11074 = vshrl.u32 %v10921, 16
      %v11076 = vrot.slane %v11074, 7
      %v11077 = vshll.u32 %v10921, 16
      %v11079 = vor.u32 %v11076, %v11077
      %v11080 = vrot.slane %v11076, 4
      %v11082 = vshrl.u32 %v10922, 16
      %v11084 = vrot.slane %v11082, 7
      %v11085 = vshll.u32 %v10922, 16
      %v11087 = vor.u32 %v11084, %v11085
      %v11088 = vsel %vm531, %v11080, %v11087
      %v11089 = vrot.slane %v11084, 4
      %v11091 = vshrl.u32 %v10923, 16
      %v11093 = vrot.slane %v11091, 7
      %v11094 = vshll.u32 %v10923, 16
      %v11096 = vor.u32 %v11093, %v11094
      %v11097 = vrot.slane %v11093, 4
      %v11099 = vshrl.u32 %v10924, 16
      %v11101 = vrot.slane %v11099, 7
      %v11102 = vshll.u32 %v10924, 16
      %v11104 = vor.u32 %v11101, %v11102
      %v11105 = vsel %vm531, %v11097, %v11104
      %v11106 = vrot.slane %v11101, 4
      %v11108 = vshrl.u32 %v10925, 16
      %v11110 = vrot.slane %v11108, 7
      %v11111 = vshll.u32 %v10925, 16
      %v11113 = vor.u32 %v11110, %v11111
      %v11114 = vrot.slane %v11110, 4
      %v11116 = vshrl.u32 %v10926, 16
      %v11118 = vrot.slane %v11116, 7
      %v11119 = vshll.u32 %v10926, 16
      %v11121 = vor.u32 %v11118, %v11119
      %v11122 = vsel %vm531, %v11114, %v11121
      %v11123 = vrot.slane %v11118, 4
      %v11125 = vshrl.u32 %v10927, 16
      %v11127 = vrot.slane %v11125, 7
      %v11128 = vshll.u32 %v10927, 16
      %v11130 = vor.u32 %v11127, %v11128
      %v11131 = vrot.slane %v11127, 4
      %v11133 = vshrl.u32 %v10928, 16
      %v11135 = vrot.slane %v11133, 7
      %v11136 = vshll.u32 %v10928, 16
      %v11138 = vor.u32 %v11135, %v11136
      %v11139 = vsel %vm531, %v11131, %v11138
      %v11140 = vrot.slane %v11135, 4
      %v11142 = vshrl.u32 %v10929, 16
      %v11144 = vrot.slane %v11142, 7
      %v11145 = vshll.u32 %v10929, 16
      %v11147 = vor.u32 %v11144, %v11145
      %v11148 = vrot.slane %v11144, 4
      %v11150 = vshrl.u32 %v10930, 16
      %v11152 = vrot.slane %v11150, 7
      %v11153 = vshll.u32 %v10930, 16
      %v11155 = vor.u32 %v11152, %v11153
      %v11156 = vsel %vm531, %v11148, %v11155
      %v11157 = vrot.slane %v11152, 4
      %v11159 = vshrl.u32 %v10931, 16
      %v11161 = vrot.slane %v11159, 7
      %v11162 = vshll.u32 %v10931, 16
      %v11164 = vor.u32 %v11161, %v11162
      %v11165 = vrot.slane %v11161, 4
      %v11167 = vshrl.u32 %v10932, 16
      %v11169 = vrot.slane %v11167, 7
      %v11170 = vshll.u32 %v10932, 16
      %v11172 = vor.u32 %v11169, %v11170
      %v11173 = vsel %vm531, %v11165, %v11172
      %v11174 = vrot.slane %v11169, 4
      %v11176 = vshrl.u32 %v10933, 16
      %v11178 = vrot.slane %v11176, 7
      %v11179 = vshll.u32 %v10933, 16
      %v11181 = vor.u32 %v11178, %v11179
      %v11182 = vrot.slane %v11178, 4
      %v11184 = vshrl.u32 %v10934, 16
      %v11186 = vrot.slane %v11184, 7
      %v11187 = vshll.u32 %v10934, 16
      %v11189 = vor.u32 %v11186, %v11187
      %v11190 = vsel %vm531, %v11182, %v11189
      %v11191 = vrot.slane %v11186, 4
      %v11193 = vshrl.u32 %v10935, 16
      %v11195 = vrot.slane %v11193, 7
      %v11196 = vshll.u32 %v10935, 16
      %v11198 = vor.u32 %v11195, %v11196
      %v11199 = vrot.slane %v11195, 4
      %v11201 = vshrl.u32 %v10936, 16
      %v11203 = vrot.slane %v11201, 7
      %v11204 = vshll.u32 %v10936, 16
      %v11206 = vor.u32 %v11203, %v11204
      %v11207 = vsel %vm531, %v11199, %v11206
      %v11208 = vrot.slane %v11203, 4
      %11209 = vrot.lane.b32.xlu0 %v10943, 12
      %v11210 = vpop.permute.xlu0 %11209
      %11211 = vrot.lane.b32.xlu0 %v10952, 12
      %v11212 = vpop.permute.xlu0 %11211
      %11213 = vrot.lane.b32.xlu0 %v10953, 12
      %v11214 = vpop.permute.xlu0 %11213
      %11215 = vrot.lane.b32.xlu0 %v10960, 12
      %v11216 = vpop.permute.xlu0 %11215
      %11217 = vrot.lane.b32.xlu0 %v10969, 12
      %v11218 = vpop.permute.xlu0 %11217
      %11219 = vrot.lane.b32.xlu0 %v10970, 12
      %v11220 = vpop.permute.xlu0 %11219
      %11221 = vrot.lane.b32.xlu0 %v10977, 12
      %v11222 = vpop.permute.xlu0 %11221
      %11223 = vrot.lane.b32.xlu0 %v10986, 12
      %v11224 = vpop.permute.xlu0 %11223
      %11225 = vrot.lane.b32.xlu0 %v10987, 12
      %v11226 = vpop.permute.xlu0 %11225
      %11227 = vrot.lane.b32.xlu0 %v10994, 12
      %v11228 = vpop.permute.xlu0 %11227
      %11229 = vrot.lane.b32.xlu0 %v11003, 12
      %v11230 = vpop.permute.xlu0 %11229
      %11231 = vrot.lane.b32.xlu0 %v11004, 12
      %v11232 = vpop.permute.xlu0 %11231
      %11233 = vrot.lane.b32.xlu0 %v11011, 12
      %v11234 = vpop.permute.xlu0 %11233
      %11235 = vrot.lane.b32.xlu0 %v11020, 12
      %v11236 = vpop.permute.xlu0 %11235
      %11237 = vrot.lane.b32.xlu0 %v11021, 12
      %v11238 = vpop.permute.xlu0 %11237
      %11239 = vrot.lane.b32.xlu0 %v11028, 12
      %v11240 = vpop.permute.xlu0 %11239
      %11241 = vrot.lane.b32.xlu0 %v11037, 12
      %v11242 = vpop.permute.xlu0 %11241
      %11243 = vrot.lane.b32.xlu0 %v11038, 12
      %v11244 = vpop.permute.xlu0 %11243
      %11245 = vrot.lane.b32.xlu0 %v11045, 12
      %v11246 = vpop.permute.xlu0 %11245
      %11247 = vrot.lane.b32.xlu0 %v11054, 12
      %v11248 = vpop.permute.xlu0 %11247
      %11249 = vrot.lane.b32.xlu0 %v11055, 12
      %v11250 = vpop.permute.xlu0 %11249
      %11251 = vrot.lane.b32.xlu0 %v11062, 12
      %v11252 = vpop.permute.xlu0 %11251
      %11253 = vrot.lane.b32.xlu0 %v11071, 12
      %v11254 = vpop.permute.xlu0 %11253
      %11255 = vrot.lane.b32.xlu0 %v11072, 12
      %v11256 = vpop.permute.xlu0 %11255
      %11257 = vrot.lane.b32.xlu0 %v11079, 12
      %v11258 = vpop.permute.xlu0 %11257
      %11259 = vrot.lane.b32.xlu0 %v11088, 12
      %v11260 = vpop.permute.xlu0 %11259
      %11261 = vrot.lane.b32.xlu0 %v11089, 12
      %v11262 = vpop.permute.xlu0 %11261
      %11263 = vrot.lane.b32.xlu0 %v11096, 12
      %v11264 = vpop.permute.xlu0 %11263
      %11265 = vrot.lane.b32.xlu0 %v11105, 12
      %v11266 = vpop.permute.xlu0 %11265
      %11267 = vrot.lane.b32.xlu0 %v11106, 12
      %v11268 = vpop.permute.xlu0 %11267
      %11269 = vrot.lane.b32.xlu0 %v11113, 12
      %v11270 = vpop.permute.xlu0 %11269
      %11271 = vrot.lane.b32.xlu0 %v11122, 12
      %v11272 = vpop.permute.xlu0 %11271
      %11273 = vrot.lane.b32.xlu0 %v11123, 12
      %v11274 = vpop.permute.xlu0 %11273
      %11275 = vrot.lane.b32.xlu0 %v11130, 12
      %v11276 = vpop.permute.xlu0 %11275
      %11277 = vrot.lane.b32.xlu0 %v11139, 12
      %v11278 = vpop.permute.xlu0 %11277
      %11279 = vrot.lane.b32.xlu0 %v11140, 12
      %v11280 = vpop.permute.xlu0 %11279
      %11281 = vrot.lane.b32.xlu0 %v11147, 12
      %v11282 = vpop.permute.xlu0 %11281
      %11283 = vrot.lane.b32.xlu0 %v11156, 12
      %v11284 = vpop.permute.xlu0 %11283
      %11285 = vrot.lane.b32.xlu0 %v11157, 12
      %v11286 = vpop.permute.xlu0 %11285
      %11287 = vrot.lane.b32.xlu0 %v11164, 12
      %v11288 = vpop.permute.xlu0 %11287
      %11289 = vrot.lane.b32.xlu0 %v11173, 12
      %v11290 = vpop.permute.xlu0 %11289
      %11291 = vrot.lane.b32.xlu0 %v11174, 12
      %v11292 = vpop.permute.xlu0 %11291
      %11293 = vrot.lane.b32.xlu0 %v11181, 12
      %v11294 = vpop.permute.xlu0 %11293
      %11295 = vrot.lane.b32.xlu0 %v11190, 12
      %v11296 = vpop.permute.xlu0 %11295
      %11297 = vrot.lane.b32.xlu0 %v11191, 12
      %v11298 = vpop.permute.xlu0 %11297
      %11299 = vrot.lane.b32.xlu0 %v11198, 12
      %v11300 = vpop.permute.xlu0 %11299
      %11301 = vrot.lane.b32.xlu0 %v11207, 12
      %v11302 = vpop.permute.xlu0 %11301
      %11303 = vrot.lane.b32.xlu0 %v11208, 12
      %v11304 = vpop.permute.xlu0 %11303
      %vm11353 = vcmask 126048
      %vm11354 = vmand %vm11353, %vm378
      %v11355 = vsel %vm11354, %v11210, %v8021
      %11356 = vst [vmem:[%s852] sm:$0xf] %v11355
      %vm11357 = vcmask 126048
      %11358 = vst.msk [vmem:[%s852 + $0x4] sm:$0xf] %vm11357, %v11212
      %vm11359 = vcmask 122976
      %vm11360 = vmand %vm11359, %vm322
      %v11361 = vld [vmem:[%s852 + $0x8] sm:$0x1]
      %v11362 = vsel %vm11360, %v11214, %v11361
      %11363 = vst [vmem:[%s852 + $0x8] sm:$0x1] %v11362
      %v11364 = vld [vmem:[%s852 + $0xc] sm:$0xf]
      %v11365 = vsel %vm11354, %v11216, %v11364
      %11366 = vst [vmem:[%s852 + $0xc] sm:$0xf] %v11365
      %11367 = vst.msk [vmem:[%s852 + $0x10] sm:$0xf] %vm11357, %v11218
      %v11368 = vld [vmem:[%s852 + $0x14] sm:$0x1]
      %v11369 = vsel %vm11360, %v11220, %v11368
      %11370 = vst [vmem:[%s852 + $0x14] sm:$0x1] %v11369
      %v11371 = vld [vmem:[%s852 + $0x18] sm:$0xf]
      %v11372 = vsel %vm11354, %v11222, %v11371
      %11373 = vst [vmem:[%s852 + $0x18] sm:$0xf] %v11372
      %11374 = vst.msk [vmem:[%s852 + $0x1c] sm:$0xf] %vm11357, %v11224
      %v11375 = vld [vmem:[%s852 + $0x20] sm:$0x1]
      %v11376 = vsel %vm11360, %v11226, %v11375
      %11377 = vst [vmem:[%s852 + $0x20] sm:$0x1] %v11376
      %v11378 = vld [vmem:[%s852 + $0x24] sm:$0xf]
      %v11379 = vsel %vm11354, %v11228, %v11378
      %11380 = vst [vmem:[%s852 + $0x24] sm:$0xf] %v11379
      %11381 = vst.msk [vmem:[%s852 + $0x28] sm:$0xf] %vm11357, %v11230
      %v11382 = vld [vmem:[%s852 + $0x2c] sm:$0x1]
      %v11383 = vsel %vm11360, %v11232, %v11382
      %11384 = vst [vmem:[%s852 + $0x2c] sm:$0x1] %v11383
      %v11385 = vld [vmem:[%s852 + $0x30] sm:$0xf]
      %v11386 = vsel %vm11354, %v11234, %v11385
      %11387 = vst [vmem:[%s852 + $0x30] sm:$0xf] %v11386
      %11388 = vst.msk [vmem:[%s852 + $0x34] sm:$0xf] %vm11357, %v11236
      %v11389 = vld [vmem:[%s852 + $0x38] sm:$0x1]
      %v11390 = vsel %vm11360, %v11238, %v11389
      %11391 = vst [vmem:[%s852 + $0x38] sm:$0x1] %v11390
      %v11392 = vld [vmem:[%s852 + $0x3c] sm:$0xf]
      %v11393 = vsel %vm11354, %v11240, %v11392
      %11394 = vst [vmem:[%s852 + $0x3c] sm:$0xf] %v11393
      %11395 = vst.msk [vmem:[%s852 + $0x40] sm:$0xf] %vm11357, %v11242
      %v11396 = vld [vmem:[%s852 + $0x44] sm:$0x1]
      %v11397 = vsel %vm11360, %v11244, %v11396
      %11398 = vst [vmem:[%s852 + $0x44] sm:$0x1] %v11397
      %v11399 = vld [vmem:[%s852 + $0x48] sm:$0xf]
      %v11400 = vsel %vm11354, %v11246, %v11399
      %11401 = vst [vmem:[%s852 + $0x48] sm:$0xf] %v11400
      %11402 = vst.msk [vmem:[%s852 + $0x4c] sm:$0xf] %vm11357, %v11248
      %v11403 = vld [vmem:[%s852 + $0x50] sm:$0x1]
      %v11404 = vsel %vm11360, %v11250, %v11403
      %11405 = vst [vmem:[%s852 + $0x50] sm:$0x1] %v11404
      %v11406 = vld [vmem:[%s852 + $0x54] sm:$0xf]
      %v11407 = vsel %vm11354, %v11252, %v11406
      %11408 = vst [vmem:[%s852 + $0x54] sm:$0xf] %v11407
      %11409 = vst.msk [vmem:[%s852 + $0x58] sm:$0xf] %vm11357, %v11254
      %v11410 = vld [vmem:[%s852 + $0x5c] sm:$0x1]
      %v11411 = vsel %vm11360, %v11256, %v11410
      %11412 = vst [vmem:[%s852 + $0x5c] sm:$0x1] %v11411
      %v11413 = vld [vmem:[%s852 + $0x60] sm:$0xf]
      %v11414 = vsel %vm11354, %v11258, %v11413
      %11415 = vst [vmem:[%s852 + $0x60] sm:$0xf] %v11414
      %11416 = vst.msk [vmem:[%s852 + $0x64] sm:$0xf] %vm11357, %v11260
      %v11417 = vld [vmem:[%s852 + $0x68] sm:$0x1]
      %v11418 = vsel %vm11360, %v11262, %v11417
      %11419 = vst [vmem:[%s852 + $0x68] sm:$0x1] %v11418
      %v11420 = vld [vmem:[%s852 + $0x6c] sm:$0xf]
      %v11421 = vsel %vm11354, %v11264, %v11420
      %11422 = vst [vmem:[%s852 + $0x6c] sm:$0xf] %v11421
      %11423 = vst.msk [vmem:[%s852 + $0x70] sm:$0xf] %vm11357, %v11266
      %v11424 = vld [vmem:[%s852 + $0x74] sm:$0x1]
      %v11425 = vsel %vm11360, %v11268, %v11424
      %11426 = vst [vmem:[%s852 + $0x74] sm:$0x1] %v11425
      %v11427 = vld [vmem:[%s852 + $0x78] sm:$0xf]
      %v11428 = vsel %vm11354, %v11270, %v11427
      %11429 = vst [vmem:[%s852 + $0x78] sm:$0xf] %v11428
      %11430 = vst.msk [vmem:[%s852 + $0x7c] sm:$0xf] %vm11357, %v11272
      %v11431 = vld [vmem:[%s852 + $0x80] sm:$0x1]
      %v11432 = vsel %vm11360, %v11274, %v11431
      %11433 = vst [vmem:[%s852 + $0x80] sm:$0x1] %v11432
      %v11434 = vld [vmem:[%s852 + $0x84] sm:$0xf]
      %v11435 = vsel %vm11354, %v11276, %v11434
      %11436 = vst [vmem:[%s852 + $0x84] sm:$0xf] %v11435
      %11437 = vst.msk [vmem:[%s852 + $0x88] sm:$0xf] %vm11357, %v11278
      %v11438 = vld [vmem:[%s852 + $0x8c] sm:$0x1]
      %v11439 = vsel %vm11360, %v11280, %v11438
      %11440 = vst [vmem:[%s852 + $0x8c] sm:$0x1] %v11439
      %v11441 = vld [vmem:[%s852 + $0x90] sm:$0xf]
      %v11442 = vsel %vm11354, %v11282, %v11441
      %11443 = vst [vmem:[%s852 + $0x90] sm:$0xf] %v11442
      %11444 = vst.msk [vmem:[%s852 + $0x94] sm:$0xf] %vm11357, %v11284
      %v11445 = vld [vmem:[%s852 + $0x98] sm:$0x1]
      %v11446 = vsel %vm11360, %v11286, %v11445
      %11447 = vst [vmem:[%s852 + $0x98] sm:$0x1] %v11446
      %v11448 = vld [vmem:[%s852 + $0x9c] sm:$0xf]
      %v11449 = vsel %vm11354, %v11288, %v11448
      %11450 = vst [vmem:[%s852 + $0x9c] sm:$0xf] %v11449
      %11451 = vst.msk [vmem:[%s852 + $0xa0] sm:$0xf] %vm11357, %v11290
      %v11452 = vld [vmem:[%s852 + $0xa4] sm:$0x1]
      %v11453 = vsel %vm11360, %v11292, %v11452
      %11454 = vst [vmem:[%s852 + $0xa4] sm:$0x1] %v11453
      %v11455 = vld [vmem:[%s852 + $0xa8] sm:$0xf]
      %v11456 = vsel %vm11354, %v11294, %v11455
      %11457 = vst [vmem:[%s852 + $0xa8] sm:$0xf] %v11456
      %11458 = vst.msk [vmem:[%s852 + $0xac] sm:$0xf] %vm11357, %v11296
      %v11459 = vld [vmem:[%s852 + $0xb0] sm:$0x1]
      %v11460 = vsel %vm11360, %v11298, %v11459
      %11461 = vst [vmem:[%s852 + $0xb0] sm:$0x1] %v11460
      %v11462 = vld [vmem:[%s852 + $0xb4] sm:$0xf]
      %v11463 = vsel %vm11354, %v11300, %v11462
      %11464 = vst [vmem:[%s852 + $0xb4] sm:$0xf] %v11463
      %11465 = vst.msk [vmem:[%s852 + $0xb8] sm:$0xf] %vm11357, %v11302
      %v11466 = vld [vmem:[%s852 + $0xbc] sm:$0x1]
      %v11467 = vsel %vm11360, %v11304, %v11466
      %11468 = vst [vmem:[%s852 + $0xbc] sm:$0x1] %v11467
      %v11469 = vld [vmem:[%s852] sm:$0xf]
      %v11470 = vld [vmem:[%s852 + $0x4] sm:$0xf]
      %v11471 = vld [vmem:[%s852 + $0x8] sm:$0x1]
      %v11472 = vld [vmem:[%s852 + $0xc] sm:$0xf]
      %v11473 = vld [vmem:[%s852 + $0x10] sm:$0xf]
      %v11474 = vld [vmem:[%s852 + $0x14] sm:$0x1]
      %v11475 = vld [vmem:[%s852 + $0x18] sm:$0xf]
      %v11476 = vld [vmem:[%s852 + $0x1c] sm:$0xf]
      %v11477 = vld [vmem:[%s852 + $0x20] sm:$0x1]
      %v11478 = vld [vmem:[%s852 + $0x24] sm:$0xf]
      %v11479 = vld [vmem:[%s852 + $0x28] sm:$0xf]
      %v11480 = vld [vmem:[%s852 + $0x2c] sm:$0x1]
      %v11481 = vld [vmem:[%s852 + $0x30] sm:$0xf]
      %v11482 = vld [vmem:[%s852 + $0x34] sm:$0xf]
      %v11483 = vld [vmem:[%s852 + $0x38] sm:$0x1]
      %v11484 = vld [vmem:[%s852 + $0x3c] sm:$0xf]
      %v11485 = vld [vmem:[%s852 + $0x40] sm:$0xf]
      %v11486 = vld [vmem:[%s852 + $0x44] sm:$0x1]
      %v11487 = vld [vmem:[%s852 + $0x48] sm:$0xf]
      %v11488 = vld [vmem:[%s852 + $0x4c] sm:$0xf]
      %v11489 = vld [vmem:[%s852 + $0x50] sm:$0x1]
      %v11490 = vld [vmem:[%s852 + $0x54] sm:$0xf]
      %v11491 = vld [vmem:[%s852 + $0x58] sm:$0xf]
      %v11492 = vld [vmem:[%s852 + $0x5c] sm:$0x1]
      %v11493 = vld [vmem:[%s852 + $0x60] sm:$0xf]
      %v11494 = vld [vmem:[%s852 + $0x64] sm:$0xf]
      %v11495 = vld [vmem:[%s852 + $0x68] sm:$0x1]
      %v11496 = vld [vmem:[%s852 + $0x6c] sm:$0xf]
      %v11497 = vld [vmem:[%s852 + $0x70] sm:$0xf]
      %v11498 = vld [vmem:[%s852 + $0x74] sm:$0x1]
      %v11499 = vld [vmem:[%s852 + $0x78] sm:$0xf]
      %v11500 = vld [vmem:[%s852 + $0x7c] sm:$0xf]
      %v11501 = vld [vmem:[%s852 + $0x80] sm:$0x1]
      %v11502 = vld [vmem:[%s852 + $0x84] sm:$0xf]
      %v11503 = vld [vmem:[%s852 + $0x88] sm:$0xf]
      %v11504 = vld [vmem:[%s852 + $0x8c] sm:$0x1]
      %v11505 = vld [vmem:[%s852 + $0x90] sm:$0xf]
      %v11506 = vld [vmem:[%s852 + $0x94] sm:$0xf]
      %v11507 = vld [vmem:[%s852 + $0x98] sm:$0x1]
      %v11508 = vld [vmem:[%s852 + $0x9c] sm:$0xf]
      %v11509 = vld [vmem:[%s852 + $0xa0] sm:$0xf]
      %v11510 = vld [vmem:[%s852 + $0xa4] sm:$0x1]
      %v11511 = vld [vmem:[%s852 + $0xa8] sm:$0xf]
      %v11512 = vld [vmem:[%s852 + $0xac] sm:$0xf]
      %v11513 = vld [vmem:[%s852 + $0xb0] sm:$0x1]
      %v11514 = vld [vmem:[%s852 + $0xb4] sm:$0xf]
      %v11515 = vld [vmem:[%s852 + $0xb8] sm:$0xf]
      %v11516 = vld [vmem:[%s852 + $0xbc] sm:$0x1]
      %v11517 = vunpack.c.l.bf16 %v11469
      %v11518 = vunpack.c.l.bf16 %v11470
      %v11519 = vunpack.c.l.bf16 %v11471
      %v11520 = vunpack.c.l.bf16 %v11472
      %v11521 = vunpack.c.l.bf16 %v11473
      %v11522 = vunpack.c.l.bf16 %v11474
      %v11523 = vunpack.c.l.bf16 %v11475
      %v11524 = vunpack.c.l.bf16 %v11476
      %v11525 = vunpack.c.l.bf16 %v11477
      %v11526 = vunpack.c.l.bf16 %v11478
      %v11527 = vunpack.c.l.bf16 %v11479
      %v11528 = vunpack.c.l.bf16 %v11480
      %v11529 = vunpack.c.l.bf16 %v11481
      %v11530 = vunpack.c.l.bf16 %v11482
      %v11531 = vunpack.c.l.bf16 %v11483
      %v11532 = vunpack.c.l.bf16 %v11484
      %v11533 = vunpack.c.l.bf16 %v11485
      %v11534 = vunpack.c.l.bf16 %v11486
      %v11535 = vunpack.c.l.bf16 %v11487
      %v11536 = vunpack.c.l.bf16 %v11488
      %v11537 = vunpack.c.l.bf16 %v11489
      %v11538 = vunpack.c.l.bf16 %v11490
      %v11539 = vunpack.c.l.bf16 %v11491
      %v11540 = vunpack.c.l.bf16 %v11492
      %v11541 = vunpack.c.l.bf16 %v11493
      %v11542 = vunpack.c.l.bf16 %v11494
      %v11543 = vunpack.c.l.bf16 %v11495
      %v11544 = vunpack.c.l.bf16 %v11496
      %v11545 = vunpack.c.l.bf16 %v11497
      %v11546 = vunpack.c.l.bf16 %v11498
      %v11547 = vunpack.c.l.bf16 %v11499
      %v11548 = vunpack.c.l.bf16 %v11500
      %v11549 = vunpack.c.l.bf16 %v11501
      %v11550 = vunpack.c.l.bf16 %v11502
      %v11551 = vunpack.c.l.bf16 %v11503
      %v11552 = vunpack.c.l.bf16 %v11504
      %v11553 = vunpack.c.l.bf16 %v11505
      %v11554 = vunpack.c.l.bf16 %v11506
      %v11555 = vunpack.c.l.bf16 %v11507
      %v11556 = vunpack.c.l.bf16 %v11508
      %v11557 = vunpack.c.l.bf16 %v11509
      %v11558 = vunpack.c.l.bf16 %v11510
      %v11559 = vunpack.c.l.bf16 %v11511
      %v11560 = vunpack.c.l.bf16 %v11512
      %v11561 = vunpack.c.l.bf16 %v11513
      %v11562 = vunpack.c.l.bf16 %v11514
      %v11563 = vunpack.c.l.bf16 %v11515
      %v11564 = vunpack.c.l.bf16 %v11516
      %vm11613 = vcmask 1046528
      %v11614 = vrot.slane %v11517, 1
      %v11615 = vrot.slane %v11518, 1
      %v11616 = vsel %vm11613, %v11614, %v11615
      %v11617 = vrot.slane %v11519, 1
      %v11618 = vsel %vm11613, %v11615, %v11617
      %v11619 = vrot.slane %v11520, 1
      %v11620 = vrot.slane %v11521, 1
      %v11621 = vsel %vm11613, %v11619, %v11620
      %v11622 = vrot.slane %v11522, 1
      %v11623 = vsel %vm11613, %v11620, %v11622
      %v11624 = vrot.slane %v11523, 1
      %v11625 = vrot.slane %v11524, 1
      %v11626 = vsel %vm11613, %v11624, %v11625
      %v11627 = vrot.slane %v11525, 1
      %v11628 = vsel %vm11613, %v11625, %v11627
      %v11629 = vrot.slane %v11526, 1
      %v11630 = vrot.slane %v11527, 1
      %v11631 = vsel %vm11613, %v11629, %v11630
      %v11632 = vrot.slane %v11528, 1
      %v11633 = vsel %vm11613, %v11630, %v11632
      %v11634 = vrot.slane %v11529, 1
      %v11635 = vrot.slane %v11530, 1
      %v11636 = vsel %vm11613, %v11634, %v11635
      %v11637 = vrot.slane %v11531, 1
      %v11638 = vsel %vm11613, %v11635, %v11637
      %v11639 = vrot.slane %v11532, 1
      %v11640 = vrot.slane %v11533, 1
      %v11641 = vsel %vm11613, %v11639, %v11640
      %v11642 = vrot.slane %v11534, 1
      %v11643 = vsel %vm11613, %v11640, %v11642
      %v11644 = vrot.slane %v11535, 1
      %v11645 = vrot.slane %v11536, 1
      %v11646 = vsel %vm11613, %v11644, %v11645
      %v11647 = vrot.slane %v11537, 1
      %v11648 = vsel %vm11613, %v11645, %v11647
      %v11649 = vrot.slane %v11538, 1
      %v11650 = vrot.slane %v11539, 1
      %v11651 = vsel %vm11613, %v11649, %v11650
      %v11652 = vrot.slane %v11540, 1
      %v11653 = vsel %vm11613, %v11650, %v11652
      %v11654 = vrot.slane %v11541, 1
      %v11655 = vrot.slane %v11542, 1
      %v11656 = vsel %vm11613, %v11654, %v11655
      %v11657 = vrot.slane %v11543, 1
      %v11658 = vsel %vm11613, %v11655, %v11657
      %v11659 = vrot.slane %v11544, 1
      %v11660 = vrot.slane %v11545, 1
      %v11661 = vsel %vm11613, %v11659, %v11660
      %v11662 = vrot.slane %v11546, 1
      %v11663 = vsel %vm11613, %v11660, %v11662
      %v11664 = vrot.slane %v11547, 1
      %v11665 = vrot.slane %v11548, 1
      %v11666 = vsel %vm11613, %v11664, %v11665
      %v11667 = vrot.slane %v11549, 1
      %v11668 = vsel %vm11613, %v11665, %v11667
      %v11669 = vrot.slane %v11550, 1
      %v11670 = vrot.slane %v11551, 1
      %v11671 = vsel %vm11613, %v11669, %v11670
      %v11672 = vrot.slane %v11552, 1
      %v11673 = vsel %vm11613, %v11670, %v11672
      %v11674 = vrot.slane %v11553, 1
      %v11675 = vrot.slane %v11554, 1
      %v11676 = vsel %vm11613, %v11674, %v11675
      %v11677 = vrot.slane %v11555, 1
      %v11678 = vsel %vm11613, %v11675, %v11677
      %v11679 = vrot.slane %v11556, 1
      %v11680 = vrot.slane %v11557, 1
      %v11681 = vsel %vm11613, %v11679, %v11680
      %v11682 = vrot.slane %v11558, 1
      %v11683 = vsel %vm11613, %v11680, %v11682
      %v11684 = vrot.slane %v11559, 1
      %v11685 = vrot.slane %v11560, 1
      %v11686 = vsel %vm11613, %v11684, %v11685
      %v11687 = vrot.slane %v11561, 1
      %v11688 = vsel %vm11613, %v11685, %v11687
      %v11689 = vrot.slane %v11562, 1
      %v11690 = vrot.slane %v11563, 1
      %v11691 = vsel %vm11613, %v11689, %v11690
      %v11692 = vrot.slane %v11564, 1
      %v11693 = vsel %vm11613, %v11690, %v11692
      %vm11726 = vcmask 130048
      %v11727 = vsel %vm11726, %v11616, 0.0
      %v11728 = vsel %vm11726, %v11618, 0.0
      %v11729 = vadd.f32 %v11727, %v11728
      %v11730 = vsel %vm11726, %v11621, 0.0
      %v11731 = vadd.f32 %v11729, %v11730
      %v11732 = vsel %vm11726, %v11623, 0.0
      %v11733 = vadd.f32 %v11731, %v11732
      %v11734 = vsel %vm11726, %v11626, 0.0
      %v11735 = vadd.f32 %v11733, %v11734
      %v11736 = vsel %vm11726, %v11628, 0.0
      %v11737 = vadd.f32 %v11735, %v11736
      %v11738 = vsel %vm11726, %v11631, 0.0
      %v11739 = vadd.f32 %v11737, %v11738
      %v11740 = vsel %vm11726, %v11633, 0.0
      %v11741 = vadd.f32 %v11739, %v11740
      %v11742 = vsel %vm11726, %v11636, 0.0
      %v11743 = vadd.f32 %v11741, %v11742
      %v11744 = vsel %vm11726, %v11638, 0.0
      %v11745 = vadd.f32 %v11743, %v11744
      %v11746 = vsel %vm11726, %v11641, 0.0
      %v11747 = vadd.f32 %v11745, %v11746
      %v11748 = vsel %vm11726, %v11643, 0.0
      %v11749 = vadd.f32 %v11747, %v11748
      %v11750 = vsel %vm11726, %v11646, 0.0
      %v11751 = vadd.f32 %v11749, %v11750
      %v11752 = vsel %vm11726, %v11648, 0.0
      %v11753 = vadd.f32 %v11751, %v11752
      %v11754 = vsel %vm11726, %v11651, 0.0
      %v11755 = vadd.f32 %v11753, %v11754
      %v11756 = vsel %vm11726, %v11653, 0.0
      %v11757 = vadd.f32 %v11755, %v11756
      %v11758 = vsel %vm11726, %v11656, 0.0
      %v11759 = vadd.f32 %v11757, %v11758
      %v11760 = vsel %vm11726, %v11658, 0.0
      %v11761 = vadd.f32 %v11759, %v11760
      %v11762 = vsel %vm11726, %v11661, 0.0
      %v11763 = vadd.f32 %v11761, %v11762
      %v11764 = vsel %vm11726, %v11663, 0.0
      %v11765 = vadd.f32 %v11763, %v11764
      %v11766 = vsel %vm11726, %v11666, 0.0
      %v11767 = vadd.f32 %v11765, %v11766
      %v11768 = vsel %vm11726, %v11668, 0.0
      %v11769 = vadd.f32 %v11767, %v11768
      %v11770 = vsel %vm11726, %v11671, 0.0
      %v11771 = vadd.f32 %v11769, %v11770
      %v11772 = vsel %vm11726, %v11673, 0.0
      %v11773 = vadd.f32 %v11771, %v11772
      %v11774 = vsel %vm11726, %v11676, 0.0
      %v11775 = vadd.f32 %v11773, %v11774
      %v11776 = vsel %vm11726, %v11678, 0.0
      %v11777 = vadd.f32 %v11775, %v11776
      %v11778 = vsel %vm11726, %v11681, 0.0
      %v11779 = vadd.f32 %v11777, %v11778
      %v11780 = vsel %vm11726, %v11683, 0.0
      %v11781 = vadd.f32 %v11779, %v11780
      %v11782 = vsel %vm11726, %v11686, 0.0
      %v11783 = vadd.f32 %v11781, %v11782
      %v11784 = vsel %vm11726, %v11688, 0.0
      %v11785 = vadd.f32 %v11783, %v11784
      %v11786 = vsel %vm11726, %v11691, 0.0
      %v11787 = vadd.f32 %v11785, %v11786
      %v11788 = vsel %vm11726, %v11693, 0.0
      %v11789 = vadd.f32 %v11787, %v11788
      %v11790 = vrot.slane %v11789, 4
      %v11791 = vadd.f32 %v11789, %v11790
      %v11792 = vrot.slane %v11791, 2
      %v11793 = vadd.f32 %v11791, %v11792
      %v11794 = vrot.slane %v11793, 1
      %v11795 = vadd.f32 %v11793, %v11794
      %v11796 = vmul.f32 %v11795, 0.00390625
      %v11797 = vsel %vm11726, %v11616, -inf
      %v11798 = vsel %vm11726, %v11618, -inf
      %v11799 = vsel %vm11726, %v11621, -inf
      %v11800 = vsel %vm11726, %v11623, -inf
      %v11801 = vsel %vm11726, %v11626, -inf
      %v11802 = vmax.f32 %v11797, %v11801
      %v11803 = vsel %vm11726, %v11628, -inf
      %v11804 = vmax.f32 %v11798, %v11803
      %v11805 = vsel %vm11726, %v11631, -inf
      %v11806 = vmax.f32 %v11799, %v11805
      %v11807 = vsel %vm11726, %v11633, -inf
      %v11808 = vmax.f32 %v11800, %v11807
      %v11809 = vsel %vm11726, %v11636, -inf
      %v11810 = vmax.f32 %v11802, %v11809
      %v11811 = vsel %vm11726, %v11638, -inf
      %v11812 = vmax.f32 %v11804, %v11811
      %v11813 = vsel %vm11726, %v11641, -inf
      %v11814 = vmax.f32 %v11806, %v11813
      %v11815 = vsel %vm11726, %v11643, -inf
      %v11816 = vmax.f32 %v11808, %v11815
      %v11817 = vsel %vm11726, %v11646, -inf
      %v11818 = vmax.f32 %v11810, %v11817
      %v11819 = vsel %vm11726, %v11648, -inf
      %v11820 = vmax.f32 %v11812, %v11819
      %v11821 = vsel %vm11726, %v11651, -inf
      %v11822 = vmax.f32 %v11814, %v11821
      %v11823 = vsel %vm11726, %v11653, -inf
      %v11824 = vmax.f32 %v11816, %v11823
      %v11825 = vsel %vm11726, %v11656, -inf
      %v11826 = vmax.f32 %v11818, %v11825
      %v11827 = vsel %vm11726, %v11658, -inf
      %v11828 = vmax.f32 %v11820, %v11827
      %v11829 = vsel %vm11726, %v11661, -inf
      %v11830 = vmax.f32 %v11822, %v11829
      %v11831 = vsel %vm11726, %v11663, -inf
      %v11832 = vmax.f32 %v11824, %v11831
      %v11833 = vsel %vm11726, %v11666, -inf
      %v11834 = vmax.f32 %v11826, %v11833
      %v11835 = vsel %vm11726, %v11668, -inf
      %v11836 = vmax.f32 %v11828, %v11835
      %v11837 = vsel %vm11726, %v11671, -inf
      %v11838 = vmax.f32 %v11830, %v11837
      %v11839 = vsel %vm11726, %v11673, -inf
      %v11840 = vmax.f32 %v11832, %v11839
      %v11841 = vsel %vm11726, %v11676, -inf
      %v11842 = vmax.f32 %v11834, %v11841
      %v11843 = vsel %vm11726, %v11678, -inf
      %v11844 = vmax.f32 %v11836, %v11843
      %v11845 = vsel %vm11726, %v11681, -inf
      %v11846 = vmax.f32 %v11838, %v11845
      %v11847 = vsel %vm11726, %v11683, -inf
      %v11848 = vmax.f32 %v11840, %v11847
      %v11849 = vsel %vm11726, %v11686, -inf
      %v11850 = vmax.f32 %v11842, %v11849
      %v11851 = vsel %vm11726, %v11688, -inf
      %v11852 = vmax.f32 %v11844, %v11851
      %v11853 = vsel %vm11726, %v11691, -inf
      %v11854 = vmax.f32 %v11846, %v11853
      %v11855 = vsel %vm11726, %v11693, -inf
      %v11856 = vmax.f32 %v11848, %v11855
      %v11857 = vmax.f32 %v11850, %v11852
      %v11858 = vmax.f32 %v11854, %v11856
      %v11859 = vmax.f32 %v11857, %v11858
      %v11860 = vrot.slane %v11859, 4
      %v11861 = vmax.f32 %v11859, %v11860
      %v11862 = vrot.slane %v11861, 2
      %v11863 = vmax.f32 %v11861, %v11862
      %v11864 = vrot.slane %v11863, 1
      %v11865 = vmax.f32 %v11863, %v11864
      %vm11866 = vcmask 1040384
      %v11867 = vsel %vm11866, %v11796, %v11865
      %v11868 = vld [vmem:[%s3] sm:$0xff]
      %v11869 = vld [vmem:[%s3 + $0x8] sm:$0xff]
      %v11871 = vsel %vm11726, %v11867, 0
      %11873 = vmatprep.subr.mxu0 0.0
      %11874 = vmatpush1.msra.mxu0 0.0
      %11875 = vmatprep.subr.mxu0 0.0
      %11876 = vmatpush1.msra.mxu0 0.0
      %11877 = vmatprep.subr.mxu0 0.0
      %11878 = vmatpush1.msra.mxu0 0.0
      %11879 = vmatprep.subr.mxu0 0.0
      %11880 = vmatpush1.msra.mxu0 0.0
      %11881 = vmatprep.subr.mxu0 0.0
      %11882 = vmatpush1.msra.mxu0 0.0
      %11883 = vmatprep.subr.mxu0 0.0
      %11884 = vmatpush1.msra.mxu0 0.0
      %11885 = vmatprep.subr.mxu0 0.0
      %11886 = vmatpush1.msra.mxu0 0.0
      %11887 = vmatprep.subr.mxu0 0.0
      %11888 = vmatpush1.msra.mxu0 0.0
      %11889 = vmatprep.subr.mxu0 0.0
      %11890 = vmatpush1.msra.mxu0 0.0
      %11891 = vmatprep.subr.mxu0 0.0
      %11892 = vmatpush1.msra.mxu0 0.0
      %11893 = vmatprep.subr.mxu0 0.0
      %11894 = vmatpush1.msra.mxu0 0.0
      %11895 = vmatprep.subr.mxu0 0.0
      %11896 = vmatpush1.msra.mxu0 0.0
      %11897 = vmatprep.subr.mxu0 0.0
      %11898 = vmatpush1.msra.mxu0 0.0
      %11899 = vmatprep.subr.mxu0 0.0
      %11900 = vmatpush1.msra.mxu0 0.0
      %11901 = vmatprep.subr.mxu0 0.0
      %11902 = vmatpush1.msra.mxu0 %v11869
      %11903 = vmatprep.subr.mxu0 0.0
      %11904 = vmatpush1.msra.mxu0 %v11868
      %11905 = vmatprep.subr.mxu0 0.0
      %11906 = vmatpush2.msra.mxu0 0.0
      %11907 = vmatprep.subr.mxu0 0.0
      %11908 = vmatpush2.msra.mxu0 0.0
      %11909 = vmatprep.subr.mxu0 0.0
      %11910 = vmatpush2.msra.mxu0 0.0
      %11911 = vmatprep.subr.mxu0 0.0
      %11912 = vmatpush2.msra.mxu0 0.0
      %11913 = vmatprep.subr.mxu0 0.0
      %11914 = vmatpush2.msra.mxu0 0.0
      %11915 = vmatprep.subr.mxu0 0.0
      %11916 = vmatpush2.msra.mxu0 0.0
      %11917 = vmatprep.subr.mxu0 0.0
      %11918 = vmatpush2.msra.mxu0 0.0
      %11919 = vmatprep.subr.mxu0 0.0
      %11920 = vmatpush2.msra.mxu0 0.0
      %11921 = vmatprep.subr.mxu0 0.0
      %11922 = vmatpush2.msra.mxu0 0.0
      %11923 = vmatprep.subr.mxu0 0.0
      %11924 = vmatpush2.msra.mxu0 0.0
      %11925 = vmatprep.subr.mxu0 0.0
      %11926 = vmatpush2.msra.mxu0 0.0
      %11927 = vmatprep.subr.mxu0 0.0
      %11928 = vmatpush2.msra.mxu0 0.0
      %11929 = vmatprep.subr.mxu0 0.0
      %11930 = vmatpush2.msra.mxu0 0.0
      %11931 = vmatprep.subr.mxu0 0.0
      %11932 = vmatpush2.msra.mxu0 0.0
      %11933 = vmatprep.subr.mxu0 0.0
      %11934 = vmatpush2.msra.mxu0 0.0
      %11935 = vmatprep.subr.mxu0 0.0
      %11936 = vmatpush2.msra.mxu0 0.0
      %11937 = vmatprep.mubr.f32.mxu0 0.0
      %11938 = vmatmul.mubr.f32.gmra.mxu0 %v11871
      %v11939 = vpop.f32.mrf.mxu0
      %v11940 = vadd.f32 0.0, %v11939
      %v11941 = vpop.f32.mrf.mxu0
      %11942 = vdwg.mxu0
      %v11943 = vmax.f32 %v11940, 0.0
      %v11944 = vld [vmem:[%s4] sm:$0x1]
      %vm11945 = vcmask 7168
      %v11947 = vsel %vm11945, %v11943, 0
      %v11950 = vsel %vm11866, %v11944, 0
      %11952 = vmatprep.subr.mxu0 0.0
      %11953 = vmatpush1.msra.mxu0 0.0
      %11954 = vmatprep.subr.mxu0 0.0
      %11955 = vmatpush1.msra.mxu0 0.0
      %11956 = vmatprep.subr.mxu0 0.0
      %11957 = vmatpush1.msra.mxu0 0.0
      %11958 = vmatprep.subr.mxu0 0.0
      %11959 = vmatpush1.msra.mxu0 0.0
      %11960 = vmatprep.subr.mxu0 0.0
      %11961 = vmatpush1.msra.mxu0 0.0
      %11962 = vmatprep.subr.mxu0 0.0
      %11963 = vmatpush1.msra.mxu0 0.0
      %11964 = vmatprep.subr.mxu0 0.0
      %11965 = vmatpush1.msra.mxu0 0.0
      %11966 = vmatprep.subr.mxu0 0.0
      %11967 = vmatpush1.msra.mxu0 0.0
      %11968 = vmatprep.subr.mxu0 0.0
      %11969 = vmatpush1.msra.mxu0 0.0
      %11970 = vmatprep.subr.mxu0 0.0
      %11971 = vmatpush1.msra.mxu0 0.0
      %11972 = vmatprep.subr.mxu0 0.0
      %11973 = vmatpush1.msra.mxu0 0.0
      %11974 = vmatprep.subr.mxu0 0.0
      %11975 = vmatpush1.msra.mxu0 0.0
      %11976 = vmatprep.subr.mxu0 0.0
      %11977 = vmatpush1.msra.mxu0 0.0
      %11978 = vmatprep.subr.mxu0 0.0
      %11979 = vmatpush1.msra.mxu0 0.0
      %11980 = vmatprep.subr.mxu0 0.0
      %11981 = vmatpush1.msra.mxu0 0.0
      %11982 = vmatprep.subr.mxu0 0.0
      %11983 = vmatpush1.msra.mxu0 %v11950
      %11984 = vmatprep.subr.mxu0 0.0
      %11985 = vmatpush2.msra.mxu0 0.0
      %11986 = vmatprep.subr.mxu0 0.0
      %11987 = vmatpush2.msra.mxu0 0.0
      %11988 = vmatprep.subr.mxu0 0.0
      %11989 = vmatpush2.msra.mxu0 0.0
      %11990 = vmatprep.subr.mxu0 0.0
      %11991 = vmatpush2.msra.mxu0 0.0
      %11992 = vmatprep.subr.mxu0 0.0
      %11993 = vmatpush2.msra.mxu0 0.0
      %11994 = vmatprep.subr.mxu0 0.0
      %11995 = vmatpush2.msra.mxu0 0.0
      %11996 = vmatprep.subr.mxu0 0.0
      %11997 = vmatpush2.msra.mxu0 0.0
      %11998 = vmatprep.subr.mxu0 0.0
      %11999 = vmatpush2.msra.mxu0 0.0
      %12000 = vmatprep.subr.mxu0 0.0
      %12001 = vmatpush2.msra.mxu0 0.0
      %12002 = vmatprep.subr.mxu0 0.0
      %12003 = vmatpush2.msra.mxu0 0.0
      %12004 = vmatprep.subr.mxu0 0.0
      %12005 = vmatpush2.msra.mxu0 0.0
      %12006 = vmatprep.subr.mxu0 0.0
      %12007 = vmatpush2.msra.mxu0 0.0
      %12008 = vmatprep.subr.mxu0 0.0
      %12009 = vmatpush2.msra.mxu0 0.0
      %12010 = vmatprep.subr.mxu0 0.0
      %12011 = vmatpush2.msra.mxu0 0.0
      %12012 = vmatprep.subr.mxu0 0.0
      %12013 = vmatpush2.msra.mxu0 0.0
      %12014 = vmatprep.subr.mxu0 0.0
      %12015 = vmatpush2.msra.mxu0 0.0
      %12016 = vmatprep.mubr.f32.mxu0 0.0
      %12017 = vmatmul.mubr.f32.gmra.mxu0 %v11947
      %v12018 = vpop.f32.mrf.mxu0
      %v12019 = vadd.f32 0.0, %v12018
      %v12020 = vpop.f32.mrf.mxu0
      %12021 = vdwg.mxu0
      %v12023 = vrot.slane %v12019, 1
      %v12025 = vadd.f32 %v12019, %v12023
      %v12026 = vxor.u32 %v12025, 2147483648
      %v12027 = vmul.f32 %v12026, 1.442695
      %v12028 = vpow.pop %v12027
      %v12029 = vadd.f32 %v12028, 1.0
      %v12030 = vrcp.pop %v12029
      %v12031 = vmul.f32 1.0, %v12030
      %v12032 = vlaneseq
      %v12033 = vshrl.u32 %v12032, 7
      %v12034 = vsub.s32 0, %v12033
      %v12035 = vrot.slane %v12031, %v12034
      %v12036 = vmul.f32 %v11616, %v12035
      %v12037 = vmul.f32 %v11618, %v12035
      %v12038 = vmul.f32 %v11621, %v12035
      %v12039 = vmul.f32 %v11623, %v12035
      %v12040 = vmul.f32 %v11626, %v12035
      %v12041 = vmul.f32 %v11628, %v12035
      %v12042 = vmul.f32 %v11631, %v12035
      %v12043 = vmul.f32 %v11633, %v12035
      %v12044 = vmul.f32 %v11636, %v12035
      %v12045 = vmul.f32 %v11638, %v12035
      %v12046 = vmul.f32 %v11641, %v12035
      %v12047 = vmul.f32 %v11643, %v12035
      %v12048 = vmul.f32 %v11646, %v12035
      %v12049 = vmul.f32 %v11648, %v12035
      %v12050 = vmul.f32 %v11651, %v12035
      %v12051 = vmul.f32 %v11653, %v12035
      %v12052 = vmul.f32 %v11656, %v12035
      %v12053 = vmul.f32 %v11658, %v12035
      %v12054 = vmul.f32 %v11661, %v12035
      %v12055 = vmul.f32 %v11663, %v12035
      %v12056 = vmul.f32 %v11666, %v12035
      %v12057 = vmul.f32 %v11668, %v12035
      %v12058 = vmul.f32 %v11671, %v12035
      %v12059 = vmul.f32 %v11673, %v12035
      %v12060 = vmul.f32 %v11676, %v12035
      %v12061 = vmul.f32 %v11678, %v12035
      %v12062 = vmul.f32 %v11681, %v12035
      %v12063 = vmul.f32 %v11683, %v12035
      %v12064 = vmul.f32 %v11686, %v12035
      %v12065 = vmul.f32 %v11688, %v12035
      %v12066 = vmul.f32 %v11691, %v12035
      %v12067 = vmul.f32 %v11693, %v12035
      %v12068 = vpack.c.bf16 %v12037, %v12036
      %v12069 = vpack.c.bf16 %v12039, %v12038
      %v12070 = vpack.c.bf16 %v12041, %v12040
      %v12071 = vpack.c.bf16 %v12043, %v12042
      %v12072 = vpack.c.bf16 %v12045, %v12044
      %v12073 = vpack.c.bf16 %v12047, %v12046
      %v12074 = vpack.c.bf16 %v12049, %v12048
      %v12075 = vpack.c.bf16 %v12051, %v12050
      %v12076 = vpack.c.bf16 %v12053, %v12052
      %v12077 = vpack.c.bf16 %v12055, %v12054
      %v12078 = vpack.c.bf16 %v12057, %v12056
      %v12079 = vpack.c.bf16 %v12059, %v12058
      %v12080 = vpack.c.bf16 %v12061, %v12060
      %v12081 = vpack.c.bf16 %v12063, %v12062
      %v12082 = vpack.c.bf16 %v12065, %v12064
      %v12083 = vpack.c.bf16 %v12067, %v12066
      %v12084 = vld [vmem:[%s5] sm:$0xf]
      %v12085 = vld [vmem:[%s5 + $0x4] sm:$0xf]
      %v12086 = vld [vmem:[%s6] sm:$0x1]
      %v12088 = vlaneseq
      %v12089 = vshrl.u32 %v12088, 7
      %v12090 = vsub.s32 0, %v12089
      %v12091 = vrot.slane %v12086, %v12090
      %v12095 = vunpack.c.l.b16 %v12084
      %v12096 = vunpack.c.l.b16 %v12085
      %v12097 = vpack.c.b16 %v12096, %v12095
      %v12100 = vsel %vm11726, %v12068, 0
      %v12103 = vsel %vm11726, %v12069, 0
      %v12106 = vsel %vm11726, %v12070, 0
      %v12109 = vsel %vm11726, %v12071, 0
      %v12112 = vsel %vm11726, %v12072, 0
      %v12115 = vsel %vm11726, %v12073, 0
      %v12118 = vsel %vm11726, %v12074, 0
      %v12121 = vsel %vm11726, %v12075, 0
      %v12124 = vsel %vm11726, %v12076, 0
      %v12127 = vsel %vm11726, %v12077, 0
      %v12130 = vsel %vm11726, %v12078, 0
      %v12133 = vsel %vm11726, %v12079, 0
      %v12136 = vsel %vm11726, %v12080, 0
      %v12139 = vsel %vm11726, %v12081, 0
      %v12142 = vsel %vm11726, %v12082, 0
      %v12145 = vsel %vm11726, %v12083, 0
      %12147 = vmatprep.subr.bf16.mxu0 0
      %12148 = vmatpush1.bf16.msra.mxu0 0
      %12149 = vmatprep.subr.bf16.mxu0 0
      %12150 = vmatpush1.bf16.msra.mxu0 0
      %12151 = vmatprep.subr.bf16.mxu0 0
      %12152 = vmatpush1.bf16.msra.mxu0 0
      %12153 = vmatprep.subr.bf16.mxu0 0
      %12154 = vmatpush1.bf16.msra.mxu0 0
      %12155 = vmatprep.subr.bf16.mxu0 0
      %12156 = vmatpush1.bf16.msra.mxu0 0
      %12157 = vmatprep.subr.bf16.mxu0 0
      %12158 = vmatpush1.bf16.msra.mxu0 0
      %12159 = vmatprep.subr.bf16.mxu0 0
      %12160 = vmatpush1.bf16.msra.mxu0 0
      %12161 = vmatprep.subr.bf16.mxu0 0
      %12162 = vmatpush1.bf16.msra.mxu0 %v12097
      %12163 = vmatprep.subr.bf16.mxu0 0
      %12164 = vmatpush2.bf16.msra.mxu0 0
      %12165 = vmatprep.subr.bf16.mxu0 0
      %12166 = vmatpush2.bf16.msra.mxu0 0
      %12167 = vmatprep.subr.bf16.mxu0 0
      %12168 = vmatpush2.bf16.msra.mxu0 0
      %12169 = vmatprep.subr.bf16.mxu0 0
      %12170 = vmatpush2.bf16.msra.mxu0 0
      %12171 = vmatprep.subr.bf16.mxu0 0
      %12172 = vmatpush2.bf16.msra.mxu0 0
      %12173 = vmatprep.subr.bf16.mxu0 0
      %12174 = vmatpush2.bf16.msra.mxu0 0
      %12175 = vmatprep.subr.bf16.mxu0 0
      %12176 = vmatpush2.bf16.msra.mxu0 0
      %12177 = vmatprep.subr.bf16.mxu0 0
      %12178 = vmatpush2.bf16.msra.mxu0 0
      %12179 = vmatprep.mubr.bf16.mxu0 0
      %12180 = vmatmul.mubr.bf16.gmra.mxu0 %v12100
      %v12181 = vpop.f32.mrf.mxu0
      %v12182 = vadd.f32 %v12091, %v12181
      %v12183 = vpop.f32.mrf.mxu0
      %v12184 = vpop.f32.mrf.mxu0
      %v12185 = vadd.f32 %v12091, %v12184
      %v12186 = vpop.f32.mrf.mxu0
      %12187 = vmatprep.mubr.bf16.mxu0 0
      %12188 = vmatmul.mubr.bf16.gmra.mxu0 %v12103
      %v12189 = vpop.f32.mrf.mxu0
      %v12190 = vadd.f32 %v12091, %v12189
      %v12191 = vpop.f32.mrf.mxu0
      %v12192 = vpop.f32.mrf.mxu0
      %v12193 = vadd.f32 %v12091, %v12192
      %v12194 = vpop.f32.mrf.mxu0
      %12195 = vmatprep.mubr.bf16.mxu0 0
      %12196 = vmatmul.mubr.bf16.gmra.mxu0 %v12106
      %v12197 = vpop.f32.mrf.mxu0
      %v12198 = vadd.f32 %v12091, %v12197
      %v12199 = vpop.f32.mrf.mxu0
      %v12200 = vpop.f32.mrf.mxu0
      %v12201 = vadd.f32 %v12091, %v12200
      %v12202 = vpop.f32.mrf.mxu0
      %12203 = vmatprep.mubr.bf16.mxu0 0
      %12204 = vmatmul.mubr.bf16.gmra.mxu0 %v12109
      %v12205 = vpop.f32.mrf.mxu0
      %v12206 = vadd.f32 %v12091, %v12205
      %v12207 = vpop.f32.mrf.mxu0
      %v12208 = vpop.f32.mrf.mxu0
      %v12209 = vadd.f32 %v12091, %v12208
      %v12210 = vpop.f32.mrf.mxu0
      %12211 = vmatprep.mubr.bf16.mxu0 0
      %12212 = vmatmul.mubr.bf16.gmra.mxu0 %v12112
      %v12213 = vpop.f32.mrf.mxu0
      %v12214 = vadd.f32 %v12091, %v12213
      %v12215 = vpop.f32.mrf.mxu0
      %v12216 = vpop.f32.mrf.mxu0
      %v12217 = vadd.f32 %v12091, %v12216
      %v12218 = vpop.f32.mrf.mxu0
      %12219 = vmatprep.mubr.bf16.mxu0 0
      %12220 = vmatmul.mubr.bf16.gmra.mxu0 %v12115
      %v12221 = vpop.f32.mrf.mxu0
      %v12222 = vadd.f32 %v12091, %v12221
      %v12223 = vpop.f32.mrf.mxu0
      %v12224 = vpop.f32.mrf.mxu0
      %v12225 = vadd.f32 %v12091, %v12224
      %v12226 = vpop.f32.mrf.mxu0
      %12227 = vmatprep.mubr.bf16.mxu0 0
      %12228 = vmatmul.mubr.bf16.gmra.mxu0 %v12118
      %v12229 = vpop.f32.mrf.mxu0
      %v12230 = vadd.f32 %v12091, %v12229
      %v12231 = vpop.f32.mrf.mxu0
      %v12232 = vpop.f32.mrf.mxu0
      %v12233 = vadd.f32 %v12091, %v12232
      %v12234 = vpop.f32.mrf.mxu0
      %12235 = vmatprep.mubr.bf16.mxu0 0
      %12236 = vmatmul.mubr.bf16.gmra.mxu0 %v12121
      %v12237 = vpop.f32.mrf.mxu0
      %v12238 = vadd.f32 %v12091, %v12237
      %v12239 = vpop.f32.mrf.mxu0
      %v12240 = vpop.f32.mrf.mxu0
      %v12241 = vadd.f32 %v12091, %v12240
      %v12242 = vpop.f32.mrf.mxu0
      %12243 = vmatprep.mubr.bf16.mxu0 0
      %12244 = vmatmul.mubr.bf16.gmra.mxu0 %v12124
      %v12245 = vpop.f32.mrf.mxu0
      %v12246 = vadd.f32 %v12091, %v12245
      %v12247 = vpop.f32.mrf.mxu0
      %v12248 = vpop.f32.mrf.mxu0
      %v12249 = vadd.f32 %v12091, %v12248
      %v12250 = vpop.f32.mrf.mxu0
      %12251 = vmatprep.mubr.bf16.mxu0 0
      %12252 = vmatmul.mubr.bf16.gmra.mxu0 %v12127
      %v12253 = vpop.f32.mrf.mxu0
      %v12254 = vadd.f32 %v12091, %v12253
      %v12255 = vpop.f32.mrf.mxu0
      %v12256 = vpop.f32.mrf.mxu0
      %v12257 = vadd.f32 %v12091, %v12256
      %v12258 = vpop.f32.mrf.mxu0
      %12259 = vmatprep.mubr.bf16.mxu0 0
      %12260 = vmatmul.mubr.bf16.gmra.mxu0 %v12130
      %v12261 = vpop.f32.mrf.mxu0
      %v12262 = vadd.f32 %v12091, %v12261
      %v12263 = vpop.f32.mrf.mxu0
      %v12264 = vpop.f32.mrf.mxu0
      %v12265 = vadd.f32 %v12091, %v12264
      %v12266 = vpop.f32.mrf.mxu0
      %12267 = vmatprep.mubr.bf16.mxu0 0
      %12268 = vmatmul.mubr.bf16.gmra.mxu0 %v12133
      %v12269 = vpop.f32.mrf.mxu0
      %v12270 = vadd.f32 %v12091, %v12269
      %v12271 = vpop.f32.mrf.mxu0
      %v12272 = vpop.f32.mrf.mxu0
      %v12273 = vadd.f32 %v12091, %v12272
      %v12274 = vpop.f32.mrf.mxu0
      %12275 = vmatprep.mubr.bf16.mxu0 0
      %12276 = vmatmul.mubr.bf16.gmra.mxu0 %v12136
      %v12277 = vpop.f32.mrf.mxu0
      %v12278 = vadd.f32 %v12091, %v12277
      %v12279 = vpop.f32.mrf.mxu0
      %v12280 = vpop.f32.mrf.mxu0
      %v12281 = vadd.f32 %v12091, %v12280
      %v12282 = vpop.f32.mrf.mxu0
      %12283 = vmatprep.mubr.bf16.mxu0 0
      %12284 = vmatmul.mubr.bf16.gmra.mxu0 %v12139
      %v12285 = vpop.f32.mrf.mxu0
      %v12286 = vadd.f32 %v12091, %v12285
      %v12287 = vpop.f32.mrf.mxu0
      %v12288 = vpop.f32.mrf.mxu0
      %v12289 = vadd.f32 %v12091, %v12288
      %v12290 = vpop.f32.mrf.mxu0
      %12291 = vmatprep.mubr.bf16.mxu0 0
      %12292 = vmatmul.mubr.bf16.gmra.mxu0 %v12142
      %v12293 = vpop.f32.mrf.mxu0
      %v12294 = vadd.f32 %v12091, %v12293
      %v12295 = vpop.f32.mrf.mxu0
      %v12296 = vpop.f32.mrf.mxu0
      %v12297 = vadd.f32 %v12091, %v12296
      %v12298 = vpop.f32.mrf.mxu0
      %12299 = vmatprep.mubr.bf16.mxu0 0
      %12300 = vmatmul.mubr.bf16.gmra.mxu0 %v12145
      %v12301 = vpop.f32.mrf.mxu0
      %v12302 = vadd.f32 %v12091, %v12301
      %v12303 = vpop.f32.mrf.mxu0
      %v12304 = vpop.f32.mrf.mxu0
      %v12305 = vadd.f32 %v12091, %v12304
      %v12306 = vpop.f32.mrf.mxu0
      %12307 = vdwg.mxu0
      %v12308 = vadd.f32 %v12182, %v280
      %v12309 = vadd.f32 %v12185, %v281
      %v12310 = vadd.f32 %v12190, %v282
      %v12311 = vadd.f32 %v12193, %v283
      %v12312 = vadd.f32 %v12198, %v284
      %v12313 = vadd.f32 %v12201, %v285
      %v12314 = vadd.f32 %v12206, %v286
      %v12315 = vadd.f32 %v12209, %v287
      %v12316 = vadd.f32 %v12214, %v288
      %v12317 = vadd.f32 %v12217, %v289
      %v12318 = vadd.f32 %v12222, %v290
      %v12319 = vadd.f32 %v12225, %v291
      %v12320 = vadd.f32 %v12230, %v292
      %v12321 = vadd.f32 %v12233, %v293
      %v12322 = vadd.f32 %v12238, %v294
      %v12323 = vadd.f32 %v12241, %v295
      %v12324 = vadd.f32 %v12246, %v296
      %v12325 = vadd.f32 %v12249, %v297
      %v12326 = vadd.f32 %v12254, %v298
      %v12327 = vadd.f32 %v12257, %v299
      %v12328 = vadd.f32 %v12262, %v300
      %v12329 = vadd.f32 %v12265, %v301
      %v12330 = vadd.f32 %v12270, %v302
      %v12331 = vadd.f32 %v12273, %v303
      %v12332 = vadd.f32 %v12278, %v304
      %v12333 = vadd.f32 %v12281, %v305
      %v12334 = vadd.f32 %v12286, %v306
      %v12335 = vadd.f32 %v12289, %v307
      %v12336 = vadd.f32 %v12294, %v308
      %v12337 = vadd.f32 %v12297, %v309
      %v12338 = vadd.f32 %v12302, %v310
      %v12339 = vadd.f32 %v12305, %v311
      %12340 = vst.msk [vmem:[%s278] sm:$0xff] %vm1456, %v12308
      %12341 = vst.msk [vmem:[%s278 + $0x8] sm:$0xff] %vm1456, %v12309
      %12342 = vst.msk [vmem:[%s278 + $0x10] sm:$0xff] %vm1456, %v12310
      %12343 = vst.msk [vmem:[%s278 + $0x18] sm:$0xff] %vm1456, %v12311
      %12344 = vst.msk [vmem:[%s278 + $0x20] sm:$0xff] %vm1456, %v12312
      %12345 = vst.msk [vmem:[%s278 + $0x28] sm:$0xff] %vm1456, %v12313
      %12346 = vst.msk [vmem:[%s278 + $0x30] sm:$0xff] %vm1456, %v12314
      %12347 = vst.msk [vmem:[%s278 + $0x38] sm:$0xff] %vm1456, %v12315
      %12348 = vst.msk [vmem:[%s278 + $0x40] sm:$0xff] %vm1456, %v12316
      %12349 = vst.msk [vmem:[%s278 + $0x48] sm:$0xff] %vm1456, %v12317
      %12350 = vst.msk [vmem:[%s278 + $0x50] sm:$0xff] %vm1456, %v12318
      %12351 = vst.msk [vmem:[%s278 + $0x58] sm:$0xff] %vm1456, %v12319
      %12352 = vst.msk [vmem:[%s278 + $0x60] sm:$0xff] %vm1456, %v12320
      %12353 = vst.msk [vmem:[%s278 + $0x68] sm:$0xff] %vm1456, %v12321
      %12354 = vst.msk [vmem:[%s278 + $0x70] sm:$0xff] %vm1456, %v12322
      %12355 = vst.msk [vmem:[%s278 + $0x78] sm:$0xff] %vm1456, %v12323
      %12356 = vst.msk [vmem:[%s278 + $0x80] sm:$0xff] %vm1456, %v12324
      %12357 = vst.msk [vmem:[%s278 + $0x88] sm:$0xff] %vm1456, %v12325
      %12358 = vst.msk [vmem:[%s278 + $0x90] sm:$0xff] %vm1456, %v12326
      %12359 = vst.msk [vmem:[%s278 + $0x98] sm:$0xff] %vm1456, %v12327
      %12360 = vst.msk [vmem:[%s278 + $0xa0] sm:$0xff] %vm1456, %v12328
      %12361 = vst.msk [vmem:[%s278 + $0xa8] sm:$0xff] %vm1456, %v12329
      %12362 = vst.msk [vmem:[%s278 + $0xb0] sm:$0xff] %vm1456, %v12330
      %12363 = vst.msk [vmem:[%s278 + $0xb8] sm:$0xff] %vm1456, %v12331
      %12364 = vst.msk [vmem:[%s278 + $0xc0] sm:$0xff] %vm1456, %v12332
      %12365 = vst.msk [vmem:[%s278 + $0xc8] sm:$0xff] %vm1456, %v12333
      %12366 = vst.msk [vmem:[%s278 + $0xd0] sm:$0xff] %vm1456, %v12334
      %12367 = vst.msk [vmem:[%s278 + $0xd8] sm:$0xff] %vm1456, %v12335
      %12368 = vst.msk [vmem:[%s278 + $0xe0] sm:$0xff] %vm1456, %v12336
      %12369 = vst.msk [vmem:[%s278 + $0xe8] sm:$0xff] %vm1456, %v12337
      %12370 = vst.msk [vmem:[%s278 + $0xf0] sm:$0xff] %vm1456, %v12338
      %12371 = vst.msk [vmem:[%s278 + $0xf8] sm:$0xff] %vm1456, %v12339
      %p12372 = scmp.lt.s32.totalorder %s18, 1
      %s12373 = scalar_select %p12372, %s18, 1
      %s12374 = smul.addr %s12373, 32
      %s12375 = smul.addr %s12374, 8
      %s12376 = scalar_lea.vmem %s7, %s12375
      // Predicated region
      $region49: #{rdb_pallas.1} parent=47 // pred_check
        %p12377 = pneg %p188
      $region50: #{rdb_pallas.1} parent=47 // pred_check_branch
        %12379 = sbr.rel (%p12377) target = $region52
      $region51: #{rdb_pallas.1} parent=47 // pred_region
        _
      $region52: #{rdb_pallas.1} parent=47 // pred_fallthru
        _
    $region48: #{rdb_pallas.1} parent=5 // pred_fallthru
      _
    %p12380 = scmp.le.s32.totalorder 2, %s13
    // Predicated region
    $region53: #{rdb_pallas.1} parent=5 // pred_check
      %p12381 = pneg %p12380
    $region54: #{rdb_pallas.1} parent=5 // pred_check_branch
      %12383 = sbr.rel (%p12381) target = $region56
    $region55: #{rdb_pallas.1} parent=5 // pred_region
      %s12384 = ssub.s32 %s13, 2
      // Predicated region
      $region57: #{rdb_pallas.1} parent=55 // pred_check
        %p12385 = pneg %p194
      $region58: #{rdb_pallas.1} parent=55 // pred_check_branch
        %12387 = sbr.rel (%p12385) target = $region60
      $region59: #{rdb_pallas.1} parent=55 // pred_region
        %p12388 = scmp.lt.s32.totalorder %s19, 1
        %s12389 = scalar_select %p12388, %s19, 1
        %s12390 = smul.addr %s12389, 32
        %s12391 = smul.addr %s12390, 8
        %s12392 = scalar_lea.vmem %s7, %s12391
      $region60: #{rdb_pallas.1} parent=55 // pred_fallthru
        _
    $region56: #{rdb_pallas.1} parent=5 // pred_fallthru
      _
  $region6: #{rdb_pallas.1} parent=0 // loop_footer
    %s17 = sadd.s32 1, %s13
  $region7: #{rdb_pallas.1} parent=0 // loop_footer_branch
    %12 = sbr.rel target = $region3
  $region8: #{rdb_pallas.1} parent=0 // loop_exit
    _

</llo_original>
